<compile_context>
chip_gen: v7x
topology: tpu7x:2x2x1
jax: 0.10.0
libtpu: 0.0.40
codegen_flags: <defaults>
</compile_context>

<pallas_src>
import functools

import jax
import jax.numpy as jnp
from jax.experimental import pallas as pl
from jax.experimental.pallas import tpu as pltpu


def _round_up(x, m):
    return (x + m - 1) // m * m


def _nbytes(shape, dtype):
    n = 1
    for d in shape:
        n *= int(d)
    return n * jnp.dtype(dtype).itemsize


def _layernorm(x, gamma, beta, d_true, eps=1e-5):
    # Single-pass LayerNorm over the last (padded) axis.  Padded lanes of x are
    # zero and gamma/beta are zero there, so dividing by the *true* feature
    # count reproduces nn.LayerNorm(d_true) exactly while keeping pads at 0.
    inv_d = 1.0 / float(d_true)
    s1 = jnp.sum(x, axis=-1, keepdims=True)
    s2 = jnp.sum(x * x, axis=-1, keepdims=True)
    mean = s1 * inv_d
    var = s2 * inv_d - mean * mean
    inv = jax.lax.rsqrt(var + eps)
    return (x - mean) * inv * gamma + beta


def _transformer_unit_kernel(
    x_ref,      # (TB, S, Dp) f32
    wqkv_ref,   # (Dp, 3*H*Dp) bf16, columns = [Q_h0..Q_h{H-1} | K_h0.. | V_h0..]
    wz_ref,     # (H*Dp, Dp) bf16
    bz_ref,     # (1, Dp) f32
    g1_ref,     # (1, Dp) f32  layernorm_1 weight
    beta1_ref,  # (1, Dp) f32  layernorm_1 bias
    w1_ref,     # (Dp, DFp) bf16
    b1_ref,     # (1, DFp) f32
    w2_ref,     # (DFp, Dp) bf16
    b2_ref,     # (1, Dp) f32
    g2_ref,     # (1, Dp) f32  layernorm_2 weight
    beta2_ref,  # (1, Dp) f32  layernorm_2 bias
    out_ref,    # (TB, S, Dp) f32
    attn_ref,   # (TB, S, S) f32
    *,
    num_heads,
    d_true,
):
    x = x_ref[...].astype(jnp.float32)          # (TB, S, Dp)
    tb, s_len, dp = x.shape
    h = num_heads
    score_scale = float(d_true) ** -0.5          # == (d**-0.25) on both q and k

    x_flat = x.reshape(tb * s_len, dp)

    # Fused QKV projection: one (TB*S, Dp) @ (Dp, 3*H*Dp) bf16 MXU matmul.
    qkv = jnp.dot(x_flat.astype(jnp.bfloat16), wqkv_ref[...],
                  preferred_element_type=jnp.float32)
    qkv = qkv.reshape(tb, s_len, 3 * h * dp)

    attn_sum = jnp.zeros((tb, s_len, s_len), jnp.float32)
    z_heads = []
    for i in range(h):                           # "wide" heads: head_dim == D
        q = qkv[:, :, i * dp:(i + 1) * dp].astype(jnp.bfloat16)
        k = qkv[:, :, (h + i) * dp:(h + i + 1) * dp].astype(jnp.bfloat16)
        v = qkv[:, :, (2 * h + i) * dp:(2 * h + i + 1) * dp].astype(jnp.bfloat16)

        scores = jnp.einsum("bqd,bkd->bqk", q, k,
                            preferred_element_type=jnp.float32) * score_scale
        m = jnp.max(scores, axis=-1, keepdims=True)
        p = jnp.exp(scores - m)
        denom = jnp.sum(p, axis=-1, keepdims=True)
        attn = p * pl.reciprocal(denom, approx=True)   # EUP vrcp
        attn_sum = attn_sum + attn

        zh = jnp.einsum("bqk,bkd->bqd", attn.astype(jnp.bfloat16), v,
                        preferred_element_type=jnp.float32)
        z_heads.append(zh)

    # Concat heads, then ONE output projection (== concat-then-Wz identity).
    z_cat = jnp.concatenate(z_heads, axis=-1).reshape(tb * s_len, h * dp)
    z_proj = jnp.dot(z_cat.astype(jnp.bfloat16), wz_ref[...],
                     preferred_element_type=jnp.float32) + bz_ref[...]

    # residual + layernorm_1
    # TODO(synk): nn.Dropout treated as identity (eval-mode semantics).
    z1 = _layernorm(z_proj + x_flat, g1_ref[...], beta1_ref[...], d_true)

    # MLP: Linear -> ReLU -> Linear (bf16 MXU, f32 accumulation).
    a1 = jnp.dot(z1.astype(jnp.bfloat16), w1_ref[...],
                 preferred_element_type=jnp.float32) + b1_ref[...]
    a1 = jnp.maximum(a1, 0.0)
    ff = jnp.dot(a1.astype(jnp.bfloat16), w2_ref[...],
                 preferred_element_type=jnp.float32) + b2_ref[...]

    # residual + layernorm_2
    z2 = _layernorm(ff + z1, g2_ref[...], beta2_ref[...], d_true)

    out_ref[...] = z2.reshape(tb, s_len, dp).astype(out_ref.dtype)
    attn_ref[...] = (attn_sum * (1.0 / h)).astype(attn_ref.dtype)


def _perbase_pool_kernel(x_ref, q_ref, z_ref, attn_ref, *, d_true):
    # PerBaseFeatureEmbAttention: Q is a learned (S, D) matrix shared over batch.
    x = x_ref[...].astype(jnp.float32)                        # (TB, S, Dp)
    tb, s_len, dp = x.shape
    score_scale = float(d_true) ** -0.5

    q = jnp.broadcast_to(q_ref[...][None], (tb, s_len, dp)).astype(jnp.bfloat16)
    k = x.astype(jnp.bfloat16)
    scores = jnp.einsum("bqd,bkd->bqk", q, k,
                        preferred_element_type=jnp.float32) * score_scale
    m = jnp.max(scores, axis=-1, keepdims=True)
    p = jnp.exp(scores - m)
    attn = p * pl.reciprocal(jnp.sum(p, axis=-1, keepdims=True), approx=True)
    z = jnp.einsum("bqk,bkd->bqd", attn.astype(jnp.bfloat16), k,
                   preferred_element_type=jnp.float32)

    z_ref[...] = z.astype(z_ref.dtype)
    attn_ref[...] = attn.astype(attn_ref.dtype)


def _const_spec(shape, single_buffer):
    # Weights/biases have a constant index_map; single-buffering halves their
    # VMEM footprint (important for v7x's 64 MiB VMEM).
    index_map = lambda b: tuple(0 for _ in shape)
    if single_buffer:
        return pl.BlockSpec(shape, index_map,
                            pipeline_mode=pl.Buffered(buffer_count=1))
    return pl.BlockSpec(shape, index_map)


_UNIT_WEIGHT_NAMES = ["wqkv", "wz", "bz", "ln1_g", "ln1_b",
                      "w1", "b1", "w2", "b2", "ln2_g", "ln2_b"]


def transformer_unit(x, p, *, num_heads, d_true, tb, single_buffer):
    b, s_len, dp = x.shape
    weights = [p[n] for n in _UNIT_WEIGHT_NAMES]

    act_spec = pl.BlockSpec((tb, s_len, dp), lambda i: (i, 0, 0))
    attn_spec = pl.BlockSpec((tb, s_len, s_len), lambda i: (i, 0, 0))
    in_specs = [act_spec] + [_const_spec(w.shape, single_buffer) for w in weights]
    out_specs = [act_spec, attn_spec]

    # Explicit VMEM budget: activations are double-buffered by the pipeline,
    # weights use `wbuf` buffers.  Keep the request well inside v7x's 64 MiB.
    wbuf = 1 if single_buffer else 2
    est = 2 * (2 * _nbytes((tb, s_len, dp), jnp.float32)
               + _nbytes((tb, s_len, s_len), jnp.float32))
    est += wbuf * sum(_nbytes(w.shape, w.dtype) for w in weights)
    vmem_limit = int(min(max(4 * est, 8 * 1024 * 1024), 32 * 1024 * 1024))

    fn = pl.pallas_call(
        functools.partial(_transformer_unit_kernel,
                          num_heads=num_heads, d_true=d_true),
        grid_spec=pltpu.PrefetchScalarGridSpec(
            num_scalar_prefetch=0,
            grid=(b // tb,),
            in_specs=in_specs,
            out_specs=out_specs,
        ),
        out_shape=[
            jax.ShapeDtypeStruct((b, s_len, dp), jnp.float32),
            jax.ShapeDtypeStruct((b, s_len, s_len), jnp.float32),
        ],
        compiler_params=pltpu.CompilerParams(
            dimension_semantics=("parallel",),
            vmem_limit_bytes=vmem_limit,
        ),
    )
    return fn(x, *weights)


def perbase_pool(x, q, *, d_true, tb, single_buffer):
    b, s_len, dp = x.shape
    act_spec = pl.BlockSpec((tb, s_len, dp), lambda i: (i, 0, 0))
    attn_spec = pl.BlockSpec((tb, s_len, s_len), lambda i: (i, 0, 0))

    fn = pl.pallas_call(
        functools.partial(_perbase_pool_kernel, d_true=d_true),
        grid_spec=pltpu.PrefetchScalarGridSpec(
            num_scalar_prefetch=0,
            grid=(b // tb,),
            in_specs=[act_spec, _const_spec(q.shape, single_buffer)],
            out_specs=[act_spec, attn_spec],
        ),
        out_shape=[
            jax.ShapeDtypeStruct((b, s_len, dp), jnp.float32),
            jax.ShapeDtypeStruct((b, s_len, s_len), jnp.float32),
        ],
        compiler_params=pltpu.CompilerParams(
            dimension_semantics=("parallel",),
            vmem_limit_bytes=8 * 1024 * 1024,
        ),
    )
    return fn(x, q)


def prediction_transformer_forward(tokens, params, *, tb, single_buffer=True):
    """tokens: (B, S) int. Returns (y, fattn_w_norm, attn_tensor)."""
    d_true = params["d_true"]
    num_heads = params["num_heads"]
    b, s_len = tokens.shape

    # NucleoPosEmbedder ('sum'); embedding gathers done in the JAX wrapper.
    x = params["nucleo_emb"][tokens] + params["pos_emb"][None, :, :]
    x = x.astype(jnp.float32)                      # (B, S, Dp); pad lanes == 0

    attn_sum = jnp.zeros((b, s_len, s_len), jnp.float32)
    for unit_p in params["units"]:
        x, attn_u = transformer_unit(x, unit_p, num_heads=num_heads,
                                     d_true=d_true, tb=tb,
                                     single_buffer=single_buffer)
        attn_sum = attn_sum + attn_u
    attn_tensor = attn_sum / float(len(params["units"]))

    # PerBaseFeatureEmbAttention pooling (Pallas kernel).
    z_pool, fattn = perbase_pool(x, params["pool_q"], d_true=d_true, tb=tb,
                                 single_buffer=single_buffer)

    # Final linear head Wy on the unpadded pooled features (tiny wrapper op).
    z_concat = z_pool[:, :, :d_true].reshape(b, s_len * d_true)
    y = z_concat @ params["wy"] + params["by"]
    return y[:, 0], fattn, attn_tensor


def init_params(key, *, num_nucleotides, seq_len, embed_dim, num_heads,
                mlp_factor, num_units, num_classes=1):
    d = embed_dim
    dp = _round_up(d, 128)          # lane-dense padded feature dim
    df = d * mlp_factor
    dfp = _round_up(df, 128)
    h = num_heads

    counter = [0]

    def nxt():
        counter[0] += 1
        return jax.random.fold_in(key, counter[0])

    def xavier(k, shape, fan_in, fan_out):
        std = (2.0 / (fan_in + fan_out)) ** 0.5
        return jax.random.normal(k, shape, jnp.float32) * std

    def bias(k, n):
        return jax.random.uniform(k, (n,), jnp.float32, minval=-0.5, maxval=1.0)

    def pad2(w, rows, cols):
        out = jnp.zeros((rows, cols), jnp.float32)
        return out.at[: w.shape[0], : w.shape[1]].set(w)

    def pad_row(v, cols):
        out = jnp.zeros((1, cols), jnp.float32)
        return out.at[0, : v.shape[0]].set(v)

    nucleo_emb = jnp.zeros((num_nucleotides, dp), jnp.float32)
    nucleo_emb = nucleo_emb.at[:, :d].set(xavier(nxt(), (num_nucleotides, d),
                                                 num_nucleotides, d))
    pos_emb = jnp.zeros((seq_len, dp), jnp.float32)
    pos_emb = pos_emb.at[:, :d].set(xavier(nxt(), (seq_len, d), seq_len, d))

    def stack_heads(w):  # (H, d, d) per-head (in, out) -> (dp, H*dp)
        padded = jnp.zeros((h, dp, dp), jnp.float32).at[:, :d, :d].set(w)
        return padded.transpose(1, 0, 2).reshape(dp, h * dp)

    units = []
    for _ in range(num_units):
        wq = xavier(nxt(), (h, d, d), d, d)
        wk = xavier(nxt(), (h, d, d), d, d)
        wv = xavier(nxt(), (h, d, d), d, d)
        wz = xavier(nxt(), (h, d, d), h * d, d)
        wz_padded = jnp.zeros((h, dp, dp), jnp.float32).at[:, :d, :d].set(wz)

        unit = {
            # fused + padded + bf16 matmul weights
            "wqkv": jnp.concatenate([stack_heads(wq), stack_heads(wk),
                                     stack_heads(wv)], axis=1).astype(jnp.bfloat16),
            "wz": wz_padded.reshape(h * dp, dp).astype(jnp.bfloat16),
            "bz": pad_row(bias(nxt(), d), dp),
            "ln1_g": pad_row(jnp.ones((d,), jnp.float32), dp),
            "ln1_b": pad_row(bias(nxt(), d), dp),
            "w1": pad2(xavier(nxt(), (d, df), d, df), dp, dfp).astype(jnp.bfloat16),
            "b1": pad_row(bias(nxt(), df), dfp),
            "w2": pad2(xavier(nxt(), (df, d), df, d), dfp, dp).astype(jnp.bfloat16),
            "b2": pad_row(bias(nxt(), d), dp),
            "ln2_g": pad_row(jnp.ones((d,), jnp.float32), dp),
            "ln2_b": pad_row(bias(nxt(), d), dp),
        }
        units.append(unit)

    params = {
        "d_true": d,
        "num_heads": h,
        "nucleo_emb": nucleo_emb,
        "pos_emb": pos_emb,
        "units": units,
        "pool_q": pad2(xavier(nxt(), (seq_len, d), d, d), seq_len, dp),
        "wy": xavier(nxt(), (seq_len * d, num_classes), seq_len * d, num_classes),
        "by": bias(nxt(), num_classes),
    }
    return params


if __name__ == "__main__":
    # Small-but-representative config (constructor args of PredictionTransformer).
    B, S = 8, 16          # batch, seq_length
    D = 64                # embed_size (padded to 128 lanes internally)
    H = 4                 # num_attn_heads (Wide multihead)
    MLP_FACTOR = 2        # mlp_embed_factor
    NUM_UNITS = 2         # num_transformer_units (kept small for the test)
    NUM_NUC = 4           # num_nucleotides
    TB = 2                # batch tile per grid step -> 4 parallel grid steps

    key = jax.random.PRNGKey(0)
    k_tok, k_par = jax.random.split(key)
    tokens = jax.random.randint(k_tok, (B, S), 0, NUM_NUC)
    params = init_params(k_par, num_nucleotides=NUM_NUC, seq_len=S, embed_dim=D,
                         num_heads=H, mlp_factor=MLP_FACTOR, num_units=NUM_UNITS)

    try:
        y, fattn, attn_t = prediction_transformer_forward(
            tokens, params, tb=TB, single_buffer=True)
        jax.block_until_ready((y, fattn, attn_t))
    except Exception:
        # Fallback in case this JAX build rejects single-buffered BlockSpecs.
        y, fattn, attn_t = prediction_transformer_forward(
            tokens, params, tb=TB, single_buffer=False)
        jax.block_until_ready((y, fattn, attn_t))

    assert y.shape == (B,)
    assert fattn.shape == (B, S, S)
    assert attn_t.shape == (B, S, S)
    # softmax rows (averaged over heads/units) must sum to ~1
    assert jnp.allclose(jnp.sum(attn_t, axis=-1), 1.0, atol=2e-2)
    assert jnp.allclose(jnp.sum(fattn, axis=-1), 1.0, atol=2e-2)
    assert bool(jnp.all(jnp.isfinite(y)))
    print("KERNEL_OK")
</pallas_src>

<mosaic_0001>
module attributes {stable_mosaic.version = 11 : i64} {
  func.func @_transformer_unit_kernel(%arg0: i32, %arg1: memref<2x16x128xf32, #tpu.memory_space<vmem>>, %arg2: memref<128x1536xbf16, #tpu.memory_space<vmem>>, %arg3: memref<512x128xbf16, #tpu.memory_space<vmem>>, %arg4: memref<1x128xf32, #tpu.memory_space<vmem>>, %arg5: memref<1x128xf32, #tpu.memory_space<vmem>>, %arg6: memref<1x128xf32, #tpu.memory_space<vmem>>, %arg7: memref<128x128xbf16, #tpu.memory_space<vmem>>, %arg8: memref<1x128xf32, #tpu.memory_space<vmem>>, %arg9: memref<128x128xbf16, #tpu.memory_space<vmem>>, %arg10: memref<1x128xf32, #tpu.memory_space<vmem>>, %arg11: memref<1x128xf32, #tpu.memory_space<vmem>>, %arg12: memref<1x128xf32, #tpu.memory_space<vmem>>, %arg13: memref<2x16x128xf32, #tpu.memory_space<vmem>>, %arg14: memref<2x16x16xf32, #tpu.memory_space<vmem>>) attributes {dimension_semantics = [#tpu.dimension_semantics<parallel>], iteration_bounds = array<i64: 4>, scalar_prefetch = 0 : i64, scratch_operands = 0 : i64, tpu.core_type = #tpu.core_type<tc>, window_params = [{transform_indices = @transform_0, window_bounds = array<i64: 2, 16, 128>}, {pipeline_mode = #tpu.pipeline_mode<synchronous>, transform_indices = @transform_1, window_bounds = array<i64: 128, 1536>}, {pipeline_mode = #tpu.pipeline_mode<synchronous>, transform_indices = @transform_2, window_bounds = array<i64: 512, 128>}, {pipeline_mode = #tpu.pipeline_mode<synchronous>, transform_indices = @transform_3, window_bounds = array<i64: 1, 128>}, {pipeline_mode = #tpu.pipeline_mode<synchronous>, transform_indices = @transform_4, window_bounds = array<i64: 1, 128>}, {pipeline_mode = #tpu.pipeline_mode<synchronous>, transform_indices = @transform_5, window_bounds = array<i64: 1, 128>}, {pipeline_mode = #tpu.pipeline_mode<synchronous>, transform_indices = @transform_6, window_bounds = array<i64: 128, 128>}, {pipeline_mode = #tpu.pipeline_mode<synchronous>, transform_indices = @transform_7, window_bounds = array<i64: 1, 128>}, {pipeline_mode = #tpu.pipeline_mode<synchronous>, transform_indices = @transform_8, window_bounds = array<i64: 128, 128>}, {pipeline_mode = #tpu.pipeline_mode<synchronous>, transform_indices = @transform_9, window_bounds = array<i64: 1, 128>}, {pipeline_mode = #tpu.pipeline_mode<synchronous>, transform_indices = @transform_10, window_bounds = array<i64: 1, 128>}, {pipeline_mode = #tpu.pipeline_mode<synchronous>, transform_indices = @transform_11, window_bounds = array<i64: 1, 128>}, {transform_indices = @transform_12, window_bounds = array<i64: 2, 16, 128>}, {transform_indices = @transform_13, window_bounds = array<i64: 2, 16, 16>}]} {
    %c0 = arith.constant 0 : index
    %c0_0 = arith.constant 0 : index
    %c0_1 = arith.constant 0 : index
    %0 = vector.load %arg1[%c0, %c0_0, %c0_1] : memref<2x16x128xf32, #tpu.memory_space<vmem>>, vector<2x16x128xf32>
    %1 = vector.shape_cast %0 : vector<2x16x128xf32> to vector<32x128xf32>
    %2 = arith.truncf %1 : vector<32x128xf32> to vector<32x128xbf16>
    %c0_2 = arith.constant 0 : index
    %c0_3 = arith.constant 0 : index
    %3 = vector.load %arg2[%c0_2, %c0_3] : memref<128x1536xbf16, #tpu.memory_space<vmem>>, vector<128x1536xbf16>
    %cst = arith.constant dense<0.000000e+00> : vector<32x1536xf32>
    %4 = tpu.matmul %2, %3, %cst {dimension_numbers = #tpu.dot_dimension_numbers<[1], [0], [0], [1], [0, 0, 1, 1], [], []>} : vector<32x128xbf16>, vector<128x1536xbf16>, vector<32x1536xf32> -> vector<32x1536xf32>
    %5 = vector.shape_cast %4 : vector<32x1536xf32> to vector<2x16x1536xf32>
    %cst_4 = arith.constant 0.000000e+00 : f32
    %6 = vector.broadcast %cst_4 : f32 to vector<2x16x16xf32>
    %7 = vector.extract_strided_slice %5 {offsets = [0, 0, 0], sizes = [2, 16, 128], strides = [1, 1, 1]} : vector<2x16x1536xf32> to vector<2x16x128xf32>
    %8 = arith.truncf %7 : vector<2x16x128xf32> to vector<2x16x128xbf16>
    %9 = vector.extract_strided_slice %5 {offsets = [0, 0, 512], sizes = [2, 16, 128], strides = [1, 1, 1]} : vector<2x16x1536xf32> to vector<2x16x128xf32>
    %10 = arith.truncf %9 : vector<2x16x128xf32> to vector<2x16x128xbf16>
    %11 = vector.extract_strided_slice %5 {offsets = [0, 0, 1024], sizes = [2, 16, 128], strides = [1, 1, 1]} : vector<2x16x1536xf32> to vector<2x16x128xf32>
    %12 = arith.truncf %11 : vector<2x16x128xf32> to vector<2x16x128xbf16>
    "tpu.trace_start"() <{level = 10 : i32, message = "bqd,bkd->bqk"}> : () -> ()
    %cst_5 = arith.constant dense<0.000000e+00> : vector<2x16x16xf32>
    %13 = tpu.matmul %8, %10, %cst_5 {dimension_numbers = #tpu.dot_dimension_numbers<[2], [2], [1], [1], [0, 0, 0, 1, 1, 1], [0], [0]>} : vector<2x16x128xbf16>, vector<2x16x128xbf16>, vector<2x16x16xf32> -> vector<2x16x16xf32>
    "tpu.trace_stop"() : () -> ()
    %cst_6 = arith.constant 1.250000e-01 : f32
    %14 = vector.broadcast %cst_6 : f32 to vector<2x16x16xf32>
    %15 = arith.mulf %13, %14 : vector<2x16x16xf32>
    %cst_7 = arith.constant dense<0xFF800000> : vector<2x16xf32>
    %16 = vector.multi_reduction <maximumf>, %15, %cst_7 [2] : vector<2x16x16xf32> to vector<2x16xf32>
    %17 = vector.shape_cast %16 : vector<2x16xf32> to vector<2x16x1xf32>
    %18 = vector.broadcast %17 : vector<2x16x1xf32> to vector<2x16x16xf32>
    %19 = arith.subf %15, %18 : vector<2x16x16xf32>
    %20 = math.exp %19 : vector<2x16x16xf32>
    %cst_8 = arith.constant dense<0.000000e+00> : vector<2x16xf32>
    %21 = vector.multi_reduction <add>, %20, %cst_8 [2] : vector<2x16x16xf32> to vector<2x16xf32>
    %22 = vector.shape_cast %21 : vector<2x16xf32> to vector<2x16x1xf32>
    %23 = tpu.reciprocal %22 {approx = true} : vector<2x16x1xf32> -> vector<2x16x1xf32>
    %24 = vector.broadcast %23 : vector<2x16x1xf32> to vector<2x16x16xf32>
    %25 = arith.mulf %20, %24 : vector<2x16x16xf32>
    %26 = arith.addf %6, %25 : vector<2x16x16xf32>
    %27 = arith.truncf %25 : vector<2x16x16xf32> to vector<2x16x16xbf16>
    "tpu.trace_start"() <{level = 10 : i32, message = "bqk,bkd->bqd"}> : () -> ()
    %cst_9 = arith.constant dense<0.000000e+00> : vector<2x16x128xf32>
    %28 = tpu.matmul %27, %12, %cst_9 {dimension_numbers = #tpu.dot_dimension_numbers<[2], [1], [1], [2], [0, 0, 0, 1, 1, 2], [0], [0]>} : vector<2x16x16xbf16>, vector<2x16x128xbf16>, vector<2x16x128xf32> -> vector<2x16x128xf32>
    "tpu.trace_stop"() : () -> ()
    %29 = vector.extract_strided_slice %5 {offsets = [0, 0, 128], sizes = [2, 16, 128], strides = [1, 1, 1]} : vector<2x16x1536xf32> to vector<2x16x128xf32>
    %30 = arith.truncf %29 : vector<2x16x128xf32> to vector<2x16x128xbf16>
    %31 = vector.extract_strided_slice %5 {offsets = [0, 0, 640], sizes = [2, 16, 128], strides = [1, 1, 1]} : vector<2x16x1536xf32> to vector<2x16x128xf32>
    %32 = arith.truncf %31 : vector<2x16x128xf32> to vector<2x16x128xbf16>
    %33 = vector.extract_strided_slice %5 {offsets = [0, 0, 1152], sizes = [2, 16, 128], strides = [1, 1, 1]} : vector<2x16x1536xf32> to vector<2x16x128xf32>
    %34 = arith.truncf %33 : vector<2x16x128xf32> to vector<2x16x128xbf16>
    "tpu.trace_start"() <{level = 10 : i32, message = "bqd,bkd->bqk"}> : () -> ()
    %cst_10 = arith.constant dense<0.000000e+00> : vector<2x16x16xf32>
    %35 = tpu.matmul %30, %32, %cst_10 {dimension_numbers = #tpu.dot_dimension_numbers<[2], [2], [1], [1], [0, 0, 0, 1, 1, 1], [0], [0]>} : vector<2x16x128xbf16>, vector<2x16x128xbf16>, vector<2x16x16xf32> -> vector<2x16x16xf32>
    "tpu.trace_stop"() : () -> ()
    %cst_11 = arith.constant 1.250000e-01 : f32
    %36 = vector.broadcast %cst_11 : f32 to vector<2x16x16xf32>
    %37 = arith.mulf %35, %36 : vector<2x16x16xf32>
    %cst_12 = arith.constant dense<0xFF800000> : vector<2x16xf32>
    %38 = vector.multi_reduction <maximumf>, %37, %cst_12 [2] : vector<2x16x16xf32> to vector<2x16xf32>
    %39 = vector.shape_cast %38 : vector<2x16xf32> to vector<2x16x1xf32>
    %40 = vector.broadcast %39 : vector<2x16x1xf32> to vector<2x16x16xf32>
    %41 = arith.subf %37, %40 : vector<2x16x16xf32>
    %42 = math.exp %41 : vector<2x16x16xf32>
    %cst_13 = arith.constant dense<0.000000e+00> : vector<2x16xf32>
    %43 = vector.multi_reduction <add>, %42, %cst_13 [2] : vector<2x16x16xf32> to vector<2x16xf32>
    %44 = vector.shape_cast %43 : vector<2x16xf32> to vector<2x16x1xf32>
    %45 = tpu.reciprocal %44 {approx = true} : vector<2x16x1xf32> -> vector<2x16x1xf32>
    %46 = vector.broadcast %45 : vector<2x16x1xf32> to vector<2x16x16xf32>
    %47 = arith.mulf %42, %46 : vector<2x16x16xf32>
    %48 = arith.addf %26, %47 : vector<2x16x16xf32>
    %49 = arith.truncf %47 : vector<2x16x16xf32> to vector<2x16x16xbf16>
    "tpu.trace_start"() <{level = 10 : i32, message = "bqk,bkd->bqd"}> : () -> ()
    %cst_14 = arith.constant dense<0.000000e+00> : vector<2x16x128xf32>
    %50 = tpu.matmul %49, %34, %cst_14 {dimension_numbers = #tpu.dot_dimension_numbers<[2], [1], [1], [2], [0, 0, 0, 1, 1, 2], [0], [0]>} : vector<2x16x16xbf16>, vector<2x16x128xbf16>, vector<2x16x128xf32> -> vector<2x16x128xf32>
    "tpu.trace_stop"() : () -> ()
    %51 = vector.extract_strided_slice %5 {offsets = [0, 0, 256], sizes = [2, 16, 128], strides = [1, 1, 1]} : vector<2x16x1536xf32> to vector<2x16x128xf32>
    %52 = arith.truncf %51 : vector<2x16x128xf32> to vector<2x16x128xbf16>
    %53 = vector.extract_strided_slice %5 {offsets = [0, 0, 768], sizes = [2, 16, 128], strides = [1, 1, 1]} : vector<2x16x1536xf32> to vector<2x16x128xf32>
    %54 = arith.truncf %53 : vector<2x16x128xf32> to vector<2x16x128xbf16>
    %55 = vector.extract_strided_slice %5 {offsets = [0, 0, 1280], sizes = [2, 16, 128], strides = [1, 1, 1]} : vector<2x16x1536xf32> to vector<2x16x128xf32>
    %56 = arith.truncf %55 : vector<2x16x128xf32> to vector<2x16x128xbf16>
    "tpu.trace_start"() <{level = 10 : i32, message = "bqd,bkd->bqk"}> : () -> ()
    %cst_15 = arith.constant dense<0.000000e+00> : vector<2x16x16xf32>
    %57 = tpu.matmul %52, %54, %cst_15 {dimension_numbers = #tpu.dot_dimension_numbers<[2], [2], [1], [1], [0, 0, 0, 1, 1, 1], [0], [0]>} : vector<2x16x128xbf16>, vector<2x16x128xbf16>, vector<2x16x16xf32> -> vector<2x16x16xf32>
    "tpu.trace_stop"() : () -> ()
    %cst_16 = arith.constant 1.250000e-01 : f32
    %58 = vector.broadcast %cst_16 : f32 to vector<2x16x16xf32>
    %59 = arith.mulf %57, %58 : vector<2x16x16xf32>
    %cst_17 = arith.constant dense<0xFF800000> : vector<2x16xf32>
    %60 = vector.multi_reduction <maximumf>, %59, %cst_17 [2] : vector<2x16x16xf32> to vector<2x16xf32>
    %61 = vector.shape_cast %60 : vector<2x16xf32> to vector<2x16x1xf32>
    %62 = vector.broadcast %61 : vector<2x16x1xf32> to vector<2x16x16xf32>
    %63 = arith.subf %59, %62 : vector<2x16x16xf32>
    %64 = math.exp %63 : vector<2x16x16xf32>
    %cst_18 = arith.constant dense<0.000000e+00> : vector<2x16xf32>
    %65 = vector.multi_reduction <add>, %64, %cst_18 [2] : vector<2x16x16xf32> to vector<2x16xf32>
    %66 = vector.shape_cast %65 : vector<2x16xf32> to vector<2x16x1xf32>
    %67 = tpu.reciprocal %66 {approx = true} : vector<2x16x1xf32> -> vector<2x16x1xf32>
    %68 = vector.broadcast %67 : vector<2x16x1xf32> to vector<2x16x16xf32>
    %69 = arith.mulf %64, %68 : vector<2x16x16xf32>
    %70 = arith.addf %48, %69 : vector<2x16x16xf32>
    %71 = arith.truncf %69 : vector<2x16x16xf32> to vector<2x16x16xbf16>
    "tpu.trace_start"() <{level = 10 : i32, message = "bqk,bkd->bqd"}> : () -> ()
    %cst_19 = arith.constant dense<0.000000e+00> : vector<2x16x128xf32>
    %72 = tpu.matmul %71, %56, %cst_19 {dimension_numbers = #tpu.dot_dimension_numbers<[2], [1], [1], [2], [0, 0, 0, 1, 1, 2], [0], [0]>} : vector<2x16x16xbf16>, vector<2x16x128xbf16>, vector<2x16x128xf32> -> vector<2x16x128xf32>
    "tpu.trace_stop"() : () -> ()
    %73 = vector.extract_strided_slice %5 {offsets = [0, 0, 384], sizes = [2, 16, 128], strides = [1, 1, 1]} : vector<2x16x1536xf32> to vector<2x16x128xf32>
    %74 = arith.truncf %73 : vector<2x16x128xf32> to vector<2x16x128xbf16>
    %75 = vector.extract_strided_slice %5 {offsets = [0, 0, 896], sizes = [2, 16, 128], strides = [1, 1, 1]} : vector<2x16x1536xf32> to vector<2x16x128xf32>
    %76 = arith.truncf %75 : vector<2x16x128xf32> to vector<2x16x128xbf16>
    %77 = vector.extract_strided_slice %5 {offsets = [0, 0, 1408], sizes = [2, 16, 128], strides = [1, 1, 1]} : vector<2x16x1536xf32> to vector<2x16x128xf32>
    %78 = arith.truncf %77 : vector<2x16x128xf32> to vector<2x16x128xbf16>
    "tpu.trace_start"() <{level = 10 : i32, message = "bqd,bkd->bqk"}> : () -> ()
    %cst_20 = arith.constant dense<0.000000e+00> : vector<2x16x16xf32>
    %79 = tpu.matmul %74, %76, %cst_20 {dimension_numbers = #tpu.dot_dimension_numbers<[2], [2], [1], [1], [0, 0, 0, 1, 1, 1], [0], [0]>} : vector<2x16x128xbf16>, vector<2x16x128xbf16>, vector<2x16x16xf32> -> vector<2x16x16xf32>
    "tpu.trace_stop"() : () -> ()
    %cst_21 = arith.constant 1.250000e-01 : f32
    %80 = vector.broadcast %cst_21 : f32 to vector<2x16x16xf32>
    %81 = arith.mulf %79, %80 : vector<2x16x16xf32>
    %cst_22 = arith.constant dense<0xFF800000> : vector<2x16xf32>
    %82 = vector.multi_reduction <maximumf>, %81, %cst_22 [2] : vector<2x16x16xf32> to vector<2x16xf32>
    %83 = vector.shape_cast %82 : vector<2x16xf32> to vector<2x16x1xf32>
    %84 = vector.broadcast %83 : vector<2x16x1xf32> to vector<2x16x16xf32>
    %85 = arith.subf %81, %84 : vector<2x16x16xf32>
    %86 = math.exp %85 : vector<2x16x16xf32>
    %cst_23 = arith.constant dense<0.000000e+00> : vector<2x16xf32>
    %87 = vector.multi_reduction <add>, %86, %cst_23 [2] : vector<2x16x16xf32> to vector<2x16xf32>
    %88 = vector.shape_cast %87 : vector<2x16xf32> to vector<2x16x1xf32>
    %89 = tpu.reciprocal %88 {approx = true} : vector<2x16x1xf32> -> vector<2x16x1xf32>
    %90 = vector.broadcast %89 : vector<2x16x1xf32> to vector<2x16x16xf32>
    %91 = arith.mulf %86, %90 : vector<2x16x16xf32>
    %92 = arith.addf %70, %91 : vector<2x16x16xf32>
    %93 = arith.truncf %91 : vector<2x16x16xf32> to vector<2x16x16xbf16>
    "tpu.trace_start"() <{level = 10 : i32, message = "bqk,bkd->bqd"}> : () -> ()
    %cst_24 = arith.constant dense<0.000000e+00> : vector<2x16x128xf32>
    %94 = tpu.matmul %93, %78, %cst_24 {dimension_numbers = #tpu.dot_dimension_numbers<[2], [1], [1], [2], [0, 0, 0, 1, 1, 2], [0], [0]>} : vector<2x16x16xbf16>, vector<2x16x128xbf16>, vector<2x16x128xf32> -> vector<2x16x128xf32>
    "tpu.trace_stop"() : () -> ()
    %95 = tpu.concatenate %28, %50, %72, %94 in 2 : vector<2x16x128xf32>, vector<2x16x128xf32>, vector<2x16x128xf32>, vector<2x16x128xf32> -> vector<2x16x512xf32>
    %96 = vector.shape_cast %95 : vector<2x16x512xf32> to vector<32x512xf32>
    %97 = arith.truncf %96 : vector<32x512xf32> to vector<32x512xbf16>
    %c0_25 = arith.constant 0 : index
    %c0_26 = arith.constant 0 : index
    %98 = vector.load %arg3[%c0_25, %c0_26] : memref<512x128xbf16, #tpu.memory_space<vmem>>, vector<512x128xbf16>
    %cst_27 = arith.constant dense<0.000000e+00> : vector<32x128xf32>
    %99 = tpu.matmul %97, %98, %cst_27 {dimension_numbers = #tpu.dot_dimension_numbers<[1], [0], [0], [1], [0, 0, 1, 1], [], []>} : vector<32x512xbf16>, vector<512x128xbf16>, vector<32x128xf32> -> vector<32x128xf32>
    %c0_28 = arith.constant 0 : index
    %c0_29 = arith.constant 0 : index
    %100 = vector.load %arg4[%c0_28, %c0_29] : memref<1x128xf32, #tpu.memory_space<vmem>>, vector<1x128xf32>
    %101 = vector.broadcast %100 : vector<1x128xf32> to vector<32x128xf32>
    %102 = arith.addf %99, %101 : vector<32x128xf32>
    %103 = arith.addf %102, %1 : vector<32x128xf32>
    %c0_30 = arith.constant 0 : index
    %c0_31 = arith.constant 0 : index
    %104 = vector.load %arg5[%c0_30, %c0_31] : memref<1x128xf32, #tpu.memory_space<vmem>>, vector<1x128xf32>
    %c0_32 = arith.constant 0 : index
    %c0_33 = arith.constant 0 : index
    %105 = vector.load %arg6[%c0_32, %c0_33] : memref<1x128xf32, #tpu.memory_space<vmem>>, vector<1x128xf32>
    %cst_34 = arith.constant dense<0.000000e+00> : vector<32xf32>
    %106 = vector.multi_reduction <add>, %103, %cst_34 [1] : vector<32x128xf32> to vector<32xf32>
    %107 = vector.shape_cast %106 : vector<32xf32> to vector<32x1xf32>
    %108 = arith.mulf %103, %103 : vector<32x128xf32>
    %cst_35 = arith.constant dense<0.000000e+00> : vector<32xf32>
    %109 = vector.multi_reduction <add>, %108, %cst_35 [1] : vector<32x128xf32> to vector<32xf32>
    %110 = vector.shape_cast %109 : vector<32xf32> to vector<32x1xf32>
    %cst_36 = arith.constant 1.562500e-02 : f32
    %111 = vector.broadcast %cst_36 : f32 to vector<32x1xf32>
    %112 = arith.mulf %107, %111 : vector<32x1xf32>
    %cst_37 = arith.constant 1.562500e-02 : f32
    %113 = vector.broadcast %cst_37 : f32 to vector<32x1xf32>
    %114 = arith.mulf %110, %113 : vector<32x1xf32>
    %115 = arith.mulf %112, %112 : vector<32x1xf32>
    %116 = arith.subf %114, %115 : vector<32x1xf32>
    %cst_38 = arith.constant 9.99999974E-6 : f32
    %117 = vector.broadcast %cst_38 : f32 to vector<32x1xf32>
    %118 = arith.addf %116, %117 : vector<32x1xf32>
    %119 = math.rsqrt %118 : vector<32x1xf32>
    %120 = vector.broadcast %112 : vector<32x1xf32> to vector<32x128xf32>
    %121 = arith.subf %103, %120 : vector<32x128xf32>
    %122 = vector.broadcast %119 : vector<32x1xf32> to vector<32x128xf32>
    %123 = arith.mulf %121, %122 : vector<32x128xf32>
    %124 = vector.broadcast %104 : vector<1x128xf32> to vector<32x128xf32>
    %125 = arith.mulf %123, %124 : vector<32x128xf32>
    %126 = vector.broadcast %105 : vector<1x128xf32> to vector<32x128xf32>
    %127 = arith.addf %125, %126 : vector<32x128xf32>
    %128 = arith.truncf %127 : vector<32x128xf32> to vector<32x128xbf16>
    %c0_39 = arith.constant 0 : index
    %c0_40 = arith.constant 0 : index
    %129 = vector.load %arg7[%c0_39, %c0_40] : memref<128x128xbf16, #tpu.memory_space<vmem>>, vector<128x128xbf16>
    %cst_41 = arith.constant dense<0.000000e+00> : vector<32x128xf32>
    %130 = tpu.matmul %128, %129, %cst_41 {dimension_numbers = #tpu.dot_dimension_numbers<[1], [0], [0], [1], [0, 0, 1, 1], [], []>} : vector<32x128xbf16>, vector<128x128xbf16>, vector<32x128xf32> -> vector<32x128xf32>
    %c0_42 = arith.constant 0 : index
    %c0_43 = arith.constant 0 : index
    %131 = vector.load %arg8[%c0_42, %c0_43] : memref<1x128xf32, #tpu.memory_space<vmem>>, vector<1x128xf32>
    %132 = vector.broadcast %131 : vector<1x128xf32> to vector<32x128xf32>
    %133 = arith.addf %130, %132 : vector<32x128xf32>
    %cst_44 = arith.constant 0.000000e+00 : f32
    %134 = vector.broadcast %cst_44 : f32 to vector<32x128xf32>
    %135 = arith.maximumf %133, %134 : vector<32x128xf32>
    %136 = arith.truncf %135 : vector<32x128xf32> to vector<32x128xbf16>
    %c0_45 = arith.constant 0 : index
    %c0_46 = arith.constant 0 : index
    %137 = vector.load %arg9[%c0_45, %c0_46] : memref<128x128xbf16, #tpu.memory_space<vmem>>, vector<128x128xbf16>
    %cst_47 = arith.constant dense<0.000000e+00> : vector<32x128xf32>
    %138 = tpu.matmul %136, %137, %cst_47 {dimension_numbers = #tpu.dot_dimension_numbers<[1], [0], [0], [1], [0, 0, 1, 1], [], []>} : vector<32x128xbf16>, vector<128x128xbf16>, vector<32x128xf32> -> vector<32x128xf32>
    %c0_48 = arith.constant 0 : index
    %c0_49 = arith.constant 0 : index
    %139 = vector.load %arg10[%c0_48, %c0_49] : memref<1x128xf32, #tpu.memory_space<vmem>>, vector<1x128xf32>
    %140 = vector.broadcast %139 : vector<1x128xf32> to vector<32x128xf32>
    %141 = arith.addf %138, %140 : vector<32x128xf32>
    %142 = arith.addf %141, %127 : vector<32x128xf32>
    %c0_50 = arith.constant 0 : index
    %c0_51 = arith.constant 0 : index
    %143 = vector.load %arg11[%c0_50, %c0_51] : memref<1x128xf32, #tpu.memory_space<vmem>>, vector<1x128xf32>
    %c0_52 = arith.constant 0 : index
    %c0_53 = arith.constant 0 : index
    %144 = vector.load %arg12[%c0_52, %c0_53] : memref<1x128xf32, #tpu.memory_space<vmem>>, vector<1x128xf32>
    %cst_54 = arith.constant dense<0.000000e+00> : vector<32xf32>
    %145 = vector.multi_reduction <add>, %142, %cst_54 [1] : vector<32x128xf32> to vector<32xf32>
    %146 = vector.shape_cast %145 : vector<32xf32> to vector<32x1xf32>
    %147 = arith.mulf %142, %142 : vector<32x128xf32>
    %cst_55 = arith.constant dense<0.000000e+00> : vector<32xf32>
    %148 = vector.multi_reduction <add>, %147, %cst_55 [1] : vector<32x128xf32> to vector<32xf32>
    %149 = vector.shape_cast %148 : vector<32xf32> to vector<32x1xf32>
    %cst_56 = arith.constant 1.562500e-02 : f32
    %150 = vector.broadcast %cst_56 : f32 to vector<32x1xf32>
    %151 = arith.mulf %146, %150 : vector<32x1xf32>
    %cst_57 = arith.constant 1.562500e-02 : f32
    %152 = vector.broadcast %cst_57 : f32 to vector<32x1xf32>
    %153 = arith.mulf %149, %152 : vector<32x1xf32>
    %154 = arith.mulf %151, %151 : vector<32x1xf32>
    %155 = arith.subf %153, %154 : vector<32x1xf32>
    %cst_58 = arith.constant 9.99999974E-6 : f32
    %156 = vector.broadcast %cst_58 : f32 to vector<32x1xf32>
    %157 = arith.addf %155, %156 : vector<32x1xf32>
    %158 = math.rsqrt %157 : vector<32x1xf32>
    %159 = vector.broadcast %151 : vector<32x1xf32> to vector<32x128xf32>
    %160 = arith.subf %142, %159 : vector<32x128xf32>
    %161 = vector.broadcast %158 : vector<32x1xf32> to vector<32x128xf32>
    %162 = arith.mulf %160, %161 : vector<32x128xf32>
    %163 = vector.broadcast %143 : vector<1x128xf32> to vector<32x128xf32>
    %164 = arith.mulf %162, %163 : vector<32x128xf32>
    %165 = vector.broadcast %144 : vector<1x128xf32> to vector<32x128xf32>
    %166 = arith.addf %164, %165 : vector<32x128xf32>
    %167 = vector.shape_cast %166 : vector<32x128xf32> to vector<2x16x128xf32>
    %c0_59 = arith.constant 0 : index
    %c0_60 = arith.constant 0 : index
    %c0_61 = arith.constant 0 : index
    %168 = vector.load %arg13[%c0_59, %c0_60, %c0_61] : memref<2x16x128xf32, #tpu.memory_space<vmem>>, vector<2x16x128xf32>
    tpu.vector_store %arg13[%c0_59, %c0_60, %c0_61], %167 {strides = array<i32>} : memref<2x16x128xf32, #tpu.memory_space<vmem>>, vector<2x16x128xf32>,
    %cst_62 = arith.constant 2.500000e-01 : f32
    %169 = vector.broadcast %cst_62 : f32 to vector<2x16x16xf32>
    %170 = arith.mulf %92, %169 : vector<2x16x16xf32>
    %c0_63 = arith.constant 0 : index
    %c0_64 = arith.constant 0 : index
    %c0_65 = arith.constant 0 : index
    %171 = vector.load %arg14[%c0_63, %c0_64, %c0_65] : memref<2x16x16xf32, #tpu.memory_space<vmem>>, vector<2x16x16xf32>
    tpu.vector_store %arg14[%c0_63, %c0_64, %c0_65], %170 {strides = array<i32>} : memref<2x16x16xf32, #tpu.memory_space<vmem>>, vector<2x16x16xf32>,
    return
  }
  func.func @transform_0(%arg0: i32) -> (i32, i32, i32) {
    %c0_i32 = arith.constant 0 : i32
    %c0_i32_0 = arith.constant 0 : i32
    %c0_i32_1 = arith.constant 0 : i32
    return %arg0, %c0_i32, %c0_i32_0 : i32, i32, i32
  }
  func.func @transform_1(%arg0: i32) -> (i32, i32) {
    %c0_i32 = arith.constant 0 : i32
    %c0_i32_0 = arith.constant 0 : i32
    %c0_i32_1 = arith.constant 0 : i32
    return %c0_i32, %c0_i32_0 : i32, i32
  }
  func.func @transform_2(%arg0: i32) -> (i32, i32) {
    %c0_i32 = arith.constant 0 : i32
    %c0_i32_0 = arith.constant 0 : i32
    %c0_i32_1 = arith.constant 0 : i32
    return %c0_i32, %c0_i32_0 : i32, i32
  }
  func.func @transform_3(%arg0: i32) -> (i32, i32) {
    %c0_i32 = arith.constant 0 : i32
    %c0_i32_0 = arith.constant 0 : i32
    %c0_i32_1 = arith.constant 0 : i32
    return %c0_i32, %c0_i32_0 : i32, i32
  }
  func.func @transform_4(%arg0: i32) -> (i32, i32) {
    %c0_i32 = arith.constant 0 : i32
    %c0_i32_0 = arith.constant 0 : i32
    %c0_i32_1 = arith.constant 0 : i32
    return %c0_i32, %c0_i32_0 : i32, i32
  }
  func.func @transform_5(%arg0: i32) -> (i32, i32) {
    %c0_i32 = arith.constant 0 : i32
    %c0_i32_0 = arith.constant 0 : i32
    %c0_i32_1 = arith.constant 0 : i32
    return %c0_i32, %c0_i32_0 : i32, i32
  }
  func.func @transform_6(%arg0: i32) -> (i32, i32) {
    %c0_i32 = arith.constant 0 : i32
    %c0_i32_0 = arith.constant 0 : i32
    %c0_i32_1 = arith.constant 0 : i32
    return %c0_i32, %c0_i32_0 : i32, i32
  }
  func.func @transform_7(%arg0: i32) -> (i32, i32) {
    %c0_i32 = arith.constant 0 : i32
    %c0_i32_0 = arith.constant 0 : i32
    %c0_i32_1 = arith.constant 0 : i32
    return %c0_i32, %c0_i32_0 : i32, i32
  }
  func.func @transform_8(%arg0: i32) -> (i32, i32) {
    %c0_i32 = arith.constant 0 : i32
    %c0_i32_0 = arith.constant 0 : i32
    %c0_i32_1 = arith.constant 0 : i32
    return %c0_i32, %c0_i32_0 : i32, i32
  }
  func.func @transform_9(%arg0: i32) -> (i32, i32) {
    %c0_i32 = arith.constant 0 : i32
    %c0_i32_0 = arith.constant 0 : i32
    %c0_i32_1 = arith.constant 0 : i32
    return %c0_i32, %c0_i32_0 : i32, i32
  }
  func.func @transform_10(%arg0: i32) -> (i32, i32) {
    %c0_i32 = arith.constant 0 : i32
    %c0_i32_0 = arith.constant 0 : i32
    %c0_i32_1 = arith.constant 0 : i32
    return %c0_i32, %c0_i32_0 : i32, i32
  }
  func.func @transform_11(%arg0: i32) -> (i32, i32) {
    %c0_i32 = arith.constant 0 : i32
    %c0_i32_0 = arith.constant 0 : i32
    %c0_i32_1 = arith.constant 0 : i32
    return %c0_i32, %c0_i32_0 : i32, i32
  }
  func.func @transform_12(%arg0: i32) -> (i32, i32, i32) {
    %c0_i32 = arith.constant 0 : i32
    %c0_i32_0 = arith.constant 0 : i32
    %c0_i32_1 = arith.constant 0 : i32
    return %arg0, %c0_i32, %c0_i32_0 : i32, i32, i32
  }
  func.func @transform_13(%arg0: i32) -> (i32, i32, i32) {
    %c0_i32 = arith.constant 0 : i32
    %c0_i32_0 = arith.constant 0 : i32
    %c0_i32_1 = arith.constant 0 : i32
    return %arg0, %c0_i32, %c0_i32_0 : i32, i32, i32
  }
}

module attributes {stable_mosaic.version = 11 : i64} {
  func.func @_transformer_unit_kernel(%arg0: i32, %arg1: memref<2x16x128xf32, #tpu.memory_space<vmem>>, %arg2: memref<128x1536xbf16, #tpu.memory_space<vmem>>, %arg3: memref<512x128xbf16, #tpu.memory_space<vmem>>, %arg4: memref<1x128xf32, #tpu.memory_space<vmem>>, %arg5: memref<1x128xf32, #tpu.memory_space<vmem>>, %arg6: memref<1x128xf32, #tpu.memory_space<vmem>>, %arg7: memref<128x128xbf16, #tpu.memory_space<vmem>>, %arg8: memref<1x128xf32, #tpu.memory_space<vmem>>, %arg9: memref<128x128xbf16, #tpu.memory_space<vmem>>, %arg10: memref<1x128xf32, #tpu.memory_space<vmem>>, %arg11: memref<1x128xf32, #tpu.memory_space<vmem>>, %arg12: memref<1x128xf32, #tpu.memory_space<vmem>>, %arg13: memref<2x16x128xf32, #tpu.memory_space<vmem>>, %arg14: memref<2x16x16xf32, #tpu.memory_space<vmem>>) attributes {dimension_semantics = [#tpu.dimension_semantics<parallel>], iteration_bounds = array<i64: 4>, scalar_prefetch = 0 : i64, scratch_operands = 0 : i64, tpu.core_type = #tpu.core_type<tc>, window_params = [{transform_indices = @transform_0, window_bounds = array<i64: 2, 16, 128>}, {pipeline_mode = #tpu.pipeline_mode<synchronous>, transform_indices = @transform_1, window_bounds = array<i64: 128, 1536>}, {pipeline_mode = #tpu.pipeline_mode<synchronous>, transform_indices = @transform_2, window_bounds = array<i64: 512, 128>}, {pipeline_mode = #tpu.pipeline_mode<synchronous>, transform_indices = @transform_3, window_bounds = array<i64: 1, 128>}, {pipeline_mode = #tpu.pipeline_mode<synchronous>, transform_indices = @transform_4, window_bounds = array<i64: 1, 128>}, {pipeline_mode = #tpu.pipeline_mode<synchronous>, transform_indices = @transform_5, window_bounds = array<i64: 1, 128>}, {pipeline_mode = #tpu.pipeline_mode<synchronous>, transform_indices = @transform_6, window_bounds = array<i64: 128, 128>}, {pipeline_mode = #tpu.pipeline_mode<synchronous>, transform_indices = @transform_7, window_bounds = array<i64: 1, 128>}, {pipeline_mode = #tpu.pipeline_mode<synchronous>, transform_indices = @transform_8, window_bounds = array<i64: 128, 128>}, {pipeline_mode = #tpu.pipeline_mode<synchronous>, transform_indices = @transform_9, window_bounds = array<i64: 1, 128>}, {pipeline_mode = #tpu.pipeline_mode<synchronous>, transform_indices = @transform_10, window_bounds = array<i64: 1, 128>}, {pipeline_mode = #tpu.pipeline_mode<synchronous>, transform_indices = @transform_11, window_bounds = array<i64: 1, 128>}, {transform_indices = @transform_12, window_bounds = array<i64: 2, 16, 128>}, {transform_indices = @transform_13, window_bounds = array<i64: 2, 16, 16>}]} {
    %c0 = arith.constant 0 : index
    %c0_0 = arith.constant 0 : index
    %c0_1 = arith.constant 0 : index
    %0 = vector.load %arg1[%c0, %c0_0, %c0_1] : memref<2x16x128xf32, #tpu.memory_space<vmem>>, vector<2x16x128xf32>
    %1 = vector.shape_cast %0 : vector<2x16x128xf32> to vector<32x128xf32>
    %2 = arith.truncf %1 : vector<32x128xf32> to vector<32x128xbf16>
    %c0_2 = arith.constant 0 : index
    %c0_3 = arith.constant 0 : index
    %3 = vector.load %arg2[%c0_2, %c0_3] : memref<128x1536xbf16, #tpu.memory_space<vmem>>, vector<128x1536xbf16>
    %cst = arith.constant dense<0.000000e+00> : vector<32x1536xf32>
    %4 = tpu.matmul %2, %3, %cst {dimension_numbers = #tpu.dot_dimension_numbers<[1], [0], [0], [1], [0, 0, 1, 1], [], []>} : vector<32x128xbf16>, vector<128x1536xbf16>, vector<32x1536xf32> -> vector<32x1536xf32>
    %5 = vector.shape_cast %4 : vector<32x1536xf32> to vector<2x16x1536xf32>
    %cst_4 = arith.constant 0.000000e+00 : f32
    %6 = vector.broadcast %cst_4 : f32 to vector<2x16x16xf32>
    %7 = vector.extract_strided_slice %5 {offsets = [0, 0, 0], sizes = [2, 16, 128], strides = [1, 1, 1]} : vector<2x16x1536xf32> to vector<2x16x128xf32>
    %8 = arith.truncf %7 : vector<2x16x128xf32> to vector<2x16x128xbf16>
    %9 = vector.extract_strided_slice %5 {offsets = [0, 0, 512], sizes = [2, 16, 128], strides = [1, 1, 1]} : vector<2x16x1536xf32> to vector<2x16x128xf32>
    %10 = arith.truncf %9 : vector<2x16x128xf32> to vector<2x16x128xbf16>
    %11 = vector.extract_strided_slice %5 {offsets = [0, 0, 1024], sizes = [2, 16, 128], strides = [1, 1, 1]} : vector<2x16x1536xf32> to vector<2x16x128xf32>
    %12 = arith.truncf %11 : vector<2x16x128xf32> to vector<2x16x128xbf16>
    "tpu.trace_start"() <{level = 10 : i32, message = "bqd,bkd->bqk"}> : () -> ()
    %cst_5 = arith.constant dense<0.000000e+00> : vector<2x16x16xf32>
    %13 = tpu.matmul %8, %10, %cst_5 {dimension_numbers = #tpu.dot_dimension_numbers<[2], [2], [1], [1], [0, 0, 0, 1, 1, 1], [0], [0]>} : vector<2x16x128xbf16>, vector<2x16x128xbf16>, vector<2x16x16xf32> -> vector<2x16x16xf32>
    "tpu.trace_stop"() : () -> ()
    %cst_6 = arith.constant 1.250000e-01 : f32
    %14 = vector.broadcast %cst_6 : f32 to vector<2x16x16xf32>
    %15 = arith.mulf %13, %14 : vector<2x16x16xf32>
    %cst_7 = arith.constant dense<0xFF800000> : vector<2x16xf32>
    %16 = vector.multi_reduction <maximumf>, %15, %cst_7 [2] : vector<2x16x16xf32> to vector<2x16xf32>
    %17 = vector.shape_cast %16 : vector<2x16xf32> to vector<2x16x1xf32>
    %18 = vector.broadcast %17 : vector<2x16x1xf32> to vector<2x16x16xf32>
    %19 = arith.subf %15, %18 : vector<2x16x16xf32>
    %20 = math.exp %19 : vector<2x16x16xf32>
    %cst_8 = arith.constant dense<0.000000e+00> : vector<2x16xf32>
    %21 = vector.multi_reduction <add>, %20, %cst_8 [2] : vector<2x16x16xf32> to vector<2x16xf32>
    %22 = vector.shape_cast %21 : vector<2x16xf32> to vector<2x16x1xf32>
    %23 = tpu.reciprocal %22 {approx = true} : vector<2x16x1xf32> -> vector<2x16x1xf32>
    %24 = vector.broadcast %23 : vector<2x16x1xf32> to vector<2x16x16xf32>
    %25 = arith.mulf %20, %24 : vector<2x16x16xf32>
    %26 = arith.addf %6, %25 : vector<2x16x16xf32>
    %27 = arith.truncf %25 : vector<2x16x16xf32> to vector<2x16x16xbf16>
    "tpu.trace_start"() <{level = 10 : i32, message = "bqk,bkd->bqd"}> : () -> ()
    %cst_9 = arith.constant dense<0.000000e+00> : vector<2x16x128xf32>
    %28 = tpu.matmul %27, %12, %cst_9 {dimension_numbers = #tpu.dot_dimension_numbers<[2], [1], [1], [2], [0, 0, 0, 1, 1, 2], [0], [0]>} : vector<2x16x16xbf16>, vector<2x16x128xbf16>, vector<2x16x128xf32> -> vector<2x16x128xf32>
    "tpu.trace_stop"() : () -> ()
    %29 = vector.extract_strided_slice %5 {offsets = [0, 0, 128], sizes = [2, 16, 128], strides = [1, 1, 1]} : vector<2x16x1536xf32> to vector<2x16x128xf32>
    %30 = arith.truncf %29 : vector<2x16x128xf32> to vector<2x16x128xbf16>
    %31 = vector.extract_strided_slice %5 {offsets = [0, 0, 640], sizes = [2, 16, 128], strides = [1, 1, 1]} : vector<2x16x1536xf32> to vector<2x16x128xf32>
    %32 = arith.truncf %31 : vector<2x16x128xf32> to vector<2x16x128xbf16>
    %33 = vector.extract_strided_slice %5 {offsets = [0, 0, 1152], sizes = [2, 16, 128], strides = [1, 1, 1]} : vector<2x16x1536xf32> to vector<2x16x128xf32>
    %34 = arith.truncf %33 : vector<2x16x128xf32> to vector<2x16x128xbf16>
    "tpu.trace_start"() <{level = 10 : i32, message = "bqd,bkd->bqk"}> : () -> ()
    %cst_10 = arith.constant dense<0.000000e+00> : vector<2x16x16xf32>
    %35 = tpu.matmul %30, %32, %cst_10 {dimension_numbers = #tpu.dot_dimension_numbers<[2], [2], [1], [1], [0, 0, 0, 1, 1, 1], [0], [0]>} : vector<2x16x128xbf16>, vector<2x16x128xbf16>, vector<2x16x16xf32> -> vector<2x16x16xf32>
    "tpu.trace_stop"() : () -> ()
    %cst_11 = arith.constant 1.250000e-01 : f32
    %36 = vector.broadcast %cst_11 : f32 to vector<2x16x16xf32>
    %37 = arith.mulf %35, %36 : vector<2x16x16xf32>
    %cst_12 = arith.constant dense<0xFF800000> : vector<2x16xf32>
    %38 = vector.multi_reduction <maximumf>, %37, %cst_12 [2] : vector<2x16x16xf32> to vector<2x16xf32>
    %39 = vector.shape_cast %38 : vector<2x16xf32> to vector<2x16x1xf32>
    %40 = vector.broadcast %39 : vector<2x16x1xf32> to vector<2x16x16xf32>
    %41 = arith.subf %37, %40 : vector<2x16x16xf32>
    %42 = math.exp %41 : vector<2x16x16xf32>
    %cst_13 = arith.constant dense<0.000000e+00> : vector<2x16xf32>
    %43 = vector.multi_reduction <add>, %42, %cst_13 [2] : vector<2x16x16xf32> to vector<2x16xf32>
    %44 = vector.shape_cast %43 : vector<2x16xf32> to vector<2x16x1xf32>
    %45 = tpu.reciprocal %44 {approx = true} : vector<2x16x1xf32> -> vector<2x16x1xf32>
    %46 = vector.broadcast %45 : vector<2x16x1xf32> to vector<2x16x16xf32>
    %47 = arith.mulf %42, %46 : vector<2x16x16xf32>
    %48 = arith.addf %26, %47 : vector<2x16x16xf32>
    %49 = arith.truncf %47 : vector<2x16x16xf32> to vector<2x16x16xbf16>
    "tpu.trace_start"() <{level = 10 : i32, message = "bqk,bkd->bqd"}> : () -> ()
    %cst_14 = arith.constant dense<0.000000e+00> : vector<2x16x128xf32>
    %50 = tpu.matmul %49, %34, %cst_14 {dimension_numbers = #tpu.dot_dimension_numbers<[2], [1], [1], [2], [0, 0, 0, 1, 1, 2], [0], [0]>} : vector<2x16x16xbf16>, vector<2x16x128xbf16>, vector<2x16x128xf32> -> vector<2x16x128xf32>
    "tpu.trace_stop"() : () -> ()
    %51 = vector.extract_strided_slice %5 {offsets = [0, 0, 256], sizes = [2, 16, 128], strides = [1, 1, 1]} : vector<2x16x1536xf32> to vector<2x16x128xf32>
    %52 = arith.truncf %51 : vector<2x16x128xf32> to vector<2x16x128xbf16>
    %53 = vector.extract_strided_slice %5 {offsets = [0, 0, 768], sizes = [2, 16, 128], strides = [1, 1, 1]} : vector<2x16x1536xf32> to vector<2x16x128xf32>
    %54 = arith.truncf %53 : vector<2x16x128xf32> to vector<2x16x128xbf16>
    %55 = vector.extract_strided_slice %5 {offsets = [0, 0, 1280], sizes = [2, 16, 128], strides = [1, 1, 1]} : vector<2x16x1536xf32> to vector<2x16x128xf32>
    %56 = arith.truncf %55 : vector<2x16x128xf32> to vector<2x16x128xbf16>
    "tpu.trace_start"() <{level = 10 : i32, message = "bqd,bkd->bqk"}> : () -> ()
    %cst_15 = arith.constant dense<0.000000e+00> : vector<2x16x16xf32>
    %57 = tpu.matmul %52, %54, %cst_15 {dimension_numbers = #tpu.dot_dimension_numbers<[2], [2], [1], [1], [0, 0, 0, 1, 1, 1], [0], [0]>} : vector<2x16x128xbf16>, vector<2x16x128xbf16>, vector<2x16x16xf32> -> vector<2x16x16xf32>
    "tpu.trace_stop"() : () -> ()
    %cst_16 = arith.constant 1.250000e-01 : f32
    %58 = vector.broadcast %cst_16 : f32 to vector<2x16x16xf32>
    %59 = arith.mulf %57, %58 : vector<2x16x16xf32>
    %cst_17 = arith.constant dense<0xFF800000> : vector<2x16xf32>
    %60 = vector.multi_reduction <maximumf>, %59, %cst_17 [2] : vector<2x16x16xf32> to vector<2x16xf32>
    %61 = vector.shape_cast %60 : vector<2x16xf32> to vector<2x16x1xf32>
    %62 = vector.broadcast %61 : vector<2x16x1xf32> to vector<2x16x16xf32>
    %63 = arith.subf %59, %62 : vector<2x16x16xf32>
    %64 = math.exp %63 : vector<2x16x16xf32>
    %cst_18 = arith.constant dense<0.000000e+00> : vector<2x16xf32>
    %65 = vector.multi_reduction <add>, %64, %cst_18 [2] : vector<2x16x16xf32> to vector<2x16xf32>
    %66 = vector.shape_cast %65 : vector<2x16xf32> to vector<2x16x1xf32>
    %67 = tpu.reciprocal %66 {approx = true} : vector<2x16x1xf32> -> vector<2x16x1xf32>
    %68 = vector.broadcast %67 : vector<2x16x1xf32> to vector<2x16x16xf32>
    %69 = arith.mulf %64, %68 : vector<2x16x16xf32>
    %70 = arith.addf %48, %69 : vector<2x16x16xf32>
    %71 = arith.truncf %69 : vector<2x16x16xf32> to vector<2x16x16xbf16>
    "tpu.trace_start"() <{level = 10 : i32, message = "bqk,bkd->bqd"}> : () -> ()
    %cst_19 = arith.constant dense<0.000000e+00> : vector<2x16x128xf32>
    %72 = tpu.matmul %71, %56, %cst_19 {dimension_numbers = #tpu.dot_dimension_numbers<[2], [1], [1], [2], [0, 0, 0, 1, 1, 2], [0], [0]>} : vector<2x16x16xbf16>, vector<2x16x128xbf16>, vector<2x16x128xf32> -> vector<2x16x128xf32>
    "tpu.trace_stop"() : () -> ()
    %73 = vector.extract_strided_slice %5 {offsets = [0, 0, 384], sizes = [2, 16, 128], strides = [1, 1, 1]} : vector<2x16x1536xf32> to vector<2x16x128xf32>
    %74 = arith.truncf %73 : vector<2x16x128xf32> to vector<2x16x128xbf16>
    %75 = vector.extract_strided_slice %5 {offsets = [0, 0, 896], sizes = [2, 16, 128], strides = [1, 1, 1]} : vector<2x16x1536xf32> to vector<2x16x128xf32>
    %76 = arith.truncf %75 : vector<2x16x128xf32> to vector<2x16x128xbf16>
    %77 = vector.extract_strided_slice %5 {offsets = [0, 0, 1408], sizes = [2, 16, 128], strides = [1, 1, 1]} : vector<2x16x1536xf32> to vector<2x16x128xf32>
    %78 = arith.truncf %77 : vector<2x16x128xf32> to vector<2x16x128xbf16>
    "tpu.trace_start"() <{level = 10 : i32, message = "bqd,bkd->bqk"}> : () -> ()
    %cst_20 = arith.constant dense<0.000000e+00> : vector<2x16x16xf32>
    %79 = tpu.matmul %74, %76, %cst_20 {dimension_numbers = #tpu.dot_dimension_numbers<[2], [2], [1], [1], [0, 0, 0, 1, 1, 1], [0], [0]>} : vector<2x16x128xbf16>, vector<2x16x128xbf16>, vector<2x16x16xf32> -> vector<2x16x16xf32>
    "tpu.trace_stop"() : () -> ()
    %cst_21 = arith.constant 1.250000e-01 : f32
    %80 = vector.broadcast %cst_21 : f32 to vector<2x16x16xf32>
    %81 = arith.mulf %79, %80 : vector<2x16x16xf32>
    %cst_22 = arith.constant dense<0xFF800000> : vector<2x16xf32>
    %82 = vector.multi_reduction <maximumf>, %81, %cst_22 [2] : vector<2x16x16xf32> to vector<2x16xf32>
    %83 = vector.shape_cast %82 : vector<2x16xf32> to vector<2x16x1xf32>
    %84 = vector.broadcast %83 : vector<2x16x1xf32> to vector<2x16x16xf32>
    %85 = arith.subf %81, %84 : vector<2x16x16xf32>
    %86 = math.exp %85 : vector<2x16x16xf32>
    %cst_23 = arith.constant dense<0.000000e+00> : vector<2x16xf32>
    %87 = vector.multi_reduction <add>, %86, %cst_23 [2] : vector<2x16x16xf32> to vector<2x16xf32>
    %88 = vector.shape_cast %87 : vector<2x16xf32> to vector<2x16x1xf32>
    %89 = tpu.reciprocal %88 {approx = true} : vector<2x16x1xf32> -> vector<2x16x1xf32>
    %90 = vector.broadcast %89 : vector<2x16x1xf32> to vector<2x16x16xf32>
    %91 = arith.mulf %86, %90 : vector<2x16x16xf32>
    %92 = arith.addf %70, %91 : vector<2x16x16xf32>
    %93 = arith.truncf %91 : vector<2x16x16xf32> to vector<2x16x16xbf16>
    "tpu.trace_start"() <{level = 10 : i32, message = "bqk,bkd->bqd"}> : () -> ()
    %cst_24 = arith.constant dense<0.000000e+00> : vector<2x16x128xf32>
    %94 = tpu.matmul %93, %78, %cst_24 {dimension_numbers = #tpu.dot_dimension_numbers<[2], [1], [1], [2], [0, 0, 0, 1, 1, 2], [0], [0]>} : vector<2x16x16xbf16>, vector<2x16x128xbf16>, vector<2x16x128xf32> -> vector<2x16x128xf32>
    "tpu.trace_stop"() : () -> ()
    %95 = tpu.concatenate %28, %50, %72, %94 in 2 : vector<2x16x128xf32>, vector<2x16x128xf32>, vector<2x16x128xf32>, vector<2x16x128xf32> -> vector<2x16x512xf32>
    %96 = vector.shape_cast %95 : vector<2x16x512xf32> to vector<32x512xf32>
    %97 = arith.truncf %96 : vector<32x512xf32> to vector<32x512xbf16>
    %c0_25 = arith.constant 0 : index
    %c0_26 = arith.constant 0 : index
    %98 = vector.load %arg3[%c0_25, %c0_26] : memref<512x128xbf16, #tpu.memory_space<vmem>>, vector<512x128xbf16>
    %cst_27 = arith.constant dense<0.000000e+00> : vector<32x128xf32>
    %99 = tpu.matmul %97, %98, %cst_27 {dimension_numbers = #tpu.dot_dimension_numbers<[1], [0], [0], [1], [0, 0, 1, 1], [], []>} : vector<32x512xbf16>, vector<512x128xbf16>, vector<32x128xf32> -> vector<32x128xf32>
    %c0_28 = arith.constant 0 : index
    %c0_29 = arith.constant 0 : index
    %100 = vector.load %arg4[%c0_28, %c0_29] : memref<1x128xf32, #tpu.memory_space<vmem>>, vector<1x128xf32>
    %101 = vector.broadcast %100 : vector<1x128xf32> to vector<32x128xf32>
    %102 = arith.addf %99, %101 : vector<32x128xf32>
    %103 = arith.addf %102, %1 : vector<32x128xf32>
    %c0_30 = arith.constant 0 : index
    %c0_31 = arith.constant 0 : index
    %104 = vector.load %arg5[%c0_30, %c0_31] : memref<1x128xf32, #tpu.memory_space<vmem>>, vector<1x128xf32>
    %c0_32 = arith.constant 0 : index
    %c0_33 = arith.constant 0 : index
    %105 = vector.load %arg6[%c0_32, %c0_33] : memref<1x128xf32, #tpu.memory_space<vmem>>, vector<1x128xf32>
    %cst_34 = arith.constant dense<0.000000e+00> : vector<32xf32>
    %106 = vector.multi_reduction <add>, %103, %cst_34 [1] : vector<32x128xf32> to vector<32xf32>
    %107 = vector.shape_cast %106 : vector<32xf32> to vector<32x1xf32>
    %108 = arith.mulf %103, %103 : vector<32x128xf32>
    %cst_35 = arith.constant dense<0.000000e+00> : vector<32xf32>
    %109 = vector.multi_reduction <add>, %108, %cst_35 [1] : vector<32x128xf32> to vector<32xf32>
    %110 = vector.shape_cast %109 : vector<32xf32> to vector<32x1xf32>
    %cst_36 = arith.constant 1.562500e-02 : f32
    %111 = vector.broadcast %cst_36 : f32 to vector<32x1xf32>
    %112 = arith.mulf %107, %111 : vector<32x1xf32>
    %cst_37 = arith.constant 1.562500e-02 : f32
    %113 = vector.broadcast %cst_37 : f32 to vector<32x1xf32>
    %114 = arith.mulf %110, %113 : vector<32x1xf32>
    %115 = arith.mulf %112, %112 : vector<32x1xf32>
    %116 = arith.subf %114, %115 : vector<32x1xf32>
    %cst_38 = arith.constant 9.99999974E-6 : f32
    %117 = vector.broadcast %cst_38 : f32 to vector<32x1xf32>
    %118 = arith.addf %116, %117 : vector<32x1xf32>
    %119 = math.rsqrt %118 : vector<32x1xf32>
    %120 = vector.broadcast %112 : vector<32x1xf32> to vector<32x128xf32>
    %121 = arith.subf %103, %120 : vector<32x128xf32>
    %122 = vector.broadcast %119 : vector<32x1xf32> to vector<32x128xf32>
    %123 = arith.mulf %121, %122 : vector<32x128xf32>
    %124 = vector.broadcast %104 : vector<1x128xf32> to vector<32x128xf32>
    %125 = arith.mulf %123, %124 : vector<32x128xf32>
    %126 = vector.broadcast %105 : vector<1x128xf32> to vector<32x128xf32>
    %127 = arith.addf %125, %126 : vector<32x128xf32>
    %128 = arith.truncf %127 : vector<32x128xf32> to vector<32x128xbf16>
    %c0_39 = arith.constant 0 : index
    %c0_40 = arith.constant 0 : index
    %129 = vector.load %arg7[%c0_39, %c0_40] : memref<128x128xbf16, #tpu.memory_space<vmem>>, vector<128x128xbf16>
    %cst_41 = arith.constant dense<0.000000e+00> : vector<32x128xf32>
    %130 = tpu.matmul %128, %129, %cst_41 {dimension_numbers = #tpu.dot_dimension_numbers<[1], [0], [0], [1], [0, 0, 1, 1], [], []>} : vector<32x128xbf16>, vector<128x128xbf16>, vector<32x128xf32> -> vector<32x128xf32>
    %c0_42 = arith.constant 0 : index
    %c0_43 = arith.constant 0 : index
    %131 = vector.load %arg8[%c0_42, %c0_43] : memref<1x128xf32, #tpu.memory_space<vmem>>, vector<1x128xf32>
    %132 = vector.broadcast %131 : vector<1x128xf32> to vector<32x128xf32>
    %133 = arith.addf %130, %132 : vector<32x128xf32>
    %cst_44 = arith.constant 0.000000e+00 : f32
    %134 = vector.broadcast %cst_44 : f32 to vector<32x128xf32>
    %135 = arith.maximumf %133, %134 : vector<32x128xf32>
    %136 = arith.truncf %135 : vector<32x128xf32> to vector<32x128xbf16>
    %c0_45 = arith.constant 0 : index
    %c0_46 = arith.constant 0 : index
    %137 = vector.load %arg9[%c0_45, %c0_46] : memref<128x128xbf16, #tpu.memory_space<vmem>>, vector<128x128xbf16>
    %cst_47 = arith.constant dense<0.000000e+00> : vector<32x128xf32>
    %138 = tpu.matmul %136, %137, %cst_47 {dimension_numbers = #tpu.dot_dimension_numbers<[1], [0], [0], [1], [0, 0, 1, 1], [], []>} : vector<32x128xbf16>, vector<128x128xbf16>, vector<32x128xf32> -> vector<32x128xf32>
    %c0_48 = arith.constant 0 : index
    %c0_49 = arith.constant 0 : index
    %139 = vector.load %arg10[%c0_48, %c0_49] : memref<1x128xf32, #tpu.memory_space<vmem>>, vector<1x128xf32>
    %140 = vector.broadcast %139 : vector<1x128xf32> to vector<32x128xf32>
    %141 = arith.addf %138, %140 : vector<32x128xf32>
    %142 = arith.addf %141, %127 : vector<32x128xf32>
    %c0_50 = arith.constant 0 : index
    %c0_51 = arith.constant 0 : index
    %143 = vector.load %arg11[%c0_50, %c0_51] : memref<1x128xf32, #tpu.memory_space<vmem>>, vector<1x128xf32>
    %c0_52 = arith.constant 0 : index
    %c0_53 = arith.constant 0 : index
    %144 = vector.load %arg12[%c0_52, %c0_53] : memref<1x128xf32, #tpu.memory_space<vmem>>, vector<1x128xf32>
    %cst_54 = arith.constant dense<0.000000e+00> : vector<32xf32>
    %145 = vector.multi_reduction <add>, %142, %cst_54 [1] : vector<32x128xf32> to vector<32xf32>
    %146 = vector.shape_cast %145 : vector<32xf32> to vector<32x1xf32>
    %147 = arith.mulf %142, %142 : vector<32x128xf32>
    %cst_55 = arith.constant dense<0.000000e+00> : vector<32xf32>
    %148 = vector.multi_reduction <add>, %147, %cst_55 [1] : vector<32x128xf32> to vector<32xf32>
    %149 = vector.shape_cast %148 : vector<32xf32> to vector<32x1xf32>
    %cst_56 = arith.constant 1.562500e-02 : f32
    %150 = vector.broadcast %cst_56 : f32 to vector<32x1xf32>
    %151 = arith.mulf %146, %150 : vector<32x1xf32>
    %cst_57 = arith.constant 1.562500e-02 : f32
    %152 = vector.broadcast %cst_57 : f32 to vector<32x1xf32>
    %153 = arith.mulf %149, %152 : vector<32x1xf32>
    %154 = arith.mulf %151, %151 : vector<32x1xf32>
    %155 = arith.subf %153, %154 : vector<32x1xf32>
    %cst_58 = arith.constant 9.99999974E-6 : f32
    %156 = vector.broadcast %cst_58 : f32 to vector<32x1xf32>
    %157 = arith.addf %155, %156 : vector<32x1xf32>
    %158 = math.rsqrt %157 : vector<32x1xf32>
    %159 = vector.broadcast %151 : vector<32x1xf32> to vector<32x128xf32>
    %160 = arith.subf %142, %159 : vector<32x128xf32>
    %161 = vector.broadcast %158 : vector<32x1xf32> to vector<32x128xf32>
    %162 = arith.mulf %160, %161 : vector<32x128xf32>
    %163 = vector.broadcast %143 : vector<1x128xf32> to vector<32x128xf32>
    %164 = arith.mulf %162, %163 : vector<32x128xf32>
    %165 = vector.broadcast %144 : vector<1x128xf32> to vector<32x128xf32>
    %166 = arith.addf %164, %165 : vector<32x128xf32>
    %167 = vector.shape_cast %166 : vector<32x128xf32> to vector<2x16x128xf32>
    %c0_59 = arith.constant 0 : index
    %c0_60 = arith.constant 0 : index
    %c0_61 = arith.constant 0 : index
    %168 = vector.load %arg13[%c0_59, %c0_60, %c0_61] : memref<2x16x128xf32, #tpu.memory_space<vmem>>, vector<2x16x128xf32>
    tpu.vector_store %arg13[%c0_59, %c0_60, %c0_61], %167 {strides = array<i32>} : memref<2x16x128xf32, #tpu.memory_space<vmem>>, vector<2x16x128xf32>,
    %cst_62 = arith.constant 2.500000e-01 : f32
    %169 = vector.broadcast %cst_62 : f32 to vector<2x16x16xf32>
    %170 = arith.mulf %92, %169 : vector<2x16x16xf32>
    %c0_63 = arith.constant 0 : index
    %c0_64 = arith.constant 0 : index
    %c0_65 = arith.constant 0 : index
    %171 = vector.load %arg14[%c0_63, %c0_64, %c0_65] : memref<2x16x16xf32, #tpu.memory_space<vmem>>, vector<2x16x16xf32>
    tpu.vector_store %arg14[%c0_63, %c0_64, %c0_65], %170 {strides = array<i32>} : memref<2x16x16xf32, #tpu.memory_space<vmem>>, vector<2x16x16xf32>,
    return
  }
  func.func @transform_0(%arg0: i32) -> (i32, i32, i32) {
    %c0_i32 = arith.constant 0 : i32
    %c0_i32_0 = arith.constant 0 : i32
    %c0_i32_1 = arith.constant 0 : i32
    return %arg0, %c0_i32, %c0_i32_0 : i32, i32, i32
  }
  func.func @transform_1(%arg0: i32) -> (i32, i32) {
    %c0_i32 = arith.constant 0 : i32
    %c0_i32_0 = arith.constant 0 : i32
    %c0_i32_1 = arith.constant 0 : i32
    return %c0_i32, %c0_i32_0 : i32, i32
  }
  func.func @transform_2(%arg0: i32) -> (i32, i32) {
    %c0_i32 = arith.constant 0 : i32
    %c0_i32_0 = arith.constant 0 : i32
    %c0_i32_1 = arith.constant 0 : i32
    return %c0_i32, %c0_i32_0 : i32, i32
  }
  func.func @transform_3(%arg0: i32) -> (i32, i32) {
    %c0_i32 = arith.constant 0 : i32
    %c0_i32_0 = arith.constant 0 : i32
    %c0_i32_1 = arith.constant 0 : i32
    return %c0_i32, %c0_i32_0 : i32, i32
  }
  func.func @transform_4(%arg0: i32) -> (i32, i32) {
    %c0_i32 = arith.constant 0 : i32
    %c0_i32_0 = arith.constant 0 : i32
    %c0_i32_1 = arith.constant 0 : i32
    return %c0_i32, %c0_i32_0 : i32, i32
  }
  func.func @transform_5(%arg0: i32) -> (i32, i32) {
    %c0_i32 = arith.constant 0 : i32
    %c0_i32_0 = arith.constant 0 : i32
    %c0_i32_1 = arith.constant 0 : i32
    return %c0_i32, %c0_i32_0 : i32, i32
  }
  func.func @transform_6(%arg0: i32) -> (i32, i32) {
    %c0_i32 = arith.constant 0 : i32
    %c0_i32_0 = arith.constant 0 : i32
    %c0_i32_1 = arith.constant 0 : i32
    return %c0_i32, %c0_i32_0 : i32, i32
  }
  func.func @transform_7(%arg0: i32) -> (i32, i32) {
    %c0_i32 = arith.constant 0 : i32
    %c0_i32_0 = arith.constant 0 : i32
    %c0_i32_1 = arith.constant 0 : i32
    return %c0_i32, %c0_i32_0 : i32, i32
  }
  func.func @transform_8(%arg0: i32) -> (i32, i32) {
    %c0_i32 = arith.constant 0 : i32
    %c0_i32_0 = arith.constant 0 : i32
    %c0_i32_1 = arith.constant 0 : i32
    return %c0_i32, %c0_i32_0 : i32, i32
  }
  func.func @transform_9(%arg0: i32) -> (i32, i32) {
    %c0_i32 = arith.constant 0 : i32
    %c0_i32_0 = arith.constant 0 : i32
    %c0_i32_1 = arith.constant 0 : i32
    return %c0_i32, %c0_i32_0 : i32, i32
  }
  func.func @transform_10(%arg0: i32) -> (i32, i32) {
    %c0_i32 = arith.constant 0 : i32
    %c0_i32_0 = arith.constant 0 : i32
    %c0_i32_1 = arith.constant 0 : i32
    return %c0_i32, %c0_i32_0 : i32, i32
  }
  func.func @transform_11(%arg0: i32) -> (i32, i32) {
    %c0_i32 = arith.constant 0 : i32
    %c0_i32_0 = arith.constant 0 : i32
    %c0_i32_1 = arith.constant 0 : i32
    return %c0_i32, %c0_i32_0 : i32, i32
  }
  func.func @transform_12(%arg0: i32) -> (i32, i32, i32) {
    %c0_i32 = arith.constant 0 : i32
    %c0_i32_0 = arith.constant 0 : i32
    %c0_i32_1 = arith.constant 0 : i32
    return %arg0, %c0_i32, %c0_i32_0 : i32, i32, i32
  }
  func.func @transform_13(%arg0: i32) -> (i32, i32, i32) {
    %c0_i32 = arith.constant 0 : i32
    %c0_i32_0 = arith.constant 0 : i32
    %c0_i32_1 = arith.constant 0 : i32
    return %arg0, %c0_i32, %c0_i32_0 : i32, i32, i32
  }
}

</mosaic_0001>

<llo_original>
// kernel: tpu_custom_call.1
$region0: #{tpu_custom_call.1}
  #allocation0 [shape = 'u32[]', space=smem, size = 0x4, offset = 0x4, fixed_abs, tag = 'smem constant byte address 0x4 - core index']
  #allocation1 [shape = 'u32[144,128]{1,0:T(1,128)}', space=vmem, size = 0x12000, scoped, tag = 'internal scratch']
  %s0 = inlined_call_operand.hbm [shape: f32[8,16,128], index: 0, kind: input, shape index: {}]
  %s1 = inlined_call_operand.hbm [shape: bf16[128,1536], index: 1, kind: input, shape index: {}]
  %s2 = inlined_call_operand.hbm [shape: bf16[512,128], index: 2, kind: input, shape index: {}]
  %s3 = inlined_call_operand.vmem [shape: f32[1,128], index: 3, kind: input, shape index: {}]
  %s4 = inlined_call_operand.vmem [shape: f32[1,128], index: 4, kind: input, shape index: {}]
  %s5 = inlined_call_operand.vmem [shape: f32[1,128], index: 5, kind: input, shape index: {}]
  %s6 = inlined_call_operand.hbm [shape: bf16[128,128], index: 6, kind: input, shape index: {}]
  %s7 = inlined_call_operand.vmem [shape: f32[1,128], index: 7, kind: input, shape index: {}]
  %s8 = inlined_call_operand.hbm [shape: bf16[128,128], index: 8, kind: input, shape index: {}]
  %s9 = inlined_call_operand.vmem [shape: f32[1,128], index: 9, kind: input, shape index: {}]
  %s10 = inlined_call_operand.vmem [shape: f32[1,128], index: 10, kind: input, shape index: {}]
  %s11 = inlined_call_operand.vmem [shape: f32[1,128], index: 11, kind: input, shape index: {}]
  %s12 = inlined_call_operand.hbm [shape: f32[8,16,128], index: 12, kind: output, shape index: {0}]
  %s13 = inlined_call_operand.hbm [shape: f32[8,16,16], index: 13, kind: output, shape index: {1}]
  %14 = xla_tuple %s12, %s13
  %s15 = sld [smem:[#allocation0]]
  $region109: #{tpu_custom_call.1} parent=0
    _
  %s17 = ssub.s32 1, %s15
  %s18 = scalar_select 0, %s17, %s15
  $region1: #{tpu_custom_call.1} parent=0
    #allocation2 [shape = 'u8[32768]{0}', space=vmem, size = 0x8000, scoped, tag = 'input window, operand 0']
    #allocation3 [shape = 's32[2]{0}', space=sflag, size = 0x8, scoped, tag = 'scoped memory for tpu_custom_call.1']
    #allocation4 [shape = 's32[2]{0}', space=sflag, size = 0x8, scoped, tag = 'scoped memory for tpu_custom_call.1']
    #allocation5 [shape = 'u8[393216]{0}', space=vmem, size = 0x60000, scoped, tag = 'input window, operand 1, single buffered']
    #allocation6 [shape = 's32[1]{0}', space=sflag, size = 0x4, scoped, tag = 'scoped memory for tpu_custom_call.1']
    #allocation7 [shape = 'u8[131072]{0}', space=vmem, size = 0x20000, scoped, tag = 'input window, operand 2, single buffered']
    #allocation8 [shape = 'u8[32768]{0}', space=vmem, size = 0x8000, scoped, tag = 'input window, operand 6, single buffered']
    #allocation9 [shape = 's32[1]{0}', space=sflag, size = 0x4, scoped, tag = 'scoped memory for tpu_custom_call.1']
    #allocation10 [shape = 'u8[32768]{0}', space=vmem, size = 0x8000, scoped, tag = 'input window, operand 8, single buffered']
    #allocation11 [shape = 'u8[32768]{0}', space=vmem, size = 0x8000, scoped, tag = 'output window, operand 0']
    #allocation12 [shape = 'u8[32768]{0}', space=vmem, size = 0x8000, scoped, tag = 'output window, operand 1']
    #allocation13 [shape = 's32[2]{0}', space=sflag, size = 0x8, scoped, tag = 'scoped memory for tpu_custom_call.1']
    %19 = vsyncpa [#allocation3], 0
    %s20 = scalar_lea.sflag [#allocation3], 1
    %21 = vsyncpa %s20, 0
    %22 = vsyncpa [#allocation6], 0
    %23 = vsyncpa [#allocation9], 0
    %24 = vsyncpa [#allocation4], 0
    %s25 = scalar_lea.sflag [#allocation4], 1
    %26 = vsyncpa %s25, 0
    %27 = vsyncpa [#allocation13], 0
    %s28 = scalar_lea.sflag [#allocation13], 1
    %29 = vsyncpa %s28, 0
    loop: start=0, step=1, limit=6
    $region2: #{tpu_custom_call.1} parent=1 // loop_pre_header
      _
    $region3: #{tpu_custom_call.1} parent=1 // loop_header
      %s31 = sphi 0, %s35
      %p32 = scmp.ge.s32.totalorder %s31, 6
      %s41 = sphi 0, %s43
      %s44 = sphi 0, %s41
      %s45 = sphi 0, %s44
      %s61 = sphi 0, %s45
      %s65 = sphi 0, %s65
      %s67 = sphi 0, %s65
      %s68 = sphi 0, %s67
      %s82 = sphi 0, %s68
      %s86 = sphi 0, %s86
      %s88 = sphi 0, %s86
      %s89 = sphi 0, %s88
      %s103 = sphi 0, %s89
      %s107 = sphi 0, %s107
      %s109 = sphi 0, %s107
      %s110 = sphi 0, %s109
      %s124 = sphi 0, %s110
      %s128 = sphi 0, %s128
      %s130 = sphi 0, %s128
      %s131 = sphi 0, %s130
      %s145 = sphi 0, %s131
      %s149 = sphi 0, %s149
      %s151 = sphi 0, %s149
      %s152 = sphi 0, %s151
      %s166 = sphi 0, %s152
      %s170 = sphi 0, %s170
      %s172 = sphi 0, %s170
      %s173 = sphi 0, %s172
      %s187 = sphi 0, %s173
      %s191 = sphi 0, %s191
      %s193 = sphi 0, %s191
      %s194 = sphi 0, %s193
      %s208 = sphi 0, %s194
      %s212 = sphi 0, %s212
      %s214 = sphi 0, %s212
      %s215 = sphi 0, %s214
      %s229 = sphi 0, %s215
      %s233 = sphi 0, %s233
      %s235 = sphi 0, %s233
      %s236 = sphi 0, %s235
      %s250 = sphi 0, %s236
      %s254 = sphi 0, %s254
      %s256 = sphi 0, %s254
      %s257 = sphi 0, %s256
      %s271 = sphi 0, %s257
      %s275 = sphi 0, %s275
      %s277 = sphi 0, %s275
      %s278 = sphi 0, %s277
      %s292 = sphi 0, %s278
      %s298 = sphi 0, %s300
      %s301 = sphi 0, %s298
      %s302 = sphi 0, %s301
      %s318 = sphi 0, %s302
      %s324 = sphi 0, %s326
      %s327 = sphi 0, %s324
      %s328 = sphi 0, %s327
      %s344 = sphi 0, %s328
    $region4: #{tpu_custom_call.1} parent=1 // loop_header_branch
      %34 = sbr.rel (%p32) target = $region8
    $region5: #{tpu_custom_call.1} parent=1 // loop_body
      %s36 = ssub.s32 %s31, 1
      %s37 = ssub.s32 %s31, 2
      %s38 = sadd.s32 %s31, 1
      %s39 = ssub.s32 %s31, %s38
      %p40 = scmp.eq.s32.totalorder %s39, 0
      %s42 = sadd.s32 %s41, 1
      %s43 = scalar_select %p40, %s41, %s42
      %p46 = pneg %p40
      %p47 = scmp.eq.s32.totalorder %s31, 3
      %p48 = por %p46, %p47
      %p49 = scmp.ne.s32.totalorder %s41, %s44
      %p50 = scmp.eq.s32.totalorder %s31, 0
      %p51 = por %p49, %p50
      %p52 = scmp.ne.s32.totalorder %s41, %s44
      %p53 = scmp.eq.s32.totalorder %s36, 3
      %p54 = por %p52, %p53
      %p55 = scmp.ne.s32.totalorder %s44, %s45
      %p56 = scmp.eq.s32.totalorder %s36, 0
      %p57 = por %p55, %p56
      %p58 = scmp.ne.s32.totalorder %s44, %s45
      %p59 = scmp.eq.s32.totalorder %s37, 3
      %p60 = por %p58, %p59
      %p62 = scmp.ne.s32.totalorder %s45, %s61
      %p63 = scmp.eq.s32.totalorder %s37, 0
      %p64 = por %p62, %p63
      %s66 = sadd.s32 %s65, 1
      %p69 = scmp.eq.s32.totalorder %s31, 3
      %p70 = scmp.ne.s32.totalorder %s65, %s67
      %p71 = scmp.eq.s32.totalorder %s31, 0
      %p72 = por %p70, %p71
      %p73 = scmp.ne.s32.totalorder %s65, %s67
      %p74 = scmp.eq.s32.totalorder %s36, 3
      %p75 = por %p73, %p74
      %p76 = scmp.ne.s32.totalorder %s67, %s68
      %p77 = scmp.eq.s32.totalorder %s36, 0
      %p78 = por %p76, %p77
      %p79 = scmp.ne.s32.totalorder %s67, %s68
      %p80 = scmp.eq.s32.totalorder %s37, 3
      %p81 = por %p79, %p80
      %p83 = scmp.ne.s32.totalorder %s68, %s82
      %p84 = scmp.eq.s32.totalorder %s37, 0
      %p85 = por %p83, %p84
      %s87 = sadd.s32 %s86, 1
      %p90 = scmp.eq.s32.totalorder %s31, 3
      %p91 = scmp.ne.s32.totalorder %s86, %s88
      %p92 = scmp.eq.s32.totalorder %s31, 0
      %p93 = por %p91, %p92
      %p94 = scmp.ne.s32.totalorder %s86, %s88
      %p95 = scmp.eq.s32.totalorder %s36, 3
      %p96 = por %p94, %p95
      %p97 = scmp.ne.s32.totalorder %s88, %s89
      %p98 = scmp.eq.s32.totalorder %s36, 0
      %p99 = por %p97, %p98
      %p100 = scmp.ne.s32.totalorder %s88, %s89
      %p101 = scmp.eq.s32.totalorder %s37, 3
      %p102 = por %p100, %p101
      %p104 = scmp.ne.s32.totalorder %s89, %s103
      %p105 = scmp.eq.s32.totalorder %s37, 0
      %p106 = por %p104, %p105
      %s108 = sadd.s32 %s107, 1
      %p111 = scmp.eq.s32.totalorder %s31, 3
      %p112 = scmp.ne.s32.totalorder %s107, %s109
      %p113 = scmp.eq.s32.totalorder %s31, 0
      %p114 = por %p112, %p113
      %p115 = scmp.ne.s32.totalorder %s107, %s109
      %p116 = scmp.eq.s32.totalorder %s36, 3
      %p117 = por %p115, %p116
      %p118 = scmp.ne.s32.totalorder %s109, %s110
      %p119 = scmp.eq.s32.totalorder %s36, 0
      %p120 = por %p118, %p119
      %p121 = scmp.ne.s32.totalorder %s109, %s110
      %p122 = scmp.eq.s32.totalorder %s37, 3
      %p123 = por %p121, %p122
      %p125 = scmp.ne.s32.totalorder %s110, %s124
      %p126 = scmp.eq.s32.totalorder %s37, 0
      %p127 = por %p125, %p126
      %s129 = sadd.s32 %s128, 1
      %p132 = scmp.eq.s32.totalorder %s31, 3
      %p133 = scmp.ne.s32.totalorder %s128, %s130
      %p134 = scmp.eq.s32.totalorder %s31, 0
      %p135 = por %p133, %p134
      %p136 = scmp.ne.s32.totalorder %s128, %s130
      %p137 = scmp.eq.s32.totalorder %s36, 3
      %p138 = por %p136, %p137
      %p139 = scmp.ne.s32.totalorder %s130, %s131
      %p140 = scmp.eq.s32.totalorder %s36, 0
      %p141 = por %p139, %p140
      %p142 = scmp.ne.s32.totalorder %s130, %s131
      %p143 = scmp.eq.s32.totalorder %s37, 3
      %p144 = por %p142, %p143
      %p146 = scmp.ne.s32.totalorder %s131, %s145
      %p147 = scmp.eq.s32.totalorder %s37, 0
      %p148 = por %p146, %p147
      %s150 = sadd.s32 %s149, 1
      %p153 = scmp.eq.s32.totalorder %s31, 3
      %p154 = scmp.ne.s32.totalorder %s149, %s151
      %p155 = scmp.eq.s32.totalorder %s31, 0
      %p156 = por %p154, %p155
      %p157 = scmp.ne.s32.totalorder %s149, %s151
      %p158 = scmp.eq.s32.totalorder %s36, 3
      %p159 = por %p157, %p158
      %p160 = scmp.ne.s32.totalorder %s151, %s152
      %p161 = scmp.eq.s32.totalorder %s36, 0
      %p162 = por %p160, %p161
      %p163 = scmp.ne.s32.totalorder %s151, %s152
      %p164 = scmp.eq.s32.totalorder %s37, 3
      %p165 = por %p163, %p164
      %p167 = scmp.ne.s32.totalorder %s152, %s166
      %p168 = scmp.eq.s32.totalorder %s37, 0
      %p169 = por %p167, %p168
      %s171 = sadd.s32 %s170, 1
      %p174 = scmp.eq.s32.totalorder %s31, 3
      %p175 = scmp.ne.s32.totalorder %s170, %s172
      %p176 = scmp.eq.s32.totalorder %s31, 0
      %p177 = por %p175, %p176
      %p178 = scmp.ne.s32.totalorder %s170, %s172
      %p179 = scmp.eq.s32.totalorder %s36, 3
      %p180 = por %p178, %p179
      %p181 = scmp.ne.s32.totalorder %s172, %s173
      %p182 = scmp.eq.s32.totalorder %s36, 0
      %p183 = por %p181, %p182
      %p184 = scmp.ne.s32.totalorder %s172, %s173
      %p185 = scmp.eq.s32.totalorder %s37, 3
      %p186 = por %p184, %p185
      %p188 = scmp.ne.s32.totalorder %s173, %s187
      %p189 = scmp.eq.s32.totalorder %s37, 0
      %p190 = por %p188, %p189
      %s192 = sadd.s32 %s191, 1
      %p195 = scmp.eq.s32.totalorder %s31, 3
      %p196 = scmp.ne.s32.totalorder %s191, %s193
      %p197 = scmp.eq.s32.totalorder %s31, 0
      %p198 = por %p196, %p197
      %p199 = scmp.ne.s32.totalorder %s191, %s193
      %p200 = scmp.eq.s32.totalorder %s36, 3
      %p201 = por %p199, %p200
      %p202 = scmp.ne.s32.totalorder %s193, %s194
      %p203 = scmp.eq.s32.totalorder %s36, 0
      %p204 = por %p202, %p203
      %p205 = scmp.ne.s32.totalorder %s193, %s194
      %p206 = scmp.eq.s32.totalorder %s37, 3
      %p207 = por %p205, %p206
      %p209 = scmp.ne.s32.totalorder %s194, %s208
      %p210 = scmp.eq.s32.totalorder %s37, 0
      %p211 = por %p209, %p210
      %s213 = sadd.s32 %s212, 1
      %p216 = scmp.eq.s32.totalorder %s31, 3
      %p217 = scmp.ne.s32.totalorder %s212, %s214
      %p218 = scmp.eq.s32.totalorder %s31, 0
      %p219 = por %p217, %p218
      %p220 = scmp.ne.s32.totalorder %s212, %s214
      %p221 = scmp.eq.s32.totalorder %s36, 3
      %p222 = por %p220, %p221
      %p223 = scmp.ne.s32.totalorder %s214, %s215
      %p224 = scmp.eq.s32.totalorder %s36, 0
      %p225 = por %p223, %p224
      %p226 = scmp.ne.s32.totalorder %s214, %s215
      %p227 = scmp.eq.s32.totalorder %s37, 3
      %p228 = por %p226, %p227
      %p230 = scmp.ne.s32.totalorder %s215, %s229
      %p231 = scmp.eq.s32.totalorder %s37, 0
      %p232 = por %p230, %p231
      %s234 = sadd.s32 %s233, 1
      %p237 = scmp.eq.s32.totalorder %s31, 3
      %p238 = scmp.ne.s32.totalorder %s233, %s235
      %p239 = scmp.eq.s32.totalorder %s31, 0
      %p240 = por %p238, %p239
      %p241 = scmp.ne.s32.totalorder %s233, %s235
      %p242 = scmp.eq.s32.totalorder %s36, 3
      %p243 = por %p241, %p242
      %p244 = scmp.ne.s32.totalorder %s235, %s236
      %p245 = scmp.eq.s32.totalorder %s36, 0
      %p246 = por %p244, %p245
      %p247 = scmp.ne.s32.totalorder %s235, %s236
      %p248 = scmp.eq.s32.totalorder %s37, 3
      %p249 = por %p247, %p248
      %p251 = scmp.ne.s32.totalorder %s236, %s250
      %p252 = scmp.eq.s32.totalorder %s37, 0
      %p253 = por %p251, %p252
      %s255 = sadd.s32 %s254, 1
      %p258 = scmp.eq.s32.totalorder %s31, 3
      %p259 = scmp.ne.s32.totalorder %s254, %s256
      %p260 = scmp.eq.s32.totalorder %s31, 0
      %p261 = por %p259, %p260
      %p262 = scmp.ne.s32.totalorder %s254, %s256
      %p263 = scmp.eq.s32.totalorder %s36, 3
      %p264 = por %p262, %p263
      %p265 = scmp.ne.s32.totalorder %s256, %s257
      %p266 = scmp.eq.s32.totalorder %s36, 0
      %p267 = por %p265, %p266
      %p268 = scmp.ne.s32.totalorder %s256, %s257
      %p269 = scmp.eq.s32.totalorder %s37, 3
      %p270 = por %p268, %p269
      %p272 = scmp.ne.s32.totalorder %s257, %s271
      %p273 = scmp.eq.s32.totalorder %s37, 0
      %p274 = por %p272, %p273
      %s276 = sadd.s32 %s275, 1
      %p279 = scmp.eq.s32.totalorder %s31, 3
      %p280 = scmp.ne.s32.totalorder %s275, %s277
      %p281 = scmp.eq.s32.totalorder %s31, 0
      %p282 = por %p280, %p281
      %p283 = scmp.ne.s32.totalorder %s275, %s277
      %p284 = scmp.eq.s32.totalorder %s36, 3
      %p285 = por %p283, %p284
      %p286 = scmp.ne.s32.totalorder %s277, %s278
      %p287 = scmp.eq.s32.totalorder %s36, 0
      %p288 = por %p286, %p287
      %p289 = scmp.ne.s32.totalorder %s277, %s278
      %p290 = scmp.eq.s32.totalorder %s37, 3
      %p291 = por %p289, %p290
      %p293 = scmp.ne.s32.totalorder %s278, %s292
      %p294 = scmp.eq.s32.totalorder %s37, 0
      %p295 = por %p293, %p294
      %s296 = ssub.s32 %s31, %s38
      %p297 = scmp.eq.s32.totalorder %s296, 0
      %s299 = sadd.s32 %s298, 1
      %s300 = scalar_select %p297, %s298, %s299
      %p303 = pneg %p297
      %p304 = scmp.eq.s32.totalorder %s31, 3
      %p305 = por %p303, %p304
      %p306 = scmp.ne.s32.totalorder %s298, %s301
      %p307 = scmp.eq.s32.totalorder %s31, 0
      %p308 = por %p306, %p307
      %p309 = scmp.ne.s32.totalorder %s298, %s301
      %p310 = scmp.eq.s32.totalorder %s36, 3
      %p311 = por %p309, %p310
      %p312 = scmp.ne.s32.totalorder %s301, %s302
      %p313 = scmp.eq.s32.totalorder %s36, 0
      %p314 = por %p312, %p313
      %p315 = scmp.ne.s32.totalorder %s301, %s302
      %p316 = scmp.eq.s32.totalorder %s37, 3
      %p317 = por %p315, %p316
      %p319 = scmp.ne.s32.totalorder %s302, %s318
      %p320 = scmp.eq.s32.totalorder %s37, 0
      %p321 = por %p319, %p320
      %s322 = ssub.s32 %s31, %s38
      %p323 = scmp.eq.s32.totalorder %s322, 0
      %s325 = sadd.s32 %s324, 1
      %s326 = scalar_select %p323, %s324, %s325
      %p329 = pneg %p323
      %p330 = scmp.eq.s32.totalorder %s31, 3
      %p331 = por %p329, %p330
      %p332 = scmp.ne.s32.totalorder %s324, %s327
      %p333 = scmp.eq.s32.totalorder %s31, 0
      %p334 = por %p332, %p333
      %p335 = scmp.ne.s32.totalorder %s324, %s327
      %p336 = scmp.eq.s32.totalorder %s36, 3
      %p337 = por %p335, %p336
      %p338 = scmp.ne.s32.totalorder %s327, %s328
      %p339 = scmp.eq.s32.totalorder %s36, 0
      %p340 = por %p338, %p339
      %p341 = scmp.ne.s32.totalorder %s327, %s328
      %p342 = scmp.eq.s32.totalorder %s37, 3
      %p343 = por %p341, %p342
      %p345 = scmp.ne.s32.totalorder %s328, %s344
      %p346 = scmp.eq.s32.totalorder %s37, 0
      %p347 = por %p345, %p346
      %p348 = scmp.le.s32.totalorder 1, %s31
      %p349 = scmp.lt.s32.totalorder %s31, 5
      %p350 = pnand %p348, %p349
      %p351 = pneg %p350
      // Predicated region
      $region9: #{tpu_custom_call.1} parent=5 // pred_check
        _
      $region10: #{tpu_custom_call.1} parent=5 // pred_check_branch
        %353 = sbr.rel (%p350) target = $region12
      $region11: #{tpu_custom_call.1} parent=5 // pred_region
        %s354 = ssub.s32 %s31, 1
        // Predicated region
        $region13: #{tpu_custom_call.1} parent=11 // pred_check
          %p355 = pneg %p78
        $region14: #{tpu_custom_call.1} parent=11 // pred_check_branch
          %357 = sbr.rel (%p355) target = $region16
        $region15: #{tpu_custom_call.1} parent=11 // pred_region
          %s359 = ssub.s32 12288, 12288
          %360 = vsyncadd [#allocation6], %s359
          %s361 = sshll.u32 [#allocation5], 4
          %s362 = int_to_ptr.vmem [resolvable:$true] %s361
          %367 = dma.hbm_to_vmem [thread:$0]  %s1, 12288, %s362, [#allocation6], 768, 768, 48
        $region16: #{tpu_custom_call.1} parent=11 // pred_fallthru
          _
        // Predicated region
        $region17: #{tpu_custom_call.1} parent=11 // pred_check
          %p368 = pneg %p99
        $region18: #{tpu_custom_call.1} parent=11 // pred_check_branch
          %370 = sbr.rel (%p368) target = $region20
        $region19: #{tpu_custom_call.1} parent=11 // pred_region
          %s372 = ssub.s32 4096, 4096
          %373 = vsyncadd [#allocation6], %s372
          %s374 = sshll.u32 [#allocation7], 4
          %s375 = int_to_ptr.vmem [resolvable:$true] %s374
          %380 = dma.hbm_to_vmem [thread:$0]  %s2, 4096, %s375, [#allocation6], 64, 64, 4
        $region20: #{tpu_custom_call.1} parent=11 // pred_fallthru
          _
        // Predicated region
        $region21: #{tpu_custom_call.1} parent=11 // pred_check
          %p381 = pneg %p120
        $region22: #{tpu_custom_call.1} parent=11 // pred_check_branch
          %383 = sbr.rel (%p381) target = $region24
        $region23: #{tpu_custom_call.1} parent=11 // pred_region
          _
        $region24: #{tpu_custom_call.1} parent=11 // pred_fallthru
          _
        // Predicated region
        $region25: #{tpu_custom_call.1} parent=11 // pred_check
          %p384 = pneg %p141
        $region26: #{tpu_custom_call.1} parent=11 // pred_check_branch
          %386 = sbr.rel (%p384) target = $region28
        $region27: #{tpu_custom_call.1} parent=11 // pred_region
          _
        $region28: #{tpu_custom_call.1} parent=11 // pred_fallthru
          _
        // Predicated region
        $region29: #{tpu_custom_call.1} parent=11 // pred_check
          %p387 = pneg %p162
        $region30: #{tpu_custom_call.1} parent=11 // pred_check_branch
          %389 = sbr.rel (%p387) target = $region32
        $region31: #{tpu_custom_call.1} parent=11 // pred_region
          _
        $region32: #{tpu_custom_call.1} parent=11 // pred_fallthru
          _
        // Predicated region
        $region33: #{tpu_custom_call.1} parent=11 // pred_check
          %p390 = pneg %p183
        $region34: #{tpu_custom_call.1} parent=11 // pred_check_branch
          %392 = sbr.rel (%p390) target = $region36
        $region35: #{tpu_custom_call.1} parent=11 // pred_region
          %s394 = ssub.s32 1024, 1024
          %395 = vsyncadd [#allocation9], %s394
          %s396 = sshll.u32 [#allocation8], 4
          %s397 = int_to_ptr.vmem [resolvable:$true] %s396
          %402 = dma.hbm_to_vmem [thread:$0]  %s6, 1024, %s397, [#allocation9], 64, 64, 4
        $region36: #{tpu_custom_call.1} parent=11 // pred_fallthru
          _
        // Predicated region
        $region37: #{tpu_custom_call.1} parent=11 // pred_check
          %p403 = pneg %p204
        $region38: #{tpu_custom_call.1} parent=11 // pred_check_branch
          %405 = sbr.rel (%p403) target = $region40
        $region39: #{tpu_custom_call.1} parent=11 // pred_region
          _
        $region40: #{tpu_custom_call.1} parent=11 // pred_fallthru
          _
        // Predicated region
        $region41: #{tpu_custom_call.1} parent=11 // pred_check
          %p406 = pneg %p225
        $region42: #{tpu_custom_call.1} parent=11 // pred_check_branch
          %408 = sbr.rel (%p406) target = $region44
        $region43: #{tpu_custom_call.1} parent=11 // pred_region
          %s410 = ssub.s32 1024, 1024
          %411 = vsyncadd [#allocation9], %s410
          %s412 = sshll.u32 [#allocation10], 4
          %s413 = int_to_ptr.vmem [resolvable:$true] %s412
          %418 = dma.hbm_to_vmem [thread:$0]  %s8, 1024, %s413, [#allocation9], 64, 64, 4
        $region44: #{tpu_custom_call.1} parent=11 // pred_fallthru
          _
        // Predicated region
        $region45: #{tpu_custom_call.1} parent=11 // pred_check
          %p419 = pneg %p246
        $region46: #{tpu_custom_call.1} parent=11 // pred_check_branch
          %421 = sbr.rel (%p419) target = $region48
        $region47: #{tpu_custom_call.1} parent=11 // pred_region
          _
        $region48: #{tpu_custom_call.1} parent=11 // pred_fallthru
          _
        // Predicated region
        $region49: #{tpu_custom_call.1} parent=11 // pred_check
          %p422 = pneg %p267
        $region50: #{tpu_custom_call.1} parent=11 // pred_check_branch
          %424 = sbr.rel (%p422) target = $region52
        $region51: #{tpu_custom_call.1} parent=11 // pred_region
          _
        $region52: #{tpu_custom_call.1} parent=11 // pred_fallthru
          _
        // Predicated region
        $region53: #{tpu_custom_call.1} parent=11 // pred_check
          %p425 = pneg %p288
        $region54: #{tpu_custom_call.1} parent=11 // pred_check_branch
          %427 = sbr.rel (%p425) target = $region56
        $region55: #{tpu_custom_call.1} parent=11 // pred_region
          _
        $region56: #{tpu_custom_call.1} parent=11 // pred_fallthru
          _
      $region12: #{tpu_custom_call.1} parent=5 // pred_fallthru
        _
      %p428 = scmp.lt.s32.totalorder %s31, 4
      // Predicated region
      $region57: #{tpu_custom_call.1} parent=5 // pred_check
        %p429 = pneg %p428
      $region58: #{tpu_custom_call.1} parent=5 // pred_check_branch
        %431 = sbr.rel (%p429) target = $region60
      $region59: #{tpu_custom_call.1} parent=5 // pred_region
        // Predicated region
        $region61: #{tpu_custom_call.1} parent=59 // pred_check
          %p432 = pneg %p51
        $region62: #{tpu_custom_call.1} parent=59 // pred_check_branch
          %434 = sbr.rel (%p432) target = $region64
        $region63: #{tpu_custom_call.1} parent=59 // pred_region
          %s435 = sand.u32 %s41, 1
          %s436 = scalar_lea.sflag [#allocation3], %s435
          %s437 = sand.u32 %s41, 1
          %s438 = smul.addr %s437, 32
          %s439 = scalar_lea.vmem [#allocation2], %s438
          %s440 = smul.u32 2, %s31
          %s442 = ssub.s32 512, 512
          %443 = vsyncadd %s436, %s442
          %s444 = smul.addr %s440, 2
          %s445 = smul.addr %s444, 128
          %s446 = scalar_lea.hbm %s0, %s445
          %s447 = sshll.u32 %s439, 4
          %s448 = int_to_ptr.vmem [resolvable:$true] %s447
          %453 = dma.hbm_to_vmem [thread:$0]  %s446, 512, %s448, %s436, 128, 128, 8
        $region64: #{tpu_custom_call.1} parent=59 // pred_fallthru
          _
      $region60: #{tpu_custom_call.1} parent=5 // pred_fallthru
        _
      %p454 = scmp.le.s32.totalorder 1, %s31
      %p455 = scmp.lt.s32.totalorder %s31, 5
      %p456 = pnand %p454, %p455
      %p457 = pneg %p456
      // Predicated region
      $region65: #{tpu_custom_call.1} parent=5 // pred_check
        _
      $region66: #{tpu_custom_call.1} parent=5 // pred_check_branch
        %459 = sbr.rel (%p456) target = $region68
      $region67: #{tpu_custom_call.1} parent=5 // pred_region
        %s460 = ssub.s32 %s31, 1
        %s461 = sand.u32 %s44, 1
        %s462 = scalar_lea.sflag [#allocation3], %s461
        %s463 = sand.u32 %s44, 1
        %s464 = smul.addr %s463, 32
        %s465 = scalar_lea.vmem [#allocation2], %s464
        // Predicated region
        $region69: #{tpu_custom_call.1} parent=67 // pred_check
          %p466 = pneg %p57
        $region70: #{tpu_custom_call.1} parent=67 // pred_check_branch
          %468 = sbr.rel (%p466) target = $region72
        $region71: #{tpu_custom_call.1} parent=67 // pred_region
          %469 = dma.done %s462, 512
        $region72: #{tpu_custom_call.1} parent=67 // pred_fallthru
          _
        // Predicated region
        $region73: #{tpu_custom_call.1} parent=67 // pred_check
          %p470 = pneg %p78
        $region74: #{tpu_custom_call.1} parent=67 // pred_check_branch
          %472 = sbr.rel (%p470) target = $region76
        $region75: #{tpu_custom_call.1} parent=67 // pred_region
          %473 = dma.done [#allocation6], 12288
        $region76: #{tpu_custom_call.1} parent=67 // pred_fallthru
          _
        // Predicated region
        $region77: #{tpu_custom_call.1} parent=67 // pred_check
          %p474 = pneg %p99
        $region78: #{tpu_custom_call.1} parent=67 // pred_check_branch
          %476 = sbr.rel (%p474) target = $region80
        $region79: #{tpu_custom_call.1} parent=67 // pred_region
          %477 = dma.done [#allocation6], 4096
        $region80: #{tpu_custom_call.1} parent=67 // pred_fallthru
          _
        // Predicated region
        $region81: #{tpu_custom_call.1} parent=67 // pred_check
          %p478 = pneg %p183
        $region82: #{tpu_custom_call.1} parent=67 // pred_check_branch
          %480 = sbr.rel (%p478) target = $region84
        $region83: #{tpu_custom_call.1} parent=67 // pred_region
          %481 = dma.done [#allocation9], 1024
        $region84: #{tpu_custom_call.1} parent=67 // pred_fallthru
          _
        // Predicated region
        $region85: #{tpu_custom_call.1} parent=67 // pred_check
          %p482 = pneg %p225
        $region86: #{tpu_custom_call.1} parent=67 // pred_check_branch
          %484 = sbr.rel (%p482) target = $region88
        $region87: #{tpu_custom_call.1} parent=67 // pred_region
          %485 = dma.done [#allocation9], 1024
        $region88: #{tpu_custom_call.1} parent=67 // pred_fallthru
          _
        %s486 = sand.u32 %s44, 1
        %s487 = scalar_lea.sflag [#allocation3], %s486
        %s488 = sand.u32 %s44, 1
        %s489 = smul.addr %s488, 32
        %s490 = scalar_lea.vmem [#allocation2], %s489
        %p491 = pneg %p57
        %p492 = pneg %p54
        %p493 = pneg %p78
        %p494 = pneg %p75
        %p495 = pneg %p99
        %p496 = pneg %p96
        %p497 = pneg %p120
        %p498 = pneg %p117
        %p499 = pneg %p141
        %p500 = pneg %p138
        %p501 = pneg %p162
        %p502 = pneg %p159
        %p503 = pneg %p183
        %p504 = pneg %p180
        %p505 = pneg %p204
        %p506 = pneg %p201
        %p507 = pneg %p225
        %p508 = pneg %p222
        %p509 = pneg %p246
        %p510 = pneg %p243
        %p511 = pneg %p267
        %p512 = pneg %p264
        %p513 = pneg %p288
        %p514 = pneg %p285
        %p515 = pneg %p314
        %p516 = pneg %p311
        %s517 = sand.u32 %s301, 1
        %s518 = scalar_lea.sflag [#allocation4], %s517
        %s519 = sand.u32 %s301, 1
        %s520 = smul.addr %s519, 32
        %s521 = scalar_lea.vmem [#allocation11], %s520
        %p522 = pneg %p340
        %p523 = pneg %p337
        %s524 = sand.u32 %s327, 1
        %s525 = scalar_lea.sflag [#allocation13], %s524
        %s526 = sand.u32 %s327, 1
        %s527 = smul.addr %s526, 32
        %s528 = scalar_lea.vmem [#allocation12], %s527
        %s529 = smul.u32 2, %s36
        %s530 = smul.u32 2, %s36
        %s531 = smul.u32 2, %s36
        %v533 = vld [vmem:[%s465] sm:$0xff]
        %v534 = vld [vmem:[%s465 + $0x8] sm:$0xff]
        %v535 = vld [vmem:[%s465 + $0x10] sm:$0xff]
        %v536 = vld [vmem:[%s465 + $0x18] sm:$0xff]
        %v537 = vpack.c.bf16 %v534, %v533
        %v538 = vpack.c.bf16 %v536, %v535
        %v539 = vld [vmem:[#allocation5] sm:$0xff]
        %v540 = vld [vmem:[#allocation5 + $0x8] sm:$0xff]
        %v541 = vld [vmem:[#allocation5 + $0x10] sm:$0xff]
        %v542 = vld [vmem:[#allocation5 + $0x18] sm:$0xff]
        %v543 = vld [vmem:[#allocation5 + $0x20] sm:$0xff]
        %v544 = vld [vmem:[#allocation5 + $0x28] sm:$0xff]
        %v545 = vld [vmem:[#allocation5 + $0x30] sm:$0xff]
        %v546 = vld [vmem:[#allocation5 + $0x38] sm:$0xff]
        %v547 = vld [vmem:[#allocation5 + $0x40] sm:$0xff]
        %v548 = vld [vmem:[#allocation5 + $0x48] sm:$0xff]
        %v549 = vld [vmem:[#allocation5 + $0x50] sm:$0xff]
        %v550 = vld [vmem:[#allocation5 + $0x58] sm:$0xff]
        %v551 = vld [vmem:[#allocation5 + $0x60] sm:$0xff]
        %v552 = vld [vmem:[#allocation5 + $0x68] sm:$0xff]
        %v553 = vld [vmem:[#allocation5 + $0x70] sm:$0xff]
        %v554 = vld [vmem:[#allocation5 + $0x78] sm:$0xff]
        %v555 = vld [vmem:[#allocation5 + $0x80] sm:$0xff]
        %v556 = vld [vmem:[#allocation5 + $0x88] sm:$0xff]
        %v557 = vld [vmem:[#allocation5 + $0x90] sm:$0xff]
        %v558 = vld [vmem:[#allocation5 + $0x98] sm:$0xff]
        %v559 = vld [vmem:[#allocation5 + $0xa0] sm:$0xff]
        %v560 = vld [vmem:[#allocation5 + $0xa8] sm:$0xff]
        %v561 = vld [vmem:[#allocation5 + $0xb0] sm:$0xff]
        %v562 = vld [vmem:[#allocation5 + $0xb8] sm:$0xff]
        %v563 = vld [vmem:[#allocation5 + $0xc0] sm:$0xff]
        %v564 = vld [vmem:[#allocation5 + $0xc8] sm:$0xff]
        %v565 = vld [vmem:[#allocation5 + $0xd0] sm:$0xff]
        %v566 = vld [vmem:[#allocation5 + $0xd8] sm:$0xff]
        %v567 = vld [vmem:[#allocation5 + $0xe0] sm:$0xff]
        %v568 = vld [vmem:[#allocation5 + $0xe8] sm:$0xff]
        %v569 = vld [vmem:[#allocation5 + $0xf0] sm:$0xff]
        %v570 = vld [vmem:[#allocation5 + $0xf8] sm:$0xff]
        %v571 = vld [vmem:[#allocation5 + $0x100] sm:$0xff]
        %v572 = vld [vmem:[#allocation5 + $0x108] sm:$0xff]
        %v573 = vld [vmem:[#allocation5 + $0x110] sm:$0xff]
        %v574 = vld [vmem:[#allocation5 + $0x118] sm:$0xff]
        %v575 = vld [vmem:[#allocation5 + $0x120] sm:$0xff]
        %v576 = vld [vmem:[#allocation5 + $0x128] sm:$0xff]
        %v577 = vld [vmem:[#allocation5 + $0x130] sm:$0xff]
        %v578 = vld [vmem:[#allocation5 + $0x138] sm:$0xff]
        %v579 = vld [vmem:[#allocation5 + $0x140] sm:$0xff]
        %v580 = vld [vmem:[#allocation5 + $0x148] sm:$0xff]
        %v581 = vld [vmem:[#allocation5 + $0x150] sm:$0xff]
        %v582 = vld [vmem:[#allocation5 + $0x158] sm:$0xff]
        %v583 = vld [vmem:[#allocation5 + $0x160] sm:$0xff]
        %v584 = vld [vmem:[#allocation5 + $0x168] sm:$0xff]
        %v585 = vld [vmem:[#allocation5 + $0x170] sm:$0xff]
        %v586 = vld [vmem:[#allocation5 + $0x178] sm:$0xff]
        %v587 = vld [vmem:[#allocation5 + $0x180] sm:$0xff]
        %v588 = vld [vmem:[#allocation5 + $0x188] sm:$0xff]
        %v589 = vld [vmem:[#allocation5 + $0x190] sm:$0xff]
        %v590 = vld [vmem:[#allocation5 + $0x198] sm:$0xff]
        %v591 = vld [vmem:[#allocation5 + $0x1a0] sm:$0xff]
        %v592 = vld [vmem:[#allocation5 + $0x1a8] sm:$0xff]
        %v593 = vld [vmem:[#allocation5 + $0x1b0] sm:$0xff]
        %v594 = vld [vmem:[#allocation5 + $0x1b8] sm:$0xff]
        %v595 = vld [vmem:[#allocation5 + $0x1c0] sm:$0xff]
        %v596 = vld [vmem:[#allocation5 + $0x1c8] sm:$0xff]
        %v597 = vld [vmem:[#allocation5 + $0x1d0] sm:$0xff]
        %v598 = vld [vmem:[#allocation5 + $0x1d8] sm:$0xff]
        %v599 = vld [vmem:[#allocation5 + $0x1e0] sm:$0xff]
        %v600 = vld [vmem:[#allocation5 + $0x1e8] sm:$0xff]
        %v601 = vld [vmem:[#allocation5 + $0x1f0] sm:$0xff]
        %v602 = vld [vmem:[#allocation5 + $0x1f8] sm:$0xff]
        %v603 = vld [vmem:[#allocation5 + $0x200] sm:$0xff]
        %v604 = vld [vmem:[#allocation5 + $0x208] sm:$0xff]
        %v605 = vld [vmem:[#allocation5 + $0x210] sm:$0xff]
        %v606 = vld [vmem:[#allocation5 + $0x218] sm:$0xff]
        %v607 = vld [vmem:[#allocation5 + $0x220] sm:$0xff]
        %v608 = vld [vmem:[#allocation5 + $0x228] sm:$0xff]
        %v609 = vld [vmem:[#allocation5 + $0x230] sm:$0xff]
        %v610 = vld [vmem:[#allocation5 + $0x238] sm:$0xff]
        %v611 = vld [vmem:[#allocation5 + $0x240] sm:$0xff]
        %v612 = vld [vmem:[#allocation5 + $0x248] sm:$0xff]
        %v613 = vld [vmem:[#allocation5 + $0x250] sm:$0xff]
        %v614 = vld [vmem:[#allocation5 + $0x258] sm:$0xff]
        %v615 = vld [vmem:[#allocation5 + $0x260] sm:$0xff]
        %v616 = vld [vmem:[#allocation5 + $0x268] sm:$0xff]
        %v617 = vld [vmem:[#allocation5 + $0x270] sm:$0xff]
        %v618 = vld [vmem:[#allocation5 + $0x278] sm:$0xff]
        %v619 = vld [vmem:[#allocation5 + $0x280] sm:$0xff]
        %v620 = vld [vmem:[#allocation5 + $0x288] sm:$0xff]
        %v621 = vld [vmem:[#allocation5 + $0x290] sm:$0xff]
        %v622 = vld [vmem:[#allocation5 + $0x298] sm:$0xff]
        %v623 = vld [vmem:[#allocation5 + $0x2a0] sm:$0xff]
        %v624 = vld [vmem:[#allocation5 + $0x2a8] sm:$0xff]
        %v625 = vld [vmem:[#allocation5 + $0x2b0] sm:$0xff]
        %v626 = vld [vmem:[#allocation5 + $0x2b8] sm:$0xff]
        %v627 = vld [vmem:[#allocation5 + $0x2c0] sm:$0xff]
        %v628 = vld [vmem:[#allocation5 + $0x2c8] sm:$0xff]
        %v629 = vld [vmem:[#allocation5 + $0x2d0] sm:$0xff]
        %v630 = vld [vmem:[#allocation5 + $0x2d8] sm:$0xff]
        %v631 = vld [vmem:[#allocation5 + $0x2e0] sm:$0xff]
        %v632 = vld [vmem:[#allocation5 + $0x2e8] sm:$0xff]
        %v633 = vld [vmem:[#allocation5 + $0x2f0] sm:$0xff]
        %v634 = vld [vmem:[#allocation5 + $0x2f8] sm:$0xff]
        %v731 = vunpack.c.l.b16 %v539
        %v732 = vunpack.c.h.b16 %v539
        %v733 = vunpack.c.l.b16 %v540
        %v734 = vunpack.c.h.b16 %v540
        %v735 = vunpack.c.l.b16 %v541
        %v736 = vunpack.c.h.b16 %v541
        %v737 = vunpack.c.l.b16 %v542
        %v738 = vunpack.c.h.b16 %v542
        %v739 = vunpack.c.l.b16 %v543
        %v740 = vunpack.c.h.b16 %v543
        %v741 = vunpack.c.l.b16 %v544
        %v742 = vunpack.c.h.b16 %v544
        %v743 = vunpack.c.l.b16 %v545
        %v744 = vunpack.c.h.b16 %v545
        %v745 = vunpack.c.l.b16 %v546
        %v746 = vunpack.c.h.b16 %v546
        %v747 = vunpack.c.l.b16 %v547
        %v748 = vunpack.c.h.b16 %v547
        %v749 = vunpack.c.l.b16 %v548
        %v750 = vunpack.c.h.b16 %v548
        %v751 = vunpack.c.l.b16 %v549
        %v752 = vunpack.c.h.b16 %v549
        %v753 = vunpack.c.l.b16 %v550
        %v754 = vunpack.c.h.b16 %v550
        %v755 = vunpack.c.l.b16 %v551
        %v756 = vunpack.c.h.b16 %v551
        %v757 = vunpack.c.l.b16 %v552
        %v758 = vunpack.c.h.b16 %v552
        %v759 = vunpack.c.l.b16 %v553
        %v760 = vunpack.c.h.b16 %v553
        %v761 = vunpack.c.l.b16 %v554
        %v762 = vunpack.c.h.b16 %v554
        %v763 = vunpack.c.l.b16 %v555
        %v764 = vunpack.c.h.b16 %v555
        %v765 = vunpack.c.l.b16 %v556
        %v766 = vunpack.c.h.b16 %v556
        %v767 = vunpack.c.l.b16 %v557
        %v768 = vunpack.c.h.b16 %v557
        %v769 = vunpack.c.l.b16 %v558
        %v770 = vunpack.c.h.b16 %v558
        %v771 = vunpack.c.l.b16 %v559
        %v772 = vunpack.c.h.b16 %v559
        %v773 = vunpack.c.l.b16 %v560
        %v774 = vunpack.c.h.b16 %v560
        %v775 = vunpack.c.l.b16 %v561
        %v776 = vunpack.c.h.b16 %v561
        %v777 = vunpack.c.l.b16 %v562
        %v778 = vunpack.c.h.b16 %v562
        %v779 = vunpack.c.l.b16 %v563
        %v780 = vunpack.c.h.b16 %v563
        %v781 = vunpack.c.l.b16 %v564
        %v782 = vunpack.c.h.b16 %v564
        %v783 = vunpack.c.l.b16 %v565
        %v784 = vunpack.c.h.b16 %v565
        %v785 = vunpack.c.l.b16 %v566
        %v786 = vunpack.c.h.b16 %v566
        %v787 = vunpack.c.l.b16 %v567
        %v788 = vunpack.c.h.b16 %v567
        %v789 = vunpack.c.l.b16 %v568
        %v790 = vunpack.c.h.b16 %v568
        %v791 = vunpack.c.l.b16 %v569
        %v792 = vunpack.c.h.b16 %v569
        %v793 = vunpack.c.l.b16 %v570
        %v794 = vunpack.c.h.b16 %v570
        %v795 = vunpack.c.l.b16 %v571
        %v796 = vunpack.c.h.b16 %v571
        %v797 = vunpack.c.l.b16 %v572
        %v798 = vunpack.c.h.b16 %v572
        %v799 = vunpack.c.l.b16 %v573
        %v800 = vunpack.c.h.b16 %v573
        %v801 = vunpack.c.l.b16 %v574
        %v802 = vunpack.c.h.b16 %v574
        %v803 = vunpack.c.l.b16 %v575
        %v804 = vunpack.c.h.b16 %v575
        %v805 = vunpack.c.l.b16 %v576
        %v806 = vunpack.c.h.b16 %v576
        %v807 = vunpack.c.l.b16 %v577
        %v808 = vunpack.c.h.b16 %v577
        %v809 = vunpack.c.l.b16 %v578
        %v810 = vunpack.c.h.b16 %v578
        %v811 = vunpack.c.l.b16 %v579
        %v812 = vunpack.c.h.b16 %v579
        %v813 = vunpack.c.l.b16 %v580
        %v814 = vunpack.c.h.b16 %v580
        %v815 = vunpack.c.l.b16 %v581
        %v816 = vunpack.c.h.b16 %v581
        %v817 = vunpack.c.l.b16 %v582
        %v818 = vunpack.c.h.b16 %v582
        %v819 = vunpack.c.l.b16 %v583
        %v820 = vunpack.c.h.b16 %v583
        %v821 = vunpack.c.l.b16 %v584
        %v822 = vunpack.c.h.b16 %v584
        %v823 = vunpack.c.l.b16 %v585
        %v824 = vunpack.c.h.b16 %v585
        %v825 = vunpack.c.l.b16 %v586
        %v826 = vunpack.c.h.b16 %v586
        %v827 = vunpack.c.l.b16 %v587
        %v828 = vunpack.c.h.b16 %v587
        %v829 = vunpack.c.l.b16 %v588
        %v830 = vunpack.c.h.b16 %v588
        %v831 = vunpack.c.l.b16 %v589
        %v832 = vunpack.c.h.b16 %v589
        %v833 = vunpack.c.l.b16 %v590
        %v834 = vunpack.c.h.b16 %v590
        %v835 = vunpack.c.l.b16 %v591
        %v836 = vunpack.c.h.b16 %v591
        %v837 = vunpack.c.l.b16 %v592
        %v838 = vunpack.c.h.b16 %v592
        %v839 = vunpack.c.l.b16 %v593
        %v840 = vunpack.c.h.b16 %v593
        %v841 = vunpack.c.l.b16 %v594
        %v842 = vunpack.c.h.b16 %v594
        %v843 = vunpack.c.l.b16 %v595
        %v844 = vunpack.c.h.b16 %v595
        %v845 = vunpack.c.l.b16 %v596
        %v846 = vunpack.c.h.b16 %v596
        %v847 = vunpack.c.l.b16 %v597
        %v848 = vunpack.c.h.b16 %v597
        %v849 = vunpack.c.l.b16 %v598
        %v850 = vunpack.c.h.b16 %v598
        %v851 = vunpack.c.l.b16 %v599
        %v852 = vunpack.c.h.b16 %v599
        %v853 = vunpack.c.l.b16 %v600
        %v854 = vunpack.c.h.b16 %v600
        %v855 = vunpack.c.l.b16 %v601
        %v856 = vunpack.c.h.b16 %v601
        %v857 = vunpack.c.l.b16 %v602
        %v858 = vunpack.c.h.b16 %v602
        %v859 = vunpack.c.l.b16 %v603
        %v860 = vunpack.c.h.b16 %v603
        %v861 = vunpack.c.l.b16 %v604
        %v862 = vunpack.c.h.b16 %v604
        %v863 = vunpack.c.l.b16 %v605
        %v864 = vunpack.c.h.b16 %v605
        %v865 = vunpack.c.l.b16 %v606
        %v866 = vunpack.c.h.b16 %v606
        %v867 = vunpack.c.l.b16 %v607
        %v868 = vunpack.c.h.b16 %v607
        %v869 = vunpack.c.l.b16 %v608
        %v870 = vunpack.c.h.b16 %v608
        %v871 = vunpack.c.l.b16 %v609
        %v872 = vunpack.c.h.b16 %v609
        %v873 = vunpack.c.l.b16 %v610
        %v874 = vunpack.c.h.b16 %v610
        %v875 = vunpack.c.l.b16 %v611
        %v876 = vunpack.c.h.b16 %v611
        %v877 = vunpack.c.l.b16 %v612
        %v878 = vunpack.c.h.b16 %v612
        %v879 = vunpack.c.l.b16 %v613
        %v880 = vunpack.c.h.b16 %v613
        %v881 = vunpack.c.l.b16 %v614
        %v882 = vunpack.c.h.b16 %v614
        %v883 = vunpack.c.l.b16 %v615
        %v884 = vunpack.c.h.b16 %v615
        %v885 = vunpack.c.l.b16 %v616
        %v886 = vunpack.c.h.b16 %v616
        %v887 = vunpack.c.l.b16 %v617
        %v888 = vunpack.c.h.b16 %v617
        %v889 = vunpack.c.l.b16 %v618
        %v890 = vunpack.c.h.b16 %v618
        %v891 = vunpack.c.l.b16 %v619
        %v892 = vunpack.c.h.b16 %v619
        %v893 = vunpack.c.l.b16 %v620
        %v894 = vunpack.c.h.b16 %v620
        %v895 = vunpack.c.l.b16 %v621
        %v896 = vunpack.c.h.b16 %v621
        %v897 = vunpack.c.l.b16 %v622
        %v898 = vunpack.c.h.b16 %v622
        %v899 = vunpack.c.l.b16 %v623
        %v900 = vunpack.c.h.b16 %v623
        %v901 = vunpack.c.l.b16 %v624
        %v902 = vunpack.c.h.b16 %v624
        %v903 = vunpack.c.l.b16 %v625
        %v904 = vunpack.c.h.b16 %v625
        %v905 = vunpack.c.l.b16 %v626
        %v906 = vunpack.c.h.b16 %v626
        %v907 = vunpack.c.l.b16 %v627
        %v908 = vunpack.c.h.b16 %v627
        %v909 = vunpack.c.l.b16 %v628
        %v910 = vunpack.c.h.b16 %v628
        %v911 = vunpack.c.l.b16 %v629
        %v912 = vunpack.c.h.b16 %v629
        %v913 = vunpack.c.l.b16 %v630
        %v914 = vunpack.c.h.b16 %v630
        %v915 = vunpack.c.l.b16 %v631
        %v916 = vunpack.c.h.b16 %v631
        %v917 = vunpack.c.l.b16 %v632
        %v918 = vunpack.c.h.b16 %v632
        %v919 = vunpack.c.l.b16 %v633
        %v920 = vunpack.c.h.b16 %v633
        %v921 = vunpack.c.l.b16 %v634
        %v922 = vunpack.c.h.b16 %v634
        %v923 = vpack.c.b16 %v743, %v731
        %v924 = vpack.c.b16 %v744, %v732
        %v925 = vpack.c.b16 %v745, %v733
        %v926 = vpack.c.b16 %v746, %v734
        %v927 = vpack.c.b16 %v747, %v735
        %v928 = vpack.c.b16 %v748, %v736
        %v929 = vpack.c.b16 %v749, %v737
        %v930 = vpack.c.b16 %v750, %v738
        %v931 = vpack.c.b16 %v751, %v739
        %v932 = vpack.c.b16 %v752, %v740
        %v933 = vpack.c.b16 %v753, %v741
        %v934 = vpack.c.b16 %v754, %v742
        %v935 = vpack.c.b16 %v767, %v755
        %v936 = vpack.c.b16 %v768, %v756
        %v937 = vpack.c.b16 %v769, %v757
        %v938 = vpack.c.b16 %v770, %v758
        %v939 = vpack.c.b16 %v771, %v759
        %v940 = vpack.c.b16 %v772, %v760
        %v941 = vpack.c.b16 %v773, %v761
        %v942 = vpack.c.b16 %v774, %v762
        %v943 = vpack.c.b16 %v775, %v763
        %v944 = vpack.c.b16 %v776, %v764
        %v945 = vpack.c.b16 %v777, %v765
        %v946 = vpack.c.b16 %v778, %v766
        %v947 = vpack.c.b16 %v791, %v779
        %v948 = vpack.c.b16 %v792, %v780
        %v949 = vpack.c.b16 %v793, %v781
        %v950 = vpack.c.b16 %v794, %v782
        %v951 = vpack.c.b16 %v795, %v783
        %v952 = vpack.c.b16 %v796, %v784
        %v953 = vpack.c.b16 %v797, %v785
        %v954 = vpack.c.b16 %v798, %v786
        %v955 = vpack.c.b16 %v799, %v787
        %v956 = vpack.c.b16 %v800, %v788
        %v957 = vpack.c.b16 %v801, %v789
        %v958 = vpack.c.b16 %v802, %v790
        %v959 = vpack.c.b16 %v815, %v803
        %v960 = vpack.c.b16 %v816, %v804
        %v961 = vpack.c.b16 %v817, %v805
        %v962 = vpack.c.b16 %v818, %v806
        %v963 = vpack.c.b16 %v819, %v807
        %v964 = vpack.c.b16 %v820, %v808
        %v965 = vpack.c.b16 %v821, %v809
        %v966 = vpack.c.b16 %v822, %v810
        %v967 = vpack.c.b16 %v823, %v811
        %v968 = vpack.c.b16 %v824, %v812
        %v969 = vpack.c.b16 %v825, %v813
        %v970 = vpack.c.b16 %v826, %v814
        %v971 = vpack.c.b16 %v839, %v827
        %v972 = vpack.c.b16 %v840, %v828
        %v973 = vpack.c.b16 %v841, %v829
        %v974 = vpack.c.b16 %v842, %v830
        %v975 = vpack.c.b16 %v843, %v831
        %v976 = vpack.c.b16 %v844, %v832
        %v977 = vpack.c.b16 %v845, %v833
        %v978 = vpack.c.b16 %v846, %v834
        %v979 = vpack.c.b16 %v847, %v835
        %v980 = vpack.c.b16 %v848, %v836
        %v981 = vpack.c.b16 %v849, %v837
        %v982 = vpack.c.b16 %v850, %v838
        %v983 = vpack.c.b16 %v863, %v851
        %v984 = vpack.c.b16 %v864, %v852
        %v985 = vpack.c.b16 %v865, %v853
        %v986 = vpack.c.b16 %v866, %v854
        %v987 = vpack.c.b16 %v867, %v855
        %v988 = vpack.c.b16 %v868, %v856
        %v989 = vpack.c.b16 %v869, %v857
        %v990 = vpack.c.b16 %v870, %v858
        %v991 = vpack.c.b16 %v871, %v859
        %v992 = vpack.c.b16 %v872, %v860
        %v993 = vpack.c.b16 %v873, %v861
        %v994 = vpack.c.b16 %v874, %v862
        %v995 = vpack.c.b16 %v887, %v875
        %v996 = vpack.c.b16 %v888, %v876
        %v997 = vpack.c.b16 %v889, %v877
        %v998 = vpack.c.b16 %v890, %v878
        %v999 = vpack.c.b16 %v891, %v879
        %v1000 = vpack.c.b16 %v892, %v880
        %v1001 = vpack.c.b16 %v893, %v881
        %v1002 = vpack.c.b16 %v894, %v882
        %v1003 = vpack.c.b16 %v895, %v883
        %v1004 = vpack.c.b16 %v896, %v884
        %v1005 = vpack.c.b16 %v897, %v885
        %v1006 = vpack.c.b16 %v898, %v886
        %v1007 = vpack.c.b16 %v911, %v899
        %v1008 = vpack.c.b16 %v912, %v900
        %v1009 = vpack.c.b16 %v913, %v901
        %v1010 = vpack.c.b16 %v914, %v902
        %v1011 = vpack.c.b16 %v915, %v903
        %v1012 = vpack.c.b16 %v916, %v904
        %v1013 = vpack.c.b16 %v917, %v905
        %v1014 = vpack.c.b16 %v918, %v906
        %v1015 = vpack.c.b16 %v919, %v907
        %v1016 = vpack.c.b16 %v920, %v908
        %v1017 = vpack.c.b16 %v921, %v909
        %v1018 = vpack.c.b16 %v922, %v910
        %1115 = vmatprep.subr.bf16.mxu0 %v924
        %1116 = vmatpush1.bf16.msra.mxu0 %v923
        %1117 = vmatprep.subr.bf16.mxu0 %v936
        %1118 = vmatpush1.bf16.msra.mxu0 %v935
        %1119 = vmatprep.subr.bf16.mxu0 %v948
        %1120 = vmatpush1.bf16.msra.mxu0 %v947
        %1121 = vmatprep.subr.bf16.mxu0 %v960
        %1122 = vmatpush1.bf16.msra.mxu0 %v959
        %1123 = vmatprep.subr.bf16.mxu0 %v972
        %1124 = vmatpush1.bf16.msra.mxu0 %v971
        %1125 = vmatprep.subr.bf16.mxu0 %v984
        %1126 = vmatpush1.bf16.msra.mxu0 %v983
        %1127 = vmatprep.subr.bf16.mxu0 %v996
        %1128 = vmatpush1.bf16.msra.mxu0 %v995
        %1129 = vmatprep.subr.bf16.mxu0 %v1008
        %1130 = vmatpush1.bf16.msra.mxu0 %v1007
        %1131 = vmatprep.subr.bf16.mxu0 0
        %1132 = vmatpush1.bf16.msra.mxu0 0
        %1133 = vmatprep.subr.bf16.mxu0 0
        %1134 = vmatpush1.bf16.msra.mxu0 0
        %1135 = vmatprep.subr.bf16.mxu0 0
        %1136 = vmatpush1.bf16.msra.mxu0 0
        %1137 = vmatprep.subr.bf16.mxu0 0
        %1138 = vmatpush1.bf16.msra.mxu0 0
        %1139 = vmatprep.subr.bf16.mxu0 0
        %1140 = vmatpush1.bf16.msra.mxu0 0
        %1141 = vmatprep.subr.bf16.mxu0 0
        %1142 = vmatpush1.bf16.msra.mxu0 0
        %1143 = vmatprep.subr.bf16.mxu0 0
        %1144 = vmatpush1.bf16.msra.mxu0 0
        %1145 = vmatprep.subr.bf16.mxu0 0
        %1146 = vmatpush1.bf16.msra.mxu0 0
        %1147 = vmatprep.mubr.bf16.mxu0 0
        %1148 = vmatmul.mubr.bf16.gmra.mrb[0].mxu0 %v537
        %v1149 = vpop.f32.mrb[0].mxu0
        %v1150 = vadd.f32 0.0, %v1149
        %v1151 = vpop.f32.mrb[0].mxu0
        %v1152 = vadd.f32 0.0, %v1151
        %v1153 = vpop.f32.mrb[0].mxu0
        %v1154 = vadd.f32 0.0, %v1153
        %v1155 = vpop.f32.mrb[0].mxu0
        %v1156 = vadd.f32 0.0, %v1155
        %1157 = vmatprep.mubr.bf16.mxu0 0
        %1158 = vmatmul.mubr.bf16.gmra.mrb[0].mxu0 %v538
        %v1159 = vpop.f32.mrb[0].mxu0
        %v1160 = vadd.f32 0.0, %v1159
        %v1161 = vpop.f32.mrb[0].mxu0
        %v1162 = vadd.f32 0.0, %v1161
        %v1163 = vpop.f32.mrb[0].mxu0
        %v1164 = vadd.f32 0.0, %v1163
        %v1165 = vpop.f32.mrb[0].mxu0
        %v1166 = vadd.f32 0.0, %v1165
        %1167 = vdwg.mxu0
        %1168 = vmatprep.subr.bf16.mxu0 %v926
        %1169 = vmatpush1.bf16.msra.mxu0 %v925
        %1170 = vmatprep.subr.bf16.mxu0 %v938
        %1171 = vmatpush1.bf16.msra.mxu0 %v937
        %1172 = vmatprep.subr.bf16.mxu0 %v950
        %1173 = vmatpush1.bf16.msra.mxu0 %v949
        %1174 = vmatprep.subr.bf16.mxu0 %v962
        %1175 = vmatpush1.bf16.msra.mxu0 %v961
        %1176 = vmatprep.subr.bf16.mxu0 %v974
        %1177 = vmatpush1.bf16.msra.mxu0 %v973
        %1178 = vmatprep.subr.bf16.mxu0 %v986
        %1179 = vmatpush1.bf16.msra.mxu0 %v985
        %1180 = vmatprep.subr.bf16.mxu0 %v998
        %1181 = vmatpush1.bf16.msra.mxu0 %v997
        %1182 = vmatprep.subr.bf16.mxu0 %v1010
        %1183 = vmatpush1.bf16.msra.mxu0 %v1009
        %1184 = vmatprep.subr.bf16.mxu0 0
        %1185 = vmatpush1.bf16.msra.mxu0 0
        %1186 = vmatprep.subr.bf16.mxu0 0
        %1187 = vmatpush1.bf16.msra.mxu0 0
        %1188 = vmatprep.subr.bf16.mxu0 0
        %1189 = vmatpush1.bf16.msra.mxu0 0
        %1190 = vmatprep.subr.bf16.mxu0 0
        %1191 = vmatpush1.bf16.msra.mxu0 0
        %1192 = vmatprep.subr.bf16.mxu0 0
        %1193 = vmatpush1.bf16.msra.mxu0 0
        %1194 = vmatprep.subr.bf16.mxu0 0
        %1195 = vmatpush1.bf16.msra.mxu0 0
        %1196 = vmatprep.subr.bf16.mxu0 0
        %1197 = vmatpush1.bf16.msra.mxu0 0
        %1198 = vmatprep.subr.bf16.mxu0 0
        %1199 = vmatpush1.bf16.msra.mxu0 0
        %1200 = vmatprep.mubr.bf16.mxu0 0
        %1201 = vmatmul.mubr.bf16.gmra.mrb[0].mxu0 %v537
        %v1202 = vpop.f32.mrb[0].mxu0
        %v1203 = vadd.f32 0.0, %v1202
        %v1204 = vpop.f32.mrb[0].mxu0
        %v1205 = vadd.f32 0.0, %v1204
        %v1206 = vpop.f32.mrb[0].mxu0
        %v1207 = vadd.f32 0.0, %v1206
        %v1208 = vpop.f32.mrb[0].mxu0
        %v1209 = vadd.f32 0.0, %v1208
        %1210 = vmatprep.mubr.bf16.mxu0 0
        %1211 = vmatmul.mubr.bf16.gmra.mrb[0].mxu0 %v538
        %v1212 = vpop.f32.mrb[0].mxu0
        %v1213 = vadd.f32 0.0, %v1212
        %v1214 = vpop.f32.mrb[0].mxu0
        %v1215 = vadd.f32 0.0, %v1214
        %v1216 = vpop.f32.mrb[0].mxu0
        %v1217 = vadd.f32 0.0, %v1216
        %v1218 = vpop.f32.mrb[0].mxu0
        %v1219 = vadd.f32 0.0, %v1218
        %1220 = vdwg.mxu0
        %1221 = vmatprep.subr.bf16.mxu0 %v928
        %1222 = vmatpush1.bf16.msra.mxu0 %v927
        %1223 = vmatprep.subr.bf16.mxu0 %v940
        %1224 = vmatpush1.bf16.msra.mxu0 %v939
        %1225 = vmatprep.subr.bf16.mxu0 %v952
        %1226 = vmatpush1.bf16.msra.mxu0 %v951
        %1227 = vmatprep.subr.bf16.mxu0 %v964
        %1228 = vmatpush1.bf16.msra.mxu0 %v963
        %1229 = vmatprep.subr.bf16.mxu0 %v976
        %1230 = vmatpush1.bf16.msra.mxu0 %v975
        %1231 = vmatprep.subr.bf16.mxu0 %v988
        %1232 = vmatpush1.bf16.msra.mxu0 %v987
        %1233 = vmatprep.subr.bf16.mxu0 %v1000
        %1234 = vmatpush1.bf16.msra.mxu0 %v999
        %1235 = vmatprep.subr.bf16.mxu0 %v1012
        %1236 = vmatpush1.bf16.msra.mxu0 %v1011
        %1237 = vmatprep.subr.bf16.mxu0 0
        %1238 = vmatpush1.bf16.msra.mxu0 0
        %1239 = vmatprep.subr.bf16.mxu0 0
        %1240 = vmatpush1.bf16.msra.mxu0 0
        %1241 = vmatprep.subr.bf16.mxu0 0
        %1242 = vmatpush1.bf16.msra.mxu0 0
        %1243 = vmatprep.subr.bf16.mxu0 0
        %1244 = vmatpush1.bf16.msra.mxu0 0
        %1245 = vmatprep.subr.bf16.mxu0 0
        %1246 = vmatpush1.bf16.msra.mxu0 0
        %1247 = vmatprep.subr.bf16.mxu0 0
        %1248 = vmatpush1.bf16.msra.mxu0 0
        %1249 = vmatprep.subr.bf16.mxu0 0
        %1250 = vmatpush1.bf16.msra.mxu0 0
        %1251 = vmatprep.subr.bf16.mxu0 0
        %1252 = vmatpush1.bf16.msra.mxu0 0
        %1253 = vmatprep.mubr.bf16.mxu0 0
        %1254 = vmatmul.mubr.bf16.gmra.mrb[0].mxu0 %v537
        %v1255 = vpop.f32.mrb[0].mxu0
        %v1256 = vadd.f32 0.0, %v1255
        %v1257 = vpop.f32.mrb[0].mxu0
        %v1258 = vadd.f32 0.0, %v1257
        %v1259 = vpop.f32.mrb[0].mxu0
        %v1260 = vadd.f32 0.0, %v1259
        %v1261 = vpop.f32.mrb[0].mxu0
        %v1262 = vadd.f32 0.0, %v1261
        %1263 = vmatprep.mubr.bf16.mxu0 0
        %1264 = vmatmul.mubr.bf16.gmra.mrb[0].mxu0 %v538
        %v1265 = vpop.f32.mrb[0].mxu0
        %v1266 = vadd.f32 0.0, %v1265
        %v1267 = vpop.f32.mrb[0].mxu0
        %v1268 = vadd.f32 0.0, %v1267
        %v1269 = vpop.f32.mrb[0].mxu0
        %v1270 = vadd.f32 0.0, %v1269
        %v1271 = vpop.f32.mrb[0].mxu0
        %v1272 = vadd.f32 0.0, %v1271
        %1273 = vdwg.mxu0
        %1274 = vmatprep.subr.bf16.mxu0 %v930
        %1275 = vmatpush1.bf16.msra.mxu0 %v929
        %1276 = vmatprep.subr.bf16.mxu0 %v942
        %1277 = vmatpush1.bf16.msra.mxu0 %v941
        %1278 = vmatprep.subr.bf16.mxu0 %v954
        %1279 = vmatpush1.bf16.msra.mxu0 %v953
        %1280 = vmatprep.subr.bf16.mxu0 %v966
        %1281 = vmatpush1.bf16.msra.mxu0 %v965
        %1282 = vmatprep.subr.bf16.mxu0 %v978
        %1283 = vmatpush1.bf16.msra.mxu0 %v977
        %1284 = vmatprep.subr.bf16.mxu0 %v990
        %1285 = vmatpush1.bf16.msra.mxu0 %v989
        %1286 = vmatprep.subr.bf16.mxu0 %v1002
        %1287 = vmatpush1.bf16.msra.mxu0 %v1001
        %1288 = vmatprep.subr.bf16.mxu0 %v1014
        %1289 = vmatpush1.bf16.msra.mxu0 %v1013
        %1290 = vmatprep.subr.bf16.mxu0 0
        %1291 = vmatpush1.bf16.msra.mxu0 0
        %1292 = vmatprep.subr.bf16.mxu0 0
        %1293 = vmatpush1.bf16.msra.mxu0 0
        %1294 = vmatprep.subr.bf16.mxu0 0
        %1295 = vmatpush1.bf16.msra.mxu0 0
        %1296 = vmatprep.subr.bf16.mxu0 0
        %1297 = vmatpush1.bf16.msra.mxu0 0
        %1298 = vmatprep.subr.bf16.mxu0 0
        %1299 = vmatpush1.bf16.msra.mxu0 0
        %1300 = vmatprep.subr.bf16.mxu0 0
        %1301 = vmatpush1.bf16.msra.mxu0 0
        %1302 = vmatprep.subr.bf16.mxu0 0
        %1303 = vmatpush1.bf16.msra.mxu0 0
        %1304 = vmatprep.subr.bf16.mxu0 0
        %1305 = vmatpush1.bf16.msra.mxu0 0
        %1306 = vmatprep.mubr.bf16.mxu0 0
        %1307 = vmatmul.mubr.bf16.gmra.mrb[0].mxu0 %v537
        %v1308 = vpop.f32.mrb[0].mxu0
        %v1309 = vadd.f32 0.0, %v1308
        %v1310 = vpop.f32.mrb[0].mxu0
        %v1311 = vadd.f32 0.0, %v1310
        %v1312 = vpop.f32.mrb[0].mxu0
        %v1313 = vadd.f32 0.0, %v1312
        %v1314 = vpop.f32.mrb[0].mxu0
        %v1315 = vadd.f32 0.0, %v1314
        %1316 = vmatprep.mubr.bf16.mxu0 0
        %1317 = vmatmul.mubr.bf16.gmra.mrb[0].mxu0 %v538
        %v1318 = vpop.f32.mrb[0].mxu0
        %v1319 = vadd.f32 0.0, %v1318
        %v1320 = vpop.f32.mrb[0].mxu0
        %v1321 = vadd.f32 0.0, %v1320
        %v1322 = vpop.f32.mrb[0].mxu0
        %v1323 = vadd.f32 0.0, %v1322
        %v1324 = vpop.f32.mrb[0].mxu0
        %v1325 = vadd.f32 0.0, %v1324
        %1326 = vdwg.mxu0
        %1327 = vmatprep.subr.bf16.mxu0 %v932
        %1328 = vmatpush1.bf16.msra.mxu0 %v931
        %1329 = vmatprep.subr.bf16.mxu0 %v944
        %1330 = vmatpush1.bf16.msra.mxu0 %v943
        %1331 = vmatprep.subr.bf16.mxu0 %v956
        %1332 = vmatpush1.bf16.msra.mxu0 %v955
        %1333 = vmatprep.subr.bf16.mxu0 %v968
        %1334 = vmatpush1.bf16.msra.mxu0 %v967
        %1335 = vmatprep.subr.bf16.mxu0 %v980
        %1336 = vmatpush1.bf16.msra.mxu0 %v979
        %1337 = vmatprep.subr.bf16.mxu0 %v992
        %1338 = vmatpush1.bf16.msra.mxu0 %v991
        %1339 = vmatprep.subr.bf16.mxu0 %v1004
        %1340 = vmatpush1.bf16.msra.mxu0 %v1003
        %1341 = vmatprep.subr.bf16.mxu0 %v1016
        %1342 = vmatpush1.bf16.msra.mxu0 %v1015
        %1343 = vmatprep.subr.bf16.mxu0 0
        %1344 = vmatpush1.bf16.msra.mxu0 0
        %1345 = vmatprep.subr.bf16.mxu0 0
        %1346 = vmatpush1.bf16.msra.mxu0 0
        %1347 = vmatprep.subr.bf16.mxu0 0
        %1348 = vmatpush1.bf16.msra.mxu0 0
        %1349 = vmatprep.subr.bf16.mxu0 0
        %1350 = vmatpush1.bf16.msra.mxu0 0
        %1351 = vmatprep.subr.bf16.mxu0 0
        %1352 = vmatpush1.bf16.msra.mxu0 0
        %1353 = vmatprep.subr.bf16.mxu0 0
        %1354 = vmatpush1.bf16.msra.mxu0 0
        %1355 = vmatprep.subr.bf16.mxu0 0
        %1356 = vmatpush1.bf16.msra.mxu0 0
        %1357 = vmatprep.subr.bf16.mxu0 0
        %1358 = vmatpush1.bf16.msra.mxu0 0
        %1359 = vmatprep.mubr.bf16.mxu0 0
        %1360 = vmatmul.mubr.bf16.gmra.mrb[0].mxu0 %v537
        %v1361 = vpop.f32.mrb[0].mxu0
        %v1362 = vadd.f32 0.0, %v1361
        %v1363 = vpop.f32.mrb[0].mxu0
        %v1364 = vadd.f32 0.0, %v1363
        %v1365 = vpop.f32.mrb[0].mxu0
        %v1366 = vadd.f32 0.0, %v1365
        %v1367 = vpop.f32.mrb[0].mxu0
        %v1368 = vadd.f32 0.0, %v1367
        %1369 = vmatprep.mubr.bf16.mxu0 0
        %1370 = vmatmul.mubr.bf16.gmra.mrb[0].mxu0 %v538
        %v1371 = vpop.f32.mrb[0].mxu0
        %v1372 = vadd.f32 0.0, %v1371
        %v1373 = vpop.f32.mrb[0].mxu0
        %v1374 = vadd.f32 0.0, %v1373
        %v1375 = vpop.f32.mrb[0].mxu0
        %v1376 = vadd.f32 0.0, %v1375
        %v1377 = vpop.f32.mrb[0].mxu0
        %v1378 = vadd.f32 0.0, %v1377
        %1379 = vdwg.mxu0
        %1380 = vmatprep.subr.bf16.mxu0 %v934
        %1381 = vmatpush1.bf16.msra.mxu0 %v933
        %1382 = vmatprep.subr.bf16.mxu0 %v946
        %1383 = vmatpush1.bf16.msra.mxu0 %v945
        %1384 = vmatprep.subr.bf16.mxu0 %v958
        %1385 = vmatpush1.bf16.msra.mxu0 %v957
        %1386 = vmatprep.subr.bf16.mxu0 %v970
        %1387 = vmatpush1.bf16.msra.mxu0 %v969
        %1388 = vmatprep.subr.bf16.mxu0 %v982
        %1389 = vmatpush1.bf16.msra.mxu0 %v981
        %1390 = vmatprep.subr.bf16.mxu0 %v994
        %1391 = vmatpush1.bf16.msra.mxu0 %v993
        %1392 = vmatprep.subr.bf16.mxu0 %v1006
        %1393 = vmatpush1.bf16.msra.mxu0 %v1005
        %1394 = vmatprep.subr.bf16.mxu0 %v1018
        %1395 = vmatpush1.bf16.msra.mxu0 %v1017
        %1396 = vmatprep.subr.bf16.mxu0 0
        %1397 = vmatpush1.bf16.msra.mxu0 0
        %1398 = vmatprep.subr.bf16.mxu0 0
        %1399 = vmatpush1.bf16.msra.mxu0 0
        %1400 = vmatprep.subr.bf16.mxu0 0
        %1401 = vmatpush1.bf16.msra.mxu0 0
        %1402 = vmatprep.subr.bf16.mxu0 0
        %1403 = vmatpush1.bf16.msra.mxu0 0
        %1404 = vmatprep.subr.bf16.mxu0 0
        %1405 = vmatpush1.bf16.msra.mxu0 0
        %1406 = vmatprep.subr.bf16.mxu0 0
        %1407 = vmatpush1.bf16.msra.mxu0 0
        %1408 = vmatprep.subr.bf16.mxu0 0
        %1409 = vmatpush1.bf16.msra.mxu0 0
        %1410 = vmatprep.subr.bf16.mxu0 0
        %1411 = vmatpush1.bf16.msra.mxu0 0
        %1412 = vmatprep.mubr.bf16.mxu0 0
        %1413 = vmatmul.mubr.bf16.gmra.mrb[0].mxu0 %v537
        %v1414 = vpop.f32.mrb[0].mxu0
        %v1415 = vadd.f32 0.0, %v1414
        %v1416 = vpop.f32.mrb[0].mxu0
        %v1417 = vadd.f32 0.0, %v1416
        %v1418 = vpop.f32.mrb[0].mxu0
        %v1419 = vadd.f32 0.0, %v1418
        %v1420 = vpop.f32.mrb[0].mxu0
        %v1421 = vadd.f32 0.0, %v1420
        %1422 = vmatprep.mubr.bf16.mxu0 0
        %1423 = vmatmul.mubr.bf16.gmra.mrb[0].mxu0 %v538
        %v1424 = vpop.f32.mrb[0].mxu0
        %v1425 = vadd.f32 0.0, %v1424
        %v1426 = vpop.f32.mrb[0].mxu0
        %v1427 = vadd.f32 0.0, %v1426
        %v1428 = vpop.f32.mrb[0].mxu0
        %v1429 = vadd.f32 0.0, %v1428
        %v1430 = vpop.f32.mrb[0].mxu0
        %v1431 = vadd.f32 0.0, %v1430
        %1432 = vdwg.mxu0
        %v1433 = vpack.c.bf16 %v1154, %v1150
        %v1434 = vpack.c.bf16 %v1164, %v1160
        %v1435 = vpack.c.bf16 %v1260, %v1256
        %v1436 = vpack.c.bf16 %v1270, %v1266
        %v1437 = vpack.c.bf16 %v1366, %v1362
        %v1438 = vpack.c.bf16 %v1376, %v1372
        %1439 = vmatprep.subr.bf16.mxu0 0
        %1440 = vmatpush1.bf16.xpose.msra.mxu0 %v1435
        %1441 = vmatprep.subr.bf16.mxu0 0
        %1442 = vmatpush1.bf16.xpose.msra.mxu0 0
        %1443 = vmatprep.subr.bf16.mxu0 0
        %1444 = vmatpush1.bf16.xpose.msra.mxu0 0
        %1445 = vmatprep.subr.bf16.mxu0 0
        %1446 = vmatpush1.bf16.xpose.msra.mxu0 0
        %1447 = vmatprep.subr.bf16.mxu0 0
        %1448 = vmatpush1.bf16.xpose.msra.mxu0 0
        %1449 = vmatprep.subr.bf16.mxu0 0
        %1450 = vmatpush1.bf16.xpose.msra.mxu0 0
        %1451 = vmatprep.subr.bf16.mxu0 0
        %1452 = vmatpush1.bf16.xpose.msra.mxu0 0
        %1453 = vmatprep.subr.bf16.mxu0 0
        %1454 = vmatpush1.bf16.xpose.msra.mxu0 0
        %1455 = vmatprep.subr.bf16.mxu0 0
        %1456 = vmatpush1.bf16.xpose.msra.mxu0 0
        %1457 = vmatprep.subr.bf16.mxu0 0
        %1458 = vmatpush1.bf16.xpose.msra.mxu0 0
        %1459 = vmatprep.subr.bf16.mxu0 0
        %1460 = vmatpush1.bf16.xpose.msra.mxu0 0
        %1461 = vmatprep.subr.bf16.mxu0 0
        %1462 = vmatpush1.bf16.xpose.msra.mxu0 0
        %1463 = vmatprep.subr.bf16.mxu0 0
        %1464 = vmatpush1.bf16.xpose.msra.mxu0 0
        %1465 = vmatprep.subr.bf16.mxu0 0
        %1466 = vmatpush1.bf16.xpose.msra.mxu0 0
        %1467 = vmatprep.subr.bf16.mxu0 0
        %1468 = vmatpush1.bf16.xpose.msra.mxu0 0
        %1469 = vmatprep.subr.bf16.mxu0 0
        %1470 = vmatpush1.bf16.xpose.msra.mxu0 0
        %1471 = vmatprep.mubr.bf16.mxu0 0
        %1472 = vmatmul.mubr.bf16.gmra.mrb[0].mxu0 %v1433
        %v1473 = vpop.f32.mrb[0].mxu0
        %v1474 = vadd.f32 0.0, %v1473
        %v1475 = vpop.f32.mrb[0].mxu0
        %v1476 = vpop.f32.mrb[0].mxu0
        %v1477 = vadd.f32 0.0, %v1476
        %v1478 = vpop.f32.mrb[0].mxu0
        %1479 = vdwg.mxu0
        %1480 = vmatprep.subr.bf16.mxu0 0
        %1481 = vmatpush1.bf16.xpose.msra.mxu0 %v1436
        %1482 = vmatprep.subr.bf16.mxu0 0
        %1483 = vmatpush1.bf16.xpose.msra.mxu0 0
        %1484 = vmatprep.subr.bf16.mxu0 0
        %1485 = vmatpush1.bf16.xpose.msra.mxu0 0
        %1486 = vmatprep.subr.bf16.mxu0 0
        %1487 = vmatpush1.bf16.xpose.msra.mxu0 0
        %1488 = vmatprep.subr.bf16.mxu0 0
        %1489 = vmatpush1.bf16.xpose.msra.mxu0 0
        %1490 = vmatprep.subr.bf16.mxu0 0
        %1491 = vmatpush1.bf16.xpose.msra.mxu0 0
        %1492 = vmatprep.subr.bf16.mxu0 0
        %1493 = vmatpush1.bf16.xpose.msra.mxu0 0
        %1494 = vmatprep.subr.bf16.mxu0 0
        %1495 = vmatpush1.bf16.xpose.msra.mxu0 0
        %1496 = vmatprep.subr.bf16.mxu0 0
        %1497 = vmatpush1.bf16.xpose.msra.mxu0 0
        %1498 = vmatprep.subr.bf16.mxu0 0
        %1499 = vmatpush1.bf16.xpose.msra.mxu0 0
        %1500 = vmatprep.subr.bf16.mxu0 0
        %1501 = vmatpush1.bf16.xpose.msra.mxu0 0
        %1502 = vmatprep.subr.bf16.mxu0 0
        %1503 = vmatpush1.bf16.xpose.msra.mxu0 0
        %1504 = vmatprep.subr.bf16.mxu0 0
        %1505 = vmatpush1.bf16.xpose.msra.mxu0 0
        %1506 = vmatprep.subr.bf16.mxu0 0
        %1507 = vmatpush1.bf16.xpose.msra.mxu0 0
        %1508 = vmatprep.subr.bf16.mxu0 0
        %1509 = vmatpush1.bf16.xpose.msra.mxu0 0
        %1510 = vmatprep.subr.bf16.mxu0 0
        %1511 = vmatpush1.bf16.xpose.msra.mxu0 0
        %1512 = vmatprep.mubr.bf16.mxu0 0
        %1513 = vmatmul.mubr.bf16.gmra.mrb[0].mxu0 %v1434
        %v1514 = vpop.f32.mrb[0].mxu0
        %v1515 = vadd.f32 0.0, %v1514
        %v1516 = vpop.f32.mrb[0].mxu0
        %v1517 = vpop.f32.mrb[0].mxu0
        %v1518 = vadd.f32 0.0, %v1517
        %v1519 = vpop.f32.mrb[0].mxu0
        %1520 = vdwg.mxu0
        %v1521 = vmul.f32 %v1474, 0.125
        %v1522 = vmul.f32 %v1477, 0.125
        %v1523 = vmul.f32 %v1515, 0.125
        %v1524 = vmul.f32 %v1518, 0.125
        %vm1525 = vcmask 130048
        %v1526 = vsel %vm1525, %v1521, -inf
        %1527 = vmax.xlane.f32.xlu0 %v1526
        %v1528 = vpop.xlane.xlu0 %1527
        %v1529 = vsel %vm1525, %v1522, -inf
        %1530 = vmax.xlane.f32.xlu0 %v1529
        %v1531 = vpop.xlane.xlu0 %1530
        %v1532 = vsel %vm1525, %v1523, -inf
        %1533 = vmax.xlane.f32.xlu0 %v1532
        %v1534 = vpop.xlane.xlu0 %1533
        %v1535 = vsel %vm1525, %v1524, -inf
        %1536 = vmax.xlane.f32.xlu0 %v1535
        %v1537 = vpop.xlane.xlu0 %1536
        %v1538 = vsub.f32 %v1521, %v1528
        %v1539 = vsub.f32 %v1522, %v1531
        %v1540 = vsub.f32 %v1523, %v1534
        %v1541 = vsub.f32 %v1524, %v1537
        %v1542 = vmul.f32 %v1538, 1.442695
        %v1543 = vpow.pop %v1542
        %v1544 = vmul.f32 %v1539, 1.442695
        %v1545 = vpow.pop %v1544
        %v1546 = vmul.f32 %v1540, 1.442695
        %v1547 = vpow.pop %v1546
        %v1548 = vmul.f32 %v1541, 1.442695
        %v1549 = vpow.pop %v1548
        %v1550 = vsel %vm1525, %v1543, 0.0
        %1551 = vadd.xlane.f32.xlu0 %v1550
        %v1552 = vpop.xlane.xlu0 %1551
        %v1553 = vsel %vm1525, %v1545, 0.0
        %1554 = vadd.xlane.f32.xlu0 %v1553
        %v1555 = vpop.xlane.xlu0 %1554
        %v1556 = vsel %vm1525, %v1547, 0.0
        %1557 = vadd.xlane.f32.xlu0 %v1556
        %v1558 = vpop.xlane.xlu0 %1557
        %v1559 = vsel %vm1525, %v1549, 0.0
        %1560 = vadd.xlane.f32.xlu0 %v1559
        %v1561 = vpop.xlane.xlu0 %1560
        %v1562 = vrcp.pop %v1552
        %v1563 = vrcp.pop %v1555
        %v1564 = vrcp.pop %v1558
        %v1565 = vrcp.pop %v1561
        %v1566 = vmul.f32 %v1543, %v1562
        %v1567 = vmul.f32 %v1545, %v1563
        %v1568 = vmul.f32 %v1547, %v1564
        %v1569 = vmul.f32 %v1549, %v1565
        %v1570 = vadd.f32 %v1566, 0.0
        %v1571 = vadd.f32 %v1567, 0.0
        %v1572 = vadd.f32 %v1568, 0.0
        %v1573 = vadd.f32 %v1569, 0.0
        %v1574 = vpack.c.bf16 %v1567, %v1566
        %v1575 = vpack.c.bf16 %v1569, %v1568
        %v1577 = vsel %vm1525, %v1574, 0
        %1579 = vmatprep.subr.bf16.mxu0 0
        %1580 = vmatpush1.bf16.msra.mxu0 %v1437
        %1581 = vmatprep.subr.bf16.mxu0 0
        %1582 = vmatpush1.bf16.msra.mxu0 0
        %1583 = vmatprep.subr.bf16.mxu0 0
        %1584 = vmatpush1.bf16.msra.mxu0 0
        %1585 = vmatprep.subr.bf16.mxu0 0
        %1586 = vmatpush1.bf16.msra.mxu0 0
        %1587 = vmatprep.subr.bf16.mxu0 0
        %1588 = vmatpush1.bf16.msra.mxu0 0
        %1589 = vmatprep.subr.bf16.mxu0 0
        %1590 = vmatpush1.bf16.msra.mxu0 0
        %1591 = vmatprep.subr.bf16.mxu0 0
        %1592 = vmatpush1.bf16.msra.mxu0 0
        %1593 = vmatprep.subr.bf16.mxu0 0
        %1594 = vmatpush1.bf16.msra.mxu0 0
        %1595 = vmatprep.subr.bf16.mxu0 0
        %1596 = vmatpush1.bf16.msra.mxu0 0
        %1597 = vmatprep.subr.bf16.mxu0 0
        %1598 = vmatpush1.bf16.msra.mxu0 0
        %1599 = vmatprep.subr.bf16.mxu0 0
        %1600 = vmatpush1.bf16.msra.mxu0 0
        %1601 = vmatprep.subr.bf16.mxu0 0
        %1602 = vmatpush1.bf16.msra.mxu0 0
        %1603 = vmatprep.subr.bf16.mxu0 0
        %1604 = vmatpush1.bf16.msra.mxu0 0
        %1605 = vmatprep.subr.bf16.mxu0 0
        %1606 = vmatpush1.bf16.msra.mxu0 0
        %1607 = vmatprep.subr.bf16.mxu0 0
        %1608 = vmatpush1.bf16.msra.mxu0 0
        %1609 = vmatprep.subr.bf16.mxu0 0
        %1610 = vmatpush1.bf16.msra.mxu0 0
        %1611 = vmatprep.mubr.bf16.mxu0 0
        %1612 = vmatmul.mubr.bf16.gmra.mrb[0].mxu0 %v1577
        %v1613 = vpop.f32.mrb[0].mxu0
        %v1614 = vadd.f32 0.0, %v1613
        %v1615 = vpop.f32.mrb[0].mxu0
        %v1616 = vpop.f32.mrb[0].mxu0
        %v1617 = vadd.f32 0.0, %v1616
        %v1618 = vpop.f32.mrb[0].mxu0
        %1619 = vdwg.mxu0
        %v1621 = vsel %vm1525, %v1575, 0
        %1623 = vmatprep.subr.bf16.mxu0 0
        %1624 = vmatpush1.bf16.msra.mxu0 %v1438
        %1625 = vmatprep.subr.bf16.mxu0 0
        %1626 = vmatpush1.bf16.msra.mxu0 0
        %1627 = vmatprep.subr.bf16.mxu0 0
        %1628 = vmatpush1.bf16.msra.mxu0 0
        %1629 = vmatprep.subr.bf16.mxu0 0
        %1630 = vmatpush1.bf16.msra.mxu0 0
        %1631 = vmatprep.subr.bf16.mxu0 0
        %1632 = vmatpush1.bf16.msra.mxu0 0
        %1633 = vmatprep.subr.bf16.mxu0 0
        %1634 = vmatpush1.bf16.msra.mxu0 0
        %1635 = vmatprep.subr.bf16.mxu0 0
        %1636 = vmatpush1.bf16.msra.mxu0 0
        %1637 = vmatprep.subr.bf16.mxu0 0
        %1638 = vmatpush1.bf16.msra.mxu0 0
        %1639 = vmatprep.subr.bf16.mxu0 0
        %1640 = vmatpush1.bf16.msra.mxu0 0
        %1641 = vmatprep.subr.bf16.mxu0 0
        %1642 = vmatpush1.bf16.msra.mxu0 0
        %1643 = vmatprep.subr.bf16.mxu0 0
        %1644 = vmatpush1.bf16.msra.mxu0 0
        %1645 = vmatprep.subr.bf16.mxu0 0
        %1646 = vmatpush1.bf16.msra.mxu0 0
        %1647 = vmatprep.subr.bf16.mxu0 0
        %1648 = vmatpush1.bf16.msra.mxu0 0
        %1649 = vmatprep.subr.bf16.mxu0 0
        %1650 = vmatpush1.bf16.msra.mxu0 0
        %1651 = vmatprep.subr.bf16.mxu0 0
        %1652 = vmatpush1.bf16.msra.mxu0 0
        %1653 = vmatprep.subr.bf16.mxu0 0
        %1654 = vmatpush1.bf16.msra.mxu0 0
        %1655 = vmatprep.mubr.bf16.mxu0 0
        %1656 = vmatmul.mubr.bf16.gmra.mrb[0].mxu0 %v1621
        %v1657 = vpop.f32.mrb[0].mxu0
        %v1658 = vadd.f32 0.0, %v1657
        %v1659 = vpop.f32.mrb[0].mxu0
        %v1660 = vpop.f32.mrb[0].mxu0
        %v1661 = vadd.f32 0.0, %v1660
        %v1662 = vpop.f32.mrb[0].mxu0
        %1663 = vdwg.mxu0
        %v1664 = vpack.c.bf16 %v1156, %v1152
        %v1665 = vpack.c.bf16 %v1166, %v1162
        %v1666 = vpack.c.bf16 %v1262, %v1258
        %v1667 = vpack.c.bf16 %v1272, %v1268
        %v1668 = vpack.c.bf16 %v1368, %v1364
        %v1669 = vpack.c.bf16 %v1378, %v1374
        %1670 = vmatprep.subr.bf16.mxu0 0
        %1671 = vmatpush1.bf16.xpose.msra.mxu0 %v1666
        %1672 = vmatprep.subr.bf16.mxu0 0
        %1673 = vmatpush1.bf16.xpose.msra.mxu0 0
        %1674 = vmatprep.subr.bf16.mxu0 0
        %1675 = vmatpush1.bf16.xpose.msra.mxu0 0
        %1676 = vmatprep.subr.bf16.mxu0 0
        %1677 = vmatpush1.bf16.xpose.msra.mxu0 0
        %1678 = vmatprep.subr.bf16.mxu0 0
        %1679 = vmatpush1.bf16.xpose.msra.mxu0 0
        %1680 = vmatprep.subr.bf16.mxu0 0
        %1681 = vmatpush1.bf16.xpose.msra.mxu0 0
        %1682 = vmatprep.subr.bf16.mxu0 0
        %1683 = vmatpush1.bf16.xpose.msra.mxu0 0
        %1684 = vmatprep.subr.bf16.mxu0 0
        %1685 = vmatpush1.bf16.xpose.msra.mxu0 0
        %1686 = vmatprep.subr.bf16.mxu0 0
        %1687 = vmatpush1.bf16.xpose.msra.mxu0 0
        %1688 = vmatprep.subr.bf16.mxu0 0
        %1689 = vmatpush1.bf16.xpose.msra.mxu0 0
        %1690 = vmatprep.subr.bf16.mxu0 0
        %1691 = vmatpush1.bf16.xpose.msra.mxu0 0
        %1692 = vmatprep.subr.bf16.mxu0 0
        %1693 = vmatpush1.bf16.xpose.msra.mxu0 0
        %1694 = vmatprep.subr.bf16.mxu0 0
        %1695 = vmatpush1.bf16.xpose.msra.mxu0 0
        %1696 = vmatprep.subr.bf16.mxu0 0
        %1697 = vmatpush1.bf16.xpose.msra.mxu0 0
        %1698 = vmatprep.subr.bf16.mxu0 0
        %1699 = vmatpush1.bf16.xpose.msra.mxu0 0
        %1700 = vmatprep.subr.bf16.mxu0 0
        %1701 = vmatpush1.bf16.xpose.msra.mxu0 0
        %1702 = vmatprep.mubr.bf16.mxu0 0
        %1703 = vmatmul.mubr.bf16.gmra.mrb[0].mxu0 %v1664
        %v1704 = vpop.f32.mrb[0].mxu0
        %v1705 = vadd.f32 0.0, %v1704
        %v1706 = vpop.f32.mrb[0].mxu0
        %v1707 = vpop.f32.mrb[0].mxu0
        %v1708 = vadd.f32 0.0, %v1707
        %v1709 = vpop.f32.mrb[0].mxu0
        %1710 = vdwg.mxu0
        %1711 = vmatprep.subr.bf16.mxu0 0
        %1712 = vmatpush1.bf16.xpose.msra.mxu0 %v1667
        %1713 = vmatprep.subr.bf16.mxu0 0
        %1714 = vmatpush1.bf16.xpose.msra.mxu0 0
        %1715 = vmatprep.subr.bf16.mxu0 0
        %1716 = vmatpush1.bf16.xpose.msra.mxu0 0
        %1717 = vmatprep.subr.bf16.mxu0 0
        %1718 = vmatpush1.bf16.xpose.msra.mxu0 0
        %1719 = vmatprep.subr.bf16.mxu0 0
        %1720 = vmatpush1.bf16.xpose.msra.mxu0 0
        %1721 = vmatprep.subr.bf16.mxu0 0
        %1722 = vmatpush1.bf16.xpose.msra.mxu0 0
        %1723 = vmatprep.subr.bf16.mxu0 0
        %1724 = vmatpush1.bf16.xpose.msra.mxu0 0
        %1725 = vmatprep.subr.bf16.mxu0 0
        %1726 = vmatpush1.bf16.xpose.msra.mxu0 0
        %1727 = vmatprep.subr.bf16.mxu0 0
        %1728 = vmatpush1.bf16.xpose.msra.mxu0 0
        %1729 = vmatprep.subr.bf16.mxu0 0
        %1730 = vmatpush1.bf16.xpose.msra.mxu0 0
        %1731 = vmatprep.subr.bf16.mxu0 0
        %1732 = vmatpush1.bf16.xpose.msra.mxu0 0
        %1733 = vmatprep.subr.bf16.mxu0 0
        %1734 = vmatpush1.bf16.xpose.msra.mxu0 0
        %1735 = vmatprep.subr.bf16.mxu0 0
        %1736 = vmatpush1.bf16.xpose.msra.mxu0 0
        %1737 = vmatprep.subr.bf16.mxu0 0
        %1738 = vmatpush1.bf16.xpose.msra.mxu0 0
        %1739 = vmatprep.subr.bf16.mxu0 0
        %1740 = vmatpush1.bf16.xpose.msra.mxu0 0
        %1741 = vmatprep.subr.bf16.mxu0 0
        %1742 = vmatpush1.bf16.xpose.msra.mxu0 0
        %1743 = vmatprep.mubr.bf16.mxu0 0
        %1744 = vmatmul.mubr.bf16.gmra.mrb[0].mxu0 %v1665
        %v1745 = vpop.f32.mrb[0].mxu0
        %v1746 = vadd.f32 0.0, %v1745
        %v1747 = vpop.f32.mrb[0].mxu0
        %v1748 = vpop.f32.mrb[0].mxu0
        %v1749 = vadd.f32 0.0, %v1748
        %v1750 = vpop.f32.mrb[0].mxu0
        %1751 = vdwg.mxu0
        %v1752 = vmul.f32 %v1705, 0.125
        %v1753 = vmul.f32 %v1708, 0.125
        %v1754 = vmul.f32 %v1746, 0.125
        %v1755 = vmul.f32 %v1749, 0.125
        %v1756 = vsel %vm1525, %v1752, -inf
        %1757 = vmax.xlane.f32.xlu0 %v1756
        %v1758 = vpop.xlane.xlu0 %1757
        %v1759 = vsel %vm1525, %v1753, -inf
        %1760 = vmax.xlane.f32.xlu0 %v1759
        %v1761 = vpop.xlane.xlu0 %1760
        %v1762 = vsel %vm1525, %v1754, -inf
        %1763 = vmax.xlane.f32.xlu0 %v1762
        %v1764 = vpop.xlane.xlu0 %1763
        %v1765 = vsel %vm1525, %v1755, -inf
        %1766 = vmax.xlane.f32.xlu0 %v1765
        %v1767 = vpop.xlane.xlu0 %1766
        %v1768 = vsub.f32 %v1752, %v1758
        %v1769 = vsub.f32 %v1753, %v1761
        %v1770 = vsub.f32 %v1754, %v1764
        %v1771 = vsub.f32 %v1755, %v1767
        %v1772 = vmul.f32 %v1768, 1.442695
        %v1773 = vpow.pop %v1772
        %v1774 = vmul.f32 %v1769, 1.442695
        %v1775 = vpow.pop %v1774
        %v1776 = vmul.f32 %v1770, 1.442695
        %v1777 = vpow.pop %v1776
        %v1778 = vmul.f32 %v1771, 1.442695
        %v1779 = vpow.pop %v1778
        %v1780 = vsel %vm1525, %v1773, 0.0
        %1781 = vadd.xlane.f32.xlu0 %v1780
        %v1782 = vpop.xlane.xlu0 %1781
        %v1783 = vsel %vm1525, %v1775, 0.0
        %1784 = vadd.xlane.f32.xlu0 %v1783
        %v1785 = vpop.xlane.xlu0 %1784
        %v1786 = vsel %vm1525, %v1777, 0.0
        %1787 = vadd.xlane.f32.xlu0 %v1786
        %v1788 = vpop.xlane.xlu0 %1787
        %v1789 = vsel %vm1525, %v1779, 0.0
        %1790 = vadd.xlane.f32.xlu0 %v1789
        %v1791 = vpop.xlane.xlu0 %1790
        %v1792 = vrcp.pop %v1782
        %v1793 = vrcp.pop %v1785
        %v1794 = vrcp.pop %v1788
        %v1795 = vrcp.pop %v1791
        %v1796 = vmul.f32 %v1773, %v1792
        %v1797 = vmul.f32 %v1775, %v1793
        %v1798 = vmul.f32 %v1777, %v1794
        %v1799 = vmul.f32 %v1779, %v1795
        %v1800 = vadd.f32 %v1570, %v1796
        %v1801 = vadd.f32 %v1571, %v1797
        %v1802 = vadd.f32 %v1572, %v1798
        %v1803 = vadd.f32 %v1573, %v1799
        %v1804 = vpack.c.bf16 %v1797, %v1796
        %v1805 = vpack.c.bf16 %v1799, %v1798
        %v1807 = vsel %vm1525, %v1804, 0
        %1809 = vmatprep.subr.bf16.mxu0 0
        %1810 = vmatpush1.bf16.msra.mxu0 %v1668
        %1811 = vmatprep.subr.bf16.mxu0 0
        %1812 = vmatpush1.bf16.msra.mxu0 0
        %1813 = vmatprep.subr.bf16.mxu0 0
        %1814 = vmatpush1.bf16.msra.mxu0 0
        %1815 = vmatprep.subr.bf16.mxu0 0
        %1816 = vmatpush1.bf16.msra.mxu0 0
        %1817 = vmatprep.subr.bf16.mxu0 0
        %1818 = vmatpush1.bf16.msra.mxu0 0
        %1819 = vmatprep.subr.bf16.mxu0 0
        %1820 = vmatpush1.bf16.msra.mxu0 0
        %1821 = vmatprep.subr.bf16.mxu0 0
        %1822 = vmatpush1.bf16.msra.mxu0 0
        %1823 = vmatprep.subr.bf16.mxu0 0
        %1824 = vmatpush1.bf16.msra.mxu0 0
        %1825 = vmatprep.subr.bf16.mxu0 0
        %1826 = vmatpush1.bf16.msra.mxu0 0
        %1827 = vmatprep.subr.bf16.mxu0 0
        %1828 = vmatpush1.bf16.msra.mxu0 0
        %1829 = vmatprep.subr.bf16.mxu0 0
        %1830 = vmatpush1.bf16.msra.mxu0 0
        %1831 = vmatprep.subr.bf16.mxu0 0
        %1832 = vmatpush1.bf16.msra.mxu0 0
        %1833 = vmatprep.subr.bf16.mxu0 0
        %1834 = vmatpush1.bf16.msra.mxu0 0
        %1835 = vmatprep.subr.bf16.mxu0 0
        %1836 = vmatpush1.bf16.msra.mxu0 0
        %1837 = vmatprep.subr.bf16.mxu0 0
        %1838 = vmatpush1.bf16.msra.mxu0 0
        %1839 = vmatprep.subr.bf16.mxu0 0
        %1840 = vmatpush1.bf16.msra.mxu0 0
        %1841 = vmatprep.mubr.bf16.mxu0 0
        %1842 = vmatmul.mubr.bf16.gmra.mrb[0].mxu0 %v1807
        %v1843 = vpop.f32.mrb[0].mxu0
        %v1844 = vadd.f32 0.0, %v1843
        %v1845 = vpop.f32.mrb[0].mxu0
        %v1846 = vpop.f32.mrb[0].mxu0
        %v1847 = vadd.f32 0.0, %v1846
        %v1848 = vpop.f32.mrb[0].mxu0
        %1849 = vdwg.mxu0
        %v1851 = vsel %vm1525, %v1805, 0
        %1853 = vmatprep.subr.bf16.mxu0 0
        %1854 = vmatpush1.bf16.msra.mxu0 %v1669
        %1855 = vmatprep.subr.bf16.mxu0 0
        %1856 = vmatpush1.bf16.msra.mxu0 0
        %1857 = vmatprep.subr.bf16.mxu0 0
        %1858 = vmatpush1.bf16.msra.mxu0 0
        %1859 = vmatprep.subr.bf16.mxu0 0
        %1860 = vmatpush1.bf16.msra.mxu0 0
        %1861 = vmatprep.subr.bf16.mxu0 0
        %1862 = vmatpush1.bf16.msra.mxu0 0
        %1863 = vmatprep.subr.bf16.mxu0 0
        %1864 = vmatpush1.bf16.msra.mxu0 0
        %1865 = vmatprep.subr.bf16.mxu0 0
        %1866 = vmatpush1.bf16.msra.mxu0 0
        %1867 = vmatprep.subr.bf16.mxu0 0
        %1868 = vmatpush1.bf16.msra.mxu0 0
        %1869 = vmatprep.subr.bf16.mxu0 0
        %1870 = vmatpush1.bf16.msra.mxu0 0
        %1871 = vmatprep.subr.bf16.mxu0 0
        %1872 = vmatpush1.bf16.msra.mxu0 0
        %1873 = vmatprep.subr.bf16.mxu0 0
        %1874 = vmatpush1.bf16.msra.mxu0 0
        %1875 = vmatprep.subr.bf16.mxu0 0
        %1876 = vmatpush1.bf16.msra.mxu0 0
        %1877 = vmatprep.subr.bf16.mxu0 0
        %1878 = vmatpush1.bf16.msra.mxu0 0
        %1879 = vmatprep.subr.bf16.mxu0 0
        %1880 = vmatpush1.bf16.msra.mxu0 0
        %1881 = vmatprep.subr.bf16.mxu0 0
        %1882 = vmatpush1.bf16.msra.mxu0 0
        %1883 = vmatprep.subr.bf16.mxu0 0
        %1884 = vmatpush1.bf16.msra.mxu0 0
        %1885 = vmatprep.mubr.bf16.mxu0 0
        %1886 = vmatmul.mubr.bf16.gmra.mrb[0].mxu0 %v1851
        %v1887 = vpop.f32.mrb[0].mxu0
        %v1888 = vadd.f32 0.0, %v1887
        %v1889 = vpop.f32.mrb[0].mxu0
        %v1890 = vpop.f32.mrb[0].mxu0
        %v1891 = vadd.f32 0.0, %v1890
        %v1892 = vpop.f32.mrb[0].mxu0
        %1893 = vdwg.mxu0
        %v1894 = vpack.c.bf16 %v1207, %v1203
        %v1895 = vpack.c.bf16 %v1217, %v1213
        %v1896 = vpack.c.bf16 %v1313, %v1309
        %v1897 = vpack.c.bf16 %v1323, %v1319
        %v1898 = vpack.c.bf16 %v1419, %v1415
        %v1899 = vpack.c.bf16 %v1429, %v1425
        %1900 = vmatprep.subr.bf16.mxu0 0
        %1901 = vmatpush1.bf16.xpose.msra.mxu0 %v1896
        %1902 = vmatprep.subr.bf16.mxu0 0
        %1903 = vmatpush1.bf16.xpose.msra.mxu0 0
        %1904 = vmatprep.subr.bf16.mxu0 0
        %1905 = vmatpush1.bf16.xpose.msra.mxu0 0
        %1906 = vmatprep.subr.bf16.mxu0 0
        %1907 = vmatpush1.bf16.xpose.msra.mxu0 0
        %1908 = vmatprep.subr.bf16.mxu0 0
        %1909 = vmatpush1.bf16.xpose.msra.mxu0 0
        %1910 = vmatprep.subr.bf16.mxu0 0
        %1911 = vmatpush1.bf16.xpose.msra.mxu0 0
        %1912 = vmatprep.subr.bf16.mxu0 0
        %1913 = vmatpush1.bf16.xpose.msra.mxu0 0
        %1914 = vmatprep.subr.bf16.mxu0 0
        %1915 = vmatpush1.bf16.xpose.msra.mxu0 0
        %1916 = vmatprep.subr.bf16.mxu0 0
        %1917 = vmatpush1.bf16.xpose.msra.mxu0 0
        %1918 = vmatprep.subr.bf16.mxu0 0
        %1919 = vmatpush1.bf16.xpose.msra.mxu0 0
        %1920 = vmatprep.subr.bf16.mxu0 0
        %1921 = vmatpush1.bf16.xpose.msra.mxu0 0
        %1922 = vmatprep.subr.bf16.mxu0 0
        %1923 = vmatpush1.bf16.xpose.msra.mxu0 0
        %1924 = vmatprep.subr.bf16.mxu0 0
        %1925 = vmatpush1.bf16.xpose.msra.mxu0 0
        %1926 = vmatprep.subr.bf16.mxu0 0
        %1927 = vmatpush1.bf16.xpose.msra.mxu0 0
        %1928 = vmatprep.subr.bf16.mxu0 0
        %1929 = vmatpush1.bf16.xpose.msra.mxu0 0
        %1930 = vmatprep.subr.bf16.mxu0 0
        %1931 = vmatpush1.bf16.xpose.msra.mxu0 0
        %1932 = vmatprep.mubr.bf16.mxu0 0
        %1933 = vmatmul.mubr.bf16.gmra.mrb[0].mxu0 %v1894
        %v1934 = vpop.f32.mrb[0].mxu0
        %v1935 = vadd.f32 0.0, %v1934
        %v1936 = vpop.f32.mrb[0].mxu0
        %v1937 = vpop.f32.mrb[0].mxu0
        %v1938 = vadd.f32 0.0, %v1937
        %v1939 = vpop.f32.mrb[0].mxu0
        %1940 = vdwg.mxu0
        %1941 = vmatprep.subr.bf16.mxu0 0
        %1942 = vmatpush1.bf16.xpose.msra.mxu0 %v1897
        %1943 = vmatprep.subr.bf16.mxu0 0
        %1944 = vmatpush1.bf16.xpose.msra.mxu0 0
        %1945 = vmatprep.subr.bf16.mxu0 0
        %1946 = vmatpush1.bf16.xpose.msra.mxu0 0
        %1947 = vmatprep.subr.bf16.mxu0 0
        %1948 = vmatpush1.bf16.xpose.msra.mxu0 0
        %1949 = vmatprep.subr.bf16.mxu0 0
        %1950 = vmatpush1.bf16.xpose.msra.mxu0 0
        %1951 = vmatprep.subr.bf16.mxu0 0
        %1952 = vmatpush1.bf16.xpose.msra.mxu0 0
        %1953 = vmatprep.subr.bf16.mxu0 0
        %1954 = vmatpush1.bf16.xpose.msra.mxu0 0
        %1955 = vmatprep.subr.bf16.mxu0 0
        %1956 = vmatpush1.bf16.xpose.msra.mxu0 0
        %1957 = vmatprep.subr.bf16.mxu0 0
        %1958 = vmatpush1.bf16.xpose.msra.mxu0 0
        %1959 = vmatprep.subr.bf16.mxu0 0
        %1960 = vmatpush1.bf16.xpose.msra.mxu0 0
        %1961 = vmatprep.subr.bf16.mxu0 0
        %1962 = vmatpush1.bf16.xpose.msra.mxu0 0
        %1963 = vmatprep.subr.bf16.mxu0 0
        %1964 = vmatpush1.bf16.xpose.msra.mxu0 0
        %1965 = vmatprep.subr.bf16.mxu0 0
        %1966 = vmatpush1.bf16.xpose.msra.mxu0 0
        %1967 = vmatprep.subr.bf16.mxu0 0
        %1968 = vmatpush1.bf16.xpose.msra.mxu0 0
        %1969 = vmatprep.subr.bf16.mxu0 0
        %1970 = vmatpush1.bf16.xpose.msra.mxu0 0
        %1971 = vmatprep.subr.bf16.mxu0 0
        %1972 = vmatpush1.bf16.xpose.msra.mxu0 0
        %1973 = vmatprep.mubr.bf16.mxu0 0
        %1974 = vmatmul.mubr.bf16.gmra.mrb[0].mxu0 %v1895
        %v1975 = vpop.f32.mrb[0].mxu0
        %v1976 = vadd.f32 0.0, %v1975
        %v1977 = vpop.f32.mrb[0].mxu0
        %v1978 = vpop.f32.mrb[0].mxu0
        %v1979 = vadd.f32 0.0, %v1978
        %v1980 = vpop.f32.mrb[0].mxu0
        %1981 = vdwg.mxu0
        %v1982 = vmul.f32 %v1935, 0.125
        %v1983 = vmul.f32 %v1938, 0.125
        %v1984 = vmul.f32 %v1976, 0.125
        %v1985 = vmul.f32 %v1979, 0.125
        %v1986 = vsel %vm1525, %v1982, -inf
        %1987 = vmax.xlane.f32.xlu0 %v1986
        %v1988 = vpop.xlane.xlu0 %1987
        %v1989 = vsel %vm1525, %v1983, -inf
        %1990 = vmax.xlane.f32.xlu0 %v1989
        %v1991 = vpop.xlane.xlu0 %1990
        %v1992 = vsel %vm1525, %v1984, -inf
        %1993 = vmax.xlane.f32.xlu0 %v1992
        %v1994 = vpop.xlane.xlu0 %1993
        %v1995 = vsel %vm1525, %v1985, -inf
        %1996 = vmax.xlane.f32.xlu0 %v1995
        %v1997 = vpop.xlane.xlu0 %1996
        %v1998 = vsub.f32 %v1982, %v1988
        %v1999 = vsub.f32 %v1983, %v1991
        %v2000 = vsub.f32 %v1984, %v1994
        %v2001 = vsub.f32 %v1985, %v1997
        %v2002 = vmul.f32 %v1998, 1.442695
        %v2003 = vpow.pop %v2002
        %v2004 = vmul.f32 %v1999, 1.442695
        %v2005 = vpow.pop %v2004
        %v2006 = vmul.f32 %v2000, 1.442695
        %v2007 = vpow.pop %v2006
        %v2008 = vmul.f32 %v2001, 1.442695
        %v2009 = vpow.pop %v2008
        %v2010 = vsel %vm1525, %v2003, 0.0
        %2011 = vadd.xlane.f32.xlu0 %v2010
        %v2012 = vpop.xlane.xlu0 %2011
        %v2013 = vsel %vm1525, %v2005, 0.0
        %2014 = vadd.xlane.f32.xlu0 %v2013
        %v2015 = vpop.xlane.xlu0 %2014
        %v2016 = vsel %vm1525, %v2007, 0.0
        %2017 = vadd.xlane.f32.xlu0 %v2016
        %v2018 = vpop.xlane.xlu0 %2017
        %v2019 = vsel %vm1525, %v2009, 0.0
        %2020 = vadd.xlane.f32.xlu0 %v2019
        %v2021 = vpop.xlane.xlu0 %2020
        %v2022 = vrcp.pop %v2012
        %v2023 = vrcp.pop %v2015
        %v2024 = vrcp.pop %v2018
        %v2025 = vrcp.pop %v2021
        %v2026 = vmul.f32 %v2003, %v2022
        %v2027 = vmul.f32 %v2005, %v2023
        %v2028 = vmul.f32 %v2007, %v2024
        %v2029 = vmul.f32 %v2009, %v2025
        %v2030 = vadd.f32 %v1800, %v2026
        %v2031 = vadd.f32 %v1801, %v2027
        %v2032 = vadd.f32 %v1802, %v2028
        %v2033 = vadd.f32 %v1803, %v2029
        %v2034 = vpack.c.bf16 %v2027, %v2026
        %v2035 = vpack.c.bf16 %v2029, %v2028
        %v2037 = vsel %vm1525, %v2034, 0
        %2039 = vmatprep.subr.bf16.mxu0 0
        %2040 = vmatpush1.bf16.msra.mxu0 %v1898
        %2041 = vmatprep.subr.bf16.mxu0 0
        %2042 = vmatpush1.bf16.msra.mxu0 0
        %2043 = vmatprep.subr.bf16.mxu0 0
        %2044 = vmatpush1.bf16.msra.mxu0 0
        %2045 = vmatprep.subr.bf16.mxu0 0
        %2046 = vmatpush1.bf16.msra.mxu0 0
        %2047 = vmatprep.subr.bf16.mxu0 0
        %2048 = vmatpush1.bf16.msra.mxu0 0
        %2049 = vmatprep.subr.bf16.mxu0 0
        %2050 = vmatpush1.bf16.msra.mxu0 0
        %2051 = vmatprep.subr.bf16.mxu0 0
        %2052 = vmatpush1.bf16.msra.mxu0 0
        %2053 = vmatprep.subr.bf16.mxu0 0
        %2054 = vmatpush1.bf16.msra.mxu0 0
        %2055 = vmatprep.subr.bf16.mxu0 0
        %2056 = vmatpush1.bf16.msra.mxu0 0
        %2057 = vmatprep.subr.bf16.mxu0 0
        %2058 = vmatpush1.bf16.msra.mxu0 0
        %2059 = vmatprep.subr.bf16.mxu0 0
        %2060 = vmatpush1.bf16.msra.mxu0 0
        %2061 = vmatprep.subr.bf16.mxu0 0
        %2062 = vmatpush1.bf16.msra.mxu0 0
        %2063 = vmatprep.subr.bf16.mxu0 0
        %2064 = vmatpush1.bf16.msra.mxu0 0
        %2065 = vmatprep.subr.bf16.mxu0 0
        %2066 = vmatpush1.bf16.msra.mxu0 0
        %2067 = vmatprep.subr.bf16.mxu0 0
        %2068 = vmatpush1.bf16.msra.mxu0 0
        %2069 = vmatprep.subr.bf16.mxu0 0
        %2070 = vmatpush1.bf16.msra.mxu0 0
        %2071 = vmatprep.mubr.bf16.mxu0 0
        %2072 = vmatmul.mubr.bf16.gmra.mrb[0].mxu0 %v2037
        %v2073 = vpop.f32.mrb[0].mxu0
        %v2074 = vadd.f32 0.0, %v2073
        %v2075 = vpop.f32.mrb[0].mxu0
        %v2076 = vpop.f32.mrb[0].mxu0
        %v2077 = vadd.f32 0.0, %v2076
        %v2078 = vpop.f32.mrb[0].mxu0
        %2079 = vdwg.mxu0
        %v2081 = vsel %vm1525, %v2035, 0
        %2083 = vmatprep.subr.bf16.mxu0 0
        %2084 = vmatpush1.bf16.msra.mxu0 %v1899
        %2085 = vmatprep.subr.bf16.mxu0 0
        %2086 = vmatpush1.bf16.msra.mxu0 0
        %2087 = vmatprep.subr.bf16.mxu0 0
        %2088 = vmatpush1.bf16.msra.mxu0 0
        %2089 = vmatprep.subr.bf16.mxu0 0
        %2090 = vmatpush1.bf16.msra.mxu0 0
        %2091 = vmatprep.subr.bf16.mxu0 0
        %2092 = vmatpush1.bf16.msra.mxu0 0
        %2093 = vmatprep.subr.bf16.mxu0 0
        %2094 = vmatpush1.bf16.msra.mxu0 0
        %2095 = vmatprep.subr.bf16.mxu0 0
        %2096 = vmatpush1.bf16.msra.mxu0 0
        %2097 = vmatprep.subr.bf16.mxu0 0
        %2098 = vmatpush1.bf16.msra.mxu0 0
        %2099 = vmatprep.subr.bf16.mxu0 0
        %2100 = vmatpush1.bf16.msra.mxu0 0
        %2101 = vmatprep.subr.bf16.mxu0 0
        %2102 = vmatpush1.bf16.msra.mxu0 0
        %2103 = vmatprep.subr.bf16.mxu0 0
        %2104 = vmatpush1.bf16.msra.mxu0 0
        %2105 = vmatprep.subr.bf16.mxu0 0
        %2106 = vmatpush1.bf16.msra.mxu0 0
        %2107 = vmatprep.subr.bf16.mxu0 0
        %2108 = vmatpush1.bf16.msra.mxu0 0
        %2109 = vmatprep.subr.bf16.mxu0 0
        %2110 = vmatpush1.bf16.msra.mxu0 0
        %2111 = vmatprep.subr.bf16.mxu0 0
        %2112 = vmatpush1.bf16.msra.mxu0 0
        %2113 = vmatprep.subr.bf16.mxu0 0
        %2114 = vmatpush1.bf16.msra.mxu0 0
        %2115 = vmatprep.mubr.bf16.mxu0 0
        %2116 = vmatmul.mubr.bf16.gmra.mrb[0].mxu0 %v2081
        %v2117 = vpop.f32.mrb[0].mxu0
        %v2118 = vadd.f32 0.0, %v2117
        %v2119 = vpop.f32.mrb[0].mxu0
        %v2120 = vpop.f32.mrb[0].mxu0
        %v2121 = vadd.f32 0.0, %v2120
        %v2122 = vpop.f32.mrb[0].mxu0
        %2123 = vdwg.mxu0
        %v2124 = vpack.c.bf16 %v1209, %v1205
        %v2125 = vpack.c.bf16 %v1219, %v1215
        %v2126 = vpack.c.bf16 %v1315, %v1311
        %v2127 = vpack.c.bf16 %v1325, %v1321
        %v2128 = vpack.c.bf16 %v1421, %v1417
        %v2129 = vpack.c.bf16 %v1431, %v1427
        %2130 = vmatprep.subr.bf16.mxu0 0
        %2131 = vmatpush1.bf16.xpose.msra.mxu0 %v2126
        %2132 = vmatprep.subr.bf16.mxu0 0
        %2133 = vmatpush1.bf16.xpose.msra.mxu0 0
        %2134 = vmatprep.subr.bf16.mxu0 0
        %2135 = vmatpush1.bf16.xpose.msra.mxu0 0
        %2136 = vmatprep.subr.bf16.mxu0 0
        %2137 = vmatpush1.bf16.xpose.msra.mxu0 0
        %2138 = vmatprep.subr.bf16.mxu0 0
        %2139 = vmatpush1.bf16.xpose.msra.mxu0 0
        %2140 = vmatprep.subr.bf16.mxu0 0
        %2141 = vmatpush1.bf16.xpose.msra.mxu0 0
        %2142 = vmatprep.subr.bf16.mxu0 0
        %2143 = vmatpush1.bf16.xpose.msra.mxu0 0
        %2144 = vmatprep.subr.bf16.mxu0 0
        %2145 = vmatpush1.bf16.xpose.msra.mxu0 0
        %2146 = vmatprep.subr.bf16.mxu0 0
        %2147 = vmatpush1.bf16.xpose.msra.mxu0 0
        %2148 = vmatprep.subr.bf16.mxu0 0
        %2149 = vmatpush1.bf16.xpose.msra.mxu0 0
        %2150 = vmatprep.subr.bf16.mxu0 0
        %2151 = vmatpush1.bf16.xpose.msra.mxu0 0
        %2152 = vmatprep.subr.bf16.mxu0 0
        %2153 = vmatpush1.bf16.xpose.msra.mxu0 0
        %2154 = vmatprep.subr.bf16.mxu0 0
        %2155 = vmatpush1.bf16.xpose.msra.mxu0 0
        %2156 = vmatprep.subr.bf16.mxu0 0
        %2157 = vmatpush1.bf16.xpose.msra.mxu0 0
        %2158 = vmatprep.subr.bf16.mxu0 0
        %2159 = vmatpush1.bf16.xpose.msra.mxu0 0
        %2160 = vmatprep.subr.bf16.mxu0 0
        %2161 = vmatpush1.bf16.xpose.msra.mxu0 0
        %2162 = vmatprep.mubr.bf16.mxu0 0
        %2163 = vmatmul.mubr.bf16.gmra.mrb[0].mxu0 %v2124
        %v2164 = vpop.f32.mrb[0].mxu0
        %v2165 = vadd.f32 0.0, %v2164
        %v2166 = vpop.f32.mrb[0].mxu0
        %v2167 = vpop.f32.mrb[0].mxu0
        %v2168 = vadd.f32 0.0, %v2167
        %v2169 = vpop.f32.mrb[0].mxu0
        %2170 = vdwg.mxu0
        %2171 = vmatprep.subr.bf16.mxu0 0
        %2172 = vmatpush1.bf16.xpose.msra.mxu0 %v2127
        %2173 = vmatprep.subr.bf16.mxu0 0
        %2174 = vmatpush1.bf16.xpose.msra.mxu0 0
        %2175 = vmatprep.subr.bf16.mxu0 0
        %2176 = vmatpush1.bf16.xpose.msra.mxu0 0
        %2177 = vmatprep.subr.bf16.mxu0 0
        %2178 = vmatpush1.bf16.xpose.msra.mxu0 0
        %2179 = vmatprep.subr.bf16.mxu0 0
        %2180 = vmatpush1.bf16.xpose.msra.mxu0 0
        %2181 = vmatprep.subr.bf16.mxu0 0
        %2182 = vmatpush1.bf16.xpose.msra.mxu0 0
        %2183 = vmatprep.subr.bf16.mxu0 0
        %2184 = vmatpush1.bf16.xpose.msra.mxu0 0
        %2185 = vmatprep.subr.bf16.mxu0 0
        %2186 = vmatpush1.bf16.xpose.msra.mxu0 0
        %2187 = vmatprep.subr.bf16.mxu0 0
        %2188 = vmatpush1.bf16.xpose.msra.mxu0 0
        %2189 = vmatprep.subr.bf16.mxu0 0
        %2190 = vmatpush1.bf16.xpose.msra.mxu0 0
        %2191 = vmatprep.subr.bf16.mxu0 0
        %2192 = vmatpush1.bf16.xpose.msra.mxu0 0
        %2193 = vmatprep.subr.bf16.mxu0 0
        %2194 = vmatpush1.bf16.xpose.msra.mxu0 0
        %2195 = vmatprep.subr.bf16.mxu0 0
        %2196 = vmatpush1.bf16.xpose.msra.mxu0 0
        %2197 = vmatprep.subr.bf16.mxu0 0
        %2198 = vmatpush1.bf16.xpose.msra.mxu0 0
        %2199 = vmatprep.subr.bf16.mxu0 0
        %2200 = vmatpush1.bf16.xpose.msra.mxu0 0
        %2201 = vmatprep.subr.bf16.mxu0 0
        %2202 = vmatpush1.bf16.xpose.msra.mxu0 0
        %2203 = vmatprep.mubr.bf16.mxu0 0
        %2204 = vmatmul.mubr.bf16.gmra.mrb[0].mxu0 %v2125
        %v2205 = vpop.f32.mrb[0].mxu0
        %v2206 = vadd.f32 0.0, %v2205
        %v2207 = vpop.f32.mrb[0].mxu0
        %v2208 = vpop.f32.mrb[0].mxu0
        %v2209 = vadd.f32 0.0, %v2208
        %v2210 = vpop.f32.mrb[0].mxu0
        %2211 = vdwg.mxu0
        %v2212 = vmul.f32 %v2165, 0.125
        %v2213 = vmul.f32 %v2168, 0.125
        %v2214 = vmul.f32 %v2206, 0.125
        %v2215 = vmul.f32 %v2209, 0.125
        %v2216 = vsel %vm1525, %v2212, -inf
        %2217 = vmax.xlane.f32.xlu0 %v2216
        %v2218 = vpop.xlane.xlu0 %2217
        %v2219 = vsel %vm1525, %v2213, -inf
        %2220 = vmax.xlane.f32.xlu0 %v2219
        %v2221 = vpop.xlane.xlu0 %2220
        %v2222 = vsel %vm1525, %v2214, -inf
        %2223 = vmax.xlane.f32.xlu0 %v2222
        %v2224 = vpop.xlane.xlu0 %2223
        %v2225 = vsel %vm1525, %v2215, -inf
        %2226 = vmax.xlane.f32.xlu0 %v2225
        %v2227 = vpop.xlane.xlu0 %2226
        %v2228 = vsub.f32 %v2212, %v2218
        %v2229 = vsub.f32 %v2213, %v2221
        %v2230 = vsub.f32 %v2214, %v2224
        %v2231 = vsub.f32 %v2215, %v2227
        %v2232 = vmul.f32 %v2228, 1.442695
        %v2233 = vpow.pop %v2232
        %v2234 = vmul.f32 %v2229, 1.442695
        %v2235 = vpow.pop %v2234
        %v2236 = vmul.f32 %v2230, 1.442695
        %v2237 = vpow.pop %v2236
        %v2238 = vmul.f32 %v2231, 1.442695
        %v2239 = vpow.pop %v2238
        %v2240 = vsel %vm1525, %v2233, 0.0
        %2241 = vadd.xlane.f32.xlu0 %v2240
        %v2242 = vpop.xlane.xlu0 %2241
        %v2243 = vsel %vm1525, %v2235, 0.0
        %2244 = vadd.xlane.f32.xlu0 %v2243
        %v2245 = vpop.xlane.xlu0 %2244
        %v2246 = vsel %vm1525, %v2237, 0.0
        %2247 = vadd.xlane.f32.xlu0 %v2246
        %v2248 = vpop.xlane.xlu0 %2247
        %v2249 = vsel %vm1525, %v2239, 0.0
        %2250 = vadd.xlane.f32.xlu0 %v2249
        %v2251 = vpop.xlane.xlu0 %2250
        %v2252 = vrcp.pop %v2242
        %v2253 = vrcp.pop %v2245
        %v2254 = vrcp.pop %v2248
        %v2255 = vrcp.pop %v2251
        %v2256 = vmul.f32 %v2233, %v2252
        %v2257 = vmul.f32 %v2235, %v2253
        %v2258 = vmul.f32 %v2237, %v2254
        %v2259 = vmul.f32 %v2239, %v2255
        %v2260 = vadd.f32 %v2030, %v2256
        %v2261 = vadd.f32 %v2031, %v2257
        %v2262 = vadd.f32 %v2032, %v2258
        %v2263 = vadd.f32 %v2033, %v2259
        %v2264 = vpack.c.bf16 %v2257, %v2256
        %v2265 = vpack.c.bf16 %v2259, %v2258
        %v2267 = vsel %vm1525, %v2264, 0
        %2269 = vmatprep.subr.bf16.mxu0 0
        %2270 = vmatpush1.bf16.msra.mxu0 %v2128
        %2271 = vmatprep.subr.bf16.mxu0 0
        %2272 = vmatpush1.bf16.msra.mxu0 0
        %2273 = vmatprep.subr.bf16.mxu0 0
        %2274 = vmatpush1.bf16.msra.mxu0 0
        %2275 = vmatprep.subr.bf16.mxu0 0
        %2276 = vmatpush1.bf16.msra.mxu0 0
        %2277 = vmatprep.subr.bf16.mxu0 0
        %2278 = vmatpush1.bf16.msra.mxu0 0
        %2279 = vmatprep.subr.bf16.mxu0 0
        %2280 = vmatpush1.bf16.msra.mxu0 0
        %2281 = vmatprep.subr.bf16.mxu0 0
        %2282 = vmatpush1.bf16.msra.mxu0 0
        %2283 = vmatprep.subr.bf16.mxu0 0
        %2284 = vmatpush1.bf16.msra.mxu0 0
        %2285 = vmatprep.subr.bf16.mxu0 0
        %2286 = vmatpush1.bf16.msra.mxu0 0
        %2287 = vmatprep.subr.bf16.mxu0 0
        %2288 = vmatpush1.bf16.msra.mxu0 0
        %2289 = vmatprep.subr.bf16.mxu0 0
        %2290 = vmatpush1.bf16.msra.mxu0 0
        %2291 = vmatprep.subr.bf16.mxu0 0
        %2292 = vmatpush1.bf16.msra.mxu0 0
        %2293 = vmatprep.subr.bf16.mxu0 0
        %2294 = vmatpush1.bf16.msra.mxu0 0
        %2295 = vmatprep.subr.bf16.mxu0 0
        %2296 = vmatpush1.bf16.msra.mxu0 0
        %2297 = vmatprep.subr.bf16.mxu0 0
        %2298 = vmatpush1.bf16.msra.mxu0 0
        %2299 = vmatprep.subr.bf16.mxu0 0
        %2300 = vmatpush1.bf16.msra.mxu0 0
        %2301 = vmatprep.mubr.bf16.mxu0 0
        %2302 = vmatmul.mubr.bf16.gmra.mrb[0].mxu0 %v2267
        %v2303 = vpop.f32.mrb[0].mxu0
        %v2304 = vadd.f32 0.0, %v2303
        %v2305 = vpop.f32.mrb[0].mxu0
        %v2306 = vpop.f32.mrb[0].mxu0
        %v2307 = vadd.f32 0.0, %v2306
        %v2308 = vpop.f32.mrb[0].mxu0
        %2309 = vdwg.mxu0
        %v2311 = vsel %vm1525, %v2265, 0
        %2313 = vmatprep.subr.bf16.mxu0 0
        %2314 = vmatpush1.bf16.msra.mxu0 %v2129
        %2315 = vmatprep.subr.bf16.mxu0 0
        %2316 = vmatpush1.bf16.msra.mxu0 0
        %2317 = vmatprep.subr.bf16.mxu0 0
        %2318 = vmatpush1.bf16.msra.mxu0 0
        %2319 = vmatprep.subr.bf16.mxu0 0
        %2320 = vmatpush1.bf16.msra.mxu0 0
        %2321 = vmatprep.subr.bf16.mxu0 0
        %2322 = vmatpush1.bf16.msra.mxu0 0
        %2323 = vmatprep.subr.bf16.mxu0 0
        %2324 = vmatpush1.bf16.msra.mxu0 0
        %2325 = vmatprep.subr.bf16.mxu0 0
        %2326 = vmatpush1.bf16.msra.mxu0 0
        %2327 = vmatprep.subr.bf16.mxu0 0
        %2328 = vmatpush1.bf16.msra.mxu0 0
        %2329 = vmatprep.subr.bf16.mxu0 0
        %2330 = vmatpush1.bf16.msra.mxu0 0
        %2331 = vmatprep.subr.bf16.mxu0 0
        %2332 = vmatpush1.bf16.msra.mxu0 0
        %2333 = vmatprep.subr.bf16.mxu0 0
        %2334 = vmatpush1.bf16.msra.mxu0 0
        %2335 = vmatprep.subr.bf16.mxu0 0
        %2336 = vmatpush1.bf16.msra.mxu0 0
        %2337 = vmatprep.subr.bf16.mxu0 0
        %2338 = vmatpush1.bf16.msra.mxu0 0
        %2339 = vmatprep.subr.bf16.mxu0 0
        %2340 = vmatpush1.bf16.msra.mxu0 0
        %2341 = vmatprep.subr.bf16.mxu0 0
        %2342 = vmatpush1.bf16.msra.mxu0 0
        %2343 = vmatprep.subr.bf16.mxu0 0
        %2344 = vmatpush1.bf16.msra.mxu0 0
        %2345 = vmatprep.mubr.bf16.mxu0 0
        %2346 = vmatmul.mubr.bf16.gmra.mrb[0].mxu0 %v2311
        %v2347 = vpop.f32.mrb[0].mxu0
        %v2348 = vadd.f32 0.0, %v2347
        %v2349 = vpop.f32.mrb[0].mxu0
        %v2350 = vpop.f32.mrb[0].mxu0
        %v2351 = vadd.f32 0.0, %v2350
        %v2352 = vpop.f32.mrb[0].mxu0
        %2353 = vdwg.mxu0
        %v2354 = vpack.c.bf16 %v1617, %v1614
        %v2355 = vpack.c.bf16 %v1847, %v1844
        %v2356 = vpack.c.bf16 %v2077, %v2074
        %v2357 = vpack.c.bf16 %v2307, %v2304
        %v2358 = vpack.c.bf16 %v1661, %v1658
        %v2359 = vpack.c.bf16 %v1891, %v1888
        %v2360 = vpack.c.bf16 %v2121, %v2118
        %v2361 = vpack.c.bf16 %v2351, %v2348
        %v2362 = vld [vmem:[#allocation7] sm:$0xf]
        %v2363 = vld [vmem:[#allocation7 + $0x4] sm:$0xf]
        %v2364 = vld [vmem:[#allocation7 + $0x8] sm:$0xf]
        %v2365 = vld [vmem:[#allocation7 + $0xc] sm:$0xf]
        %v2366 = vld [vmem:[#allocation7 + $0x10] sm:$0xf]
        %v2367 = vld [vmem:[#allocation7 + $0x14] sm:$0xf]
        %v2368 = vld [vmem:[#allocation7 + $0x18] sm:$0xf]
        %v2369 = vld [vmem:[#allocation7 + $0x1c] sm:$0xf]
        %v2370 = vld [vmem:[#allocation7 + $0x20] sm:$0xf]
        %v2371 = vld [vmem:[#allocation7 + $0x24] sm:$0xf]
        %v2372 = vld [vmem:[#allocation7 + $0x28] sm:$0xf]
        %v2373 = vld [vmem:[#allocation7 + $0x2c] sm:$0xf]
        %v2374 = vld [vmem:[#allocation7 + $0x30] sm:$0xf]
        %v2375 = vld [vmem:[#allocation7 + $0x34] sm:$0xf]
        %v2376 = vld [vmem:[#allocation7 + $0x38] sm:$0xf]
        %v2377 = vld [vmem:[#allocation7 + $0x3c] sm:$0xf]
        %v2378 = vld [vmem:[#allocation7 + $0x40] sm:$0xf]
        %v2379 = vld [vmem:[#allocation7 + $0x44] sm:$0xf]
        %v2380 = vld [vmem:[#allocation7 + $0x48] sm:$0xf]
        %v2381 = vld [vmem:[#allocation7 + $0x4c] sm:$0xf]
        %v2382 = vld [vmem:[#allocation7 + $0x50] sm:$0xf]
        %v2383 = vld [vmem:[#allocation7 + $0x54] sm:$0xf]
        %v2384 = vld [vmem:[#allocation7 + $0x58] sm:$0xf]
        %v2385 = vld [vmem:[#allocation7 + $0x5c] sm:$0xf]
        %v2386 = vld [vmem:[#allocation7 + $0x60] sm:$0xf]
        %v2387 = vld [vmem:[#allocation7 + $0x64] sm:$0xf]
        %v2388 = vld [vmem:[#allocation7 + $0x68] sm:$0xf]
        %v2389 = vld [vmem:[#allocation7 + $0x6c] sm:$0xf]
        %v2390 = vld [vmem:[#allocation7 + $0x70] sm:$0xf]
        %v2391 = vld [vmem:[#allocation7 + $0x74] sm:$0xf]
        %v2392 = vld [vmem:[#allocation7 + $0x78] sm:$0xf]
        %v2393 = vld [vmem:[#allocation7 + $0x7c] sm:$0xf]
        %v2394 = vld [vmem:[#allocation7 + $0x80] sm:$0xf]
        %v2395 = vld [vmem:[#allocation7 + $0x84] sm:$0xf]
        %v2396 = vld [vmem:[#allocation7 + $0x88] sm:$0xf]
        %v2397 = vld [vmem:[#allocation7 + $0x8c] sm:$0xf]
        %v2398 = vld [vmem:[#allocation7 + $0x90] sm:$0xf]
        %v2399 = vld [vmem:[#allocation7 + $0x94] sm:$0xf]
        %v2400 = vld [vmem:[#allocation7 + $0x98] sm:$0xf]
        %v2401 = vld [vmem:[#allocation7 + $0x9c] sm:$0xf]
        %v2402 = vld [vmem:[#allocation7 + $0xa0] sm:$0xf]
        %v2403 = vld [vmem:[#allocation7 + $0xa4] sm:$0xf]
        %v2404 = vld [vmem:[#allocation7 + $0xa8] sm:$0xf]
        %v2405 = vld [vmem:[#allocation7 + $0xac] sm:$0xf]
        %v2406 = vld [vmem:[#allocation7 + $0xb0] sm:$0xf]
        %v2407 = vld [vmem:[#allocation7 + $0xb4] sm:$0xf]
        %v2408 = vld [vmem:[#allocation7 + $0xb8] sm:$0xf]
        %v2409 = vld [vmem:[#allocation7 + $0xbc] sm:$0xf]
        %v2410 = vld [vmem:[#allocation7 + $0xc0] sm:$0xf]
        %v2411 = vld [vmem:[#allocation7 + $0xc4] sm:$0xf]
        %v2412 = vld [vmem:[#allocation7 + $0xc8] sm:$0xf]
        %v2413 = vld [vmem:[#allocation7 + $0xcc] sm:$0xf]
        %v2414 = vld [vmem:[#allocation7 + $0xd0] sm:$0xf]
        %v2415 = vld [vmem:[#allocation7 + $0xd4] sm:$0xf]
        %v2416 = vld [vmem:[#allocation7 + $0xd8] sm:$0xf]
        %v2417 = vld [vmem:[#allocation7 + $0xdc] sm:$0xf]
        %v2418 = vld [vmem:[#allocation7 + $0xe0] sm:$0xf]
        %v2419 = vld [vmem:[#allocation7 + $0xe4] sm:$0xf]
        %v2420 = vld [vmem:[#allocation7 + $0xe8] sm:$0xf]
        %v2421 = vld [vmem:[#allocation7 + $0xec] sm:$0xf]
        %v2422 = vld [vmem:[#allocation7 + $0xf0] sm:$0xf]
        %v2423 = vld [vmem:[#allocation7 + $0xf4] sm:$0xf]
        %v2424 = vld [vmem:[#allocation7 + $0xf8] sm:$0xf]
        %v2425 = vld [vmem:[#allocation7 + $0xfc] sm:$0xf]
        %v2426 = vld [vmem:[%s3] sm:$0x1]
        %v2428 = vlaneseq
        %v2429 = vshrl.u32 %v2428, 7
        %v2430 = vsub.s32 0, %v2429
        %v2431 = vrot.slane %v2426, %v2430
        %v2497 = vunpack.c.l.b16 %v2362
        %v2498 = vunpack.c.l.b16 %v2363
        %v2499 = vunpack.c.l.b16 %v2364
        %v2500 = vunpack.c.l.b16 %v2365
        %v2501 = vunpack.c.l.b16 %v2366
        %v2502 = vunpack.c.l.b16 %v2367
        %v2503 = vunpack.c.l.b16 %v2368
        %v2504 = vunpack.c.l.b16 %v2369
        %v2505 = vunpack.c.l.b16 %v2370
        %v2506 = vunpack.c.l.b16 %v2371
        %v2507 = vunpack.c.l.b16 %v2372
        %v2508 = vunpack.c.l.b16 %v2373
        %v2509 = vunpack.c.l.b16 %v2374
        %v2510 = vunpack.c.l.b16 %v2375
        %v2511 = vunpack.c.l.b16 %v2376
        %v2512 = vunpack.c.l.b16 %v2377
        %v2513 = vunpack.c.l.b16 %v2378
        %v2514 = vunpack.c.l.b16 %v2379
        %v2515 = vunpack.c.l.b16 %v2380
        %v2516 = vunpack.c.l.b16 %v2381
        %v2517 = vunpack.c.l.b16 %v2382
        %v2518 = vunpack.c.l.b16 %v2383
        %v2519 = vunpack.c.l.b16 %v2384
        %v2520 = vunpack.c.l.b16 %v2385
        %v2521 = vunpack.c.l.b16 %v2386
        %v2522 = vunpack.c.l.b16 %v2387
        %v2523 = vunpack.c.l.b16 %v2388
        %v2524 = vunpack.c.l.b16 %v2389
        %v2525 = vunpack.c.l.b16 %v2390
        %v2526 = vunpack.c.l.b16 %v2391
        %v2527 = vunpack.c.l.b16 %v2392
        %v2528 = vunpack.c.l.b16 %v2393
        %v2529 = vunpack.c.l.b16 %v2394
        %v2530 = vunpack.c.l.b16 %v2395
        %v2531 = vunpack.c.l.b16 %v2396
        %v2532 = vunpack.c.l.b16 %v2397
        %v2533 = vunpack.c.l.b16 %v2398
        %v2534 = vunpack.c.l.b16 %v2399
        %v2535 = vunpack.c.l.b16 %v2400
        %v2536 = vunpack.c.l.b16 %v2401
        %v2537 = vunpack.c.l.b16 %v2402
        %v2538 = vunpack.c.l.b16 %v2403
        %v2539 = vunpack.c.l.b16 %v2404
        %v2540 = vunpack.c.l.b16 %v2405
        %v2541 = vunpack.c.l.b16 %v2406
        %v2542 = vunpack.c.l.b16 %v2407
        %v2543 = vunpack.c.l.b16 %v2408
        %v2544 = vunpack.c.l.b16 %v2409
        %v2545 = vunpack.c.l.b16 %v2410
        %v2546 = vunpack.c.l.b16 %v2411
        %v2547 = vunpack.c.l.b16 %v2412
        %v2548 = vunpack.c.l.b16 %v2413
        %v2549 = vunpack.c.l.b16 %v2414
        %v2550 = vunpack.c.l.b16 %v2415
        %v2551 = vunpack.c.l.b16 %v2416
        %v2552 = vunpack.c.l.b16 %v2417
        %v2553 = vunpack.c.l.b16 %v2418
        %v2554 = vunpack.c.l.b16 %v2419
        %v2555 = vunpack.c.l.b16 %v2420
        %v2556 = vunpack.c.l.b16 %v2421
        %v2557 = vunpack.c.l.b16 %v2422
        %v2558 = vunpack.c.l.b16 %v2423
        %v2559 = vunpack.c.l.b16 %v2424
        %v2560 = vunpack.c.l.b16 %v2425
        %v2561 = vpack.c.b16 %v2498, %v2497
        %v2562 = vpack.c.b16 %v2500, %v2499
        %v2563 = vpack.c.b16 %v2502, %v2501
        %v2564 = vpack.c.b16 %v2504, %v2503
        %v2565 = vpack.c.b16 %v2506, %v2505
        %v2566 = vpack.c.b16 %v2508, %v2507
        %v2567 = vpack.c.b16 %v2510, %v2509
        %v2568 = vpack.c.b16 %v2512, %v2511
        %v2569 = vpack.c.b16 %v2514, %v2513
        %v2570 = vpack.c.b16 %v2516, %v2515
        %v2571 = vpack.c.b16 %v2518, %v2517
        %v2572 = vpack.c.b16 %v2520, %v2519
        %v2573 = vpack.c.b16 %v2522, %v2521
        %v2574 = vpack.c.b16 %v2524, %v2523
        %v2575 = vpack.c.b16 %v2526, %v2525
        %v2576 = vpack.c.b16 %v2528, %v2527
        %v2577 = vpack.c.b16 %v2530, %v2529
        %v2578 = vpack.c.b16 %v2532, %v2531
        %v2579 = vpack.c.b16 %v2534, %v2533
        %v2580 = vpack.c.b16 %v2536, %v2535
        %v2581 = vpack.c.b16 %v2538, %v2537
        %v2582 = vpack.c.b16 %v2540, %v2539
        %v2583 = vpack.c.b16 %v2542, %v2541
        %v2584 = vpack.c.b16 %v2544, %v2543
        %v2585 = vpack.c.b16 %v2546, %v2545
        %v2586 = vpack.c.b16 %v2548, %v2547
        %v2587 = vpack.c.b16 %v2550, %v2549
        %v2588 = vpack.c.b16 %v2552, %v2551
        %v2589 = vpack.c.b16 %v2554, %v2553
        %v2590 = vpack.c.b16 %v2556, %v2555
        %v2591 = vpack.c.b16 %v2558, %v2557
        %v2592 = vpack.c.b16 %v2560, %v2559
        %2625 = vmatprep.subr.bf16.mxu0 0
        %2626 = vmatpush1.bf16.msra.mxu0 %v2561
        %2627 = vmatprep.subr.bf16.mxu0 0
        %2628 = vmatpush1.bf16.msra.mxu0 %v2562
        %2629 = vmatprep.subr.bf16.mxu0 0
        %2630 = vmatpush1.bf16.msra.mxu0 %v2563
        %2631 = vmatprep.subr.bf16.mxu0 0
        %2632 = vmatpush1.bf16.msra.mxu0 %v2564
        %2633 = vmatprep.subr.bf16.mxu0 0
        %2634 = vmatpush1.bf16.msra.mxu0 %v2565
        %2635 = vmatprep.subr.bf16.mxu0 0
        %2636 = vmatpush1.bf16.msra.mxu0 %v2566
        %2637 = vmatprep.subr.bf16.mxu0 0
        %2638 = vmatpush1.bf16.msra.mxu0 %v2567
        %2639 = vmatprep.subr.bf16.mxu0 0
        %2640 = vmatpush1.bf16.msra.mxu0 %v2568
        %2641 = vmatprep.subr.bf16.mxu0 0
        %2642 = vmatpush1.bf16.msra.mxu0 %v2569
        %2643 = vmatprep.subr.bf16.mxu0 0
        %2644 = vmatpush1.bf16.msra.mxu0 %v2570
        %2645 = vmatprep.subr.bf16.mxu0 0
        %2646 = vmatpush1.bf16.msra.mxu0 %v2571
        %2647 = vmatprep.subr.bf16.mxu0 0
        %2648 = vmatpush1.bf16.msra.mxu0 %v2572
        %2649 = vmatprep.subr.bf16.mxu0 0
        %2650 = vmatpush1.bf16.msra.mxu0 %v2573
        %2651 = vmatprep.subr.bf16.mxu0 0
        %2652 = vmatpush1.bf16.msra.mxu0 %v2574
        %2653 = vmatprep.subr.bf16.mxu0 0
        %2654 = vmatpush1.bf16.msra.mxu0 %v2575
        %2655 = vmatprep.subr.bf16.mxu0 0
        %2656 = vmatpush1.bf16.msra.mxu0 %v2576
        %2657 = vmatprep.mubr.bf16.mxu0 %v2355
        %2658 = vmatmul.mubr.bf16.gmra.mrb[0].mxu0 %v2354
        %v2659 = vpop.f32.mrb[0].mxu0
        %v2660 = vadd.f32 %v2431, %v2659
        %v2661 = vpop.f32.mrb[0].mxu0
        %v2662 = vpop.f32.mrb[0].mxu0
        %v2663 = vadd.f32 %v2431, %v2662
        %v2664 = vpop.f32.mrb[0].mxu0
        %2665 = vmatprep.mubr.bf16.mxu0 %v2359
        %2666 = vmatmul.mubr.bf16.gmra.mrb[0].mxu0 %v2358
        %v2667 = vpop.f32.mrb[0].mxu0
        %v2668 = vadd.f32 %v2431, %v2667
        %v2669 = vpop.f32.mrb[0].mxu0
        %v2670 = vpop.f32.mrb[0].mxu0
        %v2671 = vadd.f32 %v2431, %v2670
        %v2672 = vpop.f32.mrb[0].mxu0
        %2673 = vdwg.mxu0
        %2674 = vmatprep.subr.bf16.mxu0 0
        %2675 = vmatpush1.bf16.msra.mxu0 %v2577
        %2676 = vmatprep.subr.bf16.mxu0 0
        %2677 = vmatpush1.bf16.msra.mxu0 %v2578
        %2678 = vmatprep.subr.bf16.mxu0 0
        %2679 = vmatpush1.bf16.msra.mxu0 %v2579
        %2680 = vmatprep.subr.bf16.mxu0 0
        %2681 = vmatpush1.bf16.msra.mxu0 %v2580
        %2682 = vmatprep.subr.bf16.mxu0 0
        %2683 = vmatpush1.bf16.msra.mxu0 %v2581
        %2684 = vmatprep.subr.bf16.mxu0 0
        %2685 = vmatpush1.bf16.msra.mxu0 %v2582
        %2686 = vmatprep.subr.bf16.mxu0 0
        %2687 = vmatpush1.bf16.msra.mxu0 %v2583
        %2688 = vmatprep.subr.bf16.mxu0 0
        %2689 = vmatpush1.bf16.msra.mxu0 %v2584
        %2690 = vmatprep.subr.bf16.mxu0 0
        %2691 = vmatpush1.bf16.msra.mxu0 %v2585
        %2692 = vmatprep.subr.bf16.mxu0 0
        %2693 = vmatpush1.bf16.msra.mxu0 %v2586
        %2694 = vmatprep.subr.bf16.mxu0 0
        %2695 = vmatpush1.bf16.msra.mxu0 %v2587
        %2696 = vmatprep.subr.bf16.mxu0 0
        %2697 = vmatpush1.bf16.msra.mxu0 %v2588
        %2698 = vmatprep.subr.bf16.mxu0 0
        %2699 = vmatpush1.bf16.msra.mxu0 %v2589
        %2700 = vmatprep.subr.bf16.mxu0 0
        %2701 = vmatpush1.bf16.msra.mxu0 %v2590
        %2702 = vmatprep.subr.bf16.mxu0 0
        %2703 = vmatpush1.bf16.msra.mxu0 %v2591
        %2704 = vmatprep.subr.bf16.mxu0 0
        %2705 = vmatpush1.bf16.msra.mxu0 %v2592
        %2706 = vmatprep.mubr.bf16.mxu0 %v2357
        %2707 = vmatmul.mubr.bf16.gmra.mrb[0].mxu0 %v2356
        %v2708 = vpop.f32.mrb[0].mxu0
        %v2709 = vadd.f32 %v2660, %v2708
        %v2710 = vpop.f32.mrb[0].mxu0
        %v2711 = vpop.f32.mrb[0].mxu0
        %v2712 = vadd.f32 %v2663, %v2711
        %v2713 = vpop.f32.mrb[0].mxu0
        %2714 = vmatprep.mubr.bf16.mxu0 %v2361
        %2715 = vmatmul.mubr.bf16.gmra.mrb[0].mxu0 %v2360
        %v2716 = vpop.f32.mrb[0].mxu0
        %v2717 = vadd.f32 %v2668, %v2716
        %v2718 = vpop.f32.mrb[0].mxu0
        %v2719 = vpop.f32.mrb[0].mxu0
        %v2720 = vadd.f32 %v2671, %v2719
        %v2721 = vpop.f32.mrb[0].mxu0
        %2722 = vdwg.mxu0
        %v2723 = vadd.f32 %v2709, %v533
        %v2724 = vadd.f32 %v2712, %v534
        %v2725 = vadd.f32 %v2717, %v535
        %v2726 = vadd.f32 %v2720, %v536
        %v2727 = vld [vmem:[%s4] sm:$0x1]
        %v2728 = vld [vmem:[%s5] sm:$0x1]
        %2729 = vadd.xlane.f32.xlu0 %v2723
        %v2730 = vpop.xlane.xlu0 %2729
        %2731 = vadd.xlane.f32.xlu0 %v2724
        %v2732 = vpop.xlane.xlu0 %2731
        %2733 = vadd.xlane.f32.xlu0 %v2725
        %v2734 = vpop.xlane.xlu0 %2733
        %2735 = vadd.xlane.f32.xlu0 %v2726
        %v2736 = vpop.xlane.xlu0 %2735
        %v2737 = vmul.f32 %v2723, %v2723
        %v2738 = vmul.f32 %v2724, %v2724
        %v2739 = vmul.f32 %v2725, %v2725
        %v2740 = vmul.f32 %v2726, %v2726
        %2741 = vadd.xlane.f32.xlu0 %v2737
        %v2742 = vpop.xlane.xlu0 %2741
        %2743 = vadd.xlane.f32.xlu0 %v2738
        %v2744 = vpop.xlane.xlu0 %2743
        %2745 = vadd.xlane.f32.xlu0 %v2739
        %v2746 = vpop.xlane.xlu0 %2745
        %2747 = vadd.xlane.f32.xlu0 %v2740
        %v2748 = vpop.xlane.xlu0 %2747
        %v2749 = vmul.f32 %v2730, 0.015625
        %v2750 = vmul.f32 %v2732, 0.015625
        %v2751 = vmul.f32 %v2734, 0.015625
        %v2752 = vmul.f32 %v2736, 0.015625
        %v2753 = vmul.f32 %v2742, 0.015625
        %v2754 = vmul.f32 %v2744, 0.015625
        %v2755 = vmul.f32 %v2746, 0.015625
        %v2756 = vmul.f32 %v2748, 0.015625
        %v2757 = vmul.f32 %v2749, %v2749
        %v2758 = vmul.f32 %v2750, %v2750
        %v2759 = vmul.f32 %v2751, %v2751
        %v2760 = vmul.f32 %v2752, %v2752
        %v2761 = vsub.f32 %v2753, %v2757
        %v2762 = vsub.f32 %v2754, %v2758
        %v2763 = vsub.f32 %v2755, %v2759
        %v2764 = vsub.f32 %v2756, %v2760
        %v2765 = vadd.f32 %v2761, 1e-05
        %v2766 = vadd.f32 %v2762, 1e-05
        %v2767 = vadd.f32 %v2763, 1e-05
        %v2768 = vadd.f32 %v2764, 1e-05
        %v2769 = vrsqrt.pop %v2765
        %v2770 = vrsqrt.pop %v2766
        %v2771 = vrsqrt.pop %v2767
        %v2772 = vrsqrt.pop %v2768
        %v2773 = vsub.f32 %v2723, %v2749
        %v2774 = vsub.f32 %v2724, %v2750
        %v2775 = vsub.f32 %v2725, %v2751
        %v2776 = vsub.f32 %v2726, %v2752
        %v2777 = vmul.f32 %v2773, %v2769
        %v2778 = vmul.f32 %v2774, %v2770
        %v2779 = vmul.f32 %v2775, %v2771
        %v2780 = vmul.f32 %v2776, %v2772
        %v2782 = vlaneseq
        %v2783 = vshrl.u32 %v2782, 7
        %v2784 = vsub.s32 0, %v2783
        %v2785 = vrot.slane %v2727, %v2784
        %v2787 = vmul.f32 %v2777, %v2785
        %v2788 = vmul.f32 %v2778, %v2785
        %v2789 = vmul.f32 %v2779, %v2785
        %v2790 = vmul.f32 %v2780, %v2785
        %v2792 = vlaneseq
        %v2793 = vshrl.u32 %v2792, 7
        %v2794 = vsub.s32 0, %v2793
        %v2795 = vrot.slane %v2728, %v2794
        %v2797 = vadd.f32 %v2787, %v2795
        %v2798 = vadd.f32 %v2788, %v2795
        %v2799 = vadd.f32 %v2789, %v2795
        %v2800 = vadd.f32 %v2790, %v2795
        %v2801 = vpack.c.bf16 %v2798, %v2797
        %v2802 = vpack.c.bf16 %v2800, %v2799
        %v2803 = vld [vmem:[#allocation8] sm:$0xf]
        %v2804 = vld [vmem:[#allocation8 + $0x4] sm:$0xf]
        %v2805 = vld [vmem:[#allocation8 + $0x8] sm:$0xf]
        %v2806 = vld [vmem:[#allocation8 + $0xc] sm:$0xf]
        %v2807 = vld [vmem:[#allocation8 + $0x10] sm:$0xf]
        %v2808 = vld [vmem:[#allocation8 + $0x14] sm:$0xf]
        %v2809 = vld [vmem:[#allocation8 + $0x18] sm:$0xf]
        %v2810 = vld [vmem:[#allocation8 + $0x1c] sm:$0xf]
        %v2811 = vld [vmem:[#allocation8 + $0x20] sm:$0xf]
        %v2812 = vld [vmem:[#allocation8 + $0x24] sm:$0xf]
        %v2813 = vld [vmem:[#allocation8 + $0x28] sm:$0xf]
        %v2814 = vld [vmem:[#allocation8 + $0x2c] sm:$0xf]
        %v2815 = vld [vmem:[#allocation8 + $0x30] sm:$0xf]
        %v2816 = vld [vmem:[#allocation8 + $0x34] sm:$0xf]
        %v2817 = vld [vmem:[#allocation8 + $0x38] sm:$0xf]
        %v2818 = vld [vmem:[#allocation8 + $0x3c] sm:$0xf]
        %v2819 = vld [vmem:[%s7] sm:$0x1]
        %v2821 = vlaneseq
        %v2822 = vshrl.u32 %v2821, 7
        %v2823 = vsub.s32 0, %v2822
        %v2824 = vrot.slane %v2819, %v2823
        %v2842 = vunpack.c.l.b16 %v2803
        %v2843 = vunpack.c.l.b16 %v2804
        %v2844 = vunpack.c.l.b16 %v2805
        %v2845 = vunpack.c.l.b16 %v2806
        %v2846 = vunpack.c.l.b16 %v2807
        %v2847 = vunpack.c.l.b16 %v2808
        %v2848 = vunpack.c.l.b16 %v2809
        %v2849 = vunpack.c.l.b16 %v2810
        %v2850 = vunpack.c.l.b16 %v2811
        %v2851 = vunpack.c.l.b16 %v2812
        %v2852 = vunpack.c.l.b16 %v2813
        %v2853 = vunpack.c.l.b16 %v2814
        %v2854 = vunpack.c.l.b16 %v2815
        %v2855 = vunpack.c.l.b16 %v2816
        %v2856 = vunpack.c.l.b16 %v2817
        %v2857 = vunpack.c.l.b16 %v2818
        %v2858 = vpack.c.b16 %v2843, %v2842
        %v2859 = vpack.c.b16 %v2845, %v2844
        %v2860 = vpack.c.b16 %v2847, %v2846
        %v2861 = vpack.c.b16 %v2849, %v2848
        %v2862 = vpack.c.b16 %v2851, %v2850
        %v2863 = vpack.c.b16 %v2853, %v2852
        %v2864 = vpack.c.b16 %v2855, %v2854
        %v2865 = vpack.c.b16 %v2857, %v2856
        %2874 = vmatprep.subr.bf16.mxu0 0
        %2875 = vmatpush1.bf16.msra.mxu0 %v2858
        %2876 = vmatprep.subr.bf16.mxu0 0
        %2877 = vmatpush1.bf16.msra.mxu0 %v2859
        %2878 = vmatprep.subr.bf16.mxu0 0
        %2879 = vmatpush1.bf16.msra.mxu0 %v2860
        %2880 = vmatprep.subr.bf16.mxu0 0
        %2881 = vmatpush1.bf16.msra.mxu0 %v2861
        %2882 = vmatprep.subr.bf16.mxu0 0
        %2883 = vmatpush1.bf16.msra.mxu0 %v2862
        %2884 = vmatprep.subr.bf16.mxu0 0
        %2885 = vmatpush1.bf16.msra.mxu0 %v2863
        %2886 = vmatprep.subr.bf16.mxu0 0
        %2887 = vmatpush1.bf16.msra.mxu0 %v2864
        %2888 = vmatprep.subr.bf16.mxu0 0
        %2889 = vmatpush1.bf16.msra.mxu0 %v2865
        %2890 = vmatprep.subr.bf16.mxu0 0
        %2891 = vmatpush1.bf16.msra.mxu0 0
        %2892 = vmatprep.subr.bf16.mxu0 0
        %2893 = vmatpush1.bf16.msra.mxu0 0
        %2894 = vmatprep.subr.bf16.mxu0 0
        %2895 = vmatpush1.bf16.msra.mxu0 0
        %2896 = vmatprep.subr.bf16.mxu0 0
        %2897 = vmatpush1.bf16.msra.mxu0 0
        %2898 = vmatprep.subr.bf16.mxu0 0
        %2899 = vmatpush1.bf16.msra.mxu0 0
        %2900 = vmatprep.subr.bf16.mxu0 0
        %2901 = vmatpush1.bf16.msra.mxu0 0
        %2902 = vmatprep.subr.bf16.mxu0 0
        %2903 = vmatpush1.bf16.msra.mxu0 0
        %2904 = vmatprep.subr.bf16.mxu0 0
        %2905 = vmatpush1.bf16.msra.mxu0 0
        %2906 = vmatprep.mubr.bf16.mxu0 0
        %2907 = vmatmul.mubr.bf16.gmra.mrb[0].mxu0 %v2801
        %v2908 = vpop.f32.mrb[0].mxu0
        %v2909 = vadd.f32 %v2824, %v2908
        %v2910 = vpop.f32.mrb[0].mxu0
        %v2911 = vpop.f32.mrb[0].mxu0
        %v2912 = vadd.f32 %v2824, %v2911
        %v2913 = vpop.f32.mrb[0].mxu0
        %2914 = vmatprep.mubr.bf16.mxu0 0
        %2915 = vmatmul.mubr.bf16.gmra.mrb[0].mxu0 %v2802
        %v2916 = vpop.f32.mrb[0].mxu0
        %v2917 = vadd.f32 %v2824, %v2916
        %v2918 = vpop.f32.mrb[0].mxu0
        %v2919 = vpop.f32.mrb[0].mxu0
        %v2920 = vadd.f32 %v2824, %v2919
        %v2921 = vpop.f32.mrb[0].mxu0
        %2922 = vdwg.mxu0
        %v2923 = vmax.f32 %v2909, 0.0
        %v2924 = vmax.f32 %v2912, 0.0
        %v2925 = vmax.f32 %v2917, 0.0
        %v2926 = vmax.f32 %v2920, 0.0
        %v2927 = vpack.c.bf16 %v2924, %v2923
        %v2928 = vpack.c.bf16 %v2926, %v2925
        %v2929 = vld [vmem:[#allocation10] sm:$0xf]
        %v2930 = vld [vmem:[#allocation10 + $0x4] sm:$0xf]
        %v2931 = vld [vmem:[#allocation10 + $0x8] sm:$0xf]
        %v2932 = vld [vmem:[#allocation10 + $0xc] sm:$0xf]
        %v2933 = vld [vmem:[#allocation10 + $0x10] sm:$0xf]
        %v2934 = vld [vmem:[#allocation10 + $0x14] sm:$0xf]
        %v2935 = vld [vmem:[#allocation10 + $0x18] sm:$0xf]
        %v2936 = vld [vmem:[#allocation10 + $0x1c] sm:$0xf]
        %v2937 = vld [vmem:[#allocation10 + $0x20] sm:$0xf]
        %v2938 = vld [vmem:[#allocation10 + $0x24] sm:$0xf]
        %v2939 = vld [vmem:[#allocation10 + $0x28] sm:$0xf]
        %v2940 = vld [vmem:[#allocation10 + $0x2c] sm:$0xf]
        %v2941 = vld [vmem:[#allocation10 + $0x30] sm:$0xf]
        %v2942 = vld [vmem:[#allocation10 + $0x34] sm:$0xf]
        %v2943 = vld [vmem:[#allocation10 + $0x38] sm:$0xf]
        %v2944 = vld [vmem:[#allocation10 + $0x3c] sm:$0xf]
        %v2945 = vld [vmem:[%s9] sm:$0x1]
        %v2947 = vlaneseq
        %v2948 = vshrl.u32 %v2947, 7
        %v2949 = vsub.s32 0, %v2948
        %v2950 = vrot.slane %v2945, %v2949
        %v2968 = vunpack.c.l.b16 %v2929
        %v2969 = vunpack.c.l.b16 %v2930
        %v2970 = vunpack.c.l.b16 %v2931
        %v2971 = vunpack.c.l.b16 %v2932
        %v2972 = vunpack.c.l.b16 %v2933
        %v2973 = vunpack.c.l.b16 %v2934
        %v2974 = vunpack.c.l.b16 %v2935
        %v2975 = vunpack.c.l.b16 %v2936
        %v2976 = vunpack.c.l.b16 %v2937
        %v2977 = vunpack.c.l.b16 %v2938
        %v2978 = vunpack.c.l.b16 %v2939
        %v2979 = vunpack.c.l.b16 %v2940
        %v2980 = vunpack.c.l.b16 %v2941
        %v2981 = vunpack.c.l.b16 %v2942
        %v2982 = vunpack.c.l.b16 %v2943
        %v2983 = vunpack.c.l.b16 %v2944
        %v2984 = vpack.c.b16 %v2969, %v2968
        %v2985 = vpack.c.b16 %v2971, %v2970
        %v2986 = vpack.c.b16 %v2973, %v2972
        %v2987 = vpack.c.b16 %v2975, %v2974
        %v2988 = vpack.c.b16 %v2977, %v2976
        %v2989 = vpack.c.b16 %v2979, %v2978
        %v2990 = vpack.c.b16 %v2981, %v2980
        %v2991 = vpack.c.b16 %v2983, %v2982
        %3000 = vmatprep.subr.bf16.mxu0 0
        %3001 = vmatpush1.bf16.msra.mxu0 %v2984
        %3002 = vmatprep.subr.bf16.mxu0 0
        %3003 = vmatpush1.bf16.msra.mxu0 %v2985
        %3004 = vmatprep.subr.bf16.mxu0 0
        %3005 = vmatpush1.bf16.msra.mxu0 %v2986
        %3006 = vmatprep.subr.bf16.mxu0 0
        %3007 = vmatpush1.bf16.msra.mxu0 %v2987
        %3008 = vmatprep.subr.bf16.mxu0 0
        %3009 = vmatpush1.bf16.msra.mxu0 %v2988
        %3010 = vmatprep.subr.bf16.mxu0 0
        %3011 = vmatpush1.bf16.msra.mxu0 %v2989
        %3012 = vmatprep.subr.bf16.mxu0 0
        %3013 = vmatpush1.bf16.msra.mxu0 %v2990
        %3014 = vmatprep.subr.bf16.mxu0 0
        %3015 = vmatpush1.bf16.msra.mxu0 %v2991
        %3016 = vmatprep.subr.bf16.mxu0 0
        %3017 = vmatpush1.bf16.msra.mxu0 0
        %3018 = vmatprep.subr.bf16.mxu0 0
        %3019 = vmatpush1.bf16.msra.mxu0 0
        %3020 = vmatprep.subr.bf16.mxu0 0
        %3021 = vmatpush1.bf16.msra.mxu0 0
        %3022 = vmatprep.subr.bf16.mxu0 0
        %3023 = vmatpush1.bf16.msra.mxu0 0
        %3024 = vmatprep.subr.bf16.mxu0 0
        %3025 = vmatpush1.bf16.msra.mxu0 0
        %3026 = vmatprep.subr.bf16.mxu0 0
        %3027 = vmatpush1.bf16.msra.mxu0 0
        %3028 = vmatprep.subr.bf16.mxu0 0
        %3029 = vmatpush1.bf16.msra.mxu0 0
        %3030 = vmatprep.subr.bf16.mxu0 0
        %3031 = vmatpush1.bf16.msra.mxu0 0
        %3032 = vmatprep.mubr.bf16.mxu0 0
        %3033 = vmatmul.mubr.bf16.gmra.mrb[0].mxu0 %v2927
        %v3034 = vpop.f32.mrb[0].mxu0
        %v3035 = vadd.f32 %v2950, %v3034
        %v3036 = vpop.f32.mrb[0].mxu0
        %v3037 = vpop.f32.mrb[0].mxu0
        %v3038 = vadd.f32 %v2950, %v3037
        %v3039 = vpop.f32.mrb[0].mxu0
        %3040 = vmatprep.mubr.bf16.mxu0 0
        %3041 = vmatmul.mubr.bf16.gmra.mrb[0].mxu0 %v2928
        %v3042 = vpop.f32.mrb[0].mxu0
        %v3043 = vadd.f32 %v2950, %v3042
        %v3044 = vpop.f32.mrb[0].mxu0
        %v3045 = vpop.f32.mrb[0].mxu0
        %v3046 = vadd.f32 %v2950, %v3045
        %v3047 = vpop.f32.mrb[0].mxu0
        %3048 = vdwg.mxu0
        %v3049 = vadd.f32 %v3035, %v2797
        %v3050 = vadd.f32 %v3038, %v2798
        %v3051 = vadd.f32 %v3043, %v2799
        %v3052 = vadd.f32 %v3046, %v2800
        %v3053 = vld [vmem:[%s10] sm:$0x1]
        %v3054 = vld [vmem:[%s11] sm:$0x1]
        %3055 = vadd.xlane.f32.xlu0 %v3049
        %v3056 = vpop.xlane.xlu0 %3055
        %3057 = vadd.xlane.f32.xlu0 %v3050
        %v3058 = vpop.xlane.xlu0 %3057
        %3059 = vadd.xlane.f32.xlu0 %v3051
        %v3060 = vpop.xlane.xlu0 %3059
        %3061 = vadd.xlane.f32.xlu0 %v3052
        %v3062 = vpop.xlane.xlu0 %3061
        %v3063 = vmul.f32 %v3049, %v3049
        %v3064 = vmul.f32 %v3050, %v3050
        %v3065 = vmul.f32 %v3051, %v3051
        %v3066 = vmul.f32 %v3052, %v3052
        %3067 = vadd.xlane.f32.xlu0 %v3063
        %v3068 = vpop.xlane.xlu0 %3067
        %3069 = vadd.xlane.f32.xlu0 %v3064
        %v3070 = vpop.xlane.xlu0 %3069
        %3071 = vadd.xlane.f32.xlu0 %v3065
        %v3072 = vpop.xlane.xlu0 %3071
        %3073 = vadd.xlane.f32.xlu0 %v3066
        %v3074 = vpop.xlane.xlu0 %3073
        %v3075 = vmul.f32 %v3056, 0.015625
        %v3076 = vmul.f32 %v3058, 0.015625
        %v3077 = vmul.f32 %v3060, 0.015625
        %v3078 = vmul.f32 %v3062, 0.015625
        %v3079 = vmul.f32 %v3068, 0.015625
        %v3080 = vmul.f32 %v3070, 0.015625
        %v3081 = vmul.f32 %v3072, 0.015625
        %v3082 = vmul.f32 %v3074, 0.015625
        %v3083 = vmul.f32 %v3075, %v3075
        %v3084 = vmul.f32 %v3076, %v3076
        %v3085 = vmul.f32 %v3077, %v3077
        %v3086 = vmul.f32 %v3078, %v3078
        %v3087 = vsub.f32 %v3079, %v3083
        %v3088 = vsub.f32 %v3080, %v3084
        %v3089 = vsub.f32 %v3081, %v3085
        %v3090 = vsub.f32 %v3082, %v3086
        %v3091 = vadd.f32 %v3087, 1e-05
        %v3092 = vadd.f32 %v3088, 1e-05
        %v3093 = vadd.f32 %v3089, 1e-05
        %v3094 = vadd.f32 %v3090, 1e-05
        %v3095 = vrsqrt.pop %v3091
        %v3096 = vrsqrt.pop %v3092
        %v3097 = vrsqrt.pop %v3093
        %v3098 = vrsqrt.pop %v3094
        %v3099 = vsub.f32 %v3049, %v3075
        %v3100 = vsub.f32 %v3050, %v3076
        %v3101 = vsub.f32 %v3051, %v3077
        %v3102 = vsub.f32 %v3052, %v3078
        %v3103 = vmul.f32 %v3099, %v3095
        %v3104 = vmul.f32 %v3100, %v3096
        %v3105 = vmul.f32 %v3101, %v3097
        %v3106 = vmul.f32 %v3102, %v3098
        %v3108 = vlaneseq
        %v3109 = vshrl.u32 %v3108, 7
        %v3110 = vsub.s32 0, %v3109
        %v3111 = vrot.slane %v3053, %v3110
        %v3113 = vmul.f32 %v3103, %v3111
        %v3114 = vmul.f32 %v3104, %v3111
        %v3115 = vmul.f32 %v3105, %v3111
        %v3116 = vmul.f32 %v3106, %v3111
        %v3118 = vlaneseq
        %v3119 = vshrl.u32 %v3118, 7
        %v3120 = vsub.s32 0, %v3119
        %v3121 = vrot.slane %v3054, %v3120
        %v3123 = vadd.f32 %v3113, %v3121
        %v3124 = vadd.f32 %v3114, %v3121
        %v3125 = vadd.f32 %v3115, %v3121
        %v3126 = vadd.f32 %v3116, %v3121
        %3127 = vst [vmem:[%s521] sm:$0xff] %v3123
        %3128 = vst [vmem:[%s521 + $0x8] sm:$0xff] %v3124
        %3129 = vst [vmem:[%s521 + $0x10] sm:$0xff] %v3125
        %3130 = vst [vmem:[%s521 + $0x18] sm:$0xff] %v3126
        %v3131 = vmul.f32 %v2260, 0.25
        %v3132 = vmul.f32 %v2261, 0.25
        %v3133 = vmul.f32 %v2262, 0.25
        %v3134 = vmul.f32 %v2263, 0.25
        %3135 = vst.msk [vmem:[%s528] sm:$0xff] %vm1525, %v3131
        %3136 = vst.msk [vmem:[%s528 + $0x8] sm:$0xff] %vm1525, %v3132
        %3137 = vst.msk [vmem:[%s528 + $0x10] sm:$0xff] %vm1525, %v3133
        %3138 = vst.msk [vmem:[%s528 + $0x18] sm:$0xff] %vm1525, %v3134
        %s3139 = sand.u32 %s301, 1
        %s3140 = scalar_lea.sflag [#allocation4], %s3139
        %s3141 = sand.u32 %s301, 1
        %s3142 = smul.addr %s3141, 32
        %s3143 = scalar_lea.vmem [#allocation11], %s3142
        %s3144 = sand.u32 %s327, 1
        %s3145 = scalar_lea.sflag [#allocation13], %s3144
        %s3146 = sand.u32 %s327, 1
        %s3147 = smul.addr %s3146, 32
        %s3148 = scalar_lea.vmem [#allocation12], %s3147
        // Predicated region
        $region89: #{tpu_custom_call.1} parent=67 // pred_check
          %p3149 = pneg %p311
        $region90: #{tpu_custom_call.1} parent=67 // pred_check_branch
          %3151 = sbr.rel (%p3149) target = $region92
        $region91: #{tpu_custom_call.1} parent=67 // pred_region
          %s3152 = smul.u32 2, %s36
          %s3154 = ssub.s32 512, 512
          %3155 = vsyncadd %s3140, %s3154
          %s3156 = smul.addr %s3152, 2
          %s3157 = smul.addr %s3156, 128
          %s3158 = scalar_lea.hbm %s12, %s3157
          %s3159 = sshll.u32 %s3143, 4
          %s3160 = int_to_ptr.vmem [resolvable:$true] %s3159
          %3165 = dma.vmem_to_hbm [thread:$0]  %s3160, 512, %s3158, %s3140, 128, 128, 8
        $region92: #{tpu_custom_call.1} parent=67 // pred_fallthru
          _
        // Predicated region
        $region93: #{tpu_custom_call.1} parent=67 // pred_check
          %p3166 = pneg %p337
        $region94: #{tpu_custom_call.1} parent=67 // pred_check_branch
          %3168 = sbr.rel (%p3166) target = $region96
        $region95: #{tpu_custom_call.1} parent=67 // pred_region
          %s3169 = smul.u32 2, %s36
          %s3171 = ssub.s32 512, 512
          %3172 = vsyncadd %s3145, %s3171
          %s3173 = smul.addr %s3169, 2
          %s3174 = smul.addr %s3173, 128
          %s3175 = scalar_lea.hbm %s13, %s3174
          %s3176 = sshll.u32 %s3148, 4
          %s3177 = int_to_ptr.vmem [resolvable:$true] %s3176
          %3182 = dma.vmem_to_hbm [thread:$0]  %s3177, 512, %s3175, %s3145, 128, 128, 8
        $region96: #{tpu_custom_call.1} parent=67 // pred_fallthru
          _
      $region68: #{tpu_custom_call.1} parent=5 // pred_fallthru
        _
      %p3183 = scmp.le.s32.totalorder 2, %s31
      // Predicated region
      $region97: #{tpu_custom_call.1} parent=5 // pred_check
        %p3184 = pneg %p3183
      $region98: #{tpu_custom_call.1} parent=5 // pred_check_branch
        %3186 = sbr.rel (%p3184) target = $region100
      $region99: #{tpu_custom_call.1} parent=5 // pred_region
        %s3187 = ssub.s32 %s31, 2
        // Predicated region
        $region101: #{tpu_custom_call.1} parent=99 // pred_check
          %p3188 = pneg %p317
        $region102: #{tpu_custom_call.1} parent=99 // pred_check_branch
          %3190 = sbr.rel (%p3188) target = $region104
        $region103: #{tpu_custom_call.1} parent=99 // pred_region
          %s3191 = sand.u32 %s302, 1
          %s3192 = scalar_lea.sflag [#allocation4], %s3191
          %s3193 = sand.u32 %s302, 1
          %s3194 = smul.addr %s3193, 32
          %s3195 = scalar_lea.vmem [#allocation11], %s3194
          %3196 = dma.done %s3192, 512
        $region104: #{tpu_custom_call.1} parent=99 // pred_fallthru
          _
        // Predicated region
        $region105: #{tpu_custom_call.1} parent=99 // pred_check
          %p3197 = pneg %p343
        $region106: #{tpu_custom_call.1} parent=99 // pred_check_branch
          %3199 = sbr.rel (%p3197) target = $region108
        $region107: #{tpu_custom_call.1} parent=99 // pred_region
          %s3200 = sand.u32 %s328, 1
          %s3201 = scalar_lea.sflag [#allocation13], %s3200
          %s3202 = sand.u32 %s328, 1
          %s3203 = smul.addr %s3202, 32
          %s3204 = scalar_lea.vmem [#allocation12], %s3203
          %3205 = dma.done %s3201, 512
        $region108: #{tpu_custom_call.1} parent=99 // pred_fallthru
          _
      $region100: #{tpu_custom_call.1} parent=5 // pred_fallthru
        _
    $region6: #{tpu_custom_call.1} parent=1 // loop_footer
      %s35 = sadd.s32 1, %s31
    $region7: #{tpu_custom_call.1} parent=1 // loop_footer_branch
      %30 = sbr.rel target = $region3
    $region8: #{tpu_custom_call.1} parent=1 // loop_exit
      _
    %3206 = vsyncpa [#allocation3], 1
    %s3207 = scalar_lea.sflag [#allocation3], 1
    %3208 = vsyncpa %s3207, 1
    %3209 = vsyncpa [#allocation6], 1
    %3210 = vsyncpa [#allocation9], 1
    %3211 = vsyncpa [#allocation4], 1
    %s3212 = scalar_lea.sflag [#allocation4], 1
    %3213 = vsyncpa %s3212, 1
    %3214 = vsyncpa [#allocation13], 1
    %s3215 = scalar_lea.sflag [#allocation13], 1
    %3216 = vsyncpa %s3215, 1

// kernel: tpu_custom_call.1
$region0: #{tpu_custom_call.1}
  #allocation0 [shape = 'u32[]', space=smem, size = 0x4, offset = 0x4, fixed_abs, tag = 'smem constant byte address 0x4 - core index']
  #allocation1 [shape = 'u32[144,128]{1,0:T(1,128)}', space=vmem, size = 0x12000, scoped, tag = 'internal scratch']
  %s0 = inlined_call_operand.hbm [shape: f32[8,16,128], index: 0, kind: input, shape index: {}]
  %s1 = inlined_call_operand.hbm [shape: bf16[128,1536], index: 1, kind: input, shape index: {}]
  %s2 = inlined_call_operand.hbm [shape: bf16[512,128], index: 2, kind: input, shape index: {}]
  %s3 = inlined_call_operand.vmem [shape: f32[1,128], index: 3, kind: input, shape index: {}]
  %s4 = inlined_call_operand.vmem [shape: f32[1,128], index: 4, kind: input, shape index: {}]
  %s5 = inlined_call_operand.vmem [shape: f32[1,128], index: 5, kind: input, shape index: {}]
  %s6 = inlined_call_operand.hbm [shape: bf16[128,128], index: 6, kind: input, shape index: {}]
  %s7 = inlined_call_operand.vmem [shape: f32[1,128], index: 7, kind: input, shape index: {}]
  %s8 = inlined_call_operand.hbm [shape: bf16[128,128], index: 8, kind: input, shape index: {}]
  %s9 = inlined_call_operand.vmem [shape: f32[1,128], index: 9, kind: input, shape index: {}]
  %s10 = inlined_call_operand.vmem [shape: f32[1,128], index: 10, kind: input, shape index: {}]
  %s11 = inlined_call_operand.vmem [shape: f32[1,128], index: 11, kind: input, shape index: {}]
  %s12 = inlined_call_operand.hbm [shape: f32[8,16,128], index: 12, kind: output, shape index: {0}]
  %s13 = inlined_call_operand.hbm [shape: f32[8,16,16], index: 13, kind: output, shape index: {1}]
  %14 = xla_tuple %s12, %s13
  %s15 = sld [smem:[#allocation0]]
  $region109: #{tpu_custom_call.1} parent=0
    _
  %s17 = ssub.s32 1, %s15
  %s18 = scalar_select 0, %s17, %s15
  $region1: #{tpu_custom_call.1} parent=0
    #allocation2 [shape = 'u8[32768]{0}', space=vmem, size = 0x8000, scoped, tag = 'input window, operand 0']
    #allocation3 [shape = 's32[2]{0}', space=sflag, size = 0x8, scoped, tag = 'scoped memory for tpu_custom_call.1']
    #allocation4 [shape = 's32[2]{0}', space=sflag, size = 0x8, scoped, tag = 'scoped memory for tpu_custom_call.1']
    #allocation5 [shape = 'u8[393216]{0}', space=vmem, size = 0x60000, scoped, tag = 'input window, operand 1, single buffered']
    #allocation6 [shape = 's32[1]{0}', space=sflag, size = 0x4, scoped, tag = 'scoped memory for tpu_custom_call.1']
    #allocation7 [shape = 'u8[131072]{0}', space=vmem, size = 0x20000, scoped, tag = 'input window, operand 2, single buffered']
    #allocation8 [shape = 'u8[32768]{0}', space=vmem, size = 0x8000, scoped, tag = 'input window, operand 6, single buffered']
    #allocation9 [shape = 's32[1]{0}', space=sflag, size = 0x4, scoped, tag = 'scoped memory for tpu_custom_call.1']
    #allocation10 [shape = 'u8[32768]{0}', space=vmem, size = 0x8000, scoped, tag = 'input window, operand 8, single buffered']
    #allocation11 [shape = 'u8[32768]{0}', space=vmem, size = 0x8000, scoped, tag = 'output window, operand 0']
    #allocation12 [shape = 'u8[32768]{0}', space=vmem, size = 0x8000, scoped, tag = 'output window, operand 1']
    #allocation13 [shape = 's32[2]{0}', space=sflag, size = 0x8, scoped, tag = 'scoped memory for tpu_custom_call.1']
    %19 = vsyncpa [#allocation3], 0
    %s20 = scalar_lea.sflag [#allocation3], 1
    %21 = vsyncpa %s20, 0
    %22 = vsyncpa [#allocation6], 0
    %23 = vsyncpa [#allocation9], 0
    %24 = vsyncpa [#allocation4], 0
    %s25 = scalar_lea.sflag [#allocation4], 1
    %26 = vsyncpa %s25, 0
    %27 = vsyncpa [#allocation13], 0
    %s28 = scalar_lea.sflag [#allocation13], 1
    %29 = vsyncpa %s28, 0
    loop: start=0, step=1, limit=6
    $region2: #{tpu_custom_call.1} parent=1 // loop_pre_header
      _
    $region3: #{tpu_custom_call.1} parent=1 // loop_header
      %s31 = sphi 0, %s35
      %p32 = scmp.ge.s32.totalorder %s31, 6
      %s41 = sphi 0, %s43
      %s44 = sphi 0, %s41
      %s45 = sphi 0, %s44
      %s61 = sphi 0, %s45
      %s65 = sphi 0, %s65
      %s67 = sphi 0, %s65
      %s68 = sphi 0, %s67
      %s82 = sphi 0, %s68
      %s86 = sphi 0, %s86
      %s88 = sphi 0, %s86
      %s89 = sphi 0, %s88
      %s103 = sphi 0, %s89
      %s107 = sphi 0, %s107
      %s109 = sphi 0, %s107
      %s110 = sphi 0, %s109
      %s124 = sphi 0, %s110
      %s128 = sphi 0, %s128
      %s130 = sphi 0, %s128
      %s131 = sphi 0, %s130
      %s145 = sphi 0, %s131
      %s149 = sphi 0, %s149
      %s151 = sphi 0, %s149
      %s152 = sphi 0, %s151
      %s166 = sphi 0, %s152
      %s170 = sphi 0, %s170
      %s172 = sphi 0, %s170
      %s173 = sphi 0, %s172
      %s187 = sphi 0, %s173
      %s191 = sphi 0, %s191
      %s193 = sphi 0, %s191
      %s194 = sphi 0, %s193
      %s208 = sphi 0, %s194
      %s212 = sphi 0, %s212
      %s214 = sphi 0, %s212
      %s215 = sphi 0, %s214
      %s229 = sphi 0, %s215
      %s233 = sphi 0, %s233
      %s235 = sphi 0, %s233
      %s236 = sphi 0, %s235
      %s250 = sphi 0, %s236
      %s254 = sphi 0, %s254
      %s256 = sphi 0, %s254
      %s257 = sphi 0, %s256
      %s271 = sphi 0, %s257
      %s275 = sphi 0, %s275
      %s277 = sphi 0, %s275
      %s278 = sphi 0, %s277
      %s292 = sphi 0, %s278
      %s298 = sphi 0, %s300
      %s301 = sphi 0, %s298
      %s302 = sphi 0, %s301
      %s318 = sphi 0, %s302
      %s324 = sphi 0, %s326
      %s327 = sphi 0, %s324
      %s328 = sphi 0, %s327
      %s344 = sphi 0, %s328
    $region4: #{tpu_custom_call.1} parent=1 // loop_header_branch
      %34 = sbr.rel (%p32) target = $region8
    $region5: #{tpu_custom_call.1} parent=1 // loop_body
      %s36 = ssub.s32 %s31, 1
      %s37 = ssub.s32 %s31, 2
      %s38 = sadd.s32 %s31, 1
      %s39 = ssub.s32 %s31, %s38
      %p40 = scmp.eq.s32.totalorder %s39, 0
      %s42 = sadd.s32 %s41, 1
      %s43 = scalar_select %p40, %s41, %s42
      %p46 = pneg %p40
      %p47 = scmp.eq.s32.totalorder %s31, 3
      %p48 = por %p46, %p47
      %p49 = scmp.ne.s32.totalorder %s41, %s44
      %p50 = scmp.eq.s32.totalorder %s31, 0
      %p51 = por %p49, %p50
      %p52 = scmp.ne.s32.totalorder %s41, %s44
      %p53 = scmp.eq.s32.totalorder %s36, 3
      %p54 = por %p52, %p53
      %p55 = scmp.ne.s32.totalorder %s44, %s45
      %p56 = scmp.eq.s32.totalorder %s36, 0
      %p57 = por %p55, %p56
      %p58 = scmp.ne.s32.totalorder %s44, %s45
      %p59 = scmp.eq.s32.totalorder %s37, 3
      %p60 = por %p58, %p59
      %p62 = scmp.ne.s32.totalorder %s45, %s61
      %p63 = scmp.eq.s32.totalorder %s37, 0
      %p64 = por %p62, %p63
      %s66 = sadd.s32 %s65, 1
      %p69 = scmp.eq.s32.totalorder %s31, 3
      %p70 = scmp.ne.s32.totalorder %s65, %s67
      %p71 = scmp.eq.s32.totalorder %s31, 0
      %p72 = por %p70, %p71
      %p73 = scmp.ne.s32.totalorder %s65, %s67
      %p74 = scmp.eq.s32.totalorder %s36, 3
      %p75 = por %p73, %p74
      %p76 = scmp.ne.s32.totalorder %s67, %s68
      %p77 = scmp.eq.s32.totalorder %s36, 0
      %p78 = por %p76, %p77
      %p79 = scmp.ne.s32.totalorder %s67, %s68
      %p80 = scmp.eq.s32.totalorder %s37, 3
      %p81 = por %p79, %p80
      %p83 = scmp.ne.s32.totalorder %s68, %s82
      %p84 = scmp.eq.s32.totalorder %s37, 0
      %p85 = por %p83, %p84
      %s87 = sadd.s32 %s86, 1
      %p90 = scmp.eq.s32.totalorder %s31, 3
      %p91 = scmp.ne.s32.totalorder %s86, %s88
      %p92 = scmp.eq.s32.totalorder %s31, 0
      %p93 = por %p91, %p92
      %p94 = scmp.ne.s32.totalorder %s86, %s88
      %p95 = scmp.eq.s32.totalorder %s36, 3
      %p96 = por %p94, %p95
      %p97 = scmp.ne.s32.totalorder %s88, %s89
      %p98 = scmp.eq.s32.totalorder %s36, 0
      %p99 = por %p97, %p98
      %p100 = scmp.ne.s32.totalorder %s88, %s89
      %p101 = scmp.eq.s32.totalorder %s37, 3
      %p102 = por %p100, %p101
      %p104 = scmp.ne.s32.totalorder %s89, %s103
      %p105 = scmp.eq.s32.totalorder %s37, 0
      %p106 = por %p104, %p105
      %s108 = sadd.s32 %s107, 1
      %p111 = scmp.eq.s32.totalorder %s31, 3
      %p112 = scmp.ne.s32.totalorder %s107, %s109
      %p113 = scmp.eq.s32.totalorder %s31, 0
      %p114 = por %p112, %p113
      %p115 = scmp.ne.s32.totalorder %s107, %s109
      %p116 = scmp.eq.s32.totalorder %s36, 3
      %p117 = por %p115, %p116
      %p118 = scmp.ne.s32.totalorder %s109, %s110
      %p119 = scmp.eq.s32.totalorder %s36, 0
      %p120 = por %p118, %p119
      %p121 = scmp.ne.s32.totalorder %s109, %s110
      %p122 = scmp.eq.s32.totalorder %s37, 3
      %p123 = por %p121, %p122
      %p125 = scmp.ne.s32.totalorder %s110, %s124
      %p126 = scmp.eq.s32.totalorder %s37, 0
      %p127 = por %p125, %p126
      %s129 = sadd.s32 %s128, 1
      %p132 = scmp.eq.s32.totalorder %s31, 3
      %p133 = scmp.ne.s32.totalorder %s128, %s130
      %p134 = scmp.eq.s32.totalorder %s31, 0
      %p135 = por %p133, %p134
      %p136 = scmp.ne.s32.totalorder %s128, %s130
      %p137 = scmp.eq.s32.totalorder %s36, 3
      %p138 = por %p136, %p137
      %p139 = scmp.ne.s32.totalorder %s130, %s131
      %p140 = scmp.eq.s32.totalorder %s36, 0
      %p141 = por %p139, %p140
      %p142 = scmp.ne.s32.totalorder %s130, %s131
      %p143 = scmp.eq.s32.totalorder %s37, 3
      %p144 = por %p142, %p143
      %p146 = scmp.ne.s32.totalorder %s131, %s145
      %p147 = scmp.eq.s32.totalorder %s37, 0
      %p148 = por %p146, %p147
      %s150 = sadd.s32 %s149, 1
      %p153 = scmp.eq.s32.totalorder %s31, 3
      %p154 = scmp.ne.s32.totalorder %s149, %s151
      %p155 = scmp.eq.s32.totalorder %s31, 0
      %p156 = por %p154, %p155
      %p157 = scmp.ne.s32.totalorder %s149, %s151
      %p158 = scmp.eq.s32.totalorder %s36, 3
      %p159 = por %p157, %p158
      %p160 = scmp.ne.s32.totalorder %s151, %s152
      %p161 = scmp.eq.s32.totalorder %s36, 0
      %p162 = por %p160, %p161
      %p163 = scmp.ne.s32.totalorder %s151, %s152
      %p164 = scmp.eq.s32.totalorder %s37, 3
      %p165 = por %p163, %p164
      %p167 = scmp.ne.s32.totalorder %s152, %s166
      %p168 = scmp.eq.s32.totalorder %s37, 0
      %p169 = por %p167, %p168
      %s171 = sadd.s32 %s170, 1
      %p174 = scmp.eq.s32.totalorder %s31, 3
      %p175 = scmp.ne.s32.totalorder %s170, %s172
      %p176 = scmp.eq.s32.totalorder %s31, 0
      %p177 = por %p175, %p176
      %p178 = scmp.ne.s32.totalorder %s170, %s172
      %p179 = scmp.eq.s32.totalorder %s36, 3
      %p180 = por %p178, %p179
      %p181 = scmp.ne.s32.totalorder %s172, %s173
      %p182 = scmp.eq.s32.totalorder %s36, 0
      %p183 = por %p181, %p182
      %p184 = scmp.ne.s32.totalorder %s172, %s173
      %p185 = scmp.eq.s32.totalorder %s37, 3
      %p186 = por %p184, %p185
      %p188 = scmp.ne.s32.totalorder %s173, %s187
      %p189 = scmp.eq.s32.totalorder %s37, 0
      %p190 = por %p188, %p189
      %s192 = sadd.s32 %s191, 1
      %p195 = scmp.eq.s32.totalorder %s31, 3
      %p196 = scmp.ne.s32.totalorder %s191, %s193
      %p197 = scmp.eq.s32.totalorder %s31, 0
      %p198 = por %p196, %p197
      %p199 = scmp.ne.s32.totalorder %s191, %s193
      %p200 = scmp.eq.s32.totalorder %s36, 3
      %p201 = por %p199, %p200
      %p202 = scmp.ne.s32.totalorder %s193, %s194
      %p203 = scmp.eq.s32.totalorder %s36, 0
      %p204 = por %p202, %p203
      %p205 = scmp.ne.s32.totalorder %s193, %s194
      %p206 = scmp.eq.s32.totalorder %s37, 3
      %p207 = por %p205, %p206
      %p209 = scmp.ne.s32.totalorder %s194, %s208
      %p210 = scmp.eq.s32.totalorder %s37, 0
      %p211 = por %p209, %p210
      %s213 = sadd.s32 %s212, 1
      %p216 = scmp.eq.s32.totalorder %s31, 3
      %p217 = scmp.ne.s32.totalorder %s212, %s214
      %p218 = scmp.eq.s32.totalorder %s31, 0
      %p219 = por %p217, %p218
      %p220 = scmp.ne.s32.totalorder %s212, %s214
      %p221 = scmp.eq.s32.totalorder %s36, 3
      %p222 = por %p220, %p221
      %p223 = scmp.ne.s32.totalorder %s214, %s215
      %p224 = scmp.eq.s32.totalorder %s36, 0
      %p225 = por %p223, %p224
      %p226 = scmp.ne.s32.totalorder %s214, %s215
      %p227 = scmp.eq.s32.totalorder %s37, 3
      %p228 = por %p226, %p227
      %p230 = scmp.ne.s32.totalorder %s215, %s229
      %p231 = scmp.eq.s32.totalorder %s37, 0
      %p232 = por %p230, %p231
      %s234 = sadd.s32 %s233, 1
      %p237 = scmp.eq.s32.totalorder %s31, 3
      %p238 = scmp.ne.s32.totalorder %s233, %s235
      %p239 = scmp.eq.s32.totalorder %s31, 0
      %p240 = por %p238, %p239
      %p241 = scmp.ne.s32.totalorder %s233, %s235
      %p242 = scmp.eq.s32.totalorder %s36, 3
      %p243 = por %p241, %p242
      %p244 = scmp.ne.s32.totalorder %s235, %s236
      %p245 = scmp.eq.s32.totalorder %s36, 0
      %p246 = por %p244, %p245
      %p247 = scmp.ne.s32.totalorder %s235, %s236
      %p248 = scmp.eq.s32.totalorder %s37, 3
      %p249 = por %p247, %p248
      %p251 = scmp.ne.s32.totalorder %s236, %s250
      %p252 = scmp.eq.s32.totalorder %s37, 0
      %p253 = por %p251, %p252
      %s255 = sadd.s32 %s254, 1
      %p258 = scmp.eq.s32.totalorder %s31, 3
      %p259 = scmp.ne.s32.totalorder %s254, %s256
      %p260 = scmp.eq.s32.totalorder %s31, 0
      %p261 = por %p259, %p260
      %p262 = scmp.ne.s32.totalorder %s254, %s256
      %p263 = scmp.eq.s32.totalorder %s36, 3
      %p264 = por %p262, %p263
      %p265 = scmp.ne.s32.totalorder %s256, %s257
      %p266 = scmp.eq.s32.totalorder %s36, 0
      %p267 = por %p265, %p266
      %p268 = scmp.ne.s32.totalorder %s256, %s257
      %p269 = scmp.eq.s32.totalorder %s37, 3
      %p270 = por %p268, %p269
      %p272 = scmp.ne.s32.totalorder %s257, %s271
      %p273 = scmp.eq.s32.totalorder %s37, 0
      %p274 = por %p272, %p273
      %s276 = sadd.s32 %s275, 1
      %p279 = scmp.eq.s32.totalorder %s31, 3
      %p280 = scmp.ne.s32.totalorder %s275, %s277
      %p281 = scmp.eq.s32.totalorder %s31, 0
      %p282 = por %p280, %p281
      %p283 = scmp.ne.s32.totalorder %s275, %s277
      %p284 = scmp.eq.s32.totalorder %s36, 3
      %p285 = por %p283, %p284
      %p286 = scmp.ne.s32.totalorder %s277, %s278
      %p287 = scmp.eq.s32.totalorder %s36, 0
      %p288 = por %p286, %p287
      %p289 = scmp.ne.s32.totalorder %s277, %s278
      %p290 = scmp.eq.s32.totalorder %s37, 3
      %p291 = por %p289, %p290
      %p293 = scmp.ne.s32.totalorder %s278, %s292
      %p294 = scmp.eq.s32.totalorder %s37, 0
      %p295 = por %p293, %p294
      %s296 = ssub.s32 %s31, %s38
      %p297 = scmp.eq.s32.totalorder %s296, 0
      %s299 = sadd.s32 %s298, 1
      %s300 = scalar_select %p297, %s298, %s299
      %p303 = pneg %p297
      %p304 = scmp.eq.s32.totalorder %s31, 3
      %p305 = por %p303, %p304
      %p306 = scmp.ne.s32.totalorder %s298, %s301
      %p307 = scmp.eq.s32.totalorder %s31, 0
      %p308 = por %p306, %p307
      %p309 = scmp.ne.s32.totalorder %s298, %s301
      %p310 = scmp.eq.s32.totalorder %s36, 3
      %p311 = por %p309, %p310
      %p312 = scmp.ne.s32.totalorder %s301, %s302
      %p313 = scmp.eq.s32.totalorder %s36, 0
      %p314 = por %p312, %p313
      %p315 = scmp.ne.s32.totalorder %s301, %s302
      %p316 = scmp.eq.s32.totalorder %s37, 3
      %p317 = por %p315, %p316
      %p319 = scmp.ne.s32.totalorder %s302, %s318
      %p320 = scmp.eq.s32.totalorder %s37, 0
      %p321 = por %p319, %p320
      %s322 = ssub.s32 %s31, %s38
      %p323 = scmp.eq.s32.totalorder %s322, 0
      %s325 = sadd.s32 %s324, 1
      %s326 = scalar_select %p323, %s324, %s325
      %p329 = pneg %p323
      %p330 = scmp.eq.s32.totalorder %s31, 3
      %p331 = por %p329, %p330
      %p332 = scmp.ne.s32.totalorder %s324, %s327
      %p333 = scmp.eq.s32.totalorder %s31, 0
      %p334 = por %p332, %p333
      %p335 = scmp.ne.s32.totalorder %s324, %s327
      %p336 = scmp.eq.s32.totalorder %s36, 3
      %p337 = por %p335, %p336
      %p338 = scmp.ne.s32.totalorder %s327, %s328
      %p339 = scmp.eq.s32.totalorder %s36, 0
      %p340 = por %p338, %p339
      %p341 = scmp.ne.s32.totalorder %s327, %s328
      %p342 = scmp.eq.s32.totalorder %s37, 3
      %p343 = por %p341, %p342
      %p345 = scmp.ne.s32.totalorder %s328, %s344
      %p346 = scmp.eq.s32.totalorder %s37, 0
      %p347 = por %p345, %p346
      %p348 = scmp.le.s32.totalorder 1, %s31
      %p349 = scmp.lt.s32.totalorder %s31, 5
      %p350 = pnand %p348, %p349
      %p351 = pneg %p350
      // Predicated region
      $region9: #{tpu_custom_call.1} parent=5 // pred_check
        _
      $region10: #{tpu_custom_call.1} parent=5 // pred_check_branch
        %353 = sbr.rel (%p350) target = $region12
      $region11: #{tpu_custom_call.1} parent=5 // pred_region
        %s354 = ssub.s32 %s31, 1
        // Predicated region
        $region13: #{tpu_custom_call.1} parent=11 // pred_check
          %p355 = pneg %p78
        $region14: #{tpu_custom_call.1} parent=11 // pred_check_branch
          %357 = sbr.rel (%p355) target = $region16
        $region15: #{tpu_custom_call.1} parent=11 // pred_region
          %s359 = ssub.s32 12288, 12288
          %360 = vsyncadd [#allocation6], %s359
          %s361 = sshll.u32 [#allocation5], 4
          %s362 = int_to_ptr.vmem [resolvable:$true] %s361
          %367 = dma.hbm_to_vmem [thread:$0]  %s1, 12288, %s362, [#allocation6], 768, 768, 48
        $region16: #{tpu_custom_call.1} parent=11 // pred_fallthru
          _
        // Predicated region
        $region17: #{tpu_custom_call.1} parent=11 // pred_check
          %p368 = pneg %p99
        $region18: #{tpu_custom_call.1} parent=11 // pred_check_branch
          %370 = sbr.rel (%p368) target = $region20
        $region19: #{tpu_custom_call.1} parent=11 // pred_region
          %s372 = ssub.s32 4096, 4096
          %373 = vsyncadd [#allocation6], %s372
          %s374 = sshll.u32 [#allocation7], 4
          %s375 = int_to_ptr.vmem [resolvable:$true] %s374
          %380 = dma.hbm_to_vmem [thread:$0]  %s2, 4096, %s375, [#allocation6], 64, 64, 4
        $region20: #{tpu_custom_call.1} parent=11 // pred_fallthru
          _
        // Predicated region
        $region21: #{tpu_custom_call.1} parent=11 // pred_check
          %p381 = pneg %p120
        $region22: #{tpu_custom_call.1} parent=11 // pred_check_branch
          %383 = sbr.rel (%p381) target = $region24
        $region23: #{tpu_custom_call.1} parent=11 // pred_region
          _
        $region24: #{tpu_custom_call.1} parent=11 // pred_fallthru
          _
        // Predicated region
        $region25: #{tpu_custom_call.1} parent=11 // pred_check
          %p384 = pneg %p141
        $region26: #{tpu_custom_call.1} parent=11 // pred_check_branch
          %386 = sbr.rel (%p384) target = $region28
        $region27: #{tpu_custom_call.1} parent=11 // pred_region
          _
        $region28: #{tpu_custom_call.1} parent=11 // pred_fallthru
          _
        // Predicated region
        $region29: #{tpu_custom_call.1} parent=11 // pred_check
          %p387 = pneg %p162
        $region30: #{tpu_custom_call.1} parent=11 // pred_check_branch
          %389 = sbr.rel (%p387) target = $region32
        $region31: #{tpu_custom_call.1} parent=11 // pred_region
          _
        $region32: #{tpu_custom_call.1} parent=11 // pred_fallthru
          _
        // Predicated region
        $region33: #{tpu_custom_call.1} parent=11 // pred_check
          %p390 = pneg %p183
        $region34: #{tpu_custom_call.1} parent=11 // pred_check_branch
          %392 = sbr.rel (%p390) target = $region36
        $region35: #{tpu_custom_call.1} parent=11 // pred_region
          %s394 = ssub.s32 1024, 1024
          %395 = vsyncadd [#allocation9], %s394
          %s396 = sshll.u32 [#allocation8], 4
          %s397 = int_to_ptr.vmem [resolvable:$true] %s396
          %402 = dma.hbm_to_vmem [thread:$0]  %s6, 1024, %s397, [#allocation9], 64, 64, 4
        $region36: #{tpu_custom_call.1} parent=11 // pred_fallthru
          _
        // Predicated region
        $region37: #{tpu_custom_call.1} parent=11 // pred_check
          %p403 = pneg %p204
        $region38: #{tpu_custom_call.1} parent=11 // pred_check_branch
          %405 = sbr.rel (%p403) target = $region40
        $region39: #{tpu_custom_call.1} parent=11 // pred_region
          _
        $region40: #{tpu_custom_call.1} parent=11 // pred_fallthru
          _
        // Predicated region
        $region41: #{tpu_custom_call.1} parent=11 // pred_check
          %p406 = pneg %p225
        $region42: #{tpu_custom_call.1} parent=11 // pred_check_branch
          %408 = sbr.rel (%p406) target = $region44
        $region43: #{tpu_custom_call.1} parent=11 // pred_region
          %s410 = ssub.s32 1024, 1024
          %411 = vsyncadd [#allocation9], %s410
          %s412 = sshll.u32 [#allocation10], 4
          %s413 = int_to_ptr.vmem [resolvable:$true] %s412
          %418 = dma.hbm_to_vmem [thread:$0]  %s8, 1024, %s413, [#allocation9], 64, 64, 4
        $region44: #{tpu_custom_call.1} parent=11 // pred_fallthru
          _
        // Predicated region
        $region45: #{tpu_custom_call.1} parent=11 // pred_check
          %p419 = pneg %p246
        $region46: #{tpu_custom_call.1} parent=11 // pred_check_branch
          %421 = sbr.rel (%p419) target = $region48
        $region47: #{tpu_custom_call.1} parent=11 // pred_region
          _
        $region48: #{tpu_custom_call.1} parent=11 // pred_fallthru
          _
        // Predicated region
        $region49: #{tpu_custom_call.1} parent=11 // pred_check
          %p422 = pneg %p267
        $region50: #{tpu_custom_call.1} parent=11 // pred_check_branch
          %424 = sbr.rel (%p422) target = $region52
        $region51: #{tpu_custom_call.1} parent=11 // pred_region
          _
        $region52: #{tpu_custom_call.1} parent=11 // pred_fallthru
          _
        // Predicated region
        $region53: #{tpu_custom_call.1} parent=11 // pred_check
          %p425 = pneg %p288
        $region54: #{tpu_custom_call.1} parent=11 // pred_check_branch
          %427 = sbr.rel (%p425) target = $region56
        $region55: #{tpu_custom_call.1} parent=11 // pred_region
          _
        $region56: #{tpu_custom_call.1} parent=11 // pred_fallthru
          _
      $region12: #{tpu_custom_call.1} parent=5 // pred_fallthru
        _
      %p428 = scmp.lt.s32.totalorder %s31, 4
      // Predicated region
      $region57: #{tpu_custom_call.1} parent=5 // pred_check
        %p429 = pneg %p428
      $region58: #{tpu_custom_call.1} parent=5 // pred_check_branch
        %431 = sbr.rel (%p429) target = $region60
      $region59: #{tpu_custom_call.1} parent=5 // pred_region
        // Predicated region
        $region61: #{tpu_custom_call.1} parent=59 // pred_check
          %p432 = pneg %p51
        $region62: #{tpu_custom_call.1} parent=59 // pred_check_branch
          %434 = sbr.rel (%p432) target = $region64
        $region63: #{tpu_custom_call.1} parent=59 // pred_region
          %s435 = sand.u32 %s41, 1
          %s436 = scalar_lea.sflag [#allocation3], %s435
          %s437 = sand.u32 %s41, 1
          %s438 = smul.addr %s437, 32
          %s439 = scalar_lea.vmem [#allocation2], %s438
          %s440 = smul.u32 2, %s31
          %s442 = ssub.s32 512, 512
          %443 = vsyncadd %s436, %s442
          %s444 = smul.addr %s440, 2
          %s445 = smul.addr %s444, 128
          %s446 = scalar_lea.hbm %s0, %s445
          %s447 = sshll.u32 %s439, 4
          %s448 = int_to_ptr.vmem [resolvable:$true] %s447
          %453 = dma.hbm_to_vmem [thread:$0]  %s446, 512, %s448, %s436, 128, 128, 8
        $region64: #{tpu_custom_call.1} parent=59 // pred_fallthru
          _
      $region60: #{tpu_custom_call.1} parent=5 // pred_fallthru
        _
      %p454 = scmp.le.s32.totalorder 1, %s31
      %p455 = scmp.lt.s32.totalorder %s31, 5
      %p456 = pnand %p454, %p455
      %p457 = pneg %p456
      // Predicated region
      $region65: #{tpu_custom_call.1} parent=5 // pred_check
        _
      $region66: #{tpu_custom_call.1} parent=5 // pred_check_branch
        %459 = sbr.rel (%p456) target = $region68
      $region67: #{tpu_custom_call.1} parent=5 // pred_region
        %s460 = ssub.s32 %s31, 1
        %s461 = sand.u32 %s44, 1
        %s462 = scalar_lea.sflag [#allocation3], %s461
        %s463 = sand.u32 %s44, 1
        %s464 = smul.addr %s463, 32
        %s465 = scalar_lea.vmem [#allocation2], %s464
        // Predicated region
        $region69: #{tpu_custom_call.1} parent=67 // pred_check
          %p466 = pneg %p57
        $region70: #{tpu_custom_call.1} parent=67 // pred_check_branch
          %468 = sbr.rel (%p466) target = $region72
        $region71: #{tpu_custom_call.1} parent=67 // pred_region
          %469 = dma.done %s462, 512
        $region72: #{tpu_custom_call.1} parent=67 // pred_fallthru
          _
        // Predicated region
        $region73: #{tpu_custom_call.1} parent=67 // pred_check
          %p470 = pneg %p78
        $region74: #{tpu_custom_call.1} parent=67 // pred_check_branch
          %472 = sbr.rel (%p470) target = $region76
        $region75: #{tpu_custom_call.1} parent=67 // pred_region
          %473 = dma.done [#allocation6], 12288
        $region76: #{tpu_custom_call.1} parent=67 // pred_fallthru
          _
        // Predicated region
        $region77: #{tpu_custom_call.1} parent=67 // pred_check
          %p474 = pneg %p99
        $region78: #{tpu_custom_call.1} parent=67 // pred_check_branch
          %476 = sbr.rel (%p474) target = $region80
        $region79: #{tpu_custom_call.1} parent=67 // pred_region
          %477 = dma.done [#allocation6], 4096
        $region80: #{tpu_custom_call.1} parent=67 // pred_fallthru
          _
        // Predicated region
        $region81: #{tpu_custom_call.1} parent=67 // pred_check
          %p478 = pneg %p183
        $region82: #{tpu_custom_call.1} parent=67 // pred_check_branch
          %480 = sbr.rel (%p478) target = $region84
        $region83: #{tpu_custom_call.1} parent=67 // pred_region
          %481 = dma.done [#allocation9], 1024
        $region84: #{tpu_custom_call.1} parent=67 // pred_fallthru
          _
        // Predicated region
        $region85: #{tpu_custom_call.1} parent=67 // pred_check
          %p482 = pneg %p225
        $region86: #{tpu_custom_call.1} parent=67 // pred_check_branch
          %484 = sbr.rel (%p482) target = $region88
        $region87: #{tpu_custom_call.1} parent=67 // pred_region
          %485 = dma.done [#allocation9], 1024
        $region88: #{tpu_custom_call.1} parent=67 // pred_fallthru
          _
        %s486 = sand.u32 %s44, 1
        %s487 = scalar_lea.sflag [#allocation3], %s486
        %s488 = sand.u32 %s44, 1
        %s489 = smul.addr %s488, 32
        %s490 = scalar_lea.vmem [#allocation2], %s489
        %p491 = pneg %p57
        %p492 = pneg %p54
        %p493 = pneg %p78
        %p494 = pneg %p75
        %p495 = pneg %p99
        %p496 = pneg %p96
        %p497 = pneg %p120
        %p498 = pneg %p117
        %p499 = pneg %p141
        %p500 = pneg %p138
        %p501 = pneg %p162
        %p502 = pneg %p159
        %p503 = pneg %p183
        %p504 = pneg %p180
        %p505 = pneg %p204
        %p506 = pneg %p201
        %p507 = pneg %p225
        %p508 = pneg %p222
        %p509 = pneg %p246
        %p510 = pneg %p243
        %p511 = pneg %p267
        %p512 = pneg %p264
        %p513 = pneg %p288
        %p514 = pneg %p285
        %p515 = pneg %p314
        %p516 = pneg %p311
        %s517 = sand.u32 %s301, 1
        %s518 = scalar_lea.sflag [#allocation4], %s517
        %s519 = sand.u32 %s301, 1
        %s520 = smul.addr %s519, 32
        %s521 = scalar_lea.vmem [#allocation11], %s520
        %p522 = pneg %p340
        %p523 = pneg %p337
        %s524 = sand.u32 %s327, 1
        %s525 = scalar_lea.sflag [#allocation13], %s524
        %s526 = sand.u32 %s327, 1
        %s527 = smul.addr %s526, 32
        %s528 = scalar_lea.vmem [#allocation12], %s527
        %s529 = smul.u32 2, %s36
        %s530 = smul.u32 2, %s36
        %s531 = smul.u32 2, %s36
        %v533 = vld [vmem:[%s465] sm:$0xff]
        %v534 = vld [vmem:[%s465 + $0x8] sm:$0xff]
        %v535 = vld [vmem:[%s465 + $0x10] sm:$0xff]
        %v536 = vld [vmem:[%s465 + $0x18] sm:$0xff]
        %v537 = vpack.c.bf16 %v534, %v533
        %v538 = vpack.c.bf16 %v536, %v535
        %v539 = vld [vmem:[#allocation5] sm:$0xff]
        %v540 = vld [vmem:[#allocation5 + $0x8] sm:$0xff]
        %v541 = vld [vmem:[#allocation5 + $0x10] sm:$0xff]
        %v542 = vld [vmem:[#allocation5 + $0x18] sm:$0xff]
        %v543 = vld [vmem:[#allocation5 + $0x20] sm:$0xff]
        %v544 = vld [vmem:[#allocation5 + $0x28] sm:$0xff]
        %v545 = vld [vmem:[#allocation5 + $0x30] sm:$0xff]
        %v546 = vld [vmem:[#allocation5 + $0x38] sm:$0xff]
        %v547 = vld [vmem:[#allocation5 + $0x40] sm:$0xff]
        %v548 = vld [vmem:[#allocation5 + $0x48] sm:$0xff]
        %v549 = vld [vmem:[#allocation5 + $0x50] sm:$0xff]
        %v550 = vld [vmem:[#allocation5 + $0x58] sm:$0xff]
        %v551 = vld [vmem:[#allocation5 + $0x60] sm:$0xff]
        %v552 = vld [vmem:[#allocation5 + $0x68] sm:$0xff]
        %v553 = vld [vmem:[#allocation5 + $0x70] sm:$0xff]
        %v554 = vld [vmem:[#allocation5 + $0x78] sm:$0xff]
        %v555 = vld [vmem:[#allocation5 + $0x80] sm:$0xff]
        %v556 = vld [vmem:[#allocation5 + $0x88] sm:$0xff]
        %v557 = vld [vmem:[#allocation5 + $0x90] sm:$0xff]
        %v558 = vld [vmem:[#allocation5 + $0x98] sm:$0xff]
        %v559 = vld [vmem:[#allocation5 + $0xa0] sm:$0xff]
        %v560 = vld [vmem:[#allocation5 + $0xa8] sm:$0xff]
        %v561 = vld [vmem:[#allocation5 + $0xb0] sm:$0xff]
        %v562 = vld [vmem:[#allocation5 + $0xb8] sm:$0xff]
        %v563 = vld [vmem:[#allocation5 + $0xc0] sm:$0xff]
        %v564 = vld [vmem:[#allocation5 + $0xc8] sm:$0xff]
        %v565 = vld [vmem:[#allocation5 + $0xd0] sm:$0xff]
        %v566 = vld [vmem:[#allocation5 + $0xd8] sm:$0xff]
        %v567 = vld [vmem:[#allocation5 + $0xe0] sm:$0xff]
        %v568 = vld [vmem:[#allocation5 + $0xe8] sm:$0xff]
        %v569 = vld [vmem:[#allocation5 + $0xf0] sm:$0xff]
        %v570 = vld [vmem:[#allocation5 + $0xf8] sm:$0xff]
        %v571 = vld [vmem:[#allocation5 + $0x100] sm:$0xff]
        %v572 = vld [vmem:[#allocation5 + $0x108] sm:$0xff]
        %v573 = vld [vmem:[#allocation5 + $0x110] sm:$0xff]
        %v574 = vld [vmem:[#allocation5 + $0x118] sm:$0xff]
        %v575 = vld [vmem:[#allocation5 + $0x120] sm:$0xff]
        %v576 = vld [vmem:[#allocation5 + $0x128] sm:$0xff]
        %v577 = vld [vmem:[#allocation5 + $0x130] sm:$0xff]
        %v578 = vld [vmem:[#allocation5 + $0x138] sm:$0xff]
        %v579 = vld [vmem:[#allocation5 + $0x140] sm:$0xff]
        %v580 = vld [vmem:[#allocation5 + $0x148] sm:$0xff]
        %v581 = vld [vmem:[#allocation5 + $0x150] sm:$0xff]
        %v582 = vld [vmem:[#allocation5 + $0x158] sm:$0xff]
        %v583 = vld [vmem:[#allocation5 + $0x160] sm:$0xff]
        %v584 = vld [vmem:[#allocation5 + $0x168] sm:$0xff]
        %v585 = vld [vmem:[#allocation5 + $0x170] sm:$0xff]
        %v586 = vld [vmem:[#allocation5 + $0x178] sm:$0xff]
        %v587 = vld [vmem:[#allocation5 + $0x180] sm:$0xff]
        %v588 = vld [vmem:[#allocation5 + $0x188] sm:$0xff]
        %v589 = vld [vmem:[#allocation5 + $0x190] sm:$0xff]
        %v590 = vld [vmem:[#allocation5 + $0x198] sm:$0xff]
        %v591 = vld [vmem:[#allocation5 + $0x1a0] sm:$0xff]
        %v592 = vld [vmem:[#allocation5 + $0x1a8] sm:$0xff]
        %v593 = vld [vmem:[#allocation5 + $0x1b0] sm:$0xff]
        %v594 = vld [vmem:[#allocation5 + $0x1b8] sm:$0xff]
        %v595 = vld [vmem:[#allocation5 + $0x1c0] sm:$0xff]
        %v596 = vld [vmem:[#allocation5 + $0x1c8] sm:$0xff]
        %v597 = vld [vmem:[#allocation5 + $0x1d0] sm:$0xff]
        %v598 = vld [vmem:[#allocation5 + $0x1d8] sm:$0xff]
        %v599 = vld [vmem:[#allocation5 + $0x1e0] sm:$0xff]
        %v600 = vld [vmem:[#allocation5 + $0x1e8] sm:$0xff]
        %v601 = vld [vmem:[#allocation5 + $0x1f0] sm:$0xff]
        %v602 = vld [vmem:[#allocation5 + $0x1f8] sm:$0xff]
        %v603 = vld [vmem:[#allocation5 + $0x200] sm:$0xff]
        %v604 = vld [vmem:[#allocation5 + $0x208] sm:$0xff]
        %v605 = vld [vmem:[#allocation5 + $0x210] sm:$0xff]
        %v606 = vld [vmem:[#allocation5 + $0x218] sm:$0xff]
        %v607 = vld [vmem:[#allocation5 + $0x220] sm:$0xff]
        %v608 = vld [vmem:[#allocation5 + $0x228] sm:$0xff]
        %v609 = vld [vmem:[#allocation5 + $0x230] sm:$0xff]
        %v610 = vld [vmem:[#allocation5 + $0x238] sm:$0xff]
        %v611 = vld [vmem:[#allocation5 + $0x240] sm:$0xff]
        %v612 = vld [vmem:[#allocation5 + $0x248] sm:$0xff]
        %v613 = vld [vmem:[#allocation5 + $0x250] sm:$0xff]
        %v614 = vld [vmem:[#allocation5 + $0x258] sm:$0xff]
        %v615 = vld [vmem:[#allocation5 + $0x260] sm:$0xff]
        %v616 = vld [vmem:[#allocation5 + $0x268] sm:$0xff]
        %v617 = vld [vmem:[#allocation5 + $0x270] sm:$0xff]
        %v618 = vld [vmem:[#allocation5 + $0x278] sm:$0xff]
        %v619 = vld [vmem:[#allocation5 + $0x280] sm:$0xff]
        %v620 = vld [vmem:[#allocation5 + $0x288] sm:$0xff]
        %v621 = vld [vmem:[#allocation5 + $0x290] sm:$0xff]
        %v622 = vld [vmem:[#allocation5 + $0x298] sm:$0xff]
        %v623 = vld [vmem:[#allocation5 + $0x2a0] sm:$0xff]
        %v624 = vld [vmem:[#allocation5 + $0x2a8] sm:$0xff]
        %v625 = vld [vmem:[#allocation5 + $0x2b0] sm:$0xff]
        %v626 = vld [vmem:[#allocation5 + $0x2b8] sm:$0xff]
        %v627 = vld [vmem:[#allocation5 + $0x2c0] sm:$0xff]
        %v628 = vld [vmem:[#allocation5 + $0x2c8] sm:$0xff]
        %v629 = vld [vmem:[#allocation5 + $0x2d0] sm:$0xff]
        %v630 = vld [vmem:[#allocation5 + $0x2d8] sm:$0xff]
        %v631 = vld [vmem:[#allocation5 + $0x2e0] sm:$0xff]
        %v632 = vld [vmem:[#allocation5 + $0x2e8] sm:$0xff]
        %v633 = vld [vmem:[#allocation5 + $0x2f0] sm:$0xff]
        %v634 = vld [vmem:[#allocation5 + $0x2f8] sm:$0xff]
        %v731 = vunpack.c.l.b16 %v539
        %v732 = vunpack.c.h.b16 %v539
        %v733 = vunpack.c.l.b16 %v540
        %v734 = vunpack.c.h.b16 %v540
        %v735 = vunpack.c.l.b16 %v541
        %v736 = vunpack.c.h.b16 %v541
        %v737 = vunpack.c.l.b16 %v542
        %v738 = vunpack.c.h.b16 %v542
        %v739 = vunpack.c.l.b16 %v543
        %v740 = vunpack.c.h.b16 %v543
        %v741 = vunpack.c.l.b16 %v544
        %v742 = vunpack.c.h.b16 %v544
        %v743 = vunpack.c.l.b16 %v545
        %v744 = vunpack.c.h.b16 %v545
        %v745 = vunpack.c.l.b16 %v546
        %v746 = vunpack.c.h.b16 %v546
        %v747 = vunpack.c.l.b16 %v547
        %v748 = vunpack.c.h.b16 %v547
        %v749 = vunpack.c.l.b16 %v548
        %v750 = vunpack.c.h.b16 %v548
        %v751 = vunpack.c.l.b16 %v549
        %v752 = vunpack.c.h.b16 %v549
        %v753 = vunpack.c.l.b16 %v550
        %v754 = vunpack.c.h.b16 %v550
        %v755 = vunpack.c.l.b16 %v551
        %v756 = vunpack.c.h.b16 %v551
        %v757 = vunpack.c.l.b16 %v552
        %v758 = vunpack.c.h.b16 %v552
        %v759 = vunpack.c.l.b16 %v553
        %v760 = vunpack.c.h.b16 %v553
        %v761 = vunpack.c.l.b16 %v554
        %v762 = vunpack.c.h.b16 %v554
        %v763 = vunpack.c.l.b16 %v555
        %v764 = vunpack.c.h.b16 %v555
        %v765 = vunpack.c.l.b16 %v556
        %v766 = vunpack.c.h.b16 %v556
        %v767 = vunpack.c.l.b16 %v557
        %v768 = vunpack.c.h.b16 %v557
        %v769 = vunpack.c.l.b16 %v558
        %v770 = vunpack.c.h.b16 %v558
        %v771 = vunpack.c.l.b16 %v559
        %v772 = vunpack.c.h.b16 %v559
        %v773 = vunpack.c.l.b16 %v560
        %v774 = vunpack.c.h.b16 %v560
        %v775 = vunpack.c.l.b16 %v561
        %v776 = vunpack.c.h.b16 %v561
        %v777 = vunpack.c.l.b16 %v562
        %v778 = vunpack.c.h.b16 %v562
        %v779 = vunpack.c.l.b16 %v563
        %v780 = vunpack.c.h.b16 %v563
        %v781 = vunpack.c.l.b16 %v564
        %v782 = vunpack.c.h.b16 %v564
        %v783 = vunpack.c.l.b16 %v565
        %v784 = vunpack.c.h.b16 %v565
        %v785 = vunpack.c.l.b16 %v566
        %v786 = vunpack.c.h.b16 %v566
        %v787 = vunpack.c.l.b16 %v567
        %v788 = vunpack.c.h.b16 %v567
        %v789 = vunpack.c.l.b16 %v568
        %v790 = vunpack.c.h.b16 %v568
        %v791 = vunpack.c.l.b16 %v569
        %v792 = vunpack.c.h.b16 %v569
        %v793 = vunpack.c.l.b16 %v570
        %v794 = vunpack.c.h.b16 %v570
        %v795 = vunpack.c.l.b16 %v571
        %v796 = vunpack.c.h.b16 %v571
        %v797 = vunpack.c.l.b16 %v572
        %v798 = vunpack.c.h.b16 %v572
        %v799 = vunpack.c.l.b16 %v573
        %v800 = vunpack.c.h.b16 %v573
        %v801 = vunpack.c.l.b16 %v574
        %v802 = vunpack.c.h.b16 %v574
        %v803 = vunpack.c.l.b16 %v575
        %v804 = vunpack.c.h.b16 %v575
        %v805 = vunpack.c.l.b16 %v576
        %v806 = vunpack.c.h.b16 %v576
        %v807 = vunpack.c.l.b16 %v577
        %v808 = vunpack.c.h.b16 %v577
        %v809 = vunpack.c.l.b16 %v578
        %v810 = vunpack.c.h.b16 %v578
        %v811 = vunpack.c.l.b16 %v579
        %v812 = vunpack.c.h.b16 %v579
        %v813 = vunpack.c.l.b16 %v580
        %v814 = vunpack.c.h.b16 %v580
        %v815 = vunpack.c.l.b16 %v581
        %v816 = vunpack.c.h.b16 %v581
        %v817 = vunpack.c.l.b16 %v582
        %v818 = vunpack.c.h.b16 %v582
        %v819 = vunpack.c.l.b16 %v583
        %v820 = vunpack.c.h.b16 %v583
        %v821 = vunpack.c.l.b16 %v584
        %v822 = vunpack.c.h.b16 %v584
        %v823 = vunpack.c.l.b16 %v585
        %v824 = vunpack.c.h.b16 %v585
        %v825 = vunpack.c.l.b16 %v586
        %v826 = vunpack.c.h.b16 %v586
        %v827 = vunpack.c.l.b16 %v587
        %v828 = vunpack.c.h.b16 %v587
        %v829 = vunpack.c.l.b16 %v588
        %v830 = vunpack.c.h.b16 %v588
        %v831 = vunpack.c.l.b16 %v589
        %v832 = vunpack.c.h.b16 %v589
        %v833 = vunpack.c.l.b16 %v590
        %v834 = vunpack.c.h.b16 %v590
        %v835 = vunpack.c.l.b16 %v591
        %v836 = vunpack.c.h.b16 %v591
        %v837 = vunpack.c.l.b16 %v592
        %v838 = vunpack.c.h.b16 %v592
        %v839 = vunpack.c.l.b16 %v593
        %v840 = vunpack.c.h.b16 %v593
        %v841 = vunpack.c.l.b16 %v594
        %v842 = vunpack.c.h.b16 %v594
        %v843 = vunpack.c.l.b16 %v595
        %v844 = vunpack.c.h.b16 %v595
        %v845 = vunpack.c.l.b16 %v596
        %v846 = vunpack.c.h.b16 %v596
        %v847 = vunpack.c.l.b16 %v597
        %v848 = vunpack.c.h.b16 %v597
        %v849 = vunpack.c.l.b16 %v598
        %v850 = vunpack.c.h.b16 %v598
        %v851 = vunpack.c.l.b16 %v599
        %v852 = vunpack.c.h.b16 %v599
        %v853 = vunpack.c.l.b16 %v600
        %v854 = vunpack.c.h.b16 %v600
        %v855 = vunpack.c.l.b16 %v601
        %v856 = vunpack.c.h.b16 %v601
        %v857 = vunpack.c.l.b16 %v602
        %v858 = vunpack.c.h.b16 %v602
        %v859 = vunpack.c.l.b16 %v603
        %v860 = vunpack.c.h.b16 %v603
        %v861 = vunpack.c.l.b16 %v604
        %v862 = vunpack.c.h.b16 %v604
        %v863 = vunpack.c.l.b16 %v605
        %v864 = vunpack.c.h.b16 %v605
        %v865 = vunpack.c.l.b16 %v606
        %v866 = vunpack.c.h.b16 %v606
        %v867 = vunpack.c.l.b16 %v607
        %v868 = vunpack.c.h.b16 %v607
        %v869 = vunpack.c.l.b16 %v608
        %v870 = vunpack.c.h.b16 %v608
        %v871 = vunpack.c.l.b16 %v609
        %v872 = vunpack.c.h.b16 %v609
        %v873 = vunpack.c.l.b16 %v610
        %v874 = vunpack.c.h.b16 %v610
        %v875 = vunpack.c.l.b16 %v611
        %v876 = vunpack.c.h.b16 %v611
        %v877 = vunpack.c.l.b16 %v612
        %v878 = vunpack.c.h.b16 %v612
        %v879 = vunpack.c.l.b16 %v613
        %v880 = vunpack.c.h.b16 %v613
        %v881 = vunpack.c.l.b16 %v614
        %v882 = vunpack.c.h.b16 %v614
        %v883 = vunpack.c.l.b16 %v615
        %v884 = vunpack.c.h.b16 %v615
        %v885 = vunpack.c.l.b16 %v616
        %v886 = vunpack.c.h.b16 %v616
        %v887 = vunpack.c.l.b16 %v617
        %v888 = vunpack.c.h.b16 %v617
        %v889 = vunpack.c.l.b16 %v618
        %v890 = vunpack.c.h.b16 %v618
        %v891 = vunpack.c.l.b16 %v619
        %v892 = vunpack.c.h.b16 %v619
        %v893 = vunpack.c.l.b16 %v620
        %v894 = vunpack.c.h.b16 %v620
        %v895 = vunpack.c.l.b16 %v621
        %v896 = vunpack.c.h.b16 %v621
        %v897 = vunpack.c.l.b16 %v622
        %v898 = vunpack.c.h.b16 %v622
        %v899 = vunpack.c.l.b16 %v623
        %v900 = vunpack.c.h.b16 %v623
        %v901 = vunpack.c.l.b16 %v624
        %v902 = vunpack.c.h.b16 %v624
        %v903 = vunpack.c.l.b16 %v625
        %v904 = vunpack.c.h.b16 %v625
        %v905 = vunpack.c.l.b16 %v626
        %v906 = vunpack.c.h.b16 %v626
        %v907 = vunpack.c.l.b16 %v627
        %v908 = vunpack.c.h.b16 %v627
        %v909 = vunpack.c.l.b16 %v628
        %v910 = vunpack.c.h.b16 %v628
        %v911 = vunpack.c.l.b16 %v629
        %v912 = vunpack.c.h.b16 %v629
        %v913 = vunpack.c.l.b16 %v630
        %v914 = vunpack.c.h.b16 %v630
        %v915 = vunpack.c.l.b16 %v631
        %v916 = vunpack.c.h.b16 %v631
        %v917 = vunpack.c.l.b16 %v632
        %v918 = vunpack.c.h.b16 %v632
        %v919 = vunpack.c.l.b16 %v633
        %v920 = vunpack.c.h.b16 %v633
        %v921 = vunpack.c.l.b16 %v634
        %v922 = vunpack.c.h.b16 %v634
        %v923 = vpack.c.b16 %v743, %v731
        %v924 = vpack.c.b16 %v744, %v732
        %v925 = vpack.c.b16 %v745, %v733
        %v926 = vpack.c.b16 %v746, %v734
        %v927 = vpack.c.b16 %v747, %v735
        %v928 = vpack.c.b16 %v748, %v736
        %v929 = vpack.c.b16 %v749, %v737
        %v930 = vpack.c.b16 %v750, %v738
        %v931 = vpack.c.b16 %v751, %v739
        %v932 = vpack.c.b16 %v752, %v740
        %v933 = vpack.c.b16 %v753, %v741
        %v934 = vpack.c.b16 %v754, %v742
        %v935 = vpack.c.b16 %v767, %v755
        %v936 = vpack.c.b16 %v768, %v756
        %v937 = vpack.c.b16 %v769, %v757
        %v938 = vpack.c.b16 %v770, %v758
        %v939 = vpack.c.b16 %v771, %v759
        %v940 = vpack.c.b16 %v772, %v760
        %v941 = vpack.c.b16 %v773, %v761
        %v942 = vpack.c.b16 %v774, %v762
        %v943 = vpack.c.b16 %v775, %v763
        %v944 = vpack.c.b16 %v776, %v764
        %v945 = vpack.c.b16 %v777, %v765
        %v946 = vpack.c.b16 %v778, %v766
        %v947 = vpack.c.b16 %v791, %v779
        %v948 = vpack.c.b16 %v792, %v780
        %v949 = vpack.c.b16 %v793, %v781
        %v950 = vpack.c.b16 %v794, %v782
        %v951 = vpack.c.b16 %v795, %v783
        %v952 = vpack.c.b16 %v796, %v784
        %v953 = vpack.c.b16 %v797, %v785
        %v954 = vpack.c.b16 %v798, %v786
        %v955 = vpack.c.b16 %v799, %v787
        %v956 = vpack.c.b16 %v800, %v788
        %v957 = vpack.c.b16 %v801, %v789
        %v958 = vpack.c.b16 %v802, %v790
        %v959 = vpack.c.b16 %v815, %v803
        %v960 = vpack.c.b16 %v816, %v804
        %v961 = vpack.c.b16 %v817, %v805
        %v962 = vpack.c.b16 %v818, %v806
        %v963 = vpack.c.b16 %v819, %v807
        %v964 = vpack.c.b16 %v820, %v808
        %v965 = vpack.c.b16 %v821, %v809
        %v966 = vpack.c.b16 %v822, %v810
        %v967 = vpack.c.b16 %v823, %v811
        %v968 = vpack.c.b16 %v824, %v812
        %v969 = vpack.c.b16 %v825, %v813
        %v970 = vpack.c.b16 %v826, %v814
        %v971 = vpack.c.b16 %v839, %v827
        %v972 = vpack.c.b16 %v840, %v828
        %v973 = vpack.c.b16 %v841, %v829
        %v974 = vpack.c.b16 %v842, %v830
        %v975 = vpack.c.b16 %v843, %v831
        %v976 = vpack.c.b16 %v844, %v832
        %v977 = vpack.c.b16 %v845, %v833
        %v978 = vpack.c.b16 %v846, %v834
        %v979 = vpack.c.b16 %v847, %v835
        %v980 = vpack.c.b16 %v848, %v836
        %v981 = vpack.c.b16 %v849, %v837
        %v982 = vpack.c.b16 %v850, %v838
        %v983 = vpack.c.b16 %v863, %v851
        %v984 = vpack.c.b16 %v864, %v852
        %v985 = vpack.c.b16 %v865, %v853
        %v986 = vpack.c.b16 %v866, %v854
        %v987 = vpack.c.b16 %v867, %v855
        %v988 = vpack.c.b16 %v868, %v856
        %v989 = vpack.c.b16 %v869, %v857
        %v990 = vpack.c.b16 %v870, %v858
        %v991 = vpack.c.b16 %v871, %v859
        %v992 = vpack.c.b16 %v872, %v860
        %v993 = vpack.c.b16 %v873, %v861
        %v994 = vpack.c.b16 %v874, %v862
        %v995 = vpack.c.b16 %v887, %v875
        %v996 = vpack.c.b16 %v888, %v876
        %v997 = vpack.c.b16 %v889, %v877
        %v998 = vpack.c.b16 %v890, %v878
        %v999 = vpack.c.b16 %v891, %v879
        %v1000 = vpack.c.b16 %v892, %v880
        %v1001 = vpack.c.b16 %v893, %v881
        %v1002 = vpack.c.b16 %v894, %v882
        %v1003 = vpack.c.b16 %v895, %v883
        %v1004 = vpack.c.b16 %v896, %v884
        %v1005 = vpack.c.b16 %v897, %v885
        %v1006 = vpack.c.b16 %v898, %v886
        %v1007 = vpack.c.b16 %v911, %v899
        %v1008 = vpack.c.b16 %v912, %v900
        %v1009 = vpack.c.b16 %v913, %v901
        %v1010 = vpack.c.b16 %v914, %v902
        %v1011 = vpack.c.b16 %v915, %v903
        %v1012 = vpack.c.b16 %v916, %v904
        %v1013 = vpack.c.b16 %v917, %v905
        %v1014 = vpack.c.b16 %v918, %v906
        %v1015 = vpack.c.b16 %v919, %v907
        %v1016 = vpack.c.b16 %v920, %v908
        %v1017 = vpack.c.b16 %v921, %v909
        %v1018 = vpack.c.b16 %v922, %v910
        %1115 = vmatprep.subr.bf16.mxu0 %v924
        %1116 = vmatpush1.bf16.msra.mxu0 %v923
        %1117 = vmatprep.subr.bf16.mxu0 %v936
        %1118 = vmatpush1.bf16.msra.mxu0 %v935
        %1119 = vmatprep.subr.bf16.mxu0 %v948
        %1120 = vmatpush1.bf16.msra.mxu0 %v947
        %1121 = vmatprep.subr.bf16.mxu0 %v960
        %1122 = vmatpush1.bf16.msra.mxu0 %v959
        %1123 = vmatprep.subr.bf16.mxu0 %v972
        %1124 = vmatpush1.bf16.msra.mxu0 %v971
        %1125 = vmatprep.subr.bf16.mxu0 %v984
        %1126 = vmatpush1.bf16.msra.mxu0 %v983
        %1127 = vmatprep.subr.bf16.mxu0 %v996
        %1128 = vmatpush1.bf16.msra.mxu0 %v995
        %1129 = vmatprep.subr.bf16.mxu0 %v1008
        %1130 = vmatpush1.bf16.msra.mxu0 %v1007
        %1131 = vmatprep.subr.bf16.mxu0 0
        %1132 = vmatpush1.bf16.msra.mxu0 0
        %1133 = vmatprep.subr.bf16.mxu0 0
        %1134 = vmatpush1.bf16.msra.mxu0 0
        %1135 = vmatprep.subr.bf16.mxu0 0
        %1136 = vmatpush1.bf16.msra.mxu0 0
        %1137 = vmatprep.subr.bf16.mxu0 0
        %1138 = vmatpush1.bf16.msra.mxu0 0
        %1139 = vmatprep.subr.bf16.mxu0 0
        %1140 = vmatpush1.bf16.msra.mxu0 0
        %1141 = vmatprep.subr.bf16.mxu0 0
        %1142 = vmatpush1.bf16.msra.mxu0 0
        %1143 = vmatprep.subr.bf16.mxu0 0
        %1144 = vmatpush1.bf16.msra.mxu0 0
        %1145 = vmatprep.subr.bf16.mxu0 0
        %1146 = vmatpush1.bf16.msra.mxu0 0
        %1147 = vmatprep.mubr.bf16.mxu0 0
        %1148 = vmatmul.mubr.bf16.gmra.mrb[0].mxu0 %v537
        %v1149 = vpop.f32.mrb[0].mxu0
        %v1150 = vadd.f32 0.0, %v1149
        %v1151 = vpop.f32.mrb[0].mxu0
        %v1152 = vadd.f32 0.0, %v1151
        %v1153 = vpop.f32.mrb[0].mxu0
        %v1154 = vadd.f32 0.0, %v1153
        %v1155 = vpop.f32.mrb[0].mxu0
        %v1156 = vadd.f32 0.0, %v1155
        %1157 = vmatprep.mubr.bf16.mxu0 0
        %1158 = vmatmul.mubr.bf16.gmra.mrb[0].mxu0 %v538
        %v1159 = vpop.f32.mrb[0].mxu0
        %v1160 = vadd.f32 0.0, %v1159
        %v1161 = vpop.f32.mrb[0].mxu0
        %v1162 = vadd.f32 0.0, %v1161
        %v1163 = vpop.f32.mrb[0].mxu0
        %v1164 = vadd.f32 0.0, %v1163
        %v1165 = vpop.f32.mrb[0].mxu0
        %v1166 = vadd.f32 0.0, %v1165
        %1167 = vdwg.mxu0
        %1168 = vmatprep.subr.bf16.mxu0 %v926
        %1169 = vmatpush1.bf16.msra.mxu0 %v925
        %1170 = vmatprep.subr.bf16.mxu0 %v938
        %1171 = vmatpush1.bf16.msra.mxu0 %v937
        %1172 = vmatprep.subr.bf16.mxu0 %v950
        %1173 = vmatpush1.bf16.msra.mxu0 %v949
        %1174 = vmatprep.subr.bf16.mxu0 %v962
        %1175 = vmatpush1.bf16.msra.mxu0 %v961
        %1176 = vmatprep.subr.bf16.mxu0 %v974
        %1177 = vmatpush1.bf16.msra.mxu0 %v973
        %1178 = vmatprep.subr.bf16.mxu0 %v986
        %1179 = vmatpush1.bf16.msra.mxu0 %v985
        %1180 = vmatprep.subr.bf16.mxu0 %v998
        %1181 = vmatpush1.bf16.msra.mxu0 %v997
        %1182 = vmatprep.subr.bf16.mxu0 %v1010
        %1183 = vmatpush1.bf16.msra.mxu0 %v1009
        %1184 = vmatprep.subr.bf16.mxu0 0
        %1185 = vmatpush1.bf16.msra.mxu0 0
        %1186 = vmatprep.subr.bf16.mxu0 0
        %1187 = vmatpush1.bf16.msra.mxu0 0
        %1188 = vmatprep.subr.bf16.mxu0 0
        %1189 = vmatpush1.bf16.msra.mxu0 0
        %1190 = vmatprep.subr.bf16.mxu0 0
        %1191 = vmatpush1.bf16.msra.mxu0 0
        %1192 = vmatprep.subr.bf16.mxu0 0
        %1193 = vmatpush1.bf16.msra.mxu0 0
        %1194 = vmatprep.subr.bf16.mxu0 0
        %1195 = vmatpush1.bf16.msra.mxu0 0
        %1196 = vmatprep.subr.bf16.mxu0 0
        %1197 = vmatpush1.bf16.msra.mxu0 0
        %1198 = vmatprep.subr.bf16.mxu0 0
        %1199 = vmatpush1.bf16.msra.mxu0 0
        %1200 = vmatprep.mubr.bf16.mxu0 0
        %1201 = vmatmul.mubr.bf16.gmra.mrb[0].mxu0 %v537
        %v1202 = vpop.f32.mrb[0].mxu0
        %v1203 = vadd.f32 0.0, %v1202
        %v1204 = vpop.f32.mrb[0].mxu0
        %v1205 = vadd.f32 0.0, %v1204
        %v1206 = vpop.f32.mrb[0].mxu0
        %v1207 = vadd.f32 0.0, %v1206
        %v1208 = vpop.f32.mrb[0].mxu0
        %v1209 = vadd.f32 0.0, %v1208
        %1210 = vmatprep.mubr.bf16.mxu0 0
        %1211 = vmatmul.mubr.bf16.gmra.mrb[0].mxu0 %v538
        %v1212 = vpop.f32.mrb[0].mxu0
        %v1213 = vadd.f32 0.0, %v1212
        %v1214 = vpop.f32.mrb[0].mxu0
        %v1215 = vadd.f32 0.0, %v1214
        %v1216 = vpop.f32.mrb[0].mxu0
        %v1217 = vadd.f32 0.0, %v1216
        %v1218 = vpop.f32.mrb[0].mxu0
        %v1219 = vadd.f32 0.0, %v1218
        %1220 = vdwg.mxu0
        %1221 = vmatprep.subr.bf16.mxu0 %v928
        %1222 = vmatpush1.bf16.msra.mxu0 %v927
        %1223 = vmatprep.subr.bf16.mxu0 %v940
        %1224 = vmatpush1.bf16.msra.mxu0 %v939
        %1225 = vmatprep.subr.bf16.mxu0 %v952
        %1226 = vmatpush1.bf16.msra.mxu0 %v951
        %1227 = vmatprep.subr.bf16.mxu0 %v964
        %1228 = vmatpush1.bf16.msra.mxu0 %v963
        %1229 = vmatprep.subr.bf16.mxu0 %v976
        %1230 = vmatpush1.bf16.msra.mxu0 %v975
        %1231 = vmatprep.subr.bf16.mxu0 %v988
        %1232 = vmatpush1.bf16.msra.mxu0 %v987
        %1233 = vmatprep.subr.bf16.mxu0 %v1000
        %1234 = vmatpush1.bf16.msra.mxu0 %v999
        %1235 = vmatprep.subr.bf16.mxu0 %v1012
        %1236 = vmatpush1.bf16.msra.mxu0 %v1011
        %1237 = vmatprep.subr.bf16.mxu0 0
        %1238 = vmatpush1.bf16.msra.mxu0 0
        %1239 = vmatprep.subr.bf16.mxu0 0
        %1240 = vmatpush1.bf16.msra.mxu0 0
        %1241 = vmatprep.subr.bf16.mxu0 0
        %1242 = vmatpush1.bf16.msra.mxu0 0
        %1243 = vmatprep.subr.bf16.mxu0 0
        %1244 = vmatpush1.bf16.msra.mxu0 0
        %1245 = vmatprep.subr.bf16.mxu0 0
        %1246 = vmatpush1.bf16.msra.mxu0 0
        %1247 = vmatprep.subr.bf16.mxu0 0
        %1248 = vmatpush1.bf16.msra.mxu0 0
        %1249 = vmatprep.subr.bf16.mxu0 0
        %1250 = vmatpush1.bf16.msra.mxu0 0
        %1251 = vmatprep.subr.bf16.mxu0 0
        %1252 = vmatpush1.bf16.msra.mxu0 0
        %1253 = vmatprep.mubr.bf16.mxu0 0
        %1254 = vmatmul.mubr.bf16.gmra.mrb[0].mxu0 %v537
        %v1255 = vpop.f32.mrb[0].mxu0
        %v1256 = vadd.f32 0.0, %v1255
        %v1257 = vpop.f32.mrb[0].mxu0
        %v1258 = vadd.f32 0.0, %v1257
        %v1259 = vpop.f32.mrb[0].mxu0
        %v1260 = vadd.f32 0.0, %v1259
        %v1261 = vpop.f32.mrb[0].mxu0
        %v1262 = vadd.f32 0.0, %v1261
        %1263 = vmatprep.mubr.bf16.mxu0 0
        %1264 = vmatmul.mubr.bf16.gmra.mrb[0].mxu0 %v538
        %v1265 = vpop.f32.mrb[0].mxu0
        %v1266 = vadd.f32 0.0, %v1265
        %v1267 = vpop.f32.mrb[0].mxu0
        %v1268 = vadd.f32 0.0, %v1267
        %v1269 = vpop.f32.mrb[0].mxu0
        %v1270 = vadd.f32 0.0, %v1269
        %v1271 = vpop.f32.mrb[0].mxu0
        %v1272 = vadd.f32 0.0, %v1271
        %1273 = vdwg.mxu0
        %1274 = vmatprep.subr.bf16.mxu0 %v930
        %1275 = vmatpush1.bf16.msra.mxu0 %v929
        %1276 = vmatprep.subr.bf16.mxu0 %v942
        %1277 = vmatpush1.bf16.msra.mxu0 %v941
        %1278 = vmatprep.subr.bf16.mxu0 %v954
        %1279 = vmatpush1.bf16.msra.mxu0 %v953
        %1280 = vmatprep.subr.bf16.mxu0 %v966
        %1281 = vmatpush1.bf16.msra.mxu0 %v965
        %1282 = vmatprep.subr.bf16.mxu0 %v978
        %1283 = vmatpush1.bf16.msra.mxu0 %v977
        %1284 = vmatprep.subr.bf16.mxu0 %v990
        %1285 = vmatpush1.bf16.msra.mxu0 %v989
        %1286 = vmatprep.subr.bf16.mxu0 %v1002
        %1287 = vmatpush1.bf16.msra.mxu0 %v1001
        %1288 = vmatprep.subr.bf16.mxu0 %v1014
        %1289 = vmatpush1.bf16.msra.mxu0 %v1013
        %1290 = vmatprep.subr.bf16.mxu0 0
        %1291 = vmatpush1.bf16.msra.mxu0 0
        %1292 = vmatprep.subr.bf16.mxu0 0
        %1293 = vmatpush1.bf16.msra.mxu0 0
        %1294 = vmatprep.subr.bf16.mxu0 0
        %1295 = vmatpush1.bf16.msra.mxu0 0
        %1296 = vmatprep.subr.bf16.mxu0 0
        %1297 = vmatpush1.bf16.msra.mxu0 0
        %1298 = vmatprep.subr.bf16.mxu0 0
        %1299 = vmatpush1.bf16.msra.mxu0 0
        %1300 = vmatprep.subr.bf16.mxu0 0
        %1301 = vmatpush1.bf16.msra.mxu0 0
        %1302 = vmatprep.subr.bf16.mxu0 0
        %1303 = vmatpush1.bf16.msra.mxu0 0
        %1304 = vmatprep.subr.bf16.mxu0 0
        %1305 = vmatpush1.bf16.msra.mxu0 0
        %1306 = vmatprep.mubr.bf16.mxu0 0
        %1307 = vmatmul.mubr.bf16.gmra.mrb[0].mxu0 %v537
        %v1308 = vpop.f32.mrb[0].mxu0
        %v1309 = vadd.f32 0.0, %v1308
        %v1310 = vpop.f32.mrb[0].mxu0
        %v1311 = vadd.f32 0.0, %v1310
        %v1312 = vpop.f32.mrb[0].mxu0
        %v1313 = vadd.f32 0.0, %v1312
        %v1314 = vpop.f32.mrb[0].mxu0
        %v1315 = vadd.f32 0.0, %v1314
        %1316 = vmatprep.mubr.bf16.mxu0 0
        %1317 = vmatmul.mubr.bf16.gmra.mrb[0].mxu0 %v538
        %v1318 = vpop.f32.mrb[0].mxu0
        %v1319 = vadd.f32 0.0, %v1318
        %v1320 = vpop.f32.mrb[0].mxu0
        %v1321 = vadd.f32 0.0, %v1320
        %v1322 = vpop.f32.mrb[0].mxu0
        %v1323 = vadd.f32 0.0, %v1322
        %v1324 = vpop.f32.mrb[0].mxu0
        %v1325 = vadd.f32 0.0, %v1324
        %1326 = vdwg.mxu0
        %1327 = vmatprep.subr.bf16.mxu0 %v932
        %1328 = vmatpush1.bf16.msra.mxu0 %v931
        %1329 = vmatprep.subr.bf16.mxu0 %v944
        %1330 = vmatpush1.bf16.msra.mxu0 %v943
        %1331 = vmatprep.subr.bf16.mxu0 %v956
        %1332 = vmatpush1.bf16.msra.mxu0 %v955
        %1333 = vmatprep.subr.bf16.mxu0 %v968
        %1334 = vmatpush1.bf16.msra.mxu0 %v967
        %1335 = vmatprep.subr.bf16.mxu0 %v980
        %1336 = vmatpush1.bf16.msra.mxu0 %v979
        %1337 = vmatprep.subr.bf16.mxu0 %v992
        %1338 = vmatpush1.bf16.msra.mxu0 %v991
        %1339 = vmatprep.subr.bf16.mxu0 %v1004
        %1340 = vmatpush1.bf16.msra.mxu0 %v1003
        %1341 = vmatprep.subr.bf16.mxu0 %v1016
        %1342 = vmatpush1.bf16.msra.mxu0 %v1015
        %1343 = vmatprep.subr.bf16.mxu0 0
        %1344 = vmatpush1.bf16.msra.mxu0 0
        %1345 = vmatprep.subr.bf16.mxu0 0
        %1346 = vmatpush1.bf16.msra.mxu0 0
        %1347 = vmatprep.subr.bf16.mxu0 0
        %1348 = vmatpush1.bf16.msra.mxu0 0
        %1349 = vmatprep.subr.bf16.mxu0 0
        %1350 = vmatpush1.bf16.msra.mxu0 0
        %1351 = vmatprep.subr.bf16.mxu0 0
        %1352 = vmatpush1.bf16.msra.mxu0 0
        %1353 = vmatprep.subr.bf16.mxu0 0
        %1354 = vmatpush1.bf16.msra.mxu0 0
        %1355 = vmatprep.subr.bf16.mxu0 0
        %1356 = vmatpush1.bf16.msra.mxu0 0
        %1357 = vmatprep.subr.bf16.mxu0 0
        %1358 = vmatpush1.bf16.msra.mxu0 0
        %1359 = vmatprep.mubr.bf16.mxu0 0
        %1360 = vmatmul.mubr.bf16.gmra.mrb[0].mxu0 %v537
        %v1361 = vpop.f32.mrb[0].mxu0
        %v1362 = vadd.f32 0.0, %v1361
        %v1363 = vpop.f32.mrb[0].mxu0
        %v1364 = vadd.f32 0.0, %v1363
        %v1365 = vpop.f32.mrb[0].mxu0
        %v1366 = vadd.f32 0.0, %v1365
        %v1367 = vpop.f32.mrb[0].mxu0
        %v1368 = vadd.f32 0.0, %v1367
        %1369 = vmatprep.mubr.bf16.mxu0 0
        %1370 = vmatmul.mubr.bf16.gmra.mrb[0].mxu0 %v538
        %v1371 = vpop.f32.mrb[0].mxu0
        %v1372 = vadd.f32 0.0, %v1371
        %v1373 = vpop.f32.mrb[0].mxu0
        %v1374 = vadd.f32 0.0, %v1373
        %v1375 = vpop.f32.mrb[0].mxu0
        %v1376 = vadd.f32 0.0, %v1375
        %v1377 = vpop.f32.mrb[0].mxu0
        %v1378 = vadd.f32 0.0, %v1377
        %1379 = vdwg.mxu0
        %1380 = vmatprep.subr.bf16.mxu0 %v934
        %1381 = vmatpush1.bf16.msra.mxu0 %v933
        %1382 = vmatprep.subr.bf16.mxu0 %v946
        %1383 = vmatpush1.bf16.msra.mxu0 %v945
        %1384 = vmatprep.subr.bf16.mxu0 %v958
        %1385 = vmatpush1.bf16.msra.mxu0 %v957
        %1386 = vmatprep.subr.bf16.mxu0 %v970
        %1387 = vmatpush1.bf16.msra.mxu0 %v969
        %1388 = vmatprep.subr.bf16.mxu0 %v982
        %1389 = vmatpush1.bf16.msra.mxu0 %v981
        %1390 = vmatprep.subr.bf16.mxu0 %v994
        %1391 = vmatpush1.bf16.msra.mxu0 %v993
        %1392 = vmatprep.subr.bf16.mxu0 %v1006
        %1393 = vmatpush1.bf16.msra.mxu0 %v1005
        %1394 = vmatprep.subr.bf16.mxu0 %v1018
        %1395 = vmatpush1.bf16.msra.mxu0 %v1017
        %1396 = vmatprep.subr.bf16.mxu0 0
        %1397 = vmatpush1.bf16.msra.mxu0 0
        %1398 = vmatprep.subr.bf16.mxu0 0
        %1399 = vmatpush1.bf16.msra.mxu0 0
        %1400 = vmatprep.subr.bf16.mxu0 0
        %1401 = vmatpush1.bf16.msra.mxu0 0
        %1402 = vmatprep.subr.bf16.mxu0 0
        %1403 = vmatpush1.bf16.msra.mxu0 0
        %1404 = vmatprep.subr.bf16.mxu0 0
        %1405 = vmatpush1.bf16.msra.mxu0 0
        %1406 = vmatprep.subr.bf16.mxu0 0
        %1407 = vmatpush1.bf16.msra.mxu0 0
        %1408 = vmatprep.subr.bf16.mxu0 0
        %1409 = vmatpush1.bf16.msra.mxu0 0
        %1410 = vmatprep.subr.bf16.mxu0 0
        %1411 = vmatpush1.bf16.msra.mxu0 0
        %1412 = vmatprep.mubr.bf16.mxu0 0
        %1413 = vmatmul.mubr.bf16.gmra.mrb[0].mxu0 %v537
        %v1414 = vpop.f32.mrb[0].mxu0
        %v1415 = vadd.f32 0.0, %v1414
        %v1416 = vpop.f32.mrb[0].mxu0
        %v1417 = vadd.f32 0.0, %v1416
        %v1418 = vpop.f32.mrb[0].mxu0
        %v1419 = vadd.f32 0.0, %v1418
        %v1420 = vpop.f32.mrb[0].mxu0
        %v1421 = vadd.f32 0.0, %v1420
        %1422 = vmatprep.mubr.bf16.mxu0 0
        %1423 = vmatmul.mubr.bf16.gmra.mrb[0].mxu0 %v538
        %v1424 = vpop.f32.mrb[0].mxu0
        %v1425 = vadd.f32 0.0, %v1424
        %v1426 = vpop.f32.mrb[0].mxu0
        %v1427 = vadd.f32 0.0, %v1426
        %v1428 = vpop.f32.mrb[0].mxu0
        %v1429 = vadd.f32 0.0, %v1428
        %v1430 = vpop.f32.mrb[0].mxu0
        %v1431 = vadd.f32 0.0, %v1430
        %1432 = vdwg.mxu0
        %v1433 = vpack.c.bf16 %v1154, %v1150
        %v1434 = vpack.c.bf16 %v1164, %v1160
        %v1435 = vpack.c.bf16 %v1260, %v1256
        %v1436 = vpack.c.bf16 %v1270, %v1266
        %v1437 = vpack.c.bf16 %v1366, %v1362
        %v1438 = vpack.c.bf16 %v1376, %v1372
        %1439 = vmatprep.subr.bf16.mxu0 0
        %1440 = vmatpush1.bf16.xpose.msra.mxu0 %v1435
        %1441 = vmatprep.subr.bf16.mxu0 0
        %1442 = vmatpush1.bf16.xpose.msra.mxu0 0
        %1443 = vmatprep.subr.bf16.mxu0 0
        %1444 = vmatpush1.bf16.xpose.msra.mxu0 0
        %1445 = vmatprep.subr.bf16.mxu0 0
        %1446 = vmatpush1.bf16.xpose.msra.mxu0 0
        %1447 = vmatprep.subr.bf16.mxu0 0
        %1448 = vmatpush1.bf16.xpose.msra.mxu0 0
        %1449 = vmatprep.subr.bf16.mxu0 0
        %1450 = vmatpush1.bf16.xpose.msra.mxu0 0
        %1451 = vmatprep.subr.bf16.mxu0 0
        %1452 = vmatpush1.bf16.xpose.msra.mxu0 0
        %1453 = vmatprep.subr.bf16.mxu0 0
        %1454 = vmatpush1.bf16.xpose.msra.mxu0 0
        %1455 = vmatprep.subr.bf16.mxu0 0
        %1456 = vmatpush1.bf16.xpose.msra.mxu0 0
        %1457 = vmatprep.subr.bf16.mxu0 0
        %1458 = vmatpush1.bf16.xpose.msra.mxu0 0
        %1459 = vmatprep.subr.bf16.mxu0 0
        %1460 = vmatpush1.bf16.xpose.msra.mxu0 0
        %1461 = vmatprep.subr.bf16.mxu0 0
        %1462 = vmatpush1.bf16.xpose.msra.mxu0 0
        %1463 = vmatprep.subr.bf16.mxu0 0
        %1464 = vmatpush1.bf16.xpose.msra.mxu0 0
        %1465 = vmatprep.subr.bf16.mxu0 0
        %1466 = vmatpush1.bf16.xpose.msra.mxu0 0
        %1467 = vmatprep.subr.bf16.mxu0 0
        %1468 = vmatpush1.bf16.xpose.msra.mxu0 0
        %1469 = vmatprep.subr.bf16.mxu0 0
        %1470 = vmatpush1.bf16.xpose.msra.mxu0 0
        %1471 = vmatprep.mubr.bf16.mxu0 0
        %1472 = vmatmul.mubr.bf16.gmra.mrb[0].mxu0 %v1433
        %v1473 = vpop.f32.mrb[0].mxu0
        %v1474 = vadd.f32 0.0, %v1473
        %v1475 = vpop.f32.mrb[0].mxu0
        %v1476 = vpop.f32.mrb[0].mxu0
        %v1477 = vadd.f32 0.0, %v1476
        %v1478 = vpop.f32.mrb[0].mxu0
        %1479 = vdwg.mxu0
        %1480 = vmatprep.subr.bf16.mxu0 0
        %1481 = vmatpush1.bf16.xpose.msra.mxu0 %v1436
        %1482 = vmatprep.subr.bf16.mxu0 0
        %1483 = vmatpush1.bf16.xpose.msra.mxu0 0
        %1484 = vmatprep.subr.bf16.mxu0 0
        %1485 = vmatpush1.bf16.xpose.msra.mxu0 0
        %1486 = vmatprep.subr.bf16.mxu0 0
        %1487 = vmatpush1.bf16.xpose.msra.mxu0 0
        %1488 = vmatprep.subr.bf16.mxu0 0
        %1489 = vmatpush1.bf16.xpose.msra.mxu0 0
        %1490 = vmatprep.subr.bf16.mxu0 0
        %1491 = vmatpush1.bf16.xpose.msra.mxu0 0
        %1492 = vmatprep.subr.bf16.mxu0 0
        %1493 = vmatpush1.bf16.xpose.msra.mxu0 0
        %1494 = vmatprep.subr.bf16.mxu0 0
        %1495 = vmatpush1.bf16.xpose.msra.mxu0 0
        %1496 = vmatprep.subr.bf16.mxu0 0
        %1497 = vmatpush1.bf16.xpose.msra.mxu0 0
        %1498 = vmatprep.subr.bf16.mxu0 0
        %1499 = vmatpush1.bf16.xpose.msra.mxu0 0
        %1500 = vmatprep.subr.bf16.mxu0 0
        %1501 = vmatpush1.bf16.xpose.msra.mxu0 0
        %1502 = vmatprep.subr.bf16.mxu0 0
        %1503 = vmatpush1.bf16.xpose.msra.mxu0 0
        %1504 = vmatprep.subr.bf16.mxu0 0
        %1505 = vmatpush1.bf16.xpose.msra.mxu0 0
        %1506 = vmatprep.subr.bf16.mxu0 0
        %1507 = vmatpush1.bf16.xpose.msra.mxu0 0
        %1508 = vmatprep.subr.bf16.mxu0 0
        %1509 = vmatpush1.bf16.xpose.msra.mxu0 0
        %1510 = vmatprep.subr.bf16.mxu0 0
        %1511 = vmatpush1.bf16.xpose.msra.mxu0 0
        %1512 = vmatprep.mubr.bf16.mxu0 0
        %1513 = vmatmul.mubr.bf16.gmra.mrb[0].mxu0 %v1434
        %v1514 = vpop.f32.mrb[0].mxu0
        %v1515 = vadd.f32 0.0, %v1514
        %v1516 = vpop.f32.mrb[0].mxu0
        %v1517 = vpop.f32.mrb[0].mxu0
        %v1518 = vadd.f32 0.0, %v1517
        %v1519 = vpop.f32.mrb[0].mxu0
        %1520 = vdwg.mxu0
        %v1521 = vmul.f32 %v1474, 0.125
        %v1522 = vmul.f32 %v1477, 0.125
        %v1523 = vmul.f32 %v1515, 0.125
        %v1524 = vmul.f32 %v1518, 0.125
        %vm1525 = vcmask 130048
        %v1526 = vsel %vm1525, %v1521, -inf
        %1527 = vmax.xlane.f32.xlu0 %v1526
        %v1528 = vpop.xlane.xlu0 %1527
        %v1529 = vsel %vm1525, %v1522, -inf
        %1530 = vmax.xlane.f32.xlu0 %v1529
        %v1531 = vpop.xlane.xlu0 %1530
        %v1532 = vsel %vm1525, %v1523, -inf
        %1533 = vmax.xlane.f32.xlu0 %v1532
        %v1534 = vpop.xlane.xlu0 %1533
        %v1535 = vsel %vm1525, %v1524, -inf
        %1536 = vmax.xlane.f32.xlu0 %v1535
        %v1537 = vpop.xlane.xlu0 %1536
        %v1538 = vsub.f32 %v1521, %v1528
        %v1539 = vsub.f32 %v1522, %v1531
        %v1540 = vsub.f32 %v1523, %v1534
        %v1541 = vsub.f32 %v1524, %v1537
        %v1542 = vmul.f32 %v1538, 1.442695
        %v1543 = vpow.pop %v1542
        %v1544 = vmul.f32 %v1539, 1.442695
        %v1545 = vpow.pop %v1544
        %v1546 = vmul.f32 %v1540, 1.442695
        %v1547 = vpow.pop %v1546
        %v1548 = vmul.f32 %v1541, 1.442695
        %v1549 = vpow.pop %v1548
        %v1550 = vsel %vm1525, %v1543, 0.0
        %1551 = vadd.xlane.f32.xlu0 %v1550
        %v1552 = vpop.xlane.xlu0 %1551
        %v1553 = vsel %vm1525, %v1545, 0.0
        %1554 = vadd.xlane.f32.xlu0 %v1553
        %v1555 = vpop.xlane.xlu0 %1554
        %v1556 = vsel %vm1525, %v1547, 0.0
        %1557 = vadd.xlane.f32.xlu0 %v1556
        %v1558 = vpop.xlane.xlu0 %1557
        %v1559 = vsel %vm1525, %v1549, 0.0
        %1560 = vadd.xlane.f32.xlu0 %v1559
        %v1561 = vpop.xlane.xlu0 %1560
        %v1562 = vrcp.pop %v1552
        %v1563 = vrcp.pop %v1555
        %v1564 = vrcp.pop %v1558
        %v1565 = vrcp.pop %v1561
        %v1566 = vmul.f32 %v1543, %v1562
        %v1567 = vmul.f32 %v1545, %v1563
        %v1568 = vmul.f32 %v1547, %v1564
        %v1569 = vmul.f32 %v1549, %v1565
        %v1570 = vadd.f32 %v1566, 0.0
        %v1571 = vadd.f32 %v1567, 0.0
        %v1572 = vadd.f32 %v1568, 0.0
        %v1573 = vadd.f32 %v1569, 0.0
        %v1574 = vpack.c.bf16 %v1567, %v1566
        %v1575 = vpack.c.bf16 %v1569, %v1568
        %v1577 = vsel %vm1525, %v1574, 0
        %1579 = vmatprep.subr.bf16.mxu0 0
        %1580 = vmatpush1.bf16.msra.mxu0 %v1437
        %1581 = vmatprep.subr.bf16.mxu0 0
        %1582 = vmatpush1.bf16.msra.mxu0 0
        %1583 = vmatprep.subr.bf16.mxu0 0
        %1584 = vmatpush1.bf16.msra.mxu0 0
        %1585 = vmatprep.subr.bf16.mxu0 0
        %1586 = vmatpush1.bf16.msra.mxu0 0
        %1587 = vmatprep.subr.bf16.mxu0 0
        %1588 = vmatpush1.bf16.msra.mxu0 0
        %1589 = vmatprep.subr.bf16.mxu0 0
        %1590 = vmatpush1.bf16.msra.mxu0 0
        %1591 = vmatprep.subr.bf16.mxu0 0
        %1592 = vmatpush1.bf16.msra.mxu0 0
        %1593 = vmatprep.subr.bf16.mxu0 0
        %1594 = vmatpush1.bf16.msra.mxu0 0
        %1595 = vmatprep.subr.bf16.mxu0 0
        %1596 = vmatpush1.bf16.msra.mxu0 0
        %1597 = vmatprep.subr.bf16.mxu0 0
        %1598 = vmatpush1.bf16.msra.mxu0 0
        %1599 = vmatprep.subr.bf16.mxu0 0
        %1600 = vmatpush1.bf16.msra.mxu0 0
        %1601 = vmatprep.subr.bf16.mxu0 0
        %1602 = vmatpush1.bf16.msra.mxu0 0
        %1603 = vmatprep.subr.bf16.mxu0 0
        %1604 = vmatpush1.bf16.msra.mxu0 0
        %1605 = vmatprep.subr.bf16.mxu0 0
        %1606 = vmatpush1.bf16.msra.mxu0 0
        %1607 = vmatprep.subr.bf16.mxu0 0
        %1608 = vmatpush1.bf16.msra.mxu0 0
        %1609 = vmatprep.subr.bf16.mxu0 0
        %1610 = vmatpush1.bf16.msra.mxu0 0
        %1611 = vmatprep.mubr.bf16.mxu0 0
        %1612 = vmatmul.mubr.bf16.gmra.mrb[0].mxu0 %v1577
        %v1613 = vpop.f32.mrb[0].mxu0
        %v1614 = vadd.f32 0.0, %v1613
        %v1615 = vpop.f32.mrb[0].mxu0
        %v1616 = vpop.f32.mrb[0].mxu0
        %v1617 = vadd.f32 0.0, %v1616
        %v1618 = vpop.f32.mrb[0].mxu0
        %1619 = vdwg.mxu0
        %v1621 = vsel %vm1525, %v1575, 0
        %1623 = vmatprep.subr.bf16.mxu0 0
        %1624 = vmatpush1.bf16.msra.mxu0 %v1438
        %1625 = vmatprep.subr.bf16.mxu0 0
        %1626 = vmatpush1.bf16.msra.mxu0 0
        %1627 = vmatprep.subr.bf16.mxu0 0
        %1628 = vmatpush1.bf16.msra.mxu0 0
        %1629 = vmatprep.subr.bf16.mxu0 0
        %1630 = vmatpush1.bf16.msra.mxu0 0
        %1631 = vmatprep.subr.bf16.mxu0 0
        %1632 = vmatpush1.bf16.msra.mxu0 0
        %1633 = vmatprep.subr.bf16.mxu0 0
        %1634 = vmatpush1.bf16.msra.mxu0 0
        %1635 = vmatprep.subr.bf16.mxu0 0
        %1636 = vmatpush1.bf16.msra.mxu0 0
        %1637 = vmatprep.subr.bf16.mxu0 0
        %1638 = vmatpush1.bf16.msra.mxu0 0
        %1639 = vmatprep.subr.bf16.mxu0 0
        %1640 = vmatpush1.bf16.msra.mxu0 0
        %1641 = vmatprep.subr.bf16.mxu0 0
        %1642 = vmatpush1.bf16.msra.mxu0 0
        %1643 = vmatprep.subr.bf16.mxu0 0
        %1644 = vmatpush1.bf16.msra.mxu0 0
        %1645 = vmatprep.subr.bf16.mxu0 0
        %1646 = vmatpush1.bf16.msra.mxu0 0
        %1647 = vmatprep.subr.bf16.mxu0 0
        %1648 = vmatpush1.bf16.msra.mxu0 0
        %1649 = vmatprep.subr.bf16.mxu0 0
        %1650 = vmatpush1.bf16.msra.mxu0 0
        %1651 = vmatprep.subr.bf16.mxu0 0
        %1652 = vmatpush1.bf16.msra.mxu0 0
        %1653 = vmatprep.subr.bf16.mxu0 0
        %1654 = vmatpush1.bf16.msra.mxu0 0
        %1655 = vmatprep.mubr.bf16.mxu0 0
        %1656 = vmatmul.mubr.bf16.gmra.mrb[0].mxu0 %v1621
        %v1657 = vpop.f32.mrb[0].mxu0
        %v1658 = vadd.f32 0.0, %v1657
        %v1659 = vpop.f32.mrb[0].mxu0
        %v1660 = vpop.f32.mrb[0].mxu0
        %v1661 = vadd.f32 0.0, %v1660
        %v1662 = vpop.f32.mrb[0].mxu0
        %1663 = vdwg.mxu0
        %v1664 = vpack.c.bf16 %v1156, %v1152
        %v1665 = vpack.c.bf16 %v1166, %v1162
        %v1666 = vpack.c.bf16 %v1262, %v1258
        %v1667 = vpack.c.bf16 %v1272, %v1268
        %v1668 = vpack.c.bf16 %v1368, %v1364
        %v1669 = vpack.c.bf16 %v1378, %v1374
        %1670 = vmatprep.subr.bf16.mxu0 0
        %1671 = vmatpush1.bf16.xpose.msra.mxu0 %v1666
        %1672 = vmatprep.subr.bf16.mxu0 0
        %1673 = vmatpush1.bf16.xpose.msra.mxu0 0
        %1674 = vmatprep.subr.bf16.mxu0 0
        %1675 = vmatpush1.bf16.xpose.msra.mxu0 0
        %1676 = vmatprep.subr.bf16.mxu0 0
        %1677 = vmatpush1.bf16.xpose.msra.mxu0 0
        %1678 = vmatprep.subr.bf16.mxu0 0
        %1679 = vmatpush1.bf16.xpose.msra.mxu0 0
        %1680 = vmatprep.subr.bf16.mxu0 0
        %1681 = vmatpush1.bf16.xpose.msra.mxu0 0
        %1682 = vmatprep.subr.bf16.mxu0 0
        %1683 = vmatpush1.bf16.xpose.msra.mxu0 0
        %1684 = vmatprep.subr.bf16.mxu0 0
        %1685 = vmatpush1.bf16.xpose.msra.mxu0 0
        %1686 = vmatprep.subr.bf16.mxu0 0
        %1687 = vmatpush1.bf16.xpose.msra.mxu0 0
        %1688 = vmatprep.subr.bf16.mxu0 0
        %1689 = vmatpush1.bf16.xpose.msra.mxu0 0
        %1690 = vmatprep.subr.bf16.mxu0 0
        %1691 = vmatpush1.bf16.xpose.msra.mxu0 0
        %1692 = vmatprep.subr.bf16.mxu0 0
        %1693 = vmatpush1.bf16.xpose.msra.mxu0 0
        %1694 = vmatprep.subr.bf16.mxu0 0
        %1695 = vmatpush1.bf16.xpose.msra.mxu0 0
        %1696 = vmatprep.subr.bf16.mxu0 0
        %1697 = vmatpush1.bf16.xpose.msra.mxu0 0
        %1698 = vmatprep.subr.bf16.mxu0 0
        %1699 = vmatpush1.bf16.xpose.msra.mxu0 0
        %1700 = vmatprep.subr.bf16.mxu0 0
        %1701 = vmatpush1.bf16.xpose.msra.mxu0 0
        %1702 = vmatprep.mubr.bf16.mxu0 0
        %1703 = vmatmul.mubr.bf16.gmra.mrb[0].mxu0 %v1664
        %v1704 = vpop.f32.mrb[0].mxu0
        %v1705 = vadd.f32 0.0, %v1704
        %v1706 = vpop.f32.mrb[0].mxu0
        %v1707 = vpop.f32.mrb[0].mxu0
        %v1708 = vadd.f32 0.0, %v1707
        %v1709 = vpop.f32.mrb[0].mxu0
        %1710 = vdwg.mxu0
        %1711 = vmatprep.subr.bf16.mxu0 0
        %1712 = vmatpush1.bf16.xpose.msra.mxu0 %v1667
        %1713 = vmatprep.subr.bf16.mxu0 0
        %1714 = vmatpush1.bf16.xpose.msra.mxu0 0
        %1715 = vmatprep.subr.bf16.mxu0 0
        %1716 = vmatpush1.bf16.xpose.msra.mxu0 0
        %1717 = vmatprep.subr.bf16.mxu0 0
        %1718 = vmatpush1.bf16.xpose.msra.mxu0 0
        %1719 = vmatprep.subr.bf16.mxu0 0
        %1720 = vmatpush1.bf16.xpose.msra.mxu0 0
        %1721 = vmatprep.subr.bf16.mxu0 0
        %1722 = vmatpush1.bf16.xpose.msra.mxu0 0
        %1723 = vmatprep.subr.bf16.mxu0 0
        %1724 = vmatpush1.bf16.xpose.msra.mxu0 0
        %1725 = vmatprep.subr.bf16.mxu0 0
        %1726 = vmatpush1.bf16.xpose.msra.mxu0 0
        %1727 = vmatprep.subr.bf16.mxu0 0
        %1728 = vmatpush1.bf16.xpose.msra.mxu0 0
        %1729 = vmatprep.subr.bf16.mxu0 0
        %1730 = vmatpush1.bf16.xpose.msra.mxu0 0
        %1731 = vmatprep.subr.bf16.mxu0 0
        %1732 = vmatpush1.bf16.xpose.msra.mxu0 0
        %1733 = vmatprep.subr.bf16.mxu0 0
        %1734 = vmatpush1.bf16.xpose.msra.mxu0 0
        %1735 = vmatprep.subr.bf16.mxu0 0
        %1736 = vmatpush1.bf16.xpose.msra.mxu0 0
        %1737 = vmatprep.subr.bf16.mxu0 0
        %1738 = vmatpush1.bf16.xpose.msra.mxu0 0
        %1739 = vmatprep.subr.bf16.mxu0 0
        %1740 = vmatpush1.bf16.xpose.msra.mxu0 0
        %1741 = vmatprep.subr.bf16.mxu0 0
        %1742 = vmatpush1.bf16.xpose.msra.mxu0 0
        %1743 = vmatprep.mubr.bf16.mxu0 0
        %1744 = vmatmul.mubr.bf16.gmra.mrb[0].mxu0 %v1665
        %v1745 = vpop.f32.mrb[0].mxu0
        %v1746 = vadd.f32 0.0, %v1745
        %v1747 = vpop.f32.mrb[0].mxu0
        %v1748 = vpop.f32.mrb[0].mxu0
        %v1749 = vadd.f32 0.0, %v1748
        %v1750 = vpop.f32.mrb[0].mxu0
        %1751 = vdwg.mxu0
        %v1752 = vmul.f32 %v1705, 0.125
        %v1753 = vmul.f32 %v1708, 0.125
        %v1754 = vmul.f32 %v1746, 0.125
        %v1755 = vmul.f32 %v1749, 0.125
        %v1756 = vsel %vm1525, %v1752, -inf
        %1757 = vmax.xlane.f32.xlu0 %v1756
        %v1758 = vpop.xlane.xlu0 %1757
        %v1759 = vsel %vm1525, %v1753, -inf
        %1760 = vmax.xlane.f32.xlu0 %v1759
        %v1761 = vpop.xlane.xlu0 %1760
        %v1762 = vsel %vm1525, %v1754, -inf
        %1763 = vmax.xlane.f32.xlu0 %v1762
        %v1764 = vpop.xlane.xlu0 %1763
        %v1765 = vsel %vm1525, %v1755, -inf
        %1766 = vmax.xlane.f32.xlu0 %v1765
        %v1767 = vpop.xlane.xlu0 %1766
        %v1768 = vsub.f32 %v1752, %v1758
        %v1769 = vsub.f32 %v1753, %v1761
        %v1770 = vsub.f32 %v1754, %v1764
        %v1771 = vsub.f32 %v1755, %v1767
        %v1772 = vmul.f32 %v1768, 1.442695
        %v1773 = vpow.pop %v1772
        %v1774 = vmul.f32 %v1769, 1.442695
        %v1775 = vpow.pop %v1774
        %v1776 = vmul.f32 %v1770, 1.442695
        %v1777 = vpow.pop %v1776
        %v1778 = vmul.f32 %v1771, 1.442695
        %v1779 = vpow.pop %v1778
        %v1780 = vsel %vm1525, %v1773, 0.0
        %1781 = vadd.xlane.f32.xlu0 %v1780
        %v1782 = vpop.xlane.xlu0 %1781
        %v1783 = vsel %vm1525, %v1775, 0.0
        %1784 = vadd.xlane.f32.xlu0 %v1783
        %v1785 = vpop.xlane.xlu0 %1784
        %v1786 = vsel %vm1525, %v1777, 0.0
        %1787 = vadd.xlane.f32.xlu0 %v1786
        %v1788 = vpop.xlane.xlu0 %1787
        %v1789 = vsel %vm1525, %v1779, 0.0
        %1790 = vadd.xlane.f32.xlu0 %v1789
        %v1791 = vpop.xlane.xlu0 %1790
        %v1792 = vrcp.pop %v1782
        %v1793 = vrcp.pop %v1785
        %v1794 = vrcp.pop %v1788
        %v1795 = vrcp.pop %v1791
        %v1796 = vmul.f32 %v1773, %v1792
        %v1797 = vmul.f32 %v1775, %v1793
        %v1798 = vmul.f32 %v1777, %v1794
        %v1799 = vmul.f32 %v1779, %v1795
        %v1800 = vadd.f32 %v1570, %v1796
        %v1801 = vadd.f32 %v1571, %v1797
        %v1802 = vadd.f32 %v1572, %v1798
        %v1803 = vadd.f32 %v1573, %v1799
        %v1804 = vpack.c.bf16 %v1797, %v1796
        %v1805 = vpack.c.bf16 %v1799, %v1798
        %v1807 = vsel %vm1525, %v1804, 0
        %1809 = vmatprep.subr.bf16.mxu0 0
        %1810 = vmatpush1.bf16.msra.mxu0 %v1668
        %1811 = vmatprep.subr.bf16.mxu0 0
        %1812 = vmatpush1.bf16.msra.mxu0 0
        %1813 = vmatprep.subr.bf16.mxu0 0
        %1814 = vmatpush1.bf16.msra.mxu0 0
        %1815 = vmatprep.subr.bf16.mxu0 0
        %1816 = vmatpush1.bf16.msra.mxu0 0
        %1817 = vmatprep.subr.bf16.mxu0 0
        %1818 = vmatpush1.bf16.msra.mxu0 0
        %1819 = vmatprep.subr.bf16.mxu0 0
        %1820 = vmatpush1.bf16.msra.mxu0 0
        %1821 = vmatprep.subr.bf16.mxu0 0
        %1822 = vmatpush1.bf16.msra.mxu0 0
        %1823 = vmatprep.subr.bf16.mxu0 0
        %1824 = vmatpush1.bf16.msra.mxu0 0
        %1825 = vmatprep.subr.bf16.mxu0 0
        %1826 = vmatpush1.bf16.msra.mxu0 0
        %1827 = vmatprep.subr.bf16.mxu0 0
        %1828 = vmatpush1.bf16.msra.mxu0 0
        %1829 = vmatprep.subr.bf16.mxu0 0
        %1830 = vmatpush1.bf16.msra.mxu0 0
        %1831 = vmatprep.subr.bf16.mxu0 0
        %1832 = vmatpush1.bf16.msra.mxu0 0
        %1833 = vmatprep.subr.bf16.mxu0 0
        %1834 = vmatpush1.bf16.msra.mxu0 0
        %1835 = vmatprep.subr.bf16.mxu0 0
        %1836 = vmatpush1.bf16.msra.mxu0 0
        %1837 = vmatprep.subr.bf16.mxu0 0
        %1838 = vmatpush1.bf16.msra.mxu0 0
        %1839 = vmatprep.subr.bf16.mxu0 0
        %1840 = vmatpush1.bf16.msra.mxu0 0
        %1841 = vmatprep.mubr.bf16.mxu0 0
        %1842 = vmatmul.mubr.bf16.gmra.mrb[0].mxu0 %v1807
        %v1843 = vpop.f32.mrb[0].mxu0
        %v1844 = vadd.f32 0.0, %v1843
        %v1845 = vpop.f32.mrb[0].mxu0
        %v1846 = vpop.f32.mrb[0].mxu0
        %v1847 = vadd.f32 0.0, %v1846
        %v1848 = vpop.f32.mrb[0].mxu0
        %1849 = vdwg.mxu0
        %v1851 = vsel %vm1525, %v1805, 0
        %1853 = vmatprep.subr.bf16.mxu0 0
        %1854 = vmatpush1.bf16.msra.mxu0 %v1669
        %1855 = vmatprep.subr.bf16.mxu0 0
        %1856 = vmatpush1.bf16.msra.mxu0 0
        %1857 = vmatprep.subr.bf16.mxu0 0
        %1858 = vmatpush1.bf16.msra.mxu0 0
        %1859 = vmatprep.subr.bf16.mxu0 0
        %1860 = vmatpush1.bf16.msra.mxu0 0
        %1861 = vmatprep.subr.bf16.mxu0 0
        %1862 = vmatpush1.bf16.msra.mxu0 0
        %1863 = vmatprep.subr.bf16.mxu0 0
        %1864 = vmatpush1.bf16.msra.mxu0 0
        %1865 = vmatprep.subr.bf16.mxu0 0
        %1866 = vmatpush1.bf16.msra.mxu0 0
        %1867 = vmatprep.subr.bf16.mxu0 0
        %1868 = vmatpush1.bf16.msra.mxu0 0
        %1869 = vmatprep.subr.bf16.mxu0 0
        %1870 = vmatpush1.bf16.msra.mxu0 0
        %1871 = vmatprep.subr.bf16.mxu0 0
        %1872 = vmatpush1.bf16.msra.mxu0 0
        %1873 = vmatprep.subr.bf16.mxu0 0
        %1874 = vmatpush1.bf16.msra.mxu0 0
        %1875 = vmatprep.subr.bf16.mxu0 0
        %1876 = vmatpush1.bf16.msra.mxu0 0
        %1877 = vmatprep.subr.bf16.mxu0 0
        %1878 = vmatpush1.bf16.msra.mxu0 0
        %1879 = vmatprep.subr.bf16.mxu0 0
        %1880 = vmatpush1.bf16.msra.mxu0 0
        %1881 = vmatprep.subr.bf16.mxu0 0
        %1882 = vmatpush1.bf16.msra.mxu0 0
        %1883 = vmatprep.subr.bf16.mxu0 0
        %1884 = vmatpush1.bf16.msra.mxu0 0
        %1885 = vmatprep.mubr.bf16.mxu0 0
        %1886 = vmatmul.mubr.bf16.gmra.mrb[0].mxu0 %v1851
        %v1887 = vpop.f32.mrb[0].mxu0
        %v1888 = vadd.f32 0.0, %v1887
        %v1889 = vpop.f32.mrb[0].mxu0
        %v1890 = vpop.f32.mrb[0].mxu0
        %v1891 = vadd.f32 0.0, %v1890
        %v1892 = vpop.f32.mrb[0].mxu0
        %1893 = vdwg.mxu0
        %v1894 = vpack.c.bf16 %v1207, %v1203
        %v1895 = vpack.c.bf16 %v1217, %v1213
        %v1896 = vpack.c.bf16 %v1313, %v1309
        %v1897 = vpack.c.bf16 %v1323, %v1319
        %v1898 = vpack.c.bf16 %v1419, %v1415
        %v1899 = vpack.c.bf16 %v1429, %v1425
        %1900 = vmatprep.subr.bf16.mxu0 0
        %1901 = vmatpush1.bf16.xpose.msra.mxu0 %v1896
        %1902 = vmatprep.subr.bf16.mxu0 0
        %1903 = vmatpush1.bf16.xpose.msra.mxu0 0
        %1904 = vmatprep.subr.bf16.mxu0 0
        %1905 = vmatpush1.bf16.xpose.msra.mxu0 0
        %1906 = vmatprep.subr.bf16.mxu0 0
        %1907 = vmatpush1.bf16.xpose.msra.mxu0 0
        %1908 = vmatprep.subr.bf16.mxu0 0
        %1909 = vmatpush1.bf16.xpose.msra.mxu0 0
        %1910 = vmatprep.subr.bf16.mxu0 0
        %1911 = vmatpush1.bf16.xpose.msra.mxu0 0
        %1912 = vmatprep.subr.bf16.mxu0 0
        %1913 = vmatpush1.bf16.xpose.msra.mxu0 0
        %1914 = vmatprep.subr.bf16.mxu0 0
        %1915 = vmatpush1.bf16.xpose.msra.mxu0 0
        %1916 = vmatprep.subr.bf16.mxu0 0
        %1917 = vmatpush1.bf16.xpose.msra.mxu0 0
        %1918 = vmatprep.subr.bf16.mxu0 0
        %1919 = vmatpush1.bf16.xpose.msra.mxu0 0
        %1920 = vmatprep.subr.bf16.mxu0 0
        %1921 = vmatpush1.bf16.xpose.msra.mxu0 0
        %1922 = vmatprep.subr.bf16.mxu0 0
        %1923 = vmatpush1.bf16.xpose.msra.mxu0 0
        %1924 = vmatprep.subr.bf16.mxu0 0
        %1925 = vmatpush1.bf16.xpose.msra.mxu0 0
        %1926 = vmatprep.subr.bf16.mxu0 0
        %1927 = vmatpush1.bf16.xpose.msra.mxu0 0
        %1928 = vmatprep.subr.bf16.mxu0 0
        %1929 = vmatpush1.bf16.xpose.msra.mxu0 0
        %1930 = vmatprep.subr.bf16.mxu0 0
        %1931 = vmatpush1.bf16.xpose.msra.mxu0 0
        %1932 = vmatprep.mubr.bf16.mxu0 0
        %1933 = vmatmul.mubr.bf16.gmra.mrb[0].mxu0 %v1894
        %v1934 = vpop.f32.mrb[0].mxu0
        %v1935 = vadd.f32 0.0, %v1934
        %v1936 = vpop.f32.mrb[0].mxu0
        %v1937 = vpop.f32.mrb[0].mxu0
        %v1938 = vadd.f32 0.0, %v1937
        %v1939 = vpop.f32.mrb[0].mxu0
        %1940 = vdwg.mxu0
        %1941 = vmatprep.subr.bf16.mxu0 0
        %1942 = vmatpush1.bf16.xpose.msra.mxu0 %v1897
        %1943 = vmatprep.subr.bf16.mxu0 0
        %1944 = vmatpush1.bf16.xpose.msra.mxu0 0
        %1945 = vmatprep.subr.bf16.mxu0 0
        %1946 = vmatpush1.bf16.xpose.msra.mxu0 0
        %1947 = vmatprep.subr.bf16.mxu0 0
        %1948 = vmatpush1.bf16.xpose.msra.mxu0 0
        %1949 = vmatprep.subr.bf16.mxu0 0
        %1950 = vmatpush1.bf16.xpose.msra.mxu0 0
        %1951 = vmatprep.subr.bf16.mxu0 0
        %1952 = vmatpush1.bf16.xpose.msra.mxu0 0
        %1953 = vmatprep.subr.bf16.mxu0 0
        %1954 = vmatpush1.bf16.xpose.msra.mxu0 0
        %1955 = vmatprep.subr.bf16.mxu0 0
        %1956 = vmatpush1.bf16.xpose.msra.mxu0 0
        %1957 = vmatprep.subr.bf16.mxu0 0
        %1958 = vmatpush1.bf16.xpose.msra.mxu0 0
        %1959 = vmatprep.subr.bf16.mxu0 0
        %1960 = vmatpush1.bf16.xpose.msra.mxu0 0
        %1961 = vmatprep.subr.bf16.mxu0 0
        %1962 = vmatpush1.bf16.xpose.msra.mxu0 0
        %1963 = vmatprep.subr.bf16.mxu0 0
        %1964 = vmatpush1.bf16.xpose.msra.mxu0 0
        %1965 = vmatprep.subr.bf16.mxu0 0
        %1966 = vmatpush1.bf16.xpose.msra.mxu0 0
        %1967 = vmatprep.subr.bf16.mxu0 0
        %1968 = vmatpush1.bf16.xpose.msra.mxu0 0
        %1969 = vmatprep.subr.bf16.mxu0 0
        %1970 = vmatpush1.bf16.xpose.msra.mxu0 0
        %1971 = vmatprep.subr.bf16.mxu0 0
        %1972 = vmatpush1.bf16.xpose.msra.mxu0 0
        %1973 = vmatprep.mubr.bf16.mxu0 0
        %1974 = vmatmul.mubr.bf16.gmra.mrb[0].mxu0 %v1895
        %v1975 = vpop.f32.mrb[0].mxu0
        %v1976 = vadd.f32 0.0, %v1975
        %v1977 = vpop.f32.mrb[0].mxu0
        %v1978 = vpop.f32.mrb[0].mxu0
        %v1979 = vadd.f32 0.0, %v1978
        %v1980 = vpop.f32.mrb[0].mxu0
        %1981 = vdwg.mxu0
        %v1982 = vmul.f32 %v1935, 0.125
        %v1983 = vmul.f32 %v1938, 0.125
        %v1984 = vmul.f32 %v1976, 0.125
        %v1985 = vmul.f32 %v1979, 0.125
        %v1986 = vsel %vm1525, %v1982, -inf
        %1987 = vmax.xlane.f32.xlu0 %v1986
        %v1988 = vpop.xlane.xlu0 %1987
        %v1989 = vsel %vm1525, %v1983, -inf
        %1990 = vmax.xlane.f32.xlu0 %v1989
        %v1991 = vpop.xlane.xlu0 %1990
        %v1992 = vsel %vm1525, %v1984, -inf
        %1993 = vmax.xlane.f32.xlu0 %v1992
        %v1994 = vpop.xlane.xlu0 %1993
        %v1995 = vsel %vm1525, %v1985, -inf
        %1996 = vmax.xlane.f32.xlu0 %v1995
        %v1997 = vpop.xlane.xlu0 %1996
        %v1998 = vsub.f32 %v1982, %v1988
        %v1999 = vsub.f32 %v1983, %v1991
        %v2000 = vsub.f32 %v1984, %v1994
        %v2001 = vsub.f32 %v1985, %v1997
        %v2002 = vmul.f32 %v1998, 1.442695
        %v2003 = vpow.pop %v2002
        %v2004 = vmul.f32 %v1999, 1.442695
        %v2005 = vpow.pop %v2004
        %v2006 = vmul.f32 %v2000, 1.442695
        %v2007 = vpow.pop %v2006
        %v2008 = vmul.f32 %v2001, 1.442695
        %v2009 = vpow.pop %v2008
        %v2010 = vsel %vm1525, %v2003, 0.0
        %2011 = vadd.xlane.f32.xlu0 %v2010
        %v2012 = vpop.xlane.xlu0 %2011
        %v2013 = vsel %vm1525, %v2005, 0.0
        %2014 = vadd.xlane.f32.xlu0 %v2013
        %v2015 = vpop.xlane.xlu0 %2014
        %v2016 = vsel %vm1525, %v2007, 0.0
        %2017 = vadd.xlane.f32.xlu0 %v2016
        %v2018 = vpop.xlane.xlu0 %2017
        %v2019 = vsel %vm1525, %v2009, 0.0
        %2020 = vadd.xlane.f32.xlu0 %v2019
        %v2021 = vpop.xlane.xlu0 %2020
        %v2022 = vrcp.pop %v2012
        %v2023 = vrcp.pop %v2015
        %v2024 = vrcp.pop %v2018
        %v2025 = vrcp.pop %v2021
        %v2026 = vmul.f32 %v2003, %v2022
        %v2027 = vmul.f32 %v2005, %v2023
        %v2028 = vmul.f32 %v2007, %v2024
        %v2029 = vmul.f32 %v2009, %v2025
        %v2030 = vadd.f32 %v1800, %v2026
        %v2031 = vadd.f32 %v1801, %v2027
        %v2032 = vadd.f32 %v1802, %v2028
        %v2033 = vadd.f32 %v1803, %v2029
        %v2034 = vpack.c.bf16 %v2027, %v2026
        %v2035 = vpack.c.bf16 %v2029, %v2028
        %v2037 = vsel %vm1525, %v2034, 0
        %2039 = vmatprep.subr.bf16.mxu0 0
        %2040 = vmatpush1.bf16.msra.mxu0 %v1898
        %2041 = vmatprep.subr.bf16.mxu0 0
        %2042 = vmatpush1.bf16.msra.mxu0 0
        %2043 = vmatprep.subr.bf16.mxu0 0
        %2044 = vmatpush1.bf16.msra.mxu0 0
        %2045 = vmatprep.subr.bf16.mxu0 0
        %2046 = vmatpush1.bf16.msra.mxu0 0
        %2047 = vmatprep.subr.bf16.mxu0 0
        %2048 = vmatpush1.bf16.msra.mxu0 0
        %2049 = vmatprep.subr.bf16.mxu0 0
        %2050 = vmatpush1.bf16.msra.mxu0 0
        %2051 = vmatprep.subr.bf16.mxu0 0
        %2052 = vmatpush1.bf16.msra.mxu0 0
        %2053 = vmatprep.subr.bf16.mxu0 0
        %2054 = vmatpush1.bf16.msra.mxu0 0
        %2055 = vmatprep.subr.bf16.mxu0 0
        %2056 = vmatpush1.bf16.msra.mxu0 0
        %2057 = vmatprep.subr.bf16.mxu0 0
        %2058 = vmatpush1.bf16.msra.mxu0 0
        %2059 = vmatprep.subr.bf16.mxu0 0
        %2060 = vmatpush1.bf16.msra.mxu0 0
        %2061 = vmatprep.subr.bf16.mxu0 0
        %2062 = vmatpush1.bf16.msra.mxu0 0
        %2063 = vmatprep.subr.bf16.mxu0 0
        %2064 = vmatpush1.bf16.msra.mxu0 0
        %2065 = vmatprep.subr.bf16.mxu0 0
        %2066 = vmatpush1.bf16.msra.mxu0 0
        %2067 = vmatprep.subr.bf16.mxu0 0
        %2068 = vmatpush1.bf16.msra.mxu0 0
        %2069 = vmatprep.subr.bf16.mxu0 0
        %2070 = vmatpush1.bf16.msra.mxu0 0
        %2071 = vmatprep.mubr.bf16.mxu0 0
        %2072 = vmatmul.mubr.bf16.gmra.mrb[0].mxu0 %v2037
        %v2073 = vpop.f32.mrb[0].mxu0
        %v2074 = vadd.f32 0.0, %v2073
        %v2075 = vpop.f32.mrb[0].mxu0
        %v2076 = vpop.f32.mrb[0].mxu0
        %v2077 = vadd.f32 0.0, %v2076
        %v2078 = vpop.f32.mrb[0].mxu0
        %2079 = vdwg.mxu0
        %v2081 = vsel %vm1525, %v2035, 0
        %2083 = vmatprep.subr.bf16.mxu0 0
        %2084 = vmatpush1.bf16.msra.mxu0 %v1899
        %2085 = vmatprep.subr.bf16.mxu0 0
        %2086 = vmatpush1.bf16.msra.mxu0 0
        %2087 = vmatprep.subr.bf16.mxu0 0
        %2088 = vmatpush1.bf16.msra.mxu0 0
        %2089 = vmatprep.subr.bf16.mxu0 0
        %2090 = vmatpush1.bf16.msra.mxu0 0
        %2091 = vmatprep.subr.bf16.mxu0 0
        %2092 = vmatpush1.bf16.msra.mxu0 0
        %2093 = vmatprep.subr.bf16.mxu0 0
        %2094 = vmatpush1.bf16.msra.mxu0 0
        %2095 = vmatprep.subr.bf16.mxu0 0
        %2096 = vmatpush1.bf16.msra.mxu0 0
        %2097 = vmatprep.subr.bf16.mxu0 0
        %2098 = vmatpush1.bf16.msra.mxu0 0
        %2099 = vmatprep.subr.bf16.mxu0 0
        %2100 = vmatpush1.bf16.msra.mxu0 0
        %2101 = vmatprep.subr.bf16.mxu0 0
        %2102 = vmatpush1.bf16.msra.mxu0 0
        %2103 = vmatprep.subr.bf16.mxu0 0
        %2104 = vmatpush1.bf16.msra.mxu0 0
        %2105 = vmatprep.subr.bf16.mxu0 0
        %2106 = vmatpush1.bf16.msra.mxu0 0
        %2107 = vmatprep.subr.bf16.mxu0 0
        %2108 = vmatpush1.bf16.msra.mxu0 0
        %2109 = vmatprep.subr.bf16.mxu0 0
        %2110 = vmatpush1.bf16.msra.mxu0 0
        %2111 = vmatprep.subr.bf16.mxu0 0
        %2112 = vmatpush1.bf16.msra.mxu0 0
        %2113 = vmatprep.subr.bf16.mxu0 0
        %2114 = vmatpush1.bf16.msra.mxu0 0
        %2115 = vmatprep.mubr.bf16.mxu0 0
        %2116 = vmatmul.mubr.bf16.gmra.mrb[0].mxu0 %v2081
        %v2117 = vpop.f32.mrb[0].mxu0
        %v2118 = vadd.f32 0.0, %v2117
        %v2119 = vpop.f32.mrb[0].mxu0
        %v2120 = vpop.f32.mrb[0].mxu0
        %v2121 = vadd.f32 0.0, %v2120
        %v2122 = vpop.f32.mrb[0].mxu0
        %2123 = vdwg.mxu0
        %v2124 = vpack.c.bf16 %v1209, %v1205
        %v2125 = vpack.c.bf16 %v1219, %v1215
        %v2126 = vpack.c.bf16 %v1315, %v1311
        %v2127 = vpack.c.bf16 %v1325, %v1321
        %v2128 = vpack.c.bf16 %v1421, %v1417
        %v2129 = vpack.c.bf16 %v1431, %v1427
        %2130 = vmatprep.subr.bf16.mxu0 0
        %2131 = vmatpush1.bf16.xpose.msra.mxu0 %v2126
        %2132 = vmatprep.subr.bf16.mxu0 0
        %2133 = vmatpush1.bf16.xpose.msra.mxu0 0
        %2134 = vmatprep.subr.bf16.mxu0 0
        %2135 = vmatpush1.bf16.xpose.msra.mxu0 0
        %2136 = vmatprep.subr.bf16.mxu0 0
        %2137 = vmatpush1.bf16.xpose.msra.mxu0 0
        %2138 = vmatprep.subr.bf16.mxu0 0
        %2139 = vmatpush1.bf16.xpose.msra.mxu0 0
        %2140 = vmatprep.subr.bf16.mxu0 0
        %2141 = vmatpush1.bf16.xpose.msra.mxu0 0
        %2142 = vmatprep.subr.bf16.mxu0 0
        %2143 = vmatpush1.bf16.xpose.msra.mxu0 0
        %2144 = vmatprep.subr.bf16.mxu0 0
        %2145 = vmatpush1.bf16.xpose.msra.mxu0 0
        %2146 = vmatprep.subr.bf16.mxu0 0
        %2147 = vmatpush1.bf16.xpose.msra.mxu0 0
        %2148 = vmatprep.subr.bf16.mxu0 0
        %2149 = vmatpush1.bf16.xpose.msra.mxu0 0
        %2150 = vmatprep.subr.bf16.mxu0 0
        %2151 = vmatpush1.bf16.xpose.msra.mxu0 0
        %2152 = vmatprep.subr.bf16.mxu0 0
        %2153 = vmatpush1.bf16.xpose.msra.mxu0 0
        %2154 = vmatprep.subr.bf16.mxu0 0
        %2155 = vmatpush1.bf16.xpose.msra.mxu0 0
        %2156 = vmatprep.subr.bf16.mxu0 0
        %2157 = vmatpush1.bf16.xpose.msra.mxu0 0
        %2158 = vmatprep.subr.bf16.mxu0 0
        %2159 = vmatpush1.bf16.xpose.msra.mxu0 0
        %2160 = vmatprep.subr.bf16.mxu0 0
        %2161 = vmatpush1.bf16.xpose.msra.mxu0 0
        %2162 = vmatprep.mubr.bf16.mxu0 0
        %2163 = vmatmul.mubr.bf16.gmra.mrb[0].mxu0 %v2124
        %v2164 = vpop.f32.mrb[0].mxu0
        %v2165 = vadd.f32 0.0, %v2164
        %v2166 = vpop.f32.mrb[0].mxu0
        %v2167 = vpop.f32.mrb[0].mxu0
        %v2168 = vadd.f32 0.0, %v2167
        %v2169 = vpop.f32.mrb[0].mxu0
        %2170 = vdwg.mxu0
        %2171 = vmatprep.subr.bf16.mxu0 0
        %2172 = vmatpush1.bf16.xpose.msra.mxu0 %v2127
        %2173 = vmatprep.subr.bf16.mxu0 0
        %2174 = vmatpush1.bf16.xpose.msra.mxu0 0
        %2175 = vmatprep.subr.bf16.mxu0 0
        %2176 = vmatpush1.bf16.xpose.msra.mxu0 0
        %2177 = vmatprep.subr.bf16.mxu0 0
        %2178 = vmatpush1.bf16.xpose.msra.mxu0 0
        %2179 = vmatprep.subr.bf16.mxu0 0
        %2180 = vmatpush1.bf16.xpose.msra.mxu0 0
        %2181 = vmatprep.subr.bf16.mxu0 0
        %2182 = vmatpush1.bf16.xpose.msra.mxu0 0
        %2183 = vmatprep.subr.bf16.mxu0 0
        %2184 = vmatpush1.bf16.xpose.msra.mxu0 0
        %2185 = vmatprep.subr.bf16.mxu0 0
        %2186 = vmatpush1.bf16.xpose.msra.mxu0 0
        %2187 = vmatprep.subr.bf16.mxu0 0
        %2188 = vmatpush1.bf16.xpose.msra.mxu0 0
        %2189 = vmatprep.subr.bf16.mxu0 0
        %2190 = vmatpush1.bf16.xpose.msra.mxu0 0
        %2191 = vmatprep.subr.bf16.mxu0 0
        %2192 = vmatpush1.bf16.xpose.msra.mxu0 0
        %2193 = vmatprep.subr.bf16.mxu0 0
        %2194 = vmatpush1.bf16.xpose.msra.mxu0 0
        %2195 = vmatprep.subr.bf16.mxu0 0
        %2196 = vmatpush1.bf16.xpose.msra.mxu0 0
        %2197 = vmatprep.subr.bf16.mxu0 0
        %2198 = vmatpush1.bf16.xpose.msra.mxu0 0
        %2199 = vmatprep.subr.bf16.mxu0 0
        %2200 = vmatpush1.bf16.xpose.msra.mxu0 0
        %2201 = vmatprep.subr.bf16.mxu0 0
        %2202 = vmatpush1.bf16.xpose.msra.mxu0 0
        %2203 = vmatprep.mubr.bf16.mxu0 0
        %2204 = vmatmul.mubr.bf16.gmra.mrb[0].mxu0 %v2125
        %v2205 = vpop.f32.mrb[0].mxu0
        %v2206 = vadd.f32 0.0, %v2205
        %v2207 = vpop.f32.mrb[0].mxu0
        %v2208 = vpop.f32.mrb[0].mxu0
        %v2209 = vadd.f32 0.0, %v2208
        %v2210 = vpop.f32.mrb[0].mxu0
        %2211 = vdwg.mxu0
        %v2212 = vmul.f32 %v2165, 0.125
        %v2213 = vmul.f32 %v2168, 0.125
        %v2214 = vmul.f32 %v2206, 0.125
        %v2215 = vmul.f32 %v2209, 0.125
        %v2216 = vsel %vm1525, %v2212, -inf
        %2217 = vmax.xlane.f32.xlu0 %v2216
        %v2218 = vpop.xlane.xlu0 %2217
        %v2219 = vsel %vm1525, %v2213, -inf
        %2220 = vmax.xlane.f32.xlu0 %v2219
        %v2221 = vpop.xlane.xlu0 %2220
        %v2222 = vsel %vm1525, %v2214, -inf
        %2223 = vmax.xlane.f32.xlu0 %v2222
        %v2224 = vpop.xlane.xlu0 %2223
        %v2225 = vsel %vm1525, %v2215, -inf
        %2226 = vmax.xlane.f32.xlu0 %v2225
        %v2227 = vpop.xlane.xlu0 %2226
        %v2228 = vsub.f32 %v2212, %v2218
        %v2229 = vsub.f32 %v2213, %v2221
        %v2230 = vsub.f32 %v2214, %v2224
        %v2231 = vsub.f32 %v2215, %v2227
        %v2232 = vmul.f32 %v2228, 1.442695
        %v2233 = vpow.pop %v2232
        %v2234 = vmul.f32 %v2229, 1.442695
        %v2235 = vpow.pop %v2234
        %v2236 = vmul.f32 %v2230, 1.442695
        %v2237 = vpow.pop %v2236
        %v2238 = vmul.f32 %v2231, 1.442695
        %v2239 = vpow.pop %v2238
        %v2240 = vsel %vm1525, %v2233, 0.0
        %2241 = vadd.xlane.f32.xlu0 %v2240
        %v2242 = vpop.xlane.xlu0 %2241
        %v2243 = vsel %vm1525, %v2235, 0.0
        %2244 = vadd.xlane.f32.xlu0 %v2243
        %v2245 = vpop.xlane.xlu0 %2244
        %v2246 = vsel %vm1525, %v2237, 0.0
        %2247 = vadd.xlane.f32.xlu0 %v2246
        %v2248 = vpop.xlane.xlu0 %2247
        %v2249 = vsel %vm1525, %v2239, 0.0
        %2250 = vadd.xlane.f32.xlu0 %v2249
        %v2251 = vpop.xlane.xlu0 %2250
        %v2252 = vrcp.pop %v2242
        %v2253 = vrcp.pop %v2245
        %v2254 = vrcp.pop %v2248
        %v2255 = vrcp.pop %v2251
        %v2256 = vmul.f32 %v2233, %v2252
        %v2257 = vmul.f32 %v2235, %v2253
        %v2258 = vmul.f32 %v2237, %v2254
        %v2259 = vmul.f32 %v2239, %v2255
        %v2260 = vadd.f32 %v2030, %v2256
        %v2261 = vadd.f32 %v2031, %v2257
        %v2262 = vadd.f32 %v2032, %v2258
        %v2263 = vadd.f32 %v2033, %v2259
        %v2264 = vpack.c.bf16 %v2257, %v2256
        %v2265 = vpack.c.bf16 %v2259, %v2258
        %v2267 = vsel %vm1525, %v2264, 0
        %2269 = vmatprep.subr.bf16.mxu0 0
        %2270 = vmatpush1.bf16.msra.mxu0 %v2128
        %2271 = vmatprep.subr.bf16.mxu0 0
        %2272 = vmatpush1.bf16.msra.mxu0 0
        %2273 = vmatprep.subr.bf16.mxu0 0
        %2274 = vmatpush1.bf16.msra.mxu0 0
        %2275 = vmatprep.subr.bf16.mxu0 0
        %2276 = vmatpush1.bf16.msra.mxu0 0
        %2277 = vmatprep.subr.bf16.mxu0 0
        %2278 = vmatpush1.bf16.msra.mxu0 0
        %2279 = vmatprep.subr.bf16.mxu0 0
        %2280 = vmatpush1.bf16.msra.mxu0 0
        %2281 = vmatprep.subr.bf16.mxu0 0
        %2282 = vmatpush1.bf16.msra.mxu0 0
        %2283 = vmatprep.subr.bf16.mxu0 0
        %2284 = vmatpush1.bf16.msra.mxu0 0
        %2285 = vmatprep.subr.bf16.mxu0 0
        %2286 = vmatpush1.bf16.msra.mxu0 0
        %2287 = vmatprep.subr.bf16.mxu0 0
        %2288 = vmatpush1.bf16.msra.mxu0 0
        %2289 = vmatprep.subr.bf16.mxu0 0
        %2290 = vmatpush1.bf16.msra.mxu0 0
        %2291 = vmatprep.subr.bf16.mxu0 0
        %2292 = vmatpush1.bf16.msra.mxu0 0
        %2293 = vmatprep.subr.bf16.mxu0 0
        %2294 = vmatpush1.bf16.msra.mxu0 0
        %2295 = vmatprep.subr.bf16.mxu0 0
        %2296 = vmatpush1.bf16.msra.mxu0 0
        %2297 = vmatprep.subr.bf16.mxu0 0
        %2298 = vmatpush1.bf16.msra.mxu0 0
        %2299 = vmatprep.subr.bf16.mxu0 0
        %2300 = vmatpush1.bf16.msra.mxu0 0
        %2301 = vmatprep.mubr.bf16.mxu0 0
        %2302 = vmatmul.mubr.bf16.gmra.mrb[0].mxu0 %v2267
        %v2303 = vpop.f32.mrb[0].mxu0
        %v2304 = vadd.f32 0.0, %v2303
        %v2305 = vpop.f32.mrb[0].mxu0
        %v2306 = vpop.f32.mrb[0].mxu0
        %v2307 = vadd.f32 0.0, %v2306
        %v2308 = vpop.f32.mrb[0].mxu0
        %2309 = vdwg.mxu0
        %v2311 = vsel %vm1525, %v2265, 0
        %2313 = vmatprep.subr.bf16.mxu0 0
        %2314 = vmatpush1.bf16.msra.mxu0 %v2129
        %2315 = vmatprep.subr.bf16.mxu0 0
        %2316 = vmatpush1.bf16.msra.mxu0 0
        %2317 = vmatprep.subr.bf16.mxu0 0
        %2318 = vmatpush1.bf16.msra.mxu0 0
        %2319 = vmatprep.subr.bf16.mxu0 0
        %2320 = vmatpush1.bf16.msra.mxu0 0
        %2321 = vmatprep.subr.bf16.mxu0 0
        %2322 = vmatpush1.bf16.msra.mxu0 0
        %2323 = vmatprep.subr.bf16.mxu0 0
        %2324 = vmatpush1.bf16.msra.mxu0 0
        %2325 = vmatprep.subr.bf16.mxu0 0
        %2326 = vmatpush1.bf16.msra.mxu0 0
        %2327 = vmatprep.subr.bf16.mxu0 0
        %2328 = vmatpush1.bf16.msra.mxu0 0
        %2329 = vmatprep.subr.bf16.mxu0 0
        %2330 = vmatpush1.bf16.msra.mxu0 0
        %2331 = vmatprep.subr.bf16.mxu0 0
        %2332 = vmatpush1.bf16.msra.mxu0 0
        %2333 = vmatprep.subr.bf16.mxu0 0
        %2334 = vmatpush1.bf16.msra.mxu0 0
        %2335 = vmatprep.subr.bf16.mxu0 0
        %2336 = vmatpush1.bf16.msra.mxu0 0
        %2337 = vmatprep.subr.bf16.mxu0 0
        %2338 = vmatpush1.bf16.msra.mxu0 0
        %2339 = vmatprep.subr.bf16.mxu0 0
        %2340 = vmatpush1.bf16.msra.mxu0 0
        %2341 = vmatprep.subr.bf16.mxu0 0
        %2342 = vmatpush1.bf16.msra.mxu0 0
        %2343 = vmatprep.subr.bf16.mxu0 0
        %2344 = vmatpush1.bf16.msra.mxu0 0
        %2345 = vmatprep.mubr.bf16.mxu0 0
        %2346 = vmatmul.mubr.bf16.gmra.mrb[0].mxu0 %v2311
        %v2347 = vpop.f32.mrb[0].mxu0
        %v2348 = vadd.f32 0.0, %v2347
        %v2349 = vpop.f32.mrb[0].mxu0
        %v2350 = vpop.f32.mrb[0].mxu0
        %v2351 = vadd.f32 0.0, %v2350
        %v2352 = vpop.f32.mrb[0].mxu0
        %2353 = vdwg.mxu0
        %v2354 = vpack.c.bf16 %v1617, %v1614
        %v2355 = vpack.c.bf16 %v1847, %v1844
        %v2356 = vpack.c.bf16 %v2077, %v2074
        %v2357 = vpack.c.bf16 %v2307, %v2304
        %v2358 = vpack.c.bf16 %v1661, %v1658
        %v2359 = vpack.c.bf16 %v1891, %v1888
        %v2360 = vpack.c.bf16 %v2121, %v2118
        %v2361 = vpack.c.bf16 %v2351, %v2348
        %v2362 = vld [vmem:[#allocation7] sm:$0xf]
        %v2363 = vld [vmem:[#allocation7 + $0x4] sm:$0xf]
        %v2364 = vld [vmem:[#allocation7 + $0x8] sm:$0xf]
        %v2365 = vld [vmem:[#allocation7 + $0xc] sm:$0xf]
        %v2366 = vld [vmem:[#allocation7 + $0x10] sm:$0xf]
        %v2367 = vld [vmem:[#allocation7 + $0x14] sm:$0xf]
        %v2368 = vld [vmem:[#allocation7 + $0x18] sm:$0xf]
        %v2369 = vld [vmem:[#allocation7 + $0x1c] sm:$0xf]
        %v2370 = vld [vmem:[#allocation7 + $0x20] sm:$0xf]
        %v2371 = vld [vmem:[#allocation7 + $0x24] sm:$0xf]
        %v2372 = vld [vmem:[#allocation7 + $0x28] sm:$0xf]
        %v2373 = vld [vmem:[#allocation7 + $0x2c] sm:$0xf]
        %v2374 = vld [vmem:[#allocation7 + $0x30] sm:$0xf]
        %v2375 = vld [vmem:[#allocation7 + $0x34] sm:$0xf]
        %v2376 = vld [vmem:[#allocation7 + $0x38] sm:$0xf]
        %v2377 = vld [vmem:[#allocation7 + $0x3c] sm:$0xf]
        %v2378 = vld [vmem:[#allocation7 + $0x40] sm:$0xf]
        %v2379 = vld [vmem:[#allocation7 + $0x44] sm:$0xf]
        %v2380 = vld [vmem:[#allocation7 + $0x48] sm:$0xf]
        %v2381 = vld [vmem:[#allocation7 + $0x4c] sm:$0xf]
        %v2382 = vld [vmem:[#allocation7 + $0x50] sm:$0xf]
        %v2383 = vld [vmem:[#allocation7 + $0x54] sm:$0xf]
        %v2384 = vld [vmem:[#allocation7 + $0x58] sm:$0xf]
        %v2385 = vld [vmem:[#allocation7 + $0x5c] sm:$0xf]
        %v2386 = vld [vmem:[#allocation7 + $0x60] sm:$0xf]
        %v2387 = vld [vmem:[#allocation7 + $0x64] sm:$0xf]
        %v2388 = vld [vmem:[#allocation7 + $0x68] sm:$0xf]
        %v2389 = vld [vmem:[#allocation7 + $0x6c] sm:$0xf]
        %v2390 = vld [vmem:[#allocation7 + $0x70] sm:$0xf]
        %v2391 = vld [vmem:[#allocation7 + $0x74] sm:$0xf]
        %v2392 = vld [vmem:[#allocation7 + $0x78] sm:$0xf]
        %v2393 = vld [vmem:[#allocation7 + $0x7c] sm:$0xf]
        %v2394 = vld [vmem:[#allocation7 + $0x80] sm:$0xf]
        %v2395 = vld [vmem:[#allocation7 + $0x84] sm:$0xf]
        %v2396 = vld [vmem:[#allocation7 + $0x88] sm:$0xf]
        %v2397 = vld [vmem:[#allocation7 + $0x8c] sm:$0xf]
        %v2398 = vld [vmem:[#allocation7 + $0x90] sm:$0xf]
        %v2399 = vld [vmem:[#allocation7 + $0x94] sm:$0xf]
        %v2400 = vld [vmem:[#allocation7 + $0x98] sm:$0xf]
        %v2401 = vld [vmem:[#allocation7 + $0x9c] sm:$0xf]
        %v2402 = vld [vmem:[#allocation7 + $0xa0] sm:$0xf]
        %v2403 = vld [vmem:[#allocation7 + $0xa4] sm:$0xf]
        %v2404 = vld [vmem:[#allocation7 + $0xa8] sm:$0xf]
        %v2405 = vld [vmem:[#allocation7 + $0xac] sm:$0xf]
        %v2406 = vld [vmem:[#allocation7 + $0xb0] sm:$0xf]
        %v2407 = vld [vmem:[#allocation7 + $0xb4] sm:$0xf]
        %v2408 = vld [vmem:[#allocation7 + $0xb8] sm:$0xf]
        %v2409 = vld [vmem:[#allocation7 + $0xbc] sm:$0xf]
        %v2410 = vld [vmem:[#allocation7 + $0xc0] sm:$0xf]
        %v2411 = vld [vmem:[#allocation7 + $0xc4] sm:$0xf]
        %v2412 = vld [vmem:[#allocation7 + $0xc8] sm:$0xf]
        %v2413 = vld [vmem:[#allocation7 + $0xcc] sm:$0xf]
        %v2414 = vld [vmem:[#allocation7 + $0xd0] sm:$0xf]
        %v2415 = vld [vmem:[#allocation7 + $0xd4] sm:$0xf]
        %v2416 = vld [vmem:[#allocation7 + $0xd8] sm:$0xf]
        %v2417 = vld [vmem:[#allocation7 + $0xdc] sm:$0xf]
        %v2418 = vld [vmem:[#allocation7 + $0xe0] sm:$0xf]
        %v2419 = vld [vmem:[#allocation7 + $0xe4] sm:$0xf]
        %v2420 = vld [vmem:[#allocation7 + $0xe8] sm:$0xf]
        %v2421 = vld [vmem:[#allocation7 + $0xec] sm:$0xf]
        %v2422 = vld [vmem:[#allocation7 + $0xf0] sm:$0xf]
        %v2423 = vld [vmem:[#allocation7 + $0xf4] sm:$0xf]
        %v2424 = vld [vmem:[#allocation7 + $0xf8] sm:$0xf]
        %v2425 = vld [vmem:[#allocation7 + $0xfc] sm:$0xf]
        %v2426 = vld [vmem:[%s3] sm:$0x1]
        %v2428 = vlaneseq
        %v2429 = vshrl.u32 %v2428, 7
        %v2430 = vsub.s32 0, %v2429
        %v2431 = vrot.slane %v2426, %v2430
        %v2497 = vunpack.c.l.b16 %v2362
        %v2498 = vunpack.c.l.b16 %v2363
        %v2499 = vunpack.c.l.b16 %v2364
        %v2500 = vunpack.c.l.b16 %v2365
        %v2501 = vunpack.c.l.b16 %v2366
        %v2502 = vunpack.c.l.b16 %v2367
        %v2503 = vunpack.c.l.b16 %v2368
        %v2504 = vunpack.c.l.b16 %v2369
        %v2505 = vunpack.c.l.b16 %v2370
        %v2506 = vunpack.c.l.b16 %v2371
        %v2507 = vunpack.c.l.b16 %v2372
        %v2508 = vunpack.c.l.b16 %v2373
        %v2509 = vunpack.c.l.b16 %v2374
        %v2510 = vunpack.c.l.b16 %v2375
        %v2511 = vunpack.c.l.b16 %v2376
        %v2512 = vunpack.c.l.b16 %v2377
        %v2513 = vunpack.c.l.b16 %v2378
        %v2514 = vunpack.c.l.b16 %v2379
        %v2515 = vunpack.c.l.b16 %v2380
        %v2516 = vunpack.c.l.b16 %v2381
        %v2517 = vunpack.c.l.b16 %v2382
        %v2518 = vunpack.c.l.b16 %v2383
        %v2519 = vunpack.c.l.b16 %v2384
        %v2520 = vunpack.c.l.b16 %v2385
        %v2521 = vunpack.c.l.b16 %v2386
        %v2522 = vunpack.c.l.b16 %v2387
        %v2523 = vunpack.c.l.b16 %v2388
        %v2524 = vunpack.c.l.b16 %v2389
        %v2525 = vunpack.c.l.b16 %v2390
        %v2526 = vunpack.c.l.b16 %v2391
        %v2527 = vunpack.c.l.b16 %v2392
        %v2528 = vunpack.c.l.b16 %v2393
        %v2529 = vunpack.c.l.b16 %v2394
        %v2530 = vunpack.c.l.b16 %v2395
        %v2531 = vunpack.c.l.b16 %v2396
        %v2532 = vunpack.c.l.b16 %v2397
        %v2533 = vunpack.c.l.b16 %v2398
        %v2534 = vunpack.c.l.b16 %v2399
        %v2535 = vunpack.c.l.b16 %v2400
        %v2536 = vunpack.c.l.b16 %v2401
        %v2537 = vunpack.c.l.b16 %v2402
        %v2538 = vunpack.c.l.b16 %v2403
        %v2539 = vunpack.c.l.b16 %v2404
        %v2540 = vunpack.c.l.b16 %v2405
        %v2541 = vunpack.c.l.b16 %v2406
        %v2542 = vunpack.c.l.b16 %v2407
        %v2543 = vunpack.c.l.b16 %v2408
        %v2544 = vunpack.c.l.b16 %v2409
        %v2545 = vunpack.c.l.b16 %v2410
        %v2546 = vunpack.c.l.b16 %v2411
        %v2547 = vunpack.c.l.b16 %v2412
        %v2548 = vunpack.c.l.b16 %v2413
        %v2549 = vunpack.c.l.b16 %v2414
        %v2550 = vunpack.c.l.b16 %v2415
        %v2551 = vunpack.c.l.b16 %v2416
        %v2552 = vunpack.c.l.b16 %v2417
        %v2553 = vunpack.c.l.b16 %v2418
        %v2554 = vunpack.c.l.b16 %v2419
        %v2555 = vunpack.c.l.b16 %v2420
        %v2556 = vunpack.c.l.b16 %v2421
        %v2557 = vunpack.c.l.b16 %v2422
        %v2558 = vunpack.c.l.b16 %v2423
        %v2559 = vunpack.c.l.b16 %v2424
        %v2560 = vunpack.c.l.b16 %v2425
        %v2561 = vpack.c.b16 %v2498, %v2497
        %v2562 = vpack.c.b16 %v2500, %v2499
        %v2563 = vpack.c.b16 %v2502, %v2501
        %v2564 = vpack.c.b16 %v2504, %v2503
        %v2565 = vpack.c.b16 %v2506, %v2505
        %v2566 = vpack.c.b16 %v2508, %v2507
        %v2567 = vpack.c.b16 %v2510, %v2509
        %v2568 = vpack.c.b16 %v2512, %v2511
        %v2569 = vpack.c.b16 %v2514, %v2513
        %v2570 = vpack.c.b16 %v2516, %v2515
        %v2571 = vpack.c.b16 %v2518, %v2517
        %v2572 = vpack.c.b16 %v2520, %v2519
        %v2573 = vpack.c.b16 %v2522, %v2521
        %v2574 = vpack.c.b16 %v2524, %v2523
        %v2575 = vpack.c.b16 %v2526, %v2525
        %v2576 = vpack.c.b16 %v2528, %v2527
        %v2577 = vpack.c.b16 %v2530, %v2529
        %v2578 = vpack.c.b16 %v2532, %v2531
        %v2579 = vpack.c.b16 %v2534, %v2533
        %v2580 = vpack.c.b16 %v2536, %v2535
        %v2581 = vpack.c.b16 %v2538, %v2537
        %v2582 = vpack.c.b16 %v2540, %v2539
        %v2583 = vpack.c.b16 %v2542, %v2541
        %v2584 = vpack.c.b16 %v2544, %v2543
        %v2585 = vpack.c.b16 %v2546, %v2545
        %v2586 = vpack.c.b16 %v2548, %v2547
        %v2587 = vpack.c.b16 %v2550, %v2549
        %v2588 = vpack.c.b16 %v2552, %v2551
        %v2589 = vpack.c.b16 %v2554, %v2553
        %v2590 = vpack.c.b16 %v2556, %v2555
        %v2591 = vpack.c.b16 %v2558, %v2557
        %v2592 = vpack.c.b16 %v2560, %v2559
        %2625 = vmatprep.subr.bf16.mxu0 0
        %2626 = vmatpush1.bf16.msra.mxu0 %v2561
        %2627 = vmatprep.subr.bf16.mxu0 0
        %2628 = vmatpush1.bf16.msra.mxu0 %v2562
        %2629 = vmatprep.subr.bf16.mxu0 0
        %2630 = vmatpush1.bf16.msra.mxu0 %v2563
        %2631 = vmatprep.subr.bf16.mxu0 0
        %2632 = vmatpush1.bf16.msra.mxu0 %v2564
        %2633 = vmatprep.subr.bf16.mxu0 0
        %2634 = vmatpush1.bf16.msra.mxu0 %v2565
        %2635 = vmatprep.subr.bf16.mxu0 0
        %2636 = vmatpush1.bf16.msra.mxu0 %v2566
        %2637 = vmatprep.subr.bf16.mxu0 0
        %2638 = vmatpush1.bf16.msra.mxu0 %v2567
        %2639 = vmatprep.subr.bf16.mxu0 0
        %2640 = vmatpush1.bf16.msra.mxu0 %v2568
        %2641 = vmatprep.subr.bf16.mxu0 0
        %2642 = vmatpush1.bf16.msra.mxu0 %v2569
        %2643 = vmatprep.subr.bf16.mxu0 0
        %2644 = vmatpush1.bf16.msra.mxu0 %v2570
        %2645 = vmatprep.subr.bf16.mxu0 0
        %2646 = vmatpush1.bf16.msra.mxu0 %v2571
        %2647 = vmatprep.subr.bf16.mxu0 0
        %2648 = vmatpush1.bf16.msra.mxu0 %v2572
        %2649 = vmatprep.subr.bf16.mxu0 0
        %2650 = vmatpush1.bf16.msra.mxu0 %v2573
        %2651 = vmatprep.subr.bf16.mxu0 0
        %2652 = vmatpush1.bf16.msra.mxu0 %v2574
        %2653 = vmatprep.subr.bf16.mxu0 0
        %2654 = vmatpush1.bf16.msra.mxu0 %v2575
        %2655 = vmatprep.subr.bf16.mxu0 0
        %2656 = vmatpush1.bf16.msra.mxu0 %v2576
        %2657 = vmatprep.mubr.bf16.mxu0 %v2355
        %2658 = vmatmul.mubr.bf16.gmra.mrb[0].mxu0 %v2354
        %v2659 = vpop.f32.mrb[0].mxu0
        %v2660 = vadd.f32 %v2431, %v2659
        %v2661 = vpop.f32.mrb[0].mxu0
        %v2662 = vpop.f32.mrb[0].mxu0
        %v2663 = vadd.f32 %v2431, %v2662
        %v2664 = vpop.f32.mrb[0].mxu0
        %2665 = vmatprep.mubr.bf16.mxu0 %v2359
        %2666 = vmatmul.mubr.bf16.gmra.mrb[0].mxu0 %v2358
        %v2667 = vpop.f32.mrb[0].mxu0
        %v2668 = vadd.f32 %v2431, %v2667
        %v2669 = vpop.f32.mrb[0].mxu0
        %v2670 = vpop.f32.mrb[0].mxu0
        %v2671 = vadd.f32 %v2431, %v2670
        %v2672 = vpop.f32.mrb[0].mxu0
        %2673 = vdwg.mxu0
        %2674 = vmatprep.subr.bf16.mxu0 0
        %2675 = vmatpush1.bf16.msra.mxu0 %v2577
        %2676 = vmatprep.subr.bf16.mxu0 0
        %2677 = vmatpush1.bf16.msra.mxu0 %v2578
        %2678 = vmatprep.subr.bf16.mxu0 0
        %2679 = vmatpush1.bf16.msra.mxu0 %v2579
        %2680 = vmatprep.subr.bf16.mxu0 0
        %2681 = vmatpush1.bf16.msra.mxu0 %v2580
        %2682 = vmatprep.subr.bf16.mxu0 0
        %2683 = vmatpush1.bf16.msra.mxu0 %v2581
        %2684 = vmatprep.subr.bf16.mxu0 0
        %2685 = vmatpush1.bf16.msra.mxu0 %v2582
        %2686 = vmatprep.subr.bf16.mxu0 0
        %2687 = vmatpush1.bf16.msra.mxu0 %v2583
        %2688 = vmatprep.subr.bf16.mxu0 0
        %2689 = vmatpush1.bf16.msra.mxu0 %v2584
        %2690 = vmatprep.subr.bf16.mxu0 0
        %2691 = vmatpush1.bf16.msra.mxu0 %v2585
        %2692 = vmatprep.subr.bf16.mxu0 0
        %2693 = vmatpush1.bf16.msra.mxu0 %v2586
        %2694 = vmatprep.subr.bf16.mxu0 0
        %2695 = vmatpush1.bf16.msra.mxu0 %v2587
        %2696 = vmatprep.subr.bf16.mxu0 0
        %2697 = vmatpush1.bf16.msra.mxu0 %v2588
        %2698 = vmatprep.subr.bf16.mxu0 0
        %2699 = vmatpush1.bf16.msra.mxu0 %v2589
        %2700 = vmatprep.subr.bf16.mxu0 0
        %2701 = vmatpush1.bf16.msra.mxu0 %v2590
        %2702 = vmatprep.subr.bf16.mxu0 0
        %2703 = vmatpush1.bf16.msra.mxu0 %v2591
        %2704 = vmatprep.subr.bf16.mxu0 0
        %2705 = vmatpush1.bf16.msra.mxu0 %v2592
        %2706 = vmatprep.mubr.bf16.mxu0 %v2357
        %2707 = vmatmul.mubr.bf16.gmra.mrb[0].mxu0 %v2356
        %v2708 = vpop.f32.mrb[0].mxu0
        %v2709 = vadd.f32 %v2660, %v2708
        %v2710 = vpop.f32.mrb[0].mxu0
        %v2711 = vpop.f32.mrb[0].mxu0
        %v2712 = vadd.f32 %v2663, %v2711
        %v2713 = vpop.f32.mrb[0].mxu0
        %2714 = vmatprep.mubr.bf16.mxu0 %v2361
        %2715 = vmatmul.mubr.bf16.gmra.mrb[0].mxu0 %v2360
        %v2716 = vpop.f32.mrb[0].mxu0
        %v2717 = vadd.f32 %v2668, %v2716
        %v2718 = vpop.f32.mrb[0].mxu0
        %v2719 = vpop.f32.mrb[0].mxu0
        %v2720 = vadd.f32 %v2671, %v2719
        %v2721 = vpop.f32.mrb[0].mxu0
        %2722 = vdwg.mxu0
        %v2723 = vadd.f32 %v2709, %v533
        %v2724 = vadd.f32 %v2712, %v534
        %v2725 = vadd.f32 %v2717, %v535
        %v2726 = vadd.f32 %v2720, %v536
        %v2727 = vld [vmem:[%s4] sm:$0x1]
        %v2728 = vld [vmem:[%s5] sm:$0x1]
        %2729 = vadd.xlane.f32.xlu0 %v2723
        %v2730 = vpop.xlane.xlu0 %2729
        %2731 = vadd.xlane.f32.xlu0 %v2724
        %v2732 = vpop.xlane.xlu0 %2731
        %2733 = vadd.xlane.f32.xlu0 %v2725
        %v2734 = vpop.xlane.xlu0 %2733
        %2735 = vadd.xlane.f32.xlu0 %v2726
        %v2736 = vpop.xlane.xlu0 %2735
        %v2737 = vmul.f32 %v2723, %v2723
        %v2738 = vmul.f32 %v2724, %v2724
        %v2739 = vmul.f32 %v2725, %v2725
        %v2740 = vmul.f32 %v2726, %v2726
        %2741 = vadd.xlane.f32.xlu0 %v2737
        %v2742 = vpop.xlane.xlu0 %2741
        %2743 = vadd.xlane.f32.xlu0 %v2738
        %v2744 = vpop.xlane.xlu0 %2743
        %2745 = vadd.xlane.f32.xlu0 %v2739
        %v2746 = vpop.xlane.xlu0 %2745
        %2747 = vadd.xlane.f32.xlu0 %v2740
        %v2748 = vpop.xlane.xlu0 %2747
        %v2749 = vmul.f32 %v2730, 0.015625
        %v2750 = vmul.f32 %v2732, 0.015625
        %v2751 = vmul.f32 %v2734, 0.015625
        %v2752 = vmul.f32 %v2736, 0.015625
        %v2753 = vmul.f32 %v2742, 0.015625
        %v2754 = vmul.f32 %v2744, 0.015625
        %v2755 = vmul.f32 %v2746, 0.015625
        %v2756 = vmul.f32 %v2748, 0.015625
        %v2757 = vmul.f32 %v2749, %v2749
        %v2758 = vmul.f32 %v2750, %v2750
        %v2759 = vmul.f32 %v2751, %v2751
        %v2760 = vmul.f32 %v2752, %v2752
        %v2761 = vsub.f32 %v2753, %v2757
        %v2762 = vsub.f32 %v2754, %v2758
        %v2763 = vsub.f32 %v2755, %v2759
        %v2764 = vsub.f32 %v2756, %v2760
        %v2765 = vadd.f32 %v2761, 1e-05
        %v2766 = vadd.f32 %v2762, 1e-05
        %v2767 = vadd.f32 %v2763, 1e-05
        %v2768 = vadd.f32 %v2764, 1e-05
        %v2769 = vrsqrt.pop %v2765
        %v2770 = vrsqrt.pop %v2766
        %v2771 = vrsqrt.pop %v2767
        %v2772 = vrsqrt.pop %v2768
        %v2773 = vsub.f32 %v2723, %v2749
        %v2774 = vsub.f32 %v2724, %v2750
        %v2775 = vsub.f32 %v2725, %v2751
        %v2776 = vsub.f32 %v2726, %v2752
        %v2777 = vmul.f32 %v2773, %v2769
        %v2778 = vmul.f32 %v2774, %v2770
        %v2779 = vmul.f32 %v2775, %v2771
        %v2780 = vmul.f32 %v2776, %v2772
        %v2782 = vlaneseq
        %v2783 = vshrl.u32 %v2782, 7
        %v2784 = vsub.s32 0, %v2783
        %v2785 = vrot.slane %v2727, %v2784
        %v2787 = vmul.f32 %v2777, %v2785
        %v2788 = vmul.f32 %v2778, %v2785
        %v2789 = vmul.f32 %v2779, %v2785
        %v2790 = vmul.f32 %v2780, %v2785
        %v2792 = vlaneseq
        %v2793 = vshrl.u32 %v2792, 7
        %v2794 = vsub.s32 0, %v2793
        %v2795 = vrot.slane %v2728, %v2794
        %v2797 = vadd.f32 %v2787, %v2795
        %v2798 = vadd.f32 %v2788, %v2795
        %v2799 = vadd.f32 %v2789, %v2795
        %v2800 = vadd.f32 %v2790, %v2795
        %v2801 = vpack.c.bf16 %v2798, %v2797
        %v2802 = vpack.c.bf16 %v2800, %v2799
        %v2803 = vld [vmem:[#allocation8] sm:$0xf]
        %v2804 = vld [vmem:[#allocation8 + $0x4] sm:$0xf]
        %v2805 = vld [vmem:[#allocation8 + $0x8] sm:$0xf]
        %v2806 = vld [vmem:[#allocation8 + $0xc] sm:$0xf]
        %v2807 = vld [vmem:[#allocation8 + $0x10] sm:$0xf]
        %v2808 = vld [vmem:[#allocation8 + $0x14] sm:$0xf]
        %v2809 = vld [vmem:[#allocation8 + $0x18] sm:$0xf]
        %v2810 = vld [vmem:[#allocation8 + $0x1c] sm:$0xf]
        %v2811 = vld [vmem:[#allocation8 + $0x20] sm:$0xf]
        %v2812 = vld [vmem:[#allocation8 + $0x24] sm:$0xf]
        %v2813 = vld [vmem:[#allocation8 + $0x28] sm:$0xf]
        %v2814 = vld [vmem:[#allocation8 + $0x2c] sm:$0xf]
        %v2815 = vld [vmem:[#allocation8 + $0x30] sm:$0xf]
        %v2816 = vld [vmem:[#allocation8 + $0x34] sm:$0xf]
        %v2817 = vld [vmem:[#allocation8 + $0x38] sm:$0xf]
        %v2818 = vld [vmem:[#allocation8 + $0x3c] sm:$0xf]
        %v2819 = vld [vmem:[%s7] sm:$0x1]
        %v2821 = vlaneseq
        %v2822 = vshrl.u32 %v2821, 7
        %v2823 = vsub.s32 0, %v2822
        %v2824 = vrot.slane %v2819, %v2823
        %v2842 = vunpack.c.l.b16 %v2803
        %v2843 = vunpack.c.l.b16 %v2804
        %v2844 = vunpack.c.l.b16 %v2805
        %v2845 = vunpack.c.l.b16 %v2806
        %v2846 = vunpack.c.l.b16 %v2807
        %v2847 = vunpack.c.l.b16 %v2808
        %v2848 = vunpack.c.l.b16 %v2809
        %v2849 = vunpack.c.l.b16 %v2810
        %v2850 = vunpack.c.l.b16 %v2811
        %v2851 = vunpack.c.l.b16 %v2812
        %v2852 = vunpack.c.l.b16 %v2813
        %v2853 = vunpack.c.l.b16 %v2814
        %v2854 = vunpack.c.l.b16 %v2815
        %v2855 = vunpack.c.l.b16 %v2816
        %v2856 = vunpack.c.l.b16 %v2817
        %v2857 = vunpack.c.l.b16 %v2818
        %v2858 = vpack.c.b16 %v2843, %v2842
        %v2859 = vpack.c.b16 %v2845, %v2844
        %v2860 = vpack.c.b16 %v2847, %v2846
        %v2861 = vpack.c.b16 %v2849, %v2848
        %v2862 = vpack.c.b16 %v2851, %v2850
        %v2863 = vpack.c.b16 %v2853, %v2852
        %v2864 = vpack.c.b16 %v2855, %v2854
        %v2865 = vpack.c.b16 %v2857, %v2856
        %2874 = vmatprep.subr.bf16.mxu0 0
        %2875 = vmatpush1.bf16.msra.mxu0 %v2858
        %2876 = vmatprep.subr.bf16.mxu0 0
        %2877 = vmatpush1.bf16.msra.mxu0 %v2859
        %2878 = vmatprep.subr.bf16.mxu0 0
        %2879 = vmatpush1.bf16.msra.mxu0 %v2860
        %2880 = vmatprep.subr.bf16.mxu0 0
        %2881 = vmatpush1.bf16.msra.mxu0 %v2861
        %2882 = vmatprep.subr.bf16.mxu0 0
        %2883 = vmatpush1.bf16.msra.mxu0 %v2862
        %2884 = vmatprep.subr.bf16.mxu0 0
        %2885 = vmatpush1.bf16.msra.mxu0 %v2863
        %2886 = vmatprep.subr.bf16.mxu0 0
        %2887 = vmatpush1.bf16.msra.mxu0 %v2864
        %2888 = vmatprep.subr.bf16.mxu0 0
        %2889 = vmatpush1.bf16.msra.mxu0 %v2865
        %2890 = vmatprep.subr.bf16.mxu0 0
        %2891 = vmatpush1.bf16.msra.mxu0 0
        %2892 = vmatprep.subr.bf16.mxu0 0
        %2893 = vmatpush1.bf16.msra.mxu0 0
        %2894 = vmatprep.subr.bf16.mxu0 0
        %2895 = vmatpush1.bf16.msra.mxu0 0
        %2896 = vmatprep.subr.bf16.mxu0 0
        %2897 = vmatpush1.bf16.msra.mxu0 0
        %2898 = vmatprep.subr.bf16.mxu0 0
        %2899 = vmatpush1.bf16.msra.mxu0 0
        %2900 = vmatprep.subr.bf16.mxu0 0
        %2901 = vmatpush1.bf16.msra.mxu0 0
        %2902 = vmatprep.subr.bf16.mxu0 0
        %2903 = vmatpush1.bf16.msra.mxu0 0
        %2904 = vmatprep.subr.bf16.mxu0 0
        %2905 = vmatpush1.bf16.msra.mxu0 0
        %2906 = vmatprep.mubr.bf16.mxu0 0
        %2907 = vmatmul.mubr.bf16.gmra.mrb[0].mxu0 %v2801
        %v2908 = vpop.f32.mrb[0].mxu0
        %v2909 = vadd.f32 %v2824, %v2908
        %v2910 = vpop.f32.mrb[0].mxu0
        %v2911 = vpop.f32.mrb[0].mxu0
        %v2912 = vadd.f32 %v2824, %v2911
        %v2913 = vpop.f32.mrb[0].mxu0
        %2914 = vmatprep.mubr.bf16.mxu0 0
        %2915 = vmatmul.mubr.bf16.gmra.mrb[0].mxu0 %v2802
        %v2916 = vpop.f32.mrb[0].mxu0
        %v2917 = vadd.f32 %v2824, %v2916
        %v2918 = vpop.f32.mrb[0].mxu0
        %v2919 = vpop.f32.mrb[0].mxu0
        %v2920 = vadd.f32 %v2824, %v2919
        %v2921 = vpop.f32.mrb[0].mxu0
        %2922 = vdwg.mxu0
        %v2923 = vmax.f32 %v2909, 0.0
        %v2924 = vmax.f32 %v2912, 0.0
        %v2925 = vmax.f32 %v2917, 0.0
        %v2926 = vmax.f32 %v2920, 0.0
        %v2927 = vpack.c.bf16 %v2924, %v2923
        %v2928 = vpack.c.bf16 %v2926, %v2925
        %v2929 = vld [vmem:[#allocation10] sm:$0xf]
        %v2930 = vld [vmem:[#allocation10 + $0x4] sm:$0xf]
        %v2931 = vld [vmem:[#allocation10 + $0x8] sm:$0xf]
        %v2932 = vld [vmem:[#allocation10 + $0xc] sm:$0xf]
        %v2933 = vld [vmem:[#allocation10 + $0x10] sm:$0xf]
        %v2934 = vld [vmem:[#allocation10 + $0x14] sm:$0xf]
        %v2935 = vld [vmem:[#allocation10 + $0x18] sm:$0xf]
        %v2936 = vld [vmem:[#allocation10 + $0x1c] sm:$0xf]
        %v2937 = vld [vmem:[#allocation10 + $0x20] sm:$0xf]
        %v2938 = vld [vmem:[#allocation10 + $0x24] sm:$0xf]
        %v2939 = vld [vmem:[#allocation10 + $0x28] sm:$0xf]
        %v2940 = vld [vmem:[#allocation10 + $0x2c] sm:$0xf]
        %v2941 = vld [vmem:[#allocation10 + $0x30] sm:$0xf]
        %v2942 = vld [vmem:[#allocation10 + $0x34] sm:$0xf]
        %v2943 = vld [vmem:[#allocation10 + $0x38] sm:$0xf]
        %v2944 = vld [vmem:[#allocation10 + $0x3c] sm:$0xf]
        %v2945 = vld [vmem:[%s9] sm:$0x1]
        %v2947 = vlaneseq
        %v2948 = vshrl.u32 %v2947, 7
        %v2949 = vsub.s32 0, %v2948
        %v2950 = vrot.slane %v2945, %v2949
        %v2968 = vunpack.c.l.b16 %v2929
        %v2969 = vunpack.c.l.b16 %v2930
        %v2970 = vunpack.c.l.b16 %v2931
        %v2971 = vunpack.c.l.b16 %v2932
        %v2972 = vunpack.c.l.b16 %v2933
        %v2973 = vunpack.c.l.b16 %v2934
        %v2974 = vunpack.c.l.b16 %v2935
        %v2975 = vunpack.c.l.b16 %v2936
        %v2976 = vunpack.c.l.b16 %v2937
        %v2977 = vunpack.c.l.b16 %v2938
        %v2978 = vunpack.c.l.b16 %v2939
        %v2979 = vunpack.c.l.b16 %v2940
        %v2980 = vunpack.c.l.b16 %v2941
        %v2981 = vunpack.c.l.b16 %v2942
        %v2982 = vunpack.c.l.b16 %v2943
        %v2983 = vunpack.c.l.b16 %v2944
        %v2984 = vpack.c.b16 %v2969, %v2968
        %v2985 = vpack.c.b16 %v2971, %v2970
        %v2986 = vpack.c.b16 %v2973, %v2972
        %v2987 = vpack.c.b16 %v2975, %v2974
        %v2988 = vpack.c.b16 %v2977, %v2976
        %v2989 = vpack.c.b16 %v2979, %v2978
        %v2990 = vpack.c.b16 %v2981, %v2980
        %v2991 = vpack.c.b16 %v2983, %v2982
        %3000 = vmatprep.subr.bf16.mxu0 0
        %3001 = vmatpush1.bf16.msra.mxu0 %v2984
        %3002 = vmatprep.subr.bf16.mxu0 0
        %3003 = vmatpush1.bf16.msra.mxu0 %v2985
        %3004 = vmatprep.subr.bf16.mxu0 0
        %3005 = vmatpush1.bf16.msra.mxu0 %v2986
        %3006 = vmatprep.subr.bf16.mxu0 0
        %3007 = vmatpush1.bf16.msra.mxu0 %v2987
        %3008 = vmatprep.subr.bf16.mxu0 0
        %3009 = vmatpush1.bf16.msra.mxu0 %v2988
        %3010 = vmatprep.subr.bf16.mxu0 0
        %3011 = vmatpush1.bf16.msra.mxu0 %v2989
        %3012 = vmatprep.subr.bf16.mxu0 0
        %3013 = vmatpush1.bf16.msra.mxu0 %v2990
        %3014 = vmatprep.subr.bf16.mxu0 0
        %3015 = vmatpush1.bf16.msra.mxu0 %v2991
        %3016 = vmatprep.subr.bf16.mxu0 0
        %3017 = vmatpush1.bf16.msra.mxu0 0
        %3018 = vmatprep.subr.bf16.mxu0 0
        %3019 = vmatpush1.bf16.msra.mxu0 0
        %3020 = vmatprep.subr.bf16.mxu0 0
        %3021 = vmatpush1.bf16.msra.mxu0 0
        %3022 = vmatprep.subr.bf16.mxu0 0
        %3023 = vmatpush1.bf16.msra.mxu0 0
        %3024 = vmatprep.subr.bf16.mxu0 0
        %3025 = vmatpush1.bf16.msra.mxu0 0
        %3026 = vmatprep.subr.bf16.mxu0 0
        %3027 = vmatpush1.bf16.msra.mxu0 0
        %3028 = vmatprep.subr.bf16.mxu0 0
        %3029 = vmatpush1.bf16.msra.mxu0 0
        %3030 = vmatprep.subr.bf16.mxu0 0
        %3031 = vmatpush1.bf16.msra.mxu0 0
        %3032 = vmatprep.mubr.bf16.mxu0 0
        %3033 = vmatmul.mubr.bf16.gmra.mrb[0].mxu0 %v2927
        %v3034 = vpop.f32.mrb[0].mxu0
        %v3035 = vadd.f32 %v2950, %v3034
        %v3036 = vpop.f32.mrb[0].mxu0
        %v3037 = vpop.f32.mrb[0].mxu0
        %v3038 = vadd.f32 %v2950, %v3037
        %v3039 = vpop.f32.mrb[0].mxu0
        %3040 = vmatprep.mubr.bf16.mxu0 0
        %3041 = vmatmul.mubr.bf16.gmra.mrb[0].mxu0 %v2928
        %v3042 = vpop.f32.mrb[0].mxu0
        %v3043 = vadd.f32 %v2950, %v3042
        %v3044 = vpop.f32.mrb[0].mxu0
        %v3045 = vpop.f32.mrb[0].mxu0
        %v3046 = vadd.f32 %v2950, %v3045
        %v3047 = vpop.f32.mrb[0].mxu0
        %3048 = vdwg.mxu0
        %v3049 = vadd.f32 %v3035, %v2797
        %v3050 = vadd.f32 %v3038, %v2798
        %v3051 = vadd.f32 %v3043, %v2799
        %v3052 = vadd.f32 %v3046, %v2800
        %v3053 = vld [vmem:[%s10] sm:$0x1]
        %v3054 = vld [vmem:[%s11] sm:$0x1]
        %3055 = vadd.xlane.f32.xlu0 %v3049
        %v3056 = vpop.xlane.xlu0 %3055
        %3057 = vadd.xlane.f32.xlu0 %v3050
        %v3058 = vpop.xlane.xlu0 %3057
        %3059 = vadd.xlane.f32.xlu0 %v3051
        %v3060 = vpop.xlane.xlu0 %3059
        %3061 = vadd.xlane.f32.xlu0 %v3052
        %v3062 = vpop.xlane.xlu0 %3061
        %v3063 = vmul.f32 %v3049, %v3049
        %v3064 = vmul.f32 %v3050, %v3050
        %v3065 = vmul.f32 %v3051, %v3051
        %v3066 = vmul.f32 %v3052, %v3052
        %3067 = vadd.xlane.f32.xlu0 %v3063
        %v3068 = vpop.xlane.xlu0 %3067
        %3069 = vadd.xlane.f32.xlu0 %v3064
        %v3070 = vpop.xlane.xlu0 %3069
        %3071 = vadd.xlane.f32.xlu0 %v3065
        %v3072 = vpop.xlane.xlu0 %3071
        %3073 = vadd.xlane.f32.xlu0 %v3066
        %v3074 = vpop.xlane.xlu0 %3073
        %v3075 = vmul.f32 %v3056, 0.015625
        %v3076 = vmul.f32 %v3058, 0.015625
        %v3077 = vmul.f32 %v3060, 0.015625
        %v3078 = vmul.f32 %v3062, 0.015625
        %v3079 = vmul.f32 %v3068, 0.015625
        %v3080 = vmul.f32 %v3070, 0.015625
        %v3081 = vmul.f32 %v3072, 0.015625
        %v3082 = vmul.f32 %v3074, 0.015625
        %v3083 = vmul.f32 %v3075, %v3075
        %v3084 = vmul.f32 %v3076, %v3076
        %v3085 = vmul.f32 %v3077, %v3077
        %v3086 = vmul.f32 %v3078, %v3078
        %v3087 = vsub.f32 %v3079, %v3083
        %v3088 = vsub.f32 %v3080, %v3084
        %v3089 = vsub.f32 %v3081, %v3085
        %v3090 = vsub.f32 %v3082, %v3086
        %v3091 = vadd.f32 %v3087, 1e-05
        %v3092 = vadd.f32 %v3088, 1e-05
        %v3093 = vadd.f32 %v3089, 1e-05
        %v3094 = vadd.f32 %v3090, 1e-05
        %v3095 = vrsqrt.pop %v3091
        %v3096 = vrsqrt.pop %v3092
        %v3097 = vrsqrt.pop %v3093
        %v3098 = vrsqrt.pop %v3094
        %v3099 = vsub.f32 %v3049, %v3075
        %v3100 = vsub.f32 %v3050, %v3076
        %v3101 = vsub.f32 %v3051, %v3077
        %v3102 = vsub.f32 %v3052, %v3078
        %v3103 = vmul.f32 %v3099, %v3095
        %v3104 = vmul.f32 %v3100, %v3096
        %v3105 = vmul.f32 %v3101, %v3097
        %v3106 = vmul.f32 %v3102, %v3098
        %v3108 = vlaneseq
        %v3109 = vshrl.u32 %v3108, 7
        %v3110 = vsub.s32 0, %v3109
        %v3111 = vrot.slane %v3053, %v3110
        %v3113 = vmul.f32 %v3103, %v3111
        %v3114 = vmul.f32 %v3104, %v3111
        %v3115 = vmul.f32 %v3105, %v3111
        %v3116 = vmul.f32 %v3106, %v3111
        %v3118 = vlaneseq
        %v3119 = vshrl.u32 %v3118, 7
        %v3120 = vsub.s32 0, %v3119
        %v3121 = vrot.slane %v3054, %v3120
        %v3123 = vadd.f32 %v3113, %v3121
        %v3124 = vadd.f32 %v3114, %v3121
        %v3125 = vadd.f32 %v3115, %v3121
        %v3126 = vadd.f32 %v3116, %v3121
        %3127 = vst [vmem:[%s521] sm:$0xff] %v3123
        %3128 = vst [vmem:[%s521 + $0x8] sm:$0xff] %v3124
        %3129 = vst [vmem:[%s521 + $0x10] sm:$0xff] %v3125
        %3130 = vst [vmem:[%s521 + $0x18] sm:$0xff] %v3126
        %v3131 = vmul.f32 %v2260, 0.25
        %v3132 = vmul.f32 %v2261, 0.25
        %v3133 = vmul.f32 %v2262, 0.25
        %v3134 = vmul.f32 %v2263, 0.25
        %3135 = vst.msk [vmem:[%s528] sm:$0xff] %vm1525, %v3131
        %3136 = vst.msk [vmem:[%s528 + $0x8] sm:$0xff] %vm1525, %v3132
        %3137 = vst.msk [vmem:[%s528 + $0x10] sm:$0xff] %vm1525, %v3133
        %3138 = vst.msk [vmem:[%s528 + $0x18] sm:$0xff] %vm1525, %v3134
        %s3139 = sand.u32 %s301, 1
        %s3140 = scalar_lea.sflag [#allocation4], %s3139
        %s3141 = sand.u32 %s301, 1
        %s3142 = smul.addr %s3141, 32
        %s3143 = scalar_lea.vmem [#allocation11], %s3142
        %s3144 = sand.u32 %s327, 1
        %s3145 = scalar_lea.sflag [#allocation13], %s3144
        %s3146 = sand.u32 %s327, 1
        %s3147 = smul.addr %s3146, 32
        %s3148 = scalar_lea.vmem [#allocation12], %s3147
        // Predicated region
        $region89: #{tpu_custom_call.1} parent=67 // pred_check
          %p3149 = pneg %p311
        $region90: #{tpu_custom_call.1} parent=67 // pred_check_branch
          %3151 = sbr.rel (%p3149) target = $region92
        $region91: #{tpu_custom_call.1} parent=67 // pred_region
          %s3152 = smul.u32 2, %s36
          %s3154 = ssub.s32 512, 512
          %3155 = vsyncadd %s3140, %s3154
          %s3156 = smul.addr %s3152, 2
          %s3157 = smul.addr %s3156, 128
          %s3158 = scalar_lea.hbm %s12, %s3157
          %s3159 = sshll.u32 %s3143, 4
          %s3160 = int_to_ptr.vmem [resolvable:$true] %s3159
          %3165 = dma.vmem_to_hbm [thread:$0]  %s3160, 512, %s3158, %s3140, 128, 128, 8
        $region92: #{tpu_custom_call.1} parent=67 // pred_fallthru
          _
        // Predicated region
        $region93: #{tpu_custom_call.1} parent=67 // pred_check
          %p3166 = pneg %p337
        $region94: #{tpu_custom_call.1} parent=67 // pred_check_branch
          %3168 = sbr.rel (%p3166) target = $region96
        $region95: #{tpu_custom_call.1} parent=67 // pred_region
          %s3169 = smul.u32 2, %s36
          %s3171 = ssub.s32 512, 512
          %3172 = vsyncadd %s3145, %s3171
          %s3173 = smul.addr %s3169, 2
          %s3174 = smul.addr %s3173, 128
          %s3175 = scalar_lea.hbm %s13, %s3174
          %s3176 = sshll.u32 %s3148, 4
          %s3177 = int_to_ptr.vmem [resolvable:$true] %s3176
          %3182 = dma.vmem_to_hbm [thread:$0]  %s3177, 512, %s3175, %s3145, 128, 128, 8
        $region96: #{tpu_custom_call.1} parent=67 // pred_fallthru
          _
      $region68: #{tpu_custom_call.1} parent=5 // pred_fallthru
        _
      %p3183 = scmp.le.s32.totalorder 2, %s31
      // Predicated region
      $region97: #{tpu_custom_call.1} parent=5 // pred_check
        %p3184 = pneg %p3183
      $region98: #{tpu_custom_call.1} parent=5 // pred_check_branch
        %3186 = sbr.rel (%p3184) target = $region100
      $region99: #{tpu_custom_call.1} parent=5 // pred_region
        %s3187 = ssub.s32 %s31, 2
        // Predicated region
        $region101: #{tpu_custom_call.1} parent=99 // pred_check
          %p3188 = pneg %p317
        $region102: #{tpu_custom_call.1} parent=99 // pred_check_branch
          %3190 = sbr.rel (%p3188) target = $region104
        $region103: #{tpu_custom_call.1} parent=99 // pred_region
          %s3191 = sand.u32 %s302, 1
          %s3192 = scalar_lea.sflag [#allocation4], %s3191
          %s3193 = sand.u32 %s302, 1
          %s3194 = smul.addr %s3193, 32
          %s3195 = scalar_lea.vmem [#allocation11], %s3194
          %3196 = dma.done %s3192, 512
        $region104: #{tpu_custom_call.1} parent=99 // pred_fallthru
          _
        // Predicated region
        $region105: #{tpu_custom_call.1} parent=99 // pred_check
          %p3197 = pneg %p343
        $region106: #{tpu_custom_call.1} parent=99 // pred_check_branch
          %3199 = sbr.rel (%p3197) target = $region108
        $region107: #{tpu_custom_call.1} parent=99 // pred_region
          %s3200 = sand.u32 %s328, 1
          %s3201 = scalar_lea.sflag [#allocation13], %s3200
          %s3202 = sand.u32 %s328, 1
          %s3203 = smul.addr %s3202, 32
          %s3204 = scalar_lea.vmem [#allocation12], %s3203
          %3205 = dma.done %s3201, 512
        $region108: #{tpu_custom_call.1} parent=99 // pred_fallthru
          _
      $region100: #{tpu_custom_call.1} parent=5 // pred_fallthru
        _
    $region6: #{tpu_custom_call.1} parent=1 // loop_footer
      %s35 = sadd.s32 1, %s31
    $region7: #{tpu_custom_call.1} parent=1 // loop_footer_branch
      %30 = sbr.rel target = $region3
    $region8: #{tpu_custom_call.1} parent=1 // loop_exit
      _
    %3206 = vsyncpa [#allocation3], 1
    %s3207 = scalar_lea.sflag [#allocation3], 1
    %3208 = vsyncpa %s3207, 1
    %3209 = vsyncpa [#allocation6], 1
    %3210 = vsyncpa [#allocation9], 1
    %3211 = vsyncpa [#allocation4], 1
    %s3212 = scalar_lea.sflag [#allocation4], 1
    %3213 = vsyncpa %s3212, 1
    %3214 = vsyncpa [#allocation13], 1
    %s3215 = scalar_lea.sflag [#allocation13], 1
    %3216 = vsyncpa %s3215, 1

</llo_original>
